<compile_context>
chip_gen: v6e
topology: v6e:2x2x1
jax: 0.10.0
libtpu: 0.0.40
codegen_flags: <defaults>
</compile_context>

<pallas_src>
import functools

import numpy as np
import jax
import jax.numpy as jnp
from jax.experimental import pallas as pl
from jax.experimental.pallas import tpu as pltpu


# ----------------------------------------------------------------------------
# Host-side helpers for align_corners=True bilinear interpolation.
# ----------------------------------------------------------------------------
def _bilinear_matrix(n_in, n_out):
    """Interpolation matrix U (n_out, n_in): out = U @ in (align_corners=True)."""
    U = np.zeros((n_out, n_in), dtype=np.float32)
    if n_in == 1 or n_out == 1:
        U[:, 0] = 1.0
        return U
    scale = (n_in - 1) / (n_out - 1)
    for i in range(n_out):
        s = i * scale
        i0 = min(int(np.floor(s)), n_in - 1)
        frac = s - i0
        i1 = min(i0 + 1, n_in - 1)
        U[i, i0] += 1.0 - frac
        U[i, i1] += frac
    return U


def _row_taps(n_in, n_out):
    """Static (i0, i1, w0, w1) per output row (align_corners=True)."""
    if n_in == 1 or n_out == 1:
        return tuple((0, 0, 1.0, 0.0) for _ in range(n_out))
    scale = (n_in - 1) / (n_out - 1)
    taps = []
    for i in range(n_out):
        s = i * scale
        i0 = min(int(np.floor(s)), n_in - 1)
        frac = s - i0
        i1 = min(i0 + 1, n_in - 1)
        taps.append((i0, i1, float(1.0 - frac), float(frac)))
    return tuple(taps)


# ----------------------------------------------------------------------------
# Fused kernel: upsample(x1) + concat + (conv3x3 + BN + ReLU) * 2, one batch
# element per grid step.  Internal layout is (C, H2, W2) / (C, H2*W2) so the
# flattened spatial dim sits on lanes and conv outputs store lane-dense.
# ----------------------------------------------------------------------------
def _up_fused_kernel(x1_ref, x2_ref, up_ref, w1t_ref, b1_ref,
                     w2t_ref, b2_ref, o_ref, *, h_taps, use_kron):
    _, C1, H, W = x1_ref.shape
    _, C2, H2, W2 = x2_ref.shape
    Cout = o_ref.shape[1]
    HW = H2 * W2

    # ---- bilinear x2 upsample of x1 (align_corners=True) -------------------
    x1 = x1_ref[0].astype(jnp.float32)                           # (C1, H, W)
    if use_kron:
        # One MXU matmul against kron(UH, UW)^T: (C1, H*W) @ (H*W, H2*W2).
        x1u = jnp.dot(x1.reshape(C1, H * W), up_ref[...],
                      preferred_element_type=jnp.float32)        # (C1, H2*W2)
        x1u = x1u.reshape(C1, H2, W2)
    else:
        # Separable fallback: W via matmul, H via static VPU row blends.
        t = jnp.dot(x1.reshape(C1 * H, W), up_ref[...],
                    preferred_element_type=jnp.float32)          # (C1*H, W2)
        t = t.reshape(C1, H, W2)
        rows = [w0 * t[:, i0:i0 + 1, :] + w1 * t[:, i1:i1 + 1, :]
                for (i0, i1, w0, w1) in h_taps]
        x1u = jnp.concatenate(rows, axis=1)                      # (C1, H2, W2)

    # ---- torch.cat([x2, x1], dim=1) ----------------------------------------
    x2b = x2_ref[0].astype(jnp.float32)                          # (C2, H2, W2)
    xcat = jnp.concatenate([x2b, x1u], axis=0)                   # (Cin, H2, W2)

    # ---- conv3x3 (pad=1) + folded BN (scale pre-folded into weights) + ReLU
    def conv3x3_bn_relu(x, wt, shift):
        # x: (C, H2, W2); wt: (Cout, 9*C) with BN scale folded; shift: (Cout, 1)
        C = x.shape[0]
        zr = jnp.zeros((C, 1, W2), jnp.float32)
        xp = jnp.concatenate([zr, x, zr], axis=1)                # (C, H2+2, W2)
        zc = jnp.zeros((C, H2 + 2, 1), jnp.float32)
        xp = jnp.concatenate([zc, xp, zc], axis=2)               # (C, H2+2, W2+2)
        taps = [xp[:, dy:dy + H2, dx:dx + W2]
                for dy in range(3) for dx in range(3)]
        patches = jnp.concatenate(taps, axis=0).reshape(9 * C, HW)
        y = jnp.dot(wt, patches, preferred_element_type=jnp.float32)  # (Cout, HW)
        return jnp.maximum(y + shift, 0.0)

    y1 = conv3x3_bn_relu(xcat, w1t_ref[...], b1_ref[...])
    y2 = conv3x3_bn_relu(y1.reshape(Cout, H2, W2), w2t_ref[...], b2_ref[...])
    o_ref[0] = y2.astype(o_ref.dtype)                            # (Cout, HW) lane-dense


# ----------------------------------------------------------------------------
# Parameter folding and the public `up.forward` wrapper (NCHW in / NCHW out).
# ----------------------------------------------------------------------------
def _fold_bn(w_hwio, b, gamma, beta, mean, var, eps=1e-5):
    """Fold eval-mode BN into the conv: returns (scaled weights, shift)."""
    cin, cout = w_hwio.shape[2], w_hwio.shape[3]
    scale = gamma / jnp.sqrt(var + eps)                          # (Cout,)
    shift = (b - mean) * scale + beta                            # (Cout,)
    wt = jnp.transpose(w_hwio.reshape(9 * cin, cout))            # (Cout, 9*Cin)
    wt = wt * scale[:, None]                                     # fold BN scale
    return wt.astype(jnp.float32), shift.reshape(cout, 1).astype(jnp.float32)


def _pad_or_crop(x, axis, lo, hi):
    """Static F.pad semantics on one axis (negative amounts crop)."""
    if lo == 0 and hi == 0:
        return x
    if lo < 0:
        x = jax.lax.slice_in_dim(x, -lo, x.shape[axis], axis=axis)
        lo = 0
    if hi < 0:
        x = jax.lax.slice_in_dim(x, 0, x.shape[axis] + hi, axis=axis)
        hi = 0
    if lo or hi:
        pads = [(0, 0)] * x.ndim
        pads[axis] = (lo, hi)
        x = jnp.pad(x, pads)
    return x


_KRON_BYTES_LIMIT = 4 * 1024 * 1024   # use the one-matmul upsample below this


def up_forward(x1, x2, p):
    """`up.forward(x1, x2)` with type='bilinear', dropout=None, BN in eval mode."""
    N, C1, H, W = x1.shape
    H2, W2 = 2 * H, 2 * W
    C2 = x2.shape[1]

    # Reproduce the module's diffX/diffY quirk (diffX measured on H but applied
    # to W by F.pad, and vice versa).  Usually both are zero.
    diffX = H2 - x2.shape[2]
    diffY = W2 - x2.shape[3]
    x2 = _pad_or_crop(x2, 2, diffY // 2, int(diffY / 2))         # H gets diffY split
    x2 = _pad_or_crop(x2, 3, diffX // 2, int(diffX / 2))         # W gets diffX split
    assert x2.shape[2] == H2 and x2.shape[3] == W2, (
        "padded x2 must match upsampled x1 spatially (same requirement as torch.cat)")

    Cin = C1 + C2
    w1t, b1 = _fold_bn(p['w1'], p['b1'], p['g1'], p['be1'], p['m1'], p['v1'])
    w2t, b2 = _fold_bn(p['w2'], p['b2'], p['g2'], p['be2'], p['m2'], p['v2'])
    Cout = w1t.shape[0]

    use_kron = (H * W) * (H2 * W2) * 4 <= _KRON_BYTES_LIMIT
    if use_kron:
        UH = _bilinear_matrix(H, H2)                             # (H2, H)
        UW = _bilinear_matrix(W, W2)                             # (W2, W)
        up_mat = jnp.asarray(np.kron(UH, UW).T)                  # (H*W, H2*W2)
    else:
        up_mat = jnp.asarray(_bilinear_matrix(W, W2).T)          # (W, W2)
    h_taps = _row_taps(H, H2)

    kernel = functools.partial(_up_fused_kernel, h_taps=h_taps, use_kron=use_kron)
    out = pl.pallas_call(
        kernel,
        out_shape=jax.ShapeDtypeStruct((N, Cout, H2 * W2), x1.dtype),
        grid_spec=pltpu.PrefetchScalarGridSpec(
            num_scalar_prefetch=0,
            grid=(N,),
            in_specs=[
                pl.BlockSpec((1, C1, H, W), lambda n: (n, 0, 0, 0)),
                pl.BlockSpec((1, C2, H2, W2), lambda n: (n, 0, 0, 0)),
                pl.BlockSpec(up_mat.shape, lambda n: (0, 0)),
                pl.BlockSpec((Cout, 9 * Cin), lambda n: (0, 0)),
                pl.BlockSpec((Cout, 1), lambda n: (0, 0)),
                pl.BlockSpec((Cout, 9 * Cout), lambda n: (0, 0)),
                pl.BlockSpec((Cout, 1), lambda n: (0, 0)),
            ],
            out_specs=pl.BlockSpec((1, Cout, H2 * W2), lambda n: (n, 0, 0)),
        ),
        compiler_params=pltpu.CompilerParams(
            dimension_semantics=("parallel",)),
    )(x1, x2, up_mat, w1t, b1, w2t, b2)
    return out.reshape(N, Cout, H2, W2)


# ----------------------------------------------------------------------------
# Pure-JAX reference (same math) for a sanity check.
# ----------------------------------------------------------------------------
def _ref_forward(x1, x2, p):
    N, C, H, W = x1.shape
    uh = jnp.asarray(_bilinear_matrix(H, 2 * H))
    uw = jnp.asarray(_bilinear_matrix(W, 2 * W))
    t = jnp.einsum('ph,nchw->ncpw', uh, x1)
    x1u = jnp.einsum('qw,ncpw->ncpq', uw, t)
    x = jnp.concatenate([x2, x1u], axis=1)

    def conv_bn_relu(x, w_hwio, b, g, be, m, v, eps=1e-5):
        w_oihw = jnp.transpose(w_hwio, (3, 2, 0, 1))
        y = jax.lax.conv_general_dilated(
            x, w_oihw, window_strides=(1, 1), padding='SAME',
            dimension_numbers=('NCHW', 'OIHW', 'NCHW'))
        y = y + b.reshape(1, -1, 1, 1)
        y = (y - m.reshape(1, -1, 1, 1)) / jnp.sqrt(v.reshape(1, -1, 1, 1) + eps)
        y = y * g.reshape(1, -1, 1, 1) + be.reshape(1, -1, 1, 1)
        return jnp.maximum(y, 0.0)

    y = conv_bn_relu(x, p['w1'], p['b1'], p['g1'], p['be1'], p['m1'], p['v1'])
    y = conv_bn_relu(y, p['w2'], p['b2'], p['g2'], p['be2'], p['m2'], p['v2'])
    return y


if __name__ == "__main__":
    key = jax.random.PRNGKey(0)
    N = 2
    in_ch_1, in_ch_2, out_ch = 4, 4, 8
    H1, W1 = 8, 8                      # x1 spatial; x2 is the skip at 2x resolution
    ks = jax.random.split(key, 16)

    x1 = jax.random.normal(ks[0], (N, in_ch_1, H1, W1), jnp.float32)
    x2 = jax.random.normal(ks[1], (N, in_ch_2, 2 * H1, 2 * W1), jnp.float32)

    cin = in_ch_1 + in_ch_2
    params = {
        # conv1 (cin -> out_ch), weights stored HWIO
        'w1': 0.1 * jax.random.normal(ks[2], (3, 3, cin, out_ch), jnp.float32),
        'b1': 0.05 * jax.random.normal(ks[3], (out_ch,), jnp.float32),
        'g1': 1.0 + 0.1 * jax.random.normal(ks[4], (out_ch,), jnp.float32),
        'be1': 0.05 * jax.random.normal(ks[5], (out_ch,), jnp.float32),
        'm1': 0.05 * jax.random.normal(ks[6], (out_ch,), jnp.float32),
        'v1': 1.0 + 0.5 * jax.random.uniform(ks[7], (out_ch,), jnp.float32),
        # conv2 (out_ch -> out_ch)
        'w2': 0.1 * jax.random.normal(ks[8], (3, 3, out_ch, out_ch), jnp.float32),
        'b2': 0.05 * jax.random.normal(ks[9], (out_ch,), jnp.float32),
        'g2': 1.0 + 0.1 * jax.random.normal(ks[10], (out_ch,), jnp.float32),
        'be2': 0.05 * jax.random.normal(ks[11], (out_ch,), jnp.float32),
        'm2': 0.05 * jax.random.normal(ks[12], (out_ch,), jnp.float32),
        'v2': 1.0 + 0.5 * jax.random.uniform(ks[13], (out_ch,), jnp.float32),
    }

    out = jax.jit(up_forward)(x1, x2, params)
    out = jax.block_until_ready(out)
    assert out.shape == (N, out_ch, 2 * H1, 2 * W1), out.shape

    ref = jax.block_until_ready(_ref_forward(x1, x2, params))
    assert jnp.allclose(out, ref, atol=1e-3, rtol=1e-3), float(jnp.max(jnp.abs(out - ref)))

    print("KERNEL_OK")
</pallas_src>

<mosaic_0001>
module attributes {stable_mosaic.version = 11 : i64} {
  func.func @_up_fused_kernel(%arg0: i32, %arg1: memref<1x4x8x8xf32, #tpu.memory_space<vmem>>, %arg2: memref<1x4x16x16xf32, #tpu.memory_space<vmem>>, %arg3: memref<64x256xf32, #tpu.memory_space<vmem>>, %arg4: memref<8x72xf32, #tpu.memory_space<vmem>>, %arg5: memref<8x1xf32, #tpu.memory_space<vmem>>, %arg6: memref<8x72xf32, #tpu.memory_space<vmem>>, %arg7: memref<8x1xf32, #tpu.memory_space<vmem>>, %arg8: memref<1x8x256xf32, #tpu.memory_space<vmem>>) attributes {dimension_semantics = [#tpu.dimension_semantics<parallel>], iteration_bounds = array<i64: 2>, scalar_prefetch = 0 : i64, scratch_operands = 0 : i64, tpu.core_type = #tpu.core_type<tc>, window_params = [{transform_indices = @transform_0, window_bounds = array<i64: 1, 4, 8, 8>}, {transform_indices = @transform_1, window_bounds = array<i64: 1, 4, 16, 16>}, {pipeline_mode = #tpu.pipeline_mode<synchronous>, transform_indices = @transform_2, window_bounds = array<i64: 64, 256>}, {pipeline_mode = #tpu.pipeline_mode<synchronous>, transform_indices = @transform_3, window_bounds = array<i64: 8, 72>}, {pipeline_mode = #tpu.pipeline_mode<synchronous>, transform_indices = @transform_4, window_bounds = array<i64: 8, 1>}, {pipeline_mode = #tpu.pipeline_mode<synchronous>, transform_indices = @transform_5, window_bounds = array<i64: 8, 72>}, {pipeline_mode = #tpu.pipeline_mode<synchronous>, transform_indices = @transform_6, window_bounds = array<i64: 8, 1>}, {transform_indices = @transform_7, window_bounds = array<i64: 1, 8, 256>}]} {
    %c0 = arith.constant 0 : index
    %c0_0 = arith.constant 0 : index
    %c0_1 = arith.constant 0 : index
    %c0_2 = arith.constant 0 : index
    %0 = vector.load %arg1[%c0, %c0_0, %c0_1, %c0_2] : memref<1x4x8x8xf32, #tpu.memory_space<vmem>>, vector<1x4x8x8xf32>
    %1 = vector.shape_cast %0 : vector<1x4x8x8xf32> to vector<4x8x8xf32>
    %2 = vector.shape_cast %1 : vector<4x8x8xf32> to vector<4x64xf32>
    %c0_3 = arith.constant 0 : index
    %c0_4 = arith.constant 0 : index
    %3 = vector.load %arg3[%c0_3, %c0_4] : memref<64x256xf32, #tpu.memory_space<vmem>>, vector<64x256xf32>
    %cst = arith.constant dense<0.000000e+00> : vector<4x256xf32>
    %4 = tpu.matmul %2, %3, %cst {dimension_numbers = #tpu.dot_dimension_numbers<[1], [0], [0], [1], [0, 0, 1, 1], [], []>} : vector<4x64xf32>, vector<64x256xf32>, vector<4x256xf32> -> vector<4x256xf32>
    %5 = vector.shape_cast %4 : vector<4x256xf32> to vector<4x16x16xf32>
    %c0_5 = arith.constant 0 : index
    %c0_6 = arith.constant 0 : index
    %c0_7 = arith.constant 0 : index
    %c0_8 = arith.constant 0 : index
    %6 = vector.load %arg2[%c0_5, %c0_6, %c0_7, %c0_8] : memref<1x4x16x16xf32, #tpu.memory_space<vmem>>, vector<1x4x16x16xf32>
    %7 = vector.shape_cast %6 : vector<1x4x16x16xf32> to vector<4x16x16xf32>
    %8 = tpu.concatenate %7, %5 in 0 : vector<4x16x16xf32>, vector<4x16x16xf32> -> vector<8x16x16xf32>
    %c0_9 = arith.constant 0 : index
    %c0_10 = arith.constant 0 : index
    %9 = vector.load %arg4[%c0_9, %c0_10] : memref<8x72xf32, #tpu.memory_space<vmem>>, vector<8x72xf32>
    %c0_11 = arith.constant 0 : index
    %c0_12 = arith.constant 0 : index
    %10 = vector.load %arg5[%c0_11, %c0_12] : memref<8x1xf32, #tpu.memory_space<vmem>>, vector<8x1xf32>
    %cst_13 = arith.constant 0.000000e+00 : f32
    %11 = vector.broadcast %cst_13 : f32 to vector<8x1x16xf32>
    %12 = tpu.concatenate %11, %8, %11 in 1 : vector<8x1x16xf32>, vector<8x16x16xf32>, vector<8x1x16xf32> -> vector<8x18x16xf32>
    %cst_14 = arith.constant 0.000000e+00 : f32
    %13 = vector.broadcast %cst_14 : f32 to vector<8x18x1xf32>
    %14 = tpu.concatenate %13, %12, %13 in 2 : vector<8x18x1xf32>, vector<8x18x16xf32>, vector<8x18x1xf32> -> vector<8x18x18xf32>
    %15 = vector.extract_strided_slice %14 {offsets = [0, 0, 0], sizes = [8, 16, 16], strides = [1, 1, 1]} : vector<8x18x18xf32> to vector<8x16x16xf32>
    %16 = vector.extract_strided_slice %14 {offsets = [0, 0, 1], sizes = [8, 16, 16], strides = [1, 1, 1]} : vector<8x18x18xf32> to vector<8x16x16xf32>
    %17 = vector.extract_strided_slice %14 {offsets = [0, 0, 2], sizes = [8, 16, 16], strides = [1, 1, 1]} : vector<8x18x18xf32> to vector<8x16x16xf32>
    %18 = vector.extract_strided_slice %14 {offsets = [0, 1, 0], sizes = [8, 16, 16], strides = [1, 1, 1]} : vector<8x18x18xf32> to vector<8x16x16xf32>
    %19 = vector.extract_strided_slice %14 {offsets = [0, 1, 1], sizes = [8, 16, 16], strides = [1, 1, 1]} : vector<8x18x18xf32> to vector<8x16x16xf32>
    %20 = vector.extract_strided_slice %14 {offsets = [0, 1, 2], sizes = [8, 16, 16], strides = [1, 1, 1]} : vector<8x18x18xf32> to vector<8x16x16xf32>
    %21 = vector.extract_strided_slice %14 {offsets = [0, 2, 0], sizes = [8, 16, 16], strides = [1, 1, 1]} : vector<8x18x18xf32> to vector<8x16x16xf32>
    %22 = vector.extract_strided_slice %14 {offsets = [0, 2, 1], sizes = [8, 16, 16], strides = [1, 1, 1]} : vector<8x18x18xf32> to vector<8x16x16xf32>
    %23 = vector.extract_strided_slice %14 {offsets = [0, 2, 2], sizes = [8, 16, 16], strides = [1, 1, 1]} : vector<8x18x18xf32> to vector<8x16x16xf32>
    %24 = tpu.concatenate %15, %16, %17, %18, %19, %20, %21, %22, %23 in 0 : vector<8x16x16xf32>, vector<8x16x16xf32>, vector<8x16x16xf32>, vector<8x16x16xf32>, vector<8x16x16xf32>, vector<8x16x16xf32>, vector<8x16x16xf32>, vector<8x16x16xf32>, vector<8x16x16xf32> -> vector<72x16x16xf32>
    %25 = vector.shape_cast %24 : vector<72x16x16xf32> to vector<72x256xf32>
    %cst_15 = arith.constant dense<0.000000e+00> : vector<8x256xf32>
    %26 = tpu.matmul %9, %25, %cst_15 {dimension_numbers = #tpu.dot_dimension_numbers<[1], [0], [0], [1], [0, 0, 1, 1], [], []>} : vector<8x72xf32>, vector<72x256xf32>, vector<8x256xf32> -> vector<8x256xf32>
    %27 = vector.broadcast %10 : vector<8x1xf32> to vector<8x256xf32>
    %28 = arith.addf %26, %27 : vector<8x256xf32>
    %cst_16 = arith.constant 0.000000e+00 : f32
    %29 = vector.broadcast %cst_16 : f32 to vector<8x256xf32>
    %30 = arith.maximumf %28, %29 : vector<8x256xf32>
    %31 = vector.shape_cast %30 : vector<8x256xf32> to vector<8x16x16xf32>
    %c0_17 = arith.constant 0 : index
    %c0_18 = arith.constant 0 : index
    %32 = vector.load %arg6[%c0_17, %c0_18] : memref<8x72xf32, #tpu.memory_space<vmem>>, vector<8x72xf32>
    %c0_19 = arith.constant 0 : index
    %c0_20 = arith.constant 0 : index
    %33 = vector.load %arg7[%c0_19, %c0_20] : memref<8x1xf32, #tpu.memory_space<vmem>>, vector<8x1xf32>
    %cst_21 = arith.constant 0.000000e+00 : f32
    %34 = vector.broadcast %cst_21 : f32 to vector<8x1x16xf32>
    %35 = tpu.concatenate %34, %31, %34 in 1 : vector<8x1x16xf32>, vector<8x16x16xf32>, vector<8x1x16xf32> -> vector<8x18x16xf32>
    %cst_22 = arith.constant 0.000000e+00 : f32
    %36 = vector.broadcast %cst_22 : f32 to vector<8x18x1xf32>
    %37 = tpu.concatenate %36, %35, %36 in 2 : vector<8x18x1xf32>, vector<8x18x16xf32>, vector<8x18x1xf32> -> vector<8x18x18xf32>
    %38 = vector.extract_strided_slice %37 {offsets = [0, 0, 0], sizes = [8, 16, 16], strides = [1, 1, 1]} : vector<8x18x18xf32> to vector<8x16x16xf32>
    %39 = vector.extract_strided_slice %37 {offsets = [0, 0, 1], sizes = [8, 16, 16], strides = [1, 1, 1]} : vector<8x18x18xf32> to vector<8x16x16xf32>
    %40 = vector.extract_strided_slice %37 {offsets = [0, 0, 2], sizes = [8, 16, 16], strides = [1, 1, 1]} : vector<8x18x18xf32> to vector<8x16x16xf32>
    %41 = vector.extract_strided_slice %37 {offsets = [0, 1, 0], sizes = [8, 16, 16], strides = [1, 1, 1]} : vector<8x18x18xf32> to vector<8x16x16xf32>
    %42 = vector.extract_strided_slice %37 {offsets = [0, 1, 1], sizes = [8, 16, 16], strides = [1, 1, 1]} : vector<8x18x18xf32> to vector<8x16x16xf32>
    %43 = vector.extract_strided_slice %37 {offsets = [0, 1, 2], sizes = [8, 16, 16], strides = [1, 1, 1]} : vector<8x18x18xf32> to vector<8x16x16xf32>
    %44 = vector.extract_strided_slice %37 {offsets = [0, 2, 0], sizes = [8, 16, 16], strides = [1, 1, 1]} : vector<8x18x18xf32> to vector<8x16x16xf32>
    %45 = vector.extract_strided_slice %37 {offsets = [0, 2, 1], sizes = [8, 16, 16], strides = [1, 1, 1]} : vector<8x18x18xf32> to vector<8x16x16xf32>
    %46 = vector.extract_strided_slice %37 {offsets = [0, 2, 2], sizes = [8, 16, 16], strides = [1, 1, 1]} : vector<8x18x18xf32> to vector<8x16x16xf32>
    %47 = tpu.concatenate %38, %39, %40, %41, %42, %43, %44, %45, %46 in 0 : vector<8x16x16xf32>, vector<8x16x16xf32>, vector<8x16x16xf32>, vector<8x16x16xf32>, vector<8x16x16xf32>, vector<8x16x16xf32>, vector<8x16x16xf32>, vector<8x16x16xf32>, vector<8x16x16xf32> -> vector<72x16x16xf32>
    %48 = vector.shape_cast %47 : vector<72x16x16xf32> to vector<72x256xf32>
    %cst_23 = arith.constant dense<0.000000e+00> : vector<8x256xf32>
    %49 = tpu.matmul %32, %48, %cst_23 {dimension_numbers = #tpu.dot_dimension_numbers<[1], [0], [0], [1], [0, 0, 1, 1], [], []>} : vector<8x72xf32>, vector<72x256xf32>, vector<8x256xf32> -> vector<8x256xf32>
    %50 = vector.broadcast %33 : vector<8x1xf32> to vector<8x256xf32>
    %51 = arith.addf %49, %50 : vector<8x256xf32>
    %cst_24 = arith.constant 0.000000e+00 : f32
    %52 = vector.broadcast %cst_24 : f32 to vector<8x256xf32>
    %53 = arith.maximumf %51, %52 : vector<8x256xf32>
    %c0_25 = arith.constant 0 : index
    %c0_26 = arith.constant 0 : index
    %c0_27 = arith.constant 0 : index
    %54 = vector.load %arg8[%c0_25, %c0_26, %c0_27] : memref<1x8x256xf32, #tpu.memory_space<vmem>>, vector<1x8x256xf32>
    %55 = vector.shape_cast %54 : vector<1x8x256xf32> to vector<8x256xf32>
    %56 = vector.shape_cast %53 : vector<8x256xf32> to vector<1x8x256xf32>
    tpu.vector_store %arg8[%c0_25, %c0_26, %c0_27], %56 {strides = array<i32>} : memref<1x8x256xf32, #tpu.memory_space<vmem>>, vector<1x8x256xf32>,
    return
  }
  func.func @transform_0(%arg0: i32) -> (i32, i32, i32, i32) {
    %c0_i32 = arith.constant 0 : i32
    %c0_i32_0 = arith.constant 0 : i32
    %c0_i32_1 = arith.constant 0 : i32
    %c0_i32_2 = arith.constant 0 : i32
    return %arg0, %c0_i32, %c0_i32_0, %c0_i32_1 : i32, i32, i32, i32
  }
  func.func @transform_1(%arg0: i32) -> (i32, i32, i32, i32) {
    %c0_i32 = arith.constant 0 : i32
    %c0_i32_0 = arith.constant 0 : i32
    %c0_i32_1 = arith.constant 0 : i32
    %c0_i32_2 = arith.constant 0 : i32
    return %arg0, %c0_i32, %c0_i32_0, %c0_i32_1 : i32, i32, i32, i32
  }
  func.func @transform_2(%arg0: i32) -> (i32, i32) {
    %c0_i32 = arith.constant 0 : i32
    %c0_i32_0 = arith.constant 0 : i32
    %c0_i32_1 = arith.constant 0 : i32
    return %c0_i32, %c0_i32_0 : i32, i32
  }
  func.func @transform_3(%arg0: i32) -> (i32, i32) {
    %c0_i32 = arith.constant 0 : i32
    %c0_i32_0 = arith.constant 0 : i32
    %c0_i32_1 = arith.constant 0 : i32
    return %c0_i32, %c0_i32_0 : i32, i32
  }
  func.func @transform_4(%arg0: i32) -> (i32, i32) {
    %c0_i32 = arith.constant 0 : i32
    %c0_i32_0 = arith.constant 0 : i32
    %c0_i32_1 = arith.constant 0 : i32
    return %c0_i32, %c0_i32_0 : i32, i32
  }
  func.func @transform_5(%arg0: i32) -> (i32, i32) {
    %c0_i32 = arith.constant 0 : i32
    %c0_i32_0 = arith.constant 0 : i32
    %c0_i32_1 = arith.constant 0 : i32
    return %c0_i32, %c0_i32_0 : i32, i32
  }
  func.func @transform_6(%arg0: i32) -> (i32, i32) {
    %c0_i32 = arith.constant 0 : i32
    %c0_i32_0 = arith.constant 0 : i32
    %c0_i32_1 = arith.constant 0 : i32
    return %c0_i32, %c0_i32_0 : i32, i32
  }
  func.func @transform_7(%arg0: i32) -> (i32, i32, i32) {
    %c0_i32 = arith.constant 0 : i32
    %c0_i32_0 = arith.constant 0 : i32
    %c0_i32_1 = arith.constant 0 : i32
    return %arg0, %c0_i32, %c0_i32_0 : i32, i32, i32
  }
}

</mosaic_0001>

<llo_original>
// kernel: up_forward.1
$region0: #{up_forward.1}
  #allocation0 [shape = 'u32[]', space=smem, size = 0x4, offset = 0x4, fixed_abs, tag = 'smem constant byte address 0x4 - core index']
  #allocation1 [shape = 'u32[144,128]{1,0:T(1,128)}', space=vmem, size = 0x12000, scoped, tag = 'internal scratch']
  %s0 = inlined_call_operand.hbm [shape: f32[2,4,8,8], index: 0, kind: input, shape index: {}]
  %s1 = inlined_call_operand.vmem [shape: f32[2,4,16,16], index: 1, kind: input, shape index: {}]
  %s2 = inlined_call_operand.vmem [shape: f32[64,256], index: 2, kind: input, shape index: {}]
  %s3 = inlined_call_operand.vmem [shape: f32[8,72], index: 3, kind: input, shape index: {}]
  %s4 = inlined_call_operand.vmem [shape: f32[8,1], index: 4, kind: input, shape index: {}]
  %s5 = inlined_call_operand.vmem [shape: f32[8,72], index: 5, kind: input, shape index: {}]
  %s6 = inlined_call_operand.vmem [shape: f32[8,1], index: 6, kind: input, shape index: {}]
  %s7 = inlined_call_operand.vmem [shape: f32[2,8,256], index: 7, kind: output, shape index: {}]
  %s8 = sld [smem:[#allocation0]]
  $region65: #{up_forward.1} parent=0
    _
  %s10 = ssub.s32 1, %s8
  %s11 = scalar_select 0, %s10, %s8
  $region1: #{up_forward.1} parent=0
    #allocation2 [shape = 'u8[32768]{0}', space=vmem, size = 0x8000, scoped, tag = 'input window, operand 0']
    #allocation3 [shape = 's32[2]{0}', space=sflag, size = 0x8, scoped, tag = 'scoped memory for up_forward.1']
    %12 = vsyncpa [#allocation3], 0
    %s13 = scalar_lea.sflag [#allocation3], 1
    %14 = vsyncpa %s13, 0
    loop: start=0, step=1, limit=4
    $region2: #{up_forward.1} parent=1 // loop_pre_header
      _
    $region3: #{up_forward.1} parent=1 // loop_header
      %s16 = sphi 0, %s20
      %p17 = scmp.ge.s32.totalorder %s16, 4
      %s26 = sphi 0, %s28
      %s29 = sphi 0, %s26
      %s30 = sphi 0, %s29
      %s46 = sphi 0, %s30
      %s52 = sphi 0, %s54
      %s55 = sphi 0, %s52
      %s56 = sphi 0, %s55
      %s72 = sphi 0, %s56
      %s76 = sphi 0, %s76
      %s78 = sphi 0, %s76
      %s79 = sphi 0, %s78
      %s93 = sphi 0, %s79
      %s97 = sphi 0, %s97
      %s99 = sphi 0, %s97
      %s100 = sphi 0, %s99
      %s114 = sphi 0, %s100
      %s118 = sphi 0, %s118
      %s120 = sphi 0, %s118
      %s121 = sphi 0, %s120
      %s135 = sphi 0, %s121
      %s139 = sphi 0, %s139
      %s141 = sphi 0, %s139
      %s142 = sphi 0, %s141
      %s156 = sphi 0, %s142
      %s160 = sphi 0, %s160
      %s162 = sphi 0, %s160
      %s163 = sphi 0, %s162
      %s177 = sphi 0, %s163
      %s183 = sphi 0, %s185
      %s186 = sphi 0, %s183
      %s187 = sphi 0, %s186
      %s203 = sphi 0, %s187
    $region4: #{up_forward.1} parent=1 // loop_header_branch
      %19 = sbr.rel (%p17) target = $region8
    $region5: #{up_forward.1} parent=1 // loop_body
      %s21 = ssub.s32 %s16, 1
      %s22 = ssub.s32 %s16, 2
      %s23 = sadd.s32 %s16, 1
      %s24 = ssub.s32 %s16, %s23
      %p25 = scmp.eq.s32.totalorder %s24, 0
      %s27 = sadd.s32 %s26, 1
      %s28 = scalar_select %p25, %s26, %s27
      %p31 = pneg %p25
      %p32 = scmp.eq.s32.totalorder %s16, 1
      %p33 = por %p31, %p32
      %p34 = scmp.ne.s32.totalorder %s26, %s29
      %p35 = scmp.eq.s32.totalorder %s16, 0
      %p36 = por %p34, %p35
      %p37 = scmp.ne.s32.totalorder %s26, %s29
      %p38 = scmp.eq.s32.totalorder %s21, 1
      %p39 = por %p37, %p38
      %p40 = scmp.ne.s32.totalorder %s29, %s30
      %p41 = scmp.eq.s32.totalorder %s21, 0
      %p42 = por %p40, %p41
      %p43 = scmp.ne.s32.totalorder %s29, %s30
      %p44 = scmp.eq.s32.totalorder %s22, 1
      %p45 = por %p43, %p44
      %p47 = scmp.ne.s32.totalorder %s30, %s46
      %p48 = scmp.eq.s32.totalorder %s22, 0
      %p49 = por %p47, %p48
      %s50 = ssub.s32 %s16, %s23
      %p51 = scmp.eq.s32.totalorder %s50, 0
      %s53 = sadd.s32 %s52, 1
      %s54 = scalar_select %p51, %s52, %s53
      %p57 = pneg %p51
      %p58 = scmp.eq.s32.totalorder %s16, 1
      %p59 = por %p57, %p58
      %p60 = scmp.ne.s32.totalorder %s52, %s55
      %p61 = scmp.eq.s32.totalorder %s16, 0
      %p62 = por %p60, %p61
      %p63 = scmp.ne.s32.totalorder %s52, %s55
      %p64 = scmp.eq.s32.totalorder %s21, 1
      %p65 = por %p63, %p64
      %p66 = scmp.ne.s32.totalorder %s55, %s56
      %p67 = scmp.eq.s32.totalorder %s21, 0
      %p68 = por %p66, %p67
      %p69 = scmp.ne.s32.totalorder %s55, %s56
      %p70 = scmp.eq.s32.totalorder %s22, 1
      %p71 = por %p69, %p70
      %p73 = scmp.ne.s32.totalorder %s56, %s72
      %p74 = scmp.eq.s32.totalorder %s22, 0
      %p75 = por %p73, %p74
      %s77 = sadd.s32 %s76, 1
      %p80 = scmp.eq.s32.totalorder %s16, 1
      %p81 = scmp.ne.s32.totalorder %s76, %s78
      %p82 = scmp.eq.s32.totalorder %s16, 0
      %p83 = por %p81, %p82
      %p84 = scmp.ne.s32.totalorder %s76, %s78
      %p85 = scmp.eq.s32.totalorder %s21, 1
      %p86 = por %p84, %p85
      %p87 = scmp.ne.s32.totalorder %s78, %s79
      %p88 = scmp.eq.s32.totalorder %s21, 0
      %p89 = por %p87, %p88
      %p90 = scmp.ne.s32.totalorder %s78, %s79
      %p91 = scmp.eq.s32.totalorder %s22, 1
      %p92 = por %p90, %p91
      %p94 = scmp.ne.s32.totalorder %s79, %s93
      %p95 = scmp.eq.s32.totalorder %s22, 0
      %p96 = por %p94, %p95
      %s98 = sadd.s32 %s97, 1
      %p101 = scmp.eq.s32.totalorder %s16, 1
      %p102 = scmp.ne.s32.totalorder %s97, %s99
      %p103 = scmp.eq.s32.totalorder %s16, 0
      %p104 = por %p102, %p103
      %p105 = scmp.ne.s32.totalorder %s97, %s99
      %p106 = scmp.eq.s32.totalorder %s21, 1
      %p107 = por %p105, %p106
      %p108 = scmp.ne.s32.totalorder %s99, %s100
      %p109 = scmp.eq.s32.totalorder %s21, 0
      %p110 = por %p108, %p109
      %p111 = scmp.ne.s32.totalorder %s99, %s100
      %p112 = scmp.eq.s32.totalorder %s22, 1
      %p113 = por %p111, %p112
      %p115 = scmp.ne.s32.totalorder %s100, %s114
      %p116 = scmp.eq.s32.totalorder %s22, 0
      %p117 = por %p115, %p116
      %s119 = sadd.s32 %s118, 1
      %p122 = scmp.eq.s32.totalorder %s16, 1
      %p123 = scmp.ne.s32.totalorder %s118, %s120
      %p124 = scmp.eq.s32.totalorder %s16, 0
      %p125 = por %p123, %p124
      %p126 = scmp.ne.s32.totalorder %s118, %s120
      %p127 = scmp.eq.s32.totalorder %s21, 1
      %p128 = por %p126, %p127
      %p129 = scmp.ne.s32.totalorder %s120, %s121
      %p130 = scmp.eq.s32.totalorder %s21, 0
      %p131 = por %p129, %p130
      %p132 = scmp.ne.s32.totalorder %s120, %s121
      %p133 = scmp.eq.s32.totalorder %s22, 1
      %p134 = por %p132, %p133
      %p136 = scmp.ne.s32.totalorder %s121, %s135
      %p137 = scmp.eq.s32.totalorder %s22, 0
      %p138 = por %p136, %p137
      %s140 = sadd.s32 %s139, 1
      %p143 = scmp.eq.s32.totalorder %s16, 1
      %p144 = scmp.ne.s32.totalorder %s139, %s141
      %p145 = scmp.eq.s32.totalorder %s16, 0
      %p146 = por %p144, %p145
      %p147 = scmp.ne.s32.totalorder %s139, %s141
      %p148 = scmp.eq.s32.totalorder %s21, 1
      %p149 = por %p147, %p148
      %p150 = scmp.ne.s32.totalorder %s141, %s142
      %p151 = scmp.eq.s32.totalorder %s21, 0
      %p152 = por %p150, %p151
      %p153 = scmp.ne.s32.totalorder %s141, %s142
      %p154 = scmp.eq.s32.totalorder %s22, 1
      %p155 = por %p153, %p154
      %p157 = scmp.ne.s32.totalorder %s142, %s156
      %p158 = scmp.eq.s32.totalorder %s22, 0
      %p159 = por %p157, %p158
      %s161 = sadd.s32 %s160, 1
      %p164 = scmp.eq.s32.totalorder %s16, 1
      %p165 = scmp.ne.s32.totalorder %s160, %s162
      %p166 = scmp.eq.s32.totalorder %s16, 0
      %p167 = por %p165, %p166
      %p168 = scmp.ne.s32.totalorder %s160, %s162
      %p169 = scmp.eq.s32.totalorder %s21, 1
      %p170 = por %p168, %p169
      %p171 = scmp.ne.s32.totalorder %s162, %s163
      %p172 = scmp.eq.s32.totalorder %s21, 0
      %p173 = por %p171, %p172
      %p174 = scmp.ne.s32.totalorder %s162, %s163
      %p175 = scmp.eq.s32.totalorder %s22, 1
      %p176 = por %p174, %p175
      %p178 = scmp.ne.s32.totalorder %s163, %s177
      %p179 = scmp.eq.s32.totalorder %s22, 0
      %p180 = por %p178, %p179
      %s181 = ssub.s32 %s16, %s23
      %p182 = scmp.eq.s32.totalorder %s181, 0
      %s184 = sadd.s32 %s183, 1
      %s185 = scalar_select %p182, %s183, %s184
      %p188 = pneg %p182
      %p189 = scmp.eq.s32.totalorder %s16, 1
      %p190 = por %p188, %p189
      %p191 = scmp.ne.s32.totalorder %s183, %s186
      %p192 = scmp.eq.s32.totalorder %s16, 0
      %p193 = por %p191, %p192
      %p194 = scmp.ne.s32.totalorder %s183, %s186
      %p195 = scmp.eq.s32.totalorder %s21, 1
      %p196 = por %p194, %p195
      %p197 = scmp.ne.s32.totalorder %s186, %s187
      %p198 = scmp.eq.s32.totalorder %s21, 0
      %p199 = por %p197, %p198
      %p200 = scmp.ne.s32.totalorder %s186, %s187
      %p201 = scmp.eq.s32.totalorder %s22, 1
      %p202 = por %p200, %p201
      %p204 = scmp.ne.s32.totalorder %s187, %s203
      %p205 = scmp.eq.s32.totalorder %s22, 0
      %p206 = por %p204, %p205
      %p207 = scmp.le.s32.totalorder 1, %s16
      %p208 = scmp.lt.s32.totalorder %s16, 3
      %p209 = pnand %p207, %p208
      %p210 = pneg %p209
      // Predicated region
      $region9: #{up_forward.1} parent=5 // pred_check
        _
      $region10: #{up_forward.1} parent=5 // pred_check_branch
        %212 = sbr.rel (%p209) target = $region12
      $region11: #{up_forward.1} parent=5 // pred_region
        %s213 = ssub.s32 %s16, 1
        // Predicated region
        $region13: #{up_forward.1} parent=11 // pred_check
          %p214 = pneg %p89
        $region14: #{up_forward.1} parent=11 // pred_check_branch
          %216 = sbr.rel (%p214) target = $region16
        $region15: #{up_forward.1} parent=11 // pred_region
          _
        $region16: #{up_forward.1} parent=11 // pred_fallthru
          _
        // Predicated region
        $region17: #{up_forward.1} parent=11 // pred_check
          %p217 = pneg %p110
        $region18: #{up_forward.1} parent=11 // pred_check_branch
          %219 = sbr.rel (%p217) target = $region20
        $region19: #{up_forward.1} parent=11 // pred_region
          _
        $region20: #{up_forward.1} parent=11 // pred_fallthru
          _
        // Predicated region
        $region21: #{up_forward.1} parent=11 // pred_check
          %p220 = pneg %p131
        $region22: #{up_forward.1} parent=11 // pred_check_branch
          %222 = sbr.rel (%p220) target = $region24
        $region23: #{up_forward.1} parent=11 // pred_region
          _
        $region24: #{up_forward.1} parent=11 // pred_fallthru
          _
        // Predicated region
        $region25: #{up_forward.1} parent=11 // pred_check
          %p223 = pneg %p152
        $region26: #{up_forward.1} parent=11 // pred_check_branch
          %225 = sbr.rel (%p223) target = $region28
        $region27: #{up_forward.1} parent=11 // pred_region
          _
        $region28: #{up_forward.1} parent=11 // pred_fallthru
          _
        // Predicated region
        $region29: #{up_forward.1} parent=11 // pred_check
          %p226 = pneg %p173
        $region30: #{up_forward.1} parent=11 // pred_check_branch
          %228 = sbr.rel (%p226) target = $region32
        $region31: #{up_forward.1} parent=11 // pred_region
          _
        $region32: #{up_forward.1} parent=11 // pred_fallthru
          _
      $region12: #{up_forward.1} parent=5 // pred_fallthru
        _
      %p229 = scmp.lt.s32.totalorder %s16, 2
      // Predicated region
      $region33: #{up_forward.1} parent=5 // pred_check
        %p230 = pneg %p229
      $region34: #{up_forward.1} parent=5 // pred_check_branch
        %232 = sbr.rel (%p230) target = $region36
      $region35: #{up_forward.1} parent=5 // pred_region
        // Predicated region
        $region37: #{up_forward.1} parent=35 // pred_check
          %p233 = pneg %p36
        $region38: #{up_forward.1} parent=35 // pred_check_branch
          %235 = sbr.rel (%p233) target = $region40
        $region39: #{up_forward.1} parent=35 // pred_region
          %s236 = sand.u32 %s26, 1
          %s237 = scalar_lea.sflag [#allocation3], %s236
          %s238 = sand.u32 %s26, 1
          %s239 = smul.addr %s238, 32
          %s240 = scalar_lea.vmem [#allocation2], %s239
          %s242 = ssub.s32 512, 512
          %243 = vsyncadd %s237, %s242
          %s244 = smul.addr %s16, 4
          %s245 = smul.addr %s244, 128
          %s246 = scalar_lea.hbm %s0, %s245
          %s247 = sshll.u32 %s240, 4
          %s248 = int_to_ptr.vmem [resolvable:$true] %s247
          %253 = dma.hbm_to_vmem [thread:$0]  %s246, 512, %s248, %s237, 128, 128, 8
        $region40: #{up_forward.1} parent=35 // pred_fallthru
          _
        // Predicated region
        $region41: #{up_forward.1} parent=35 // pred_check
          %p254 = pneg %p62
        $region42: #{up_forward.1} parent=35 // pred_check_branch
          %256 = sbr.rel (%p254) target = $region44
        $region43: #{up_forward.1} parent=35 // pred_region
          %p257 = scmp.lt.s32.totalorder %s16, 1
          %s258 = scalar_select %p257, %s16, 1
          %s259 = smul.addr %s258, 8
          %s260 = smul.addr %s259, 8
          %s261 = scalar_lea.vmem %s1, %s260
        $region44: #{up_forward.1} parent=35 // pred_fallthru
          _
      $region36: #{up_forward.1} parent=5 // pred_fallthru
        _
      %p262 = scmp.le.s32.totalorder 1, %s16
      %p263 = scmp.lt.s32.totalorder %s16, 3
      %p264 = pnand %p262, %p263
      %p265 = pneg %p264
      // Predicated region
      $region45: #{up_forward.1} parent=5 // pred_check
        _
      $region46: #{up_forward.1} parent=5 // pred_check_branch
        %267 = sbr.rel (%p264) target = $region48
      $region47: #{up_forward.1} parent=5 // pred_region
        %s268 = ssub.s32 %s16, 1
        %s269 = sand.u32 %s29, 1
        %s270 = scalar_lea.sflag [#allocation3], %s269
        %s271 = sand.u32 %s29, 1
        %s272 = smul.addr %s271, 32
        %s273 = scalar_lea.vmem [#allocation2], %s272
        // Predicated region
        $region49: #{up_forward.1} parent=47 // pred_check
          %p274 = pneg %p42
        $region50: #{up_forward.1} parent=47 // pred_check_branch
          %276 = sbr.rel (%p274) target = $region52
        $region51: #{up_forward.1} parent=47 // pred_region
          %277 = dma.done %s270, 512
        $region52: #{up_forward.1} parent=47 // pred_fallthru
          _
        %s278 = sand.u32 %s29, 1
        %s279 = scalar_lea.sflag [#allocation3], %s278
        %s280 = sand.u32 %s29, 1
        %s281 = smul.addr %s280, 32
        %s282 = scalar_lea.vmem [#allocation2], %s281
        %p283 = pneg %p42
        %p284 = pneg %p39
        %p285 = scmp.lt.s32.totalorder %s21, 1
        %s286 = scalar_select %p285, %s21, 1
        %s287 = smul.addr %s286, 8
        %s288 = smul.addr %s287, 8
        %s289 = scalar_lea.vmem %s1, %s288
        %p290 = pneg %p68
        %p291 = pneg %p65
        %p292 = pneg %p89
        %p293 = pneg %p86
        %p294 = pneg %p110
        %p295 = pneg %p107
        %p296 = pneg %p131
        %p297 = pneg %p128
        %p298 = pneg %p152
        %p299 = pneg %p149
        %p300 = pneg %p173
        %p301 = pneg %p170
        %p302 = pneg %p199
        %p303 = pneg %p196
        %p304 = scmp.lt.s32.totalorder %s21, 1
        %s305 = scalar_select %p304, %s21, 1
        %s306 = smul.addr %s305, 2
        %s307 = smul.addr %s306, 8
        %s308 = scalar_lea.vmem %s7, %s307
        %p309 = scmp.lt.s32.totalorder %s21, 1
        %s310 = scalar_select %p309, %s21, 1
        %s311 = smul.addr %s310, 8
        %s312 = smul.addr %s311, 8
        %s313 = scalar_lea.vmem %s1, %s312
        %p314 = scmp.lt.s32.totalorder %s21, 1
        %s315 = scalar_select %p314, %s21, 1
        %s316 = smul.addr %s315, 2
        %s317 = smul.addr %s316, 8
        %s318 = scalar_lea.vmem %s7, %s317
        %v319 = vld [vmem:[%s273] sm:$0xff]
        %v320 = vld [vmem:[%s273 + $0x8] sm:$0xff]
        %v321 = vld [vmem:[%s273 + $0x10] sm:$0xff]
        %v322 = vld [vmem:[%s273 + $0x18] sm:$0xff]
        %v323 = vcombine.low %v319, %v321
        %v324 = vcombine.high %v319, %v321
        %v326 = vunpack.c.l.s4 1983009808
        %v327 = vunpack.c.0.s8 %v326
        %v328 = vlaneseq
        %v329 = vshrl.u32 %v328, 7
        %v330 = vsub.s32 %v327, %v329
        %v331 = vrot.slane %v323, %v330
        %v333 = vunpack.c.l.s4 1983009808
        %v334 = vunpack.c.0.s8 %v333
        %v335 = vlaneseq
        %v336 = vshrl.u32 %v335, 7
        %v337 = vsub.s32 %v334, %v336
        %v338 = vrot.slane %v324, %v337
        %v339 = vcombine.low %v320, %v322
        %v340 = vcombine.high %v320, %v322
        %v342 = vunpack.c.l.s4 1983009808
        %v343 = vunpack.c.0.s8 %v342
        %v344 = vlaneseq
        %v345 = vshrl.u32 %v344, 7
        %v346 = vsub.s32 %v343, %v345
        %v347 = vrot.slane %v339, %v346
        %v349 = vunpack.c.l.s4 1983009808
        %v350 = vunpack.c.0.s8 %v349
        %v351 = vlaneseq
        %v352 = vshrl.u32 %v351, 7
        %v353 = vsub.s32 %v350, %v352
        %v354 = vrot.slane %v340, %v353
        %v355 = vcombine.low %v331, %v347
        %v356 = vcombine.high %v331, %v347
        %v358 = vunpack.c.l.s4 1934713408
        %v359 = vunpack.c.0.s8 %v358
        %v360 = vlaneseq
        %v361 = vshrl.u32 %v360, 7
        %v362 = vsub.s32 %v359, %v361
        %v363 = vrot.slane %v355, %v362
        %v365 = vunpack.c.l.s4 1934713408
        %v366 = vunpack.c.0.s8 %v365
        %v367 = vlaneseq
        %v368 = vshrl.u32 %v367, 7
        %v369 = vsub.s32 %v366, %v368
        %v370 = vrot.slane %v356, %v369
        %v371 = vcombine.low %v338, %v354
        %v372 = vcombine.high %v338, %v354
        %v374 = vunpack.c.l.s4 1934713408
        %v375 = vunpack.c.0.s8 %v374
        %v376 = vlaneseq
        %v377 = vshrl.u32 %v376, 7
        %v378 = vsub.s32 %v375, %v377
        %v379 = vrot.slane %v371, %v378
        %v381 = vunpack.c.l.s4 1934713408
        %v382 = vunpack.c.0.s8 %v381
        %v383 = vlaneseq
        %v384 = vshrl.u32 %v383, 7
        %v385 = vsub.s32 %v382, %v384
        %v386 = vrot.slane %v372, %v385
        %v387 = vcombine.high %v363, 0.0
        %v388 = vcombine.high %v370, 0.0
        %v389 = vcombine.high %v379, 0.0
        %v390 = vcombine.high %v386, 0.0
        %392 = vrot.lane.b32.xlu0 %v387, 8
        %v393 = vpop.permute.xlu0 %392
        %396 = vrot.lane.b32.xlu0 %v370, 16
        %v397 = vpop.permute.xlu0 %396
        %400 = vrot.lane.b32.xlu0 %v388, 24
        %v401 = vpop.permute.xlu0 %400
        %404 = vrot.lane.b32.xlu0 %v379, 32
        %v405 = vpop.permute.xlu0 %404
        %408 = vrot.lane.b32.xlu0 %v389, 40
        %v409 = vpop.permute.xlu0 %408
        %412 = vrot.lane.b32.xlu0 %v386, 48
        %v413 = vpop.permute.xlu0 %412
        %416 = vrot.lane.b32.xlu0 %v390, 56
        %v417 = vpop.permute.xlu0 %416
        %vm419 = vcmask 64512
        %v420 = vsel %vm419, %v363, %v393
        %vm421 = vcmask 130048
        %v422 = vsel %vm421, %v420, %v397
        %vm423 = vcmask 195584
        %v424 = vsel %vm423, %v422, %v401
        %vm425 = vcmask 261120
        %v426 = vsel %vm425, %v424, %v405
        %vm427 = vcmask 326656
        %v428 = vsel %vm427, %v426, %v409
        %vm429 = vcmask 392192
        %v430 = vsel %vm429, %v428, %v413
        %vm431 = vcmask 457728
        %v432 = vsel %vm431, %v430, %v417
        %v433 = vld [vmem:[%s2] sm:$0xff]
        %v434 = vld [vmem:[%s2 + $0x8] sm:$0xff]
        %v435 = vld [vmem:[%s2 + $0x10] sm:$0xff]
        %v436 = vld [vmem:[%s2 + $0x18] sm:$0xff]
        %v437 = vld [vmem:[%s2 + $0x20] sm:$0xff]
        %v438 = vld [vmem:[%s2 + $0x28] sm:$0xff]
        %v439 = vld [vmem:[%s2 + $0x30] sm:$0xff]
        %v440 = vld [vmem:[%s2 + $0x38] sm:$0xff]
        %v441 = vld [vmem:[%s2 + $0x40] sm:$0xff]
        %v442 = vld [vmem:[%s2 + $0x48] sm:$0xff]
        %v443 = vld [vmem:[%s2 + $0x50] sm:$0xff]
        %v444 = vld [vmem:[%s2 + $0x58] sm:$0xff]
        %v445 = vld [vmem:[%s2 + $0x60] sm:$0xff]
        %v446 = vld [vmem:[%s2 + $0x68] sm:$0xff]
        %v447 = vld [vmem:[%s2 + $0x70] sm:$0xff]
        %v448 = vld [vmem:[%s2 + $0x78] sm:$0xff]
        %vm449 = vcmask 523264
        %v451 = vsel %vm449, %v432, 0
        %453 = vmatprep.subr.mxu0 0.0
        %454 = vmatpush1.msra.mxu0 0.0
        %455 = vmatprep.subr.mxu0 0.0
        %456 = vmatpush1.msra.mxu0 0.0
        %457 = vmatprep.subr.mxu0 0.0
        %458 = vmatpush1.msra.mxu0 0.0
        %459 = vmatprep.subr.mxu0 0.0
        %460 = vmatpush1.msra.mxu0 0.0
        %461 = vmatprep.subr.mxu0 0.0
        %462 = vmatpush1.msra.mxu0 0.0
        %463 = vmatprep.subr.mxu0 0.0
        %464 = vmatpush1.msra.mxu0 0.0
        %465 = vmatprep.subr.mxu0 0.0
        %466 = vmatpush1.msra.mxu0 0.0
        %467 = vmatprep.subr.mxu0 0.0
        %468 = vmatpush1.msra.mxu0 0.0
        %469 = vmatprep.subr.mxu0 %v448
        %470 = vmatpush1.msra.mxu0 %v447
        %471 = vmatprep.subr.mxu0 %v446
        %472 = vmatpush1.msra.mxu0 %v445
        %473 = vmatprep.subr.mxu0 %v444
        %474 = vmatpush1.msra.mxu0 %v443
        %475 = vmatprep.subr.mxu0 %v442
        %476 = vmatpush1.msra.mxu0 %v441
        %477 = vmatprep.subr.mxu0 %v440
        %478 = vmatpush1.msra.mxu0 %v439
        %479 = vmatprep.subr.mxu0 %v438
        %480 = vmatpush1.msra.mxu0 %v437
        %481 = vmatprep.subr.mxu0 %v436
        %482 = vmatpush1.msra.mxu0 %v435
        %483 = vmatprep.subr.mxu0 %v434
        %484 = vmatpush1.msra.mxu0 %v433
        %485 = vmatprep.subr.mxu0 0.0
        %486 = vmatpush2.msra.mxu0 0.0
        %487 = vmatprep.subr.mxu0 0.0
        %488 = vmatpush2.msra.mxu0 0.0
        %489 = vmatprep.subr.mxu0 0.0
        %490 = vmatpush2.msra.mxu0 0.0
        %491 = vmatprep.subr.mxu0 0.0
        %492 = vmatpush2.msra.mxu0 0.0
        %493 = vmatprep.subr.mxu0 0.0
        %494 = vmatpush2.msra.mxu0 0.0
        %495 = vmatprep.subr.mxu0 0.0
        %496 = vmatpush2.msra.mxu0 0.0
        %497 = vmatprep.subr.mxu0 0.0
        %498 = vmatpush2.msra.mxu0 0.0
        %499 = vmatprep.subr.mxu0 0.0
        %500 = vmatpush2.msra.mxu0 0.0
        %501 = vmatprep.subr.mxu0 0.0
        %502 = vmatpush2.msra.mxu0 0.0
        %503 = vmatprep.subr.mxu0 0.0
        %504 = vmatpush2.msra.mxu0 0.0
        %505 = vmatprep.subr.mxu0 0.0
        %506 = vmatpush2.msra.mxu0 0.0
        %507 = vmatprep.subr.mxu0 0.0
        %508 = vmatpush2.msra.mxu0 0.0
        %509 = vmatprep.subr.mxu0 0.0
        %510 = vmatpush2.msra.mxu0 0.0
        %511 = vmatprep.subr.mxu0 0.0
        %512 = vmatpush2.msra.mxu0 0.0
        %513 = vmatprep.subr.mxu0 0.0
        %514 = vmatpush2.msra.mxu0 0.0
        %515 = vmatprep.subr.mxu0 0.0
        %516 = vmatpush2.msra.mxu0 0.0
        %517 = vmatprep.mubr.f32.mxu0 0.0
        %518 = vmatmul.mubr.f32.gmra.mxu0 %v451
        %v519 = vpop.f32.mrf.mxu0
        %v520 = vadd.f32 0.0, %v519
        %v521 = vpop.f32.mrf.mxu0
        %v522 = vadd.f32 0.0, %v521
        %523 = vdwg.mxu0
        %525 = vrot.lane.b32.xlu0 %v520, 112
        %v526 = vpop.permute.xlu0 %525
        %528 = vrot.lane.b32.xlu0 %v520, 96
        %v529 = vpop.permute.xlu0 %528
        %531 = vrot.lane.b32.xlu0 %v520, 80
        %v532 = vpop.permute.xlu0 %531
        %534 = vrot.lane.b32.xlu0 %v520, 64
        %v535 = vpop.permute.xlu0 %534
        %537 = vrot.lane.b32.xlu0 %v520, 48
        %v538 = vpop.permute.xlu0 %537
        %540 = vrot.lane.b32.xlu0 %v520, 32
        %v541 = vpop.permute.xlu0 %540
        %543 = vrot.lane.b32.xlu0 %v520, 16
        %v544 = vpop.permute.xlu0 %543
        %547 = vrot.lane.b32.xlu0 %v522, 112
        %v548 = vpop.permute.xlu0 %547
        %550 = vrot.lane.b32.xlu0 %v522, 96
        %v551 = vpop.permute.xlu0 %550
        %553 = vrot.lane.b32.xlu0 %v522, 80
        %v554 = vpop.permute.xlu0 %553
        %556 = vrot.lane.b32.xlu0 %v522, 64
        %v557 = vpop.permute.xlu0 %556
        %559 = vrot.lane.b32.xlu0 %v522, 48
        %v560 = vpop.permute.xlu0 %559
        %562 = vrot.lane.b32.xlu0 %v522, 32
        %v563 = vpop.permute.xlu0 %562
        %565 = vrot.lane.b32.xlu0 %v522, 16
        %v566 = vpop.permute.xlu0 %565
        %v568 = vcombine.low %v520, %v529
        %v570 = vunpack.c.l.s4 1983009808
        %v571 = vunpack.c.0.s8 %v570
        %v572 = vlaneseq
        %v573 = vshrl.u32 %v572, 7
        %v574 = vsub.s32 %v571, %v573
        %v575 = vrot.slane %v568, %v574
        %v576 = vcombine.low %v526, %v532
        %v578 = vunpack.c.l.s4 1983009808
        %v579 = vunpack.c.0.s8 %v578
        %v580 = vlaneseq
        %v581 = vshrl.u32 %v580, 7
        %v582 = vsub.s32 %v579, %v581
        %v583 = vrot.slane %v576, %v582
        %v584 = vcombine.low %v535, %v541
        %v586 = vunpack.c.l.s4 1983009808
        %v587 = vunpack.c.0.s8 %v586
        %v588 = vlaneseq
        %v589 = vshrl.u32 %v588, 7
        %v590 = vsub.s32 %v587, %v589
        %v591 = vrot.slane %v584, %v590
        %v592 = vcombine.low %v538, %v544
        %v594 = vunpack.c.l.s4 1983009808
        %v595 = vunpack.c.0.s8 %v594
        %v596 = vlaneseq
        %v597 = vshrl.u32 %v596, 7
        %v598 = vsub.s32 %v595, %v597
        %v599 = vrot.slane %v592, %v598
        %v600 = vcombine.low %v575, %v583
        %v601 = vcombine.high %v575, %v583
        %v603 = vunpack.c.l.s4 1934713408
        %v604 = vunpack.c.0.s8 %v603
        %v605 = vlaneseq
        %v606 = vshrl.u32 %v605, 7
        %v607 = vsub.s32 %v604, %v606
        %v608 = vrot.slane %v600, %v607
        %v610 = vunpack.c.l.s4 1934713408
        %v611 = vunpack.c.0.s8 %v610
        %v612 = vlaneseq
        %v613 = vshrl.u32 %v612, 7
        %v614 = vsub.s32 %v611, %v613
        %v615 = vrot.slane %v601, %v614
        %v616 = vcombine.low %v591, %v599
        %v617 = vcombine.high %v591, %v599
        %v619 = vunpack.c.l.s4 1934713408
        %v620 = vunpack.c.0.s8 %v619
        %v621 = vlaneseq
        %v622 = vshrl.u32 %v621, 7
        %v623 = vsub.s32 %v620, %v622
        %v624 = vrot.slane %v616, %v623
        %v626 = vunpack.c.l.s4 1934713408
        %v627 = vunpack.c.0.s8 %v626
        %v628 = vlaneseq
        %v629 = vshrl.u32 %v628, 7
        %v630 = vsub.s32 %v627, %v629
        %v631 = vrot.slane %v617, %v630
        %v632 = vcombine.low %v608, %v624
        %v633 = vcombine.high %v608, %v624
        %v634 = vcombine.low %v615, %v631
        %v635 = vcombine.high %v615, %v631
        %v636 = vcombine.low %v522, %v551
        %v638 = vunpack.c.l.s4 1983009808
        %v639 = vunpack.c.0.s8 %v638
        %v640 = vlaneseq
        %v641 = vshrl.u32 %v640, 7
        %v642 = vsub.s32 %v639, %v641
        %v643 = vrot.slane %v636, %v642
        %v644 = vcombine.low %v548, %v554
        %v646 = vunpack.c.l.s4 1983009808
        %v647 = vunpack.c.0.s8 %v646
        %v648 = vlaneseq
        %v649 = vshrl.u32 %v648, 7
        %v650 = vsub.s32 %v647, %v649
        %v651 = vrot.slane %v644, %v650
        %v652 = vcombine.low %v557, %v563
        %v654 = vunpack.c.l.s4 1983009808
        %v655 = vunpack.c.0.s8 %v654
        %v656 = vlaneseq
        %v657 = vshrl.u32 %v656, 7
        %v658 = vsub.s32 %v655, %v657
        %v659 = vrot.slane %v652, %v658
        %v660 = vcombine.low %v560, %v566
        %v662 = vunpack.c.l.s4 1983009808
        %v663 = vunpack.c.0.s8 %v662
        %v664 = vlaneseq
        %v665 = vshrl.u32 %v664, 7
        %v666 = vsub.s32 %v663, %v665
        %v667 = vrot.slane %v660, %v666
        %v668 = vcombine.low %v643, %v651
        %v669 = vcombine.high %v643, %v651
        %v671 = vunpack.c.l.s4 1934713408
        %v672 = vunpack.c.0.s8 %v671
        %v673 = vlaneseq
        %v674 = vshrl.u32 %v673, 7
        %v675 = vsub.s32 %v672, %v674
        %v676 = vrot.slane %v668, %v675
        %v678 = vunpack.c.l.s4 1934713408
        %v679 = vunpack.c.0.s8 %v678
        %v680 = vlaneseq
        %v681 = vshrl.u32 %v680, 7
        %v682 = vsub.s32 %v679, %v681
        %v683 = vrot.slane %v669, %v682
        %v684 = vcombine.low %v659, %v667
        %v685 = vcombine.high %v659, %v667
        %v687 = vunpack.c.l.s4 1934713408
        %v688 = vunpack.c.0.s8 %v687
        %v689 = vlaneseq
        %v690 = vshrl.u32 %v689, 7
        %v691 = vsub.s32 %v688, %v690
        %v692 = vrot.slane %v684, %v691
        %v694 = vunpack.c.l.s4 1934713408
        %v695 = vunpack.c.0.s8 %v694
        %v696 = vlaneseq
        %v697 = vshrl.u32 %v696, 7
        %v698 = vsub.s32 %v695, %v697
        %v699 = vrot.slane %v685, %v698
        %v700 = vcombine.low %v676, %v692
        %v701 = vcombine.high %v676, %v692
        %v702 = vcombine.low %v683, %v699
        %v703 = vcombine.high %v683, %v699
        %v704 = vld [vmem:[%s313] sm:$0xff]
        %v705 = vld [vmem:[%s313 + $0x8] sm:$0xff]
        %v706 = vld [vmem:[%s313 + $0x10] sm:$0xff]
        %v707 = vld [vmem:[%s313 + $0x18] sm:$0xff]
        %v708 = vld [vmem:[%s313 + $0x20] sm:$0xff]
        %v709 = vld [vmem:[%s313 + $0x28] sm:$0xff]
        %v710 = vld [vmem:[%s313 + $0x30] sm:$0xff]
        %v711 = vld [vmem:[%s313 + $0x38] sm:$0xff]
        %v712 = vld [vmem:[%s3] sm:$0xff]
        %v713 = vld [vmem:[%s4] sm:$0xff]
        %vm730 = vcmask 1040384
        %v731 = vrot.slane %v704, 7
        %v732 = vrot.slane %v705, 7
        %v733 = vsel %vm730, %v731, %v732
        %v734 = vrot.slane %v706, 7
        %v735 = vrot.slane %v707, 7
        %v736 = vsel %vm730, %v734, %v735
        %v737 = vrot.slane %v708, 7
        %v738 = vrot.slane %v709, 7
        %v739 = vsel %vm730, %v737, %v738
        %v740 = vrot.slane %v710, 7
        %v741 = vrot.slane %v711, 7
        %v742 = vsel %vm730, %v740, %v741
        %v743 = vrot.slane %v632, 7
        %v744 = vrot.slane %v700, 7
        %v745 = vsel %vm730, %v743, %v744
        %v746 = vrot.slane %v633, 7
        %v747 = vrot.slane %v701, 7
        %v748 = vsel %vm730, %v746, %v747
        %v749 = vrot.slane %v634, 7
        %v750 = vrot.slane %v702, 7
        %v751 = vsel %vm730, %v749, %v750
        %v752 = vrot.slane %v635, 7
        %v753 = vrot.slane %v703, 7
        %v754 = vsel %vm730, %v752, %v753
        %v771 = vsel %vm730, 0.0, %v731
        %v772 = vsel %vm730, 0.0, %v734
        %v773 = vsel %vm730, 0.0, %v737
        %v774 = vsel %vm730, 0.0, %v740
        %v775 = vsel %vm730, 0.0, %v743
        %v776 = vsel %vm730, 0.0, %v746
        %v777 = vsel %vm730, 0.0, %v749
        %v778 = vsel %vm730, 0.0, %v752
        %v779 = vsel %vm730, %v732, 0.0
        %v780 = vsel %vm730, %v735, 0.0
        %v781 = vsel %vm730, %v738, 0.0
        %v782 = vsel %vm730, %v741, 0.0
        %v783 = vsel %vm730, %v744, 0.0
        %v784 = vsel %vm730, %v747, 0.0
        %v785 = vsel %vm730, %v750, 0.0
        %v786 = vsel %vm730, %v753, 0.0
        %803 = vrot.lane.b32.xlu0 %v771, 1
        %v804 = vpop.permute.xlu0 %803
        %805 = vrot.lane.b32.xlu0 %v733, 1
        %v806 = vpop.permute.xlu0 %805
        %807 = vrot.lane.b32.xlu0 %v779, 1
        %v808 = vpop.permute.xlu0 %807
        %809 = vrot.lane.b32.xlu0 %v772, 1
        %v810 = vpop.permute.xlu0 %809
        %811 = vrot.lane.b32.xlu0 %v736, 1
        %v812 = vpop.permute.xlu0 %811
        %813 = vrot.lane.b32.xlu0 %v780, 1
        %v814 = vpop.permute.xlu0 %813
        %815 = vrot.lane.b32.xlu0 %v773, 1
        %v816 = vpop.permute.xlu0 %815
        %817 = vrot.lane.b32.xlu0 %v739, 1
        %v818 = vpop.permute.xlu0 %817
        %819 = vrot.lane.b32.xlu0 %v781, 1
        %v820 = vpop.permute.xlu0 %819
        %821 = vrot.lane.b32.xlu0 %v774, 1
        %v822 = vpop.permute.xlu0 %821
        %823 = vrot.lane.b32.xlu0 %v742, 1
        %v824 = vpop.permute.xlu0 %823
        %825 = vrot.lane.b32.xlu0 %v782, 1
        %v826 = vpop.permute.xlu0 %825
        %827 = vrot.lane.b32.xlu0 %v775, 1
        %v828 = vpop.permute.xlu0 %827
        %829 = vrot.lane.b32.xlu0 %v745, 1
        %v830 = vpop.permute.xlu0 %829
        %831 = vrot.lane.b32.xlu0 %v783, 1
        %v832 = vpop.permute.xlu0 %831
        %833 = vrot.lane.b32.xlu0 %v776, 1
        %v834 = vpop.permute.xlu0 %833
        %835 = vrot.lane.b32.xlu0 %v748, 1
        %v836 = vpop.permute.xlu0 %835
        %837 = vrot.lane.b32.xlu0 %v784, 1
        %v838 = vpop.permute.xlu0 %837
        %839 = vrot.lane.b32.xlu0 %v777, 1
        %v840 = vpop.permute.xlu0 %839
        %841 = vrot.lane.b32.xlu0 %v751, 1
        %v842 = vpop.permute.xlu0 %841
        %843 = vrot.lane.b32.xlu0 %v785, 1
        %v844 = vpop.permute.xlu0 %843
        %845 = vrot.lane.b32.xlu0 %v778, 1
        %v846 = vpop.permute.xlu0 %845
        %847 = vrot.lane.b32.xlu0 %v754, 1
        %v848 = vpop.permute.xlu0 %847
        %849 = vrot.lane.b32.xlu0 %v786, 1
        %v850 = vpop.permute.xlu0 %849
        %vm875 = vcmask 7168
        %v876 = vsel %vm875, 0.0, %v804
        %v877 = vsel %vm875, 0.0, %v806
        %v878 = vsel %vm875, 0.0, %v808
        %v879 = vsel %vm875, 0.0, %v810
        %v880 = vsel %vm875, 0.0, %v812
        %v881 = vsel %vm875, 0.0, %v814
        %v882 = vsel %vm875, 0.0, %v816
        %v883 = vsel %vm875, 0.0, %v818
        %v884 = vsel %vm875, 0.0, %v820
        %v885 = vsel %vm875, 0.0, %v822
        %v886 = vsel %vm875, 0.0, %v824
        %v887 = vsel %vm875, 0.0, %v826
        %v888 = vsel %vm875, 0.0, %v828
        %v889 = vsel %vm875, 0.0, %v830
        %v890 = vsel %vm875, 0.0, %v832
        %v891 = vsel %vm875, 0.0, %v834
        %v892 = vsel %vm875, 0.0, %v836
        %v893 = vsel %vm875, 0.0, %v838
        %v894 = vsel %vm875, 0.0, %v840
        %v895 = vsel %vm875, 0.0, %v842
        %v896 = vsel %vm875, 0.0, %v844
        %v897 = vsel %vm875, 0.0, %v846
        %v898 = vsel %vm875, 0.0, %v848
        %v899 = vsel %vm875, 0.0, %v850
        %vm900 = vcmask 138240
        %v901 = vsel %vm900, %v876, 0.0
        %v902 = vsel %vm900, %v877, 0.0
        %v903 = vsel %vm900, %v878, 0.0
        %v904 = vsel %vm900, %v879, 0.0
        %v905 = vsel %vm900, %v880, 0.0
        %v906 = vsel %vm900, %v881, 0.0
        %v907 = vsel %vm900, %v882, 0.0
        %v908 = vsel %vm900, %v883, 0.0
        %v909 = vsel %vm900, %v884, 0.0
        %v910 = vsel %vm900, %v885, 0.0
        %v911 = vsel %vm900, %v886, 0.0
        %v912 = vsel %vm900, %v887, 0.0
        %v913 = vsel %vm900, %v888, 0.0
        %v914 = vsel %vm900, %v889, 0.0
        %v915 = vsel %vm900, %v890, 0.0
        %v916 = vsel %vm900, %v891, 0.0
        %v917 = vsel %vm900, %v892, 0.0
        %v918 = vsel %vm900, %v893, 0.0
        %v919 = vsel %vm900, %v894, 0.0
        %v920 = vsel %vm900, %v895, 0.0
        %v921 = vsel %vm900, %v896, 0.0
        %v922 = vsel %vm900, %v897, 0.0
        %v923 = vsel %vm900, %v898, 0.0
        %v924 = vsel %vm900, %v899, 0.0
        %941 = vrot.lane.b32.xlu0 %v901, 127
        %v942 = vpop.permute.xlu0 %941
        %943 = vrot.lane.b32.xlu0 %v902, 127
        %v944 = vpop.permute.xlu0 %943
        %945 = vrot.lane.b32.xlu0 %v904, 127
        %v946 = vpop.permute.xlu0 %945
        %947 = vrot.lane.b32.xlu0 %v905, 127
        %v948 = vpop.permute.xlu0 %947
        %949 = vrot.lane.b32.xlu0 %v907, 127
        %v950 = vpop.permute.xlu0 %949
        %951 = vrot.lane.b32.xlu0 %v908, 127
        %v952 = vpop.permute.xlu0 %951
        %953 = vrot.lane.b32.xlu0 %v910, 127
        %v954 = vpop.permute.xlu0 %953
        %955 = vrot.lane.b32.xlu0 %v911, 127
        %v956 = vpop.permute.xlu0 %955
        %957 = vrot.lane.b32.xlu0 %v913, 127
        %v958 = vpop.permute.xlu0 %957
        %959 = vrot.lane.b32.xlu0 %v914, 127
        %v960 = vpop.permute.xlu0 %959
        %961 = vrot.lane.b32.xlu0 %v916, 127
        %v962 = vpop.permute.xlu0 %961
        %963 = vrot.lane.b32.xlu0 %v917, 127
        %v964 = vpop.permute.xlu0 %963
        %965 = vrot.lane.b32.xlu0 %v919, 127
        %v966 = vpop.permute.xlu0 %965
        %967 = vrot.lane.b32.xlu0 %v920, 127
        %v968 = vpop.permute.xlu0 %967
        %969 = vrot.lane.b32.xlu0 %v922, 127
        %v970 = vpop.permute.xlu0 %969
        %971 = vrot.lane.b32.xlu0 %v923, 127
        %v972 = vpop.permute.xlu0 %971
        %989 = vrot.lane.b32.xlu0 %v901, 126
        %v990 = vpop.permute.xlu0 %989
        %991 = vrot.lane.b32.xlu0 %v902, 126
        %v992 = vpop.permute.xlu0 %991
        %993 = vrot.lane.b32.xlu0 %v904, 126
        %v994 = vpop.permute.xlu0 %993
        %995 = vrot.lane.b32.xlu0 %v905, 126
        %v996 = vpop.permute.xlu0 %995
        %997 = vrot.lane.b32.xlu0 %v907, 126
        %v998 = vpop.permute.xlu0 %997
        %999 = vrot.lane.b32.xlu0 %v908, 126
        %v1000 = vpop.permute.xlu0 %999
        %1001 = vrot.lane.b32.xlu0 %v910, 126
        %v1002 = vpop.permute.xlu0 %1001
        %1003 = vrot.lane.b32.xlu0 %v911, 126
        %v1004 = vpop.permute.xlu0 %1003
        %1005 = vrot.lane.b32.xlu0 %v913, 126
        %v1006 = vpop.permute.xlu0 %1005
        %1007 = vrot.lane.b32.xlu0 %v914, 126
        %v1008 = vpop.permute.xlu0 %1007
        %1009 = vrot.lane.b32.xlu0 %v916, 126
        %v1010 = vpop.permute.xlu0 %1009
        %1011 = vrot.lane.b32.xlu0 %v917, 126
        %v1012 = vpop.permute.xlu0 %1011
        %1013 = vrot.lane.b32.xlu0 %v919, 126
        %v1014 = vpop.permute.xlu0 %1013
        %1015 = vrot.lane.b32.xlu0 %v920, 126
        %v1016 = vpop.permute.xlu0 %1015
        %1017 = vrot.lane.b32.xlu0 %v922, 126
        %v1018 = vpop.permute.xlu0 %1017
        %1019 = vrot.lane.b32.xlu0 %v923, 126
        %v1020 = vpop.permute.xlu0 %1019
        %vm1045 = vcmask 1046528
        %v1046 = vrot.slane %v901, 1
        %v1047 = vrot.slane %v902, 1
        %v1048 = vsel %vm1045, %v1046, %v1047
        %v1049 = vrot.slane %v903, 1
        %v1050 = vsel %vm1045, %v1047, %v1049
        %v1051 = vrot.slane %v904, 1
        %v1052 = vrot.slane %v905, 1
        %v1053 = vsel %vm1045, %v1051, %v1052
        %v1054 = vrot.slane %v906, 1
        %v1055 = vsel %vm1045, %v1052, %v1054
        %v1056 = vrot.slane %v907, 1
        %v1057 = vrot.slane %v908, 1
        %v1058 = vsel %vm1045, %v1056, %v1057
        %v1059 = vrot.slane %v909, 1
        %v1060 = vsel %vm1045, %v1057, %v1059
        %v1061 = vrot.slane %v910, 1
        %v1062 = vrot.slane %v911, 1
        %v1063 = vsel %vm1045, %v1061, %v1062
        %v1064 = vrot.slane %v912, 1
        %v1065 = vsel %vm1045, %v1062, %v1064
        %v1066 = vrot.slane %v913, 1
        %v1067 = vrot.slane %v914, 1
        %v1068 = vsel %vm1045, %v1066, %v1067
        %v1069 = vrot.slane %v915, 1
        %v1070 = vsel %vm1045, %v1067, %v1069
        %v1071 = vrot.slane %v916, 1
        %v1072 = vrot.slane %v917, 1
        %v1073 = vsel %vm1045, %v1071, %v1072
        %v1074 = vrot.slane %v918, 1
        %v1075 = vsel %vm1045, %v1072, %v1074
        %v1076 = vrot.slane %v919, 1
        %v1077 = vrot.slane %v920, 1
        %v1078 = vsel %vm1045, %v1076, %v1077
        %v1079 = vrot.slane %v921, 1
        %v1080 = vsel %vm1045, %v1077, %v1079
        %v1081 = vrot.slane %v922, 1
        %v1082 = vrot.slane %v923, 1
        %v1083 = vsel %vm1045, %v1081, %v1082
        %v1084 = vrot.slane %v924, 1
        %v1085 = vsel %vm1045, %v1082, %v1084
        %1102 = vrot.lane.b32.xlu0 %v1048, 127
        %v1103 = vpop.permute.xlu0 %1102
        %1104 = vrot.lane.b32.xlu0 %v1050, 127
        %v1105 = vpop.permute.xlu0 %1104
        %1106 = vrot.lane.b32.xlu0 %v1053, 127
        %v1107 = vpop.permute.xlu0 %1106
        %1108 = vrot.lane.b32.xlu0 %v1055, 127
        %v1109 = vpop.permute.xlu0 %1108
        %1110 = vrot.lane.b32.xlu0 %v1058, 127
        %v1111 = vpop.permute.xlu0 %1110
        %1112 = vrot.lane.b32.xlu0 %v1060, 127
        %v1113 = vpop.permute.xlu0 %1112
        %1114 = vrot.lane.b32.xlu0 %v1063, 127
        %v1115 = vpop.permute.xlu0 %1114
        %1116 = vrot.lane.b32.xlu0 %v1065, 127
        %v1117 = vpop.permute.xlu0 %1116
        %1118 = vrot.lane.b32.xlu0 %v1068, 127
        %v1119 = vpop.permute.xlu0 %1118
        %1120 = vrot.lane.b32.xlu0 %v1070, 127
        %v1121 = vpop.permute.xlu0 %1120
        %1122 = vrot.lane.b32.xlu0 %v1073, 127
        %v1123 = vpop.permute.xlu0 %1122
        %1124 = vrot.lane.b32.xlu0 %v1075, 127
        %v1125 = vpop.permute.xlu0 %1124
        %1126 = vrot.lane.b32.xlu0 %v1078, 127
        %v1127 = vpop.permute.xlu0 %1126
        %1128 = vrot.lane.b32.xlu0 %v1080, 127
        %v1129 = vpop.permute.xlu0 %1128
        %1130 = vrot.lane.b32.xlu0 %v1083, 127
        %v1131 = vpop.permute.xlu0 %1130
        %1132 = vrot.lane.b32.xlu0 %v1085, 127
        %v1133 = vpop.permute.xlu0 %1132
        %1150 = vrot.lane.b32.xlu0 %v1048, 126
        %v1151 = vpop.permute.xlu0 %1150
        %1152 = vrot.lane.b32.xlu0 %v1050, 126
        %v1153 = vpop.permute.xlu0 %1152
        %1154 = vrot.lane.b32.xlu0 %v1053, 126
        %v1155 = vpop.permute.xlu0 %1154
        %1156 = vrot.lane.b32.xlu0 %v1055, 126
        %v1157 = vpop.permute.xlu0 %1156
        %1158 = vrot.lane.b32.xlu0 %v1058, 126
        %v1159 = vpop.permute.xlu0 %1158
        %1160 = vrot.lane.b32.xlu0 %v1060, 126
        %v1161 = vpop.permute.xlu0 %1160
        %1162 = vrot.lane.b32.xlu0 %v1063, 126
        %v1163 = vpop.permute.xlu0 %1162
        %1164 = vrot.lane.b32.xlu0 %v1065, 126
        %v1165 = vpop.permute.xlu0 %1164
        %1166 = vrot.lane.b32.xlu0 %v1068, 126
        %v1167 = vpop.permute.xlu0 %1166
        %1168 = vrot.lane.b32.xlu0 %v1070, 126
        %v1169 = vpop.permute.xlu0 %1168
        %1170 = vrot.lane.b32.xlu0 %v1073, 126
        %v1171 = vpop.permute.xlu0 %1170
        %1172 = vrot.lane.b32.xlu0 %v1075, 126
        %v1173 = vpop.permute.xlu0 %1172
        %1174 = vrot.lane.b32.xlu0 %v1078, 126
        %v1175 = vpop.permute.xlu0 %1174
        %1176 = vrot.lane.b32.xlu0 %v1080, 126
        %v1177 = vpop.permute.xlu0 %1176
        %1178 = vrot.lane.b32.xlu0 %v1083, 126
        %v1179 = vpop.permute.xlu0 %1178
        %1180 = vrot.lane.b32.xlu0 %v1085, 126
        %v1181 = vpop.permute.xlu0 %1180
        %vm1198 = vcmask 1045504
        %v1199 = vrot.slane %v901, 2
        %v1200 = vrot.slane %v902, 2
        %v1201 = vsel %vm1198, %v1199, %v1200
        %v1202 = vrot.slane %v903, 2
        %v1203 = vsel %vm1198, %v1200, %v1202
        %v1204 = vrot.slane %v904, 2
        %v1205 = vrot.slane %v905, 2
        %v1206 = vsel %vm1198, %v1204, %v1205
        %v1207 = vrot.slane %v906, 2
        %v1208 = vsel %vm1198, %v1205, %v1207
        %v1209 = vrot.slane %v907, 2
        %v1210 = vrot.slane %v908, 2
        %v1211 = vsel %vm1198, %v1209, %v1210
        %v1212 = vrot.slane %v909, 2
        %v1213 = vsel %vm1198, %v1210, %v1212
        %v1214 = vrot.slane %v910, 2
        %v1215 = vrot.slane %v911, 2
        %v1216 = vsel %vm1198, %v1214, %v1215
        %v1217 = vrot.slane %v912, 2
        %v1218 = vsel %vm1198, %v1215, %v1217
        %v1219 = vrot.slane %v913, 2
        %v1220 = vrot.slane %v914, 2
        %v1221 = vsel %vm1198, %v1219, %v1220
        %v1222 = vrot.slane %v915, 2
        %v1223 = vsel %vm1198, %v1220, %v1222
        %v1224 = vrot.slane %v916, 2
        %v1225 = vrot.slane %v917, 2
        %v1226 = vsel %vm1198, %v1224, %v1225
        %v1227 = vrot.slane %v918, 2
        %v1228 = vsel %vm1198, %v1225, %v1227
        %v1229 = vrot.slane %v919, 2
        %v1230 = vrot.slane %v920, 2
        %v1231 = vsel %vm1198, %v1229, %v1230
        %v1232 = vrot.slane %v921, 2
        %v1233 = vsel %vm1198, %v1230, %v1232
        %v1234 = vrot.slane %v922, 2
        %v1235 = vrot.slane %v923, 2
        %v1236 = vsel %vm1198, %v1234, %v1235
        %v1237 = vrot.slane %v924, 2
        %v1238 = vsel %vm1198, %v1235, %v1237
        %1255 = vrot.lane.b32.xlu0 %v1201, 127
        %v1256 = vpop.permute.xlu0 %1255
        %1257 = vrot.lane.b32.xlu0 %v1203, 127
        %v1258 = vpop.permute.xlu0 %1257
        %1259 = vrot.lane.b32.xlu0 %v1206, 127
        %v1260 = vpop.permute.xlu0 %1259
        %1261 = vrot.lane.b32.xlu0 %v1208, 127
        %v1262 = vpop.permute.xlu0 %1261
        %1263 = vrot.lane.b32.xlu0 %v1211, 127
        %v1264 = vpop.permute.xlu0 %1263
        %1265 = vrot.lane.b32.xlu0 %v1213, 127
        %v1266 = vpop.permute.xlu0 %1265
        %1267 = vrot.lane.b32.xlu0 %v1216, 127
        %v1268 = vpop.permute.xlu0 %1267
        %1269 = vrot.lane.b32.xlu0 %v1218, 127
        %v1270 = vpop.permute.xlu0 %1269
        %1271 = vrot.lane.b32.xlu0 %v1221, 127
        %v1272 = vpop.permute.xlu0 %1271
        %1273 = vrot.lane.b32.xlu0 %v1223, 127
        %v1274 = vpop.permute.xlu0 %1273
        %1275 = vrot.lane.b32.xlu0 %v1226, 127
        %v1276 = vpop.permute.xlu0 %1275
        %1277 = vrot.lane.b32.xlu0 %v1228, 127
        %v1278 = vpop.permute.xlu0 %1277
        %1279 = vrot.lane.b32.xlu0 %v1231, 127
        %v1280 = vpop.permute.xlu0 %1279
        %1281 = vrot.lane.b32.xlu0 %v1233, 127
        %v1282 = vpop.permute.xlu0 %1281
        %1283 = vrot.lane.b32.xlu0 %v1236, 127
        %v1284 = vpop.permute.xlu0 %1283
        %1285 = vrot.lane.b32.xlu0 %v1238, 127
        %v1286 = vpop.permute.xlu0 %1285
        %1303 = vrot.lane.b32.xlu0 %v1201, 126
        %v1304 = vpop.permute.xlu0 %1303
        %1305 = vrot.lane.b32.xlu0 %v1203, 126
        %v1306 = vpop.permute.xlu0 %1305
        %1307 = vrot.lane.b32.xlu0 %v1206, 126
        %v1308 = vpop.permute.xlu0 %1307
        %1309 = vrot.lane.b32.xlu0 %v1208, 126
        %v1310 = vpop.permute.xlu0 %1309
        %1311 = vrot.lane.b32.xlu0 %v1211, 126
        %v1312 = vpop.permute.xlu0 %1311
        %1313 = vrot.lane.b32.xlu0 %v1213, 126
        %v1314 = vpop.permute.xlu0 %1313
        %1315 = vrot.lane.b32.xlu0 %v1216, 126
        %v1316 = vpop.permute.xlu0 %1315
        %1317 = vrot.lane.b32.xlu0 %v1218, 126
        %v1318 = vpop.permute.xlu0 %1317
        %1319 = vrot.lane.b32.xlu0 %v1221, 126
        %v1320 = vpop.permute.xlu0 %1319
        %1321 = vrot.lane.b32.xlu0 %v1223, 126
        %v1322 = vpop.permute.xlu0 %1321
        %1323 = vrot.lane.b32.xlu0 %v1226, 126
        %v1324 = vpop.permute.xlu0 %1323
        %1325 = vrot.lane.b32.xlu0 %v1228, 126
        %v1326 = vpop.permute.xlu0 %1325
        %1327 = vrot.lane.b32.xlu0 %v1231, 126
        %v1328 = vpop.permute.xlu0 %1327
        %1329 = vrot.lane.b32.xlu0 %v1233, 126
        %v1330 = vpop.permute.xlu0 %1329
        %1331 = vrot.lane.b32.xlu0 %v1236, 126
        %v1332 = vpop.permute.xlu0 %1331
        %1333 = vrot.lane.b32.xlu0 %v1238, 126
        %v1334 = vpop.permute.xlu0 %1333
        %v1351 = vcombine.low %v901, %v907
        %v1352 = vcombine.high %v901, %v907
        %v1354 = vunpack.c.l.s4 1983009808
        %v1355 = vunpack.c.0.s8 %v1354
        %v1356 = vlaneseq
        %v1357 = vshrl.u32 %v1356, 7
        %v1358 = vsub.s32 %v1355, %v1357
        %v1359 = vrot.slane %v1351, %v1358
        %v1361 = vunpack.c.l.s4 1983009808
        %v1362 = vunpack.c.0.s8 %v1361
        %v1363 = vlaneseq
        %v1364 = vshrl.u32 %v1363, 7
        %v1365 = vsub.s32 %v1362, %v1364
        %v1366 = vrot.slane %v1352, %v1365
        %v1367 = vcombine.low %v904, %v910
        %v1368 = vcombine.high %v904, %v910
        %v1370 = vunpack.c.l.s4 1983009808
        %v1371 = vunpack.c.0.s8 %v1370
        %v1372 = vlaneseq
        %v1373 = vshrl.u32 %v1372, 7
        %v1374 = vsub.s32 %v1371, %v1373
        %v1375 = vrot.slane %v1367, %v1374
        %v1377 = vunpack.c.l.s4 1983009808
        %v1378 = vunpack.c.0.s8 %v1377
        %v1379 = vlaneseq
        %v1380 = vshrl.u32 %v1379, 7
        %v1381 = vsub.s32 %v1378, %v1380
        %v1382 = vrot.slane %v1368, %v1381
        %v1383 = vcombine.low %v913, %v919
        %v1384 = vcombine.high %v913, %v919
        %v1386 = vunpack.c.l.s4 1983009808
        %v1387 = vunpack.c.0.s8 %v1386
        %v1388 = vlaneseq
        %v1389 = vshrl.u32 %v1388, 7
        %v1390 = vsub.s32 %v1387, %v1389
        %v1391 = vrot.slane %v1383, %v1390
        %v1393 = vunpack.c.l.s4 1983009808
        %v1394 = vunpack.c.0.s8 %v1393
        %v1395 = vlaneseq
        %v1396 = vshrl.u32 %v1395, 7
        %v1397 = vsub.s32 %v1394, %v1396
        %v1398 = vrot.slane %v1384, %v1397
        %v1399 = vcombine.low %v916, %v922
        %v1400 = vcombine.high %v916, %v922
        %v1402 = vunpack.c.l.s4 1983009808
        %v1403 = vunpack.c.0.s8 %v1402
        %v1404 = vlaneseq
        %v1405 = vshrl.u32 %v1404, 7
        %v1406 = vsub.s32 %v1403, %v1405
        %v1407 = vrot.slane %v1399, %v1406
        %v1409 = vunpack.c.l.s4 1983009808
        %v1410 = vunpack.c.0.s8 %v1409
        %v1411 = vlaneseq
        %v1412 = vshrl.u32 %v1411, 7
        %v1413 = vsub.s32 %v1410, %v1412
        %v1414 = vrot.slane %v1400, %v1413
        %v1415 = vcombine.low %v1359, %v1375
        %v1416 = vcombine.high %v1359, %v1375
        %v1418 = vunpack.c.l.s4 1934713408
        %v1419 = vunpack.c.0.s8 %v1418
        %v1420 = vlaneseq
        %v1421 = vshrl.u32 %v1420, 7
        %v1422 = vsub.s32 %v1419, %v1421
        %v1423 = vrot.slane %v1415, %v1422
        %v1425 = vunpack.c.l.s4 1934713408
        %v1426 = vunpack.c.0.s8 %v1425
        %v1427 = vlaneseq
        %v1428 = vshrl.u32 %v1427, 7
        %v1429 = vsub.s32 %v1426, %v1428
        %v1430 = vrot.slane %v1416, %v1429
        %v1431 = vcombine.low %v1366, %v1382
        %v1432 = vcombine.high %v1366, %v1382
        %v1434 = vunpack.c.l.s4 1934713408
        %v1435 = vunpack.c.0.s8 %v1434
        %v1436 = vlaneseq
        %v1437 = vshrl.u32 %v1436, 7
        %v1438 = vsub.s32 %v1435, %v1437
        %v1439 = vrot.slane %v1431, %v1438
        %v1441 = vunpack.c.l.s4 1934713408
        %v1442 = vunpack.c.0.s8 %v1441
        %v1443 = vlaneseq
        %v1444 = vshrl.u32 %v1443, 7
        %v1445 = vsub.s32 %v1442, %v1444
        %v1446 = vrot.slane %v1432, %v1445
        %v1447 = vcombine.low %v1391, %v1407
        %v1448 = vcombine.high %v1391, %v1407
        %v1450 = vunpack.c.l.s4 1934713408
        %v1451 = vunpack.c.0.s8 %v1450
        %v1452 = vlaneseq
        %v1453 = vshrl.u32 %v1452, 7
        %v1454 = vsub.s32 %v1451, %v1453
        %v1455 = vrot.slane %v1447, %v1454
        %v1457 = vunpack.c.l.s4 1934713408
        %v1458 = vunpack.c.0.s8 %v1457
        %v1459 = vlaneseq
        %v1460 = vshrl.u32 %v1459, 7
        %v1461 = vsub.s32 %v1458, %v1460
        %v1462 = vrot.slane %v1448, %v1461
        %v1463 = vcombine.low %v1398, %v1414
        %v1464 = vcombine.high %v1398, %v1414
        %v1466 = vunpack.c.l.s4 1934713408
        %v1467 = vunpack.c.0.s8 %v1466
        %v1468 = vlaneseq
        %v1469 = vshrl.u32 %v1468, 7
        %v1470 = vsub.s32 %v1467, %v1469
        %v1471 = vrot.slane %v1463, %v1470
        %v1473 = vunpack.c.l.s4 1934713408
        %v1474 = vunpack.c.0.s8 %v1473
        %v1475 = vlaneseq
        %v1476 = vshrl.u32 %v1475, 7
        %v1477 = vsub.s32 %v1474, %v1476
        %v1478 = vrot.slane %v1464, %v1477
        %v1479 = vcombine.low %v1423, %v1455
        %v1480 = vcombine.high %v1423, %v1455
        %v1481 = vcombine.low %v1430, %v1462
        %v1482 = vcombine.high %v1430, %v1462
        %v1483 = vcombine.low %v1439, %v1471
        %v1484 = vcombine.high %v1439, %v1471
        %v1485 = vcombine.low %v1446, %v1478
        %v1486 = vcombine.high %v1446, %v1478
        %v1487 = vcombine.low %v942, %v950
        %v1488 = vcombine.high %v942, %v950
        %v1490 = vunpack.c.l.s4 1983009808
        %v1491 = vunpack.c.0.s8 %v1490
        %v1492 = vlaneseq
        %v1493 = vshrl.u32 %v1492, 7
        %v1494 = vsub.s32 %v1491, %v1493
        %v1495 = vrot.slane %v1487, %v1494
        %v1497 = vunpack.c.l.s4 1983009808
        %v1498 = vunpack.c.0.s8 %v1497
        %v1499 = vlaneseq
        %v1500 = vshrl.u32 %v1499, 7
        %v1501 = vsub.s32 %v1498, %v1500
        %v1502 = vrot.slane %v1488, %v1501
        %v1503 = vcombine.low %v946, %v954
        %v1504 = vcombine.high %v946, %v954
        %v1506 = vunpack.c.l.s4 1983009808
        %v1507 = vunpack.c.0.s8 %v1506
        %v1508 = vlaneseq
        %v1509 = vshrl.u32 %v1508, 7
        %v1510 = vsub.s32 %v1507, %v1509
        %v1511 = vrot.slane %v1503, %v1510
        %v1513 = vunpack.c.l.s4 1983009808
        %v1514 = vunpack.c.0.s8 %v1513
        %v1515 = vlaneseq
        %v1516 = vshrl.u32 %v1515, 7
        %v1517 = vsub.s32 %v1514, %v1516
        %v1518 = vrot.slane %v1504, %v1517
        %v1519 = vcombine.low %v958, %v966
        %v1520 = vcombine.high %v958, %v966
        %v1522 = vunpack.c.l.s4 1983009808
        %v1523 = vunpack.c.0.s8 %v1522
        %v1524 = vlaneseq
        %v1525 = vshrl.u32 %v1524, 7
        %v1526 = vsub.s32 %v1523, %v1525
        %v1527 = vrot.slane %v1519, %v1526
        %v1529 = vunpack.c.l.s4 1983009808
        %v1530 = vunpack.c.0.s8 %v1529
        %v1531 = vlaneseq
        %v1532 = vshrl.u32 %v1531, 7
        %v1533 = vsub.s32 %v1530, %v1532
        %v1534 = vrot.slane %v1520, %v1533
        %v1535 = vcombine.low %v962, %v970
        %v1536 = vcombine.high %v962, %v970
        %v1538 = vunpack.c.l.s4 1983009808
        %v1539 = vunpack.c.0.s8 %v1538
        %v1540 = vlaneseq
        %v1541 = vshrl.u32 %v1540, 7
        %v1542 = vsub.s32 %v1539, %v1541
        %v1543 = vrot.slane %v1535, %v1542
        %v1545 = vunpack.c.l.s4 1983009808
        %v1546 = vunpack.c.0.s8 %v1545
        %v1547 = vlaneseq
        %v1548 = vshrl.u32 %v1547, 7
        %v1549 = vsub.s32 %v1546, %v1548
        %v1550 = vrot.slane %v1536, %v1549
        %v1551 = vcombine.low %v1495, %v1511
        %v1552 = vcombine.high %v1495, %v1511
        %v1554 = vunpack.c.l.s4 1934713408
        %v1555 = vunpack.c.0.s8 %v1554
        %v1556 = vlaneseq
        %v1557 = vshrl.u32 %v1556, 7
        %v1558 = vsub.s32 %v1555, %v1557
        %v1559 = vrot.slane %v1551, %v1558
        %v1561 = vunpack.c.l.s4 1934713408
        %v1562 = vunpack.c.0.s8 %v1561
        %v1563 = vlaneseq
        %v1564 = vshrl.u32 %v1563, 7
        %v1565 = vsub.s32 %v1562, %v1564
        %v1566 = vrot.slane %v1552, %v1565
        %v1567 = vcombine.low %v1502, %v1518
        %v1568 = vcombine.high %v1502, %v1518
        %v1570 = vunpack.c.l.s4 1934713408
        %v1571 = vunpack.c.0.s8 %v1570
        %v1572 = vlaneseq
        %v1573 = vshrl.u32 %v1572, 7
        %v1574 = vsub.s32 %v1571, %v1573
        %v1575 = vrot.slane %v1567, %v1574
        %v1577 = vunpack.c.l.s4 1934713408
        %v1578 = vunpack.c.0.s8 %v1577
        %v1579 = vlaneseq
        %v1580 = vshrl.u32 %v1579, 7
        %v1581 = vsub.s32 %v1578, %v1580
        %v1582 = vrot.slane %v1568, %v1581
        %v1583 = vcombine.low %v1527, %v1543
        %v1584 = vcombine.high %v1527, %v1543
        %v1586 = vunpack.c.l.s4 1934713408
        %v1587 = vunpack.c.0.s8 %v1586
        %v1588 = vlaneseq
        %v1589 = vshrl.u32 %v1588, 7
        %v1590 = vsub.s32 %v1587, %v1589
        %v1591 = vrot.slane %v1583, %v1590
        %v1593 = vunpack.c.l.s4 1934713408
        %v1594 = vunpack.c.0.s8 %v1593
        %v1595 = vlaneseq
        %v1596 = vshrl.u32 %v1595, 7
        %v1597 = vsub.s32 %v1594, %v1596
        %v1598 = vrot.slane %v1584, %v1597
        %v1599 = vcombine.low %v1534, %v1550
        %v1600 = vcombine.high %v1534, %v1550
        %v1602 = vunpack.c.l.s4 1934713408
        %v1603 = vunpack.c.0.s8 %v1602
        %v1604 = vlaneseq
        %v1605 = vshrl.u32 %v1604, 7
        %v1606 = vsub.s32 %v1603, %v1605
        %v1607 = vrot.slane %v1599, %v1606
        %v1609 = vunpack.c.l.s4 1934713408
        %v1610 = vunpack.c.0.s8 %v1609
        %v1611 = vlaneseq
        %v1612 = vshrl.u32 %v1611, 7
        %v1613 = vsub.s32 %v1610, %v1612
        %v1614 = vrot.slane %v1600, %v1613
        %v1615 = vcombine.low %v1559, %v1591
        %v1616 = vcombine.high %v1559, %v1591
        %v1617 = vcombine.low %v1566, %v1598
        %v1618 = vcombine.high %v1566, %v1598
        %v1619 = vcombine.low %v1575, %v1607
        %v1620 = vcombine.high %v1575, %v1607
        %v1621 = vcombine.low %v1582, %v1614
        %v1622 = vcombine.high %v1582, %v1614
        %v1623 = vcombine.low %v990, %v998
        %v1624 = vcombine.high %v990, %v998
        %v1626 = vunpack.c.l.s4 1983009808
        %v1627 = vunpack.c.0.s8 %v1626
        %v1628 = vlaneseq
        %v1629 = vshrl.u32 %v1628, 7
        %v1630 = vsub.s32 %v1627, %v1629
        %v1631 = vrot.slane %v1623, %v1630
        %v1633 = vunpack.c.l.s4 1983009808
        %v1634 = vunpack.c.0.s8 %v1633
        %v1635 = vlaneseq
        %v1636 = vshrl.u32 %v1635, 7
        %v1637 = vsub.s32 %v1634, %v1636
        %v1638 = vrot.slane %v1624, %v1637
        %v1639 = vcombine.low %v994, %v1002
        %v1640 = vcombine.high %v994, %v1002
        %v1642 = vunpack.c.l.s4 1983009808
        %v1643 = vunpack.c.0.s8 %v1642
        %v1644 = vlaneseq
        %v1645 = vshrl.u32 %v1644, 7
        %v1646 = vsub.s32 %v1643, %v1645
        %v1647 = vrot.slane %v1639, %v1646
        %v1649 = vunpack.c.l.s4 1983009808
        %v1650 = vunpack.c.0.s8 %v1649
        %v1651 = vlaneseq
        %v1652 = vshrl.u32 %v1651, 7
        %v1653 = vsub.s32 %v1650, %v1652
        %v1654 = vrot.slane %v1640, %v1653
        %v1655 = vcombine.low %v1006, %v1014
        %v1656 = vcombine.high %v1006, %v1014
        %v1658 = vunpack.c.l.s4 1983009808
        %v1659 = vunpack.c.0.s8 %v1658
        %v1660 = vlaneseq
        %v1661 = vshrl.u32 %v1660, 7
        %v1662 = vsub.s32 %v1659, %v1661
        %v1663 = vrot.slane %v1655, %v1662
        %v1665 = vunpack.c.l.s4 1983009808
        %v1666 = vunpack.c.0.s8 %v1665
        %v1667 = vlaneseq
        %v1668 = vshrl.u32 %v1667, 7
        %v1669 = vsub.s32 %v1666, %v1668
        %v1670 = vrot.slane %v1656, %v1669
        %v1671 = vcombine.low %v1010, %v1018
        %v1672 = vcombine.high %v1010, %v1018
        %v1674 = vunpack.c.l.s4 1983009808
        %v1675 = vunpack.c.0.s8 %v1674
        %v1676 = vlaneseq
        %v1677 = vshrl.u32 %v1676, 7
        %v1678 = vsub.s32 %v1675, %v1677
        %v1679 = vrot.slane %v1671, %v1678
        %v1681 = vunpack.c.l.s4 1983009808
        %v1682 = vunpack.c.0.s8 %v1681
        %v1683 = vlaneseq
        %v1684 = vshrl.u32 %v1683, 7
        %v1685 = vsub.s32 %v1682, %v1684
        %v1686 = vrot.slane %v1672, %v1685
        %v1687 = vcombine.low %v1631, %v1647
        %v1688 = vcombine.high %v1631, %v1647
        %v1690 = vunpack.c.l.s4 1934713408
        %v1691 = vunpack.c.0.s8 %v1690
        %v1692 = vlaneseq
        %v1693 = vshrl.u32 %v1692, 7
        %v1694 = vsub.s32 %v1691, %v1693
        %v1695 = vrot.slane %v1687, %v1694
        %v1697 = vunpack.c.l.s4 1934713408
        %v1698 = vunpack.c.0.s8 %v1697
        %v1699 = vlaneseq
        %v1700 = vshrl.u32 %v1699, 7
        %v1701 = vsub.s32 %v1698, %v1700
        %v1702 = vrot.slane %v1688, %v1701
        %v1703 = vcombine.low %v1638, %v1654
        %v1704 = vcombine.high %v1638, %v1654
        %v1706 = vunpack.c.l.s4 1934713408
        %v1707 = vunpack.c.0.s8 %v1706
        %v1708 = vlaneseq
        %v1709 = vshrl.u32 %v1708, 7
        %v1710 = vsub.s32 %v1707, %v1709
        %v1711 = vrot.slane %v1703, %v1710
        %v1713 = vunpack.c.l.s4 1934713408
        %v1714 = vunpack.c.0.s8 %v1713
        %v1715 = vlaneseq
        %v1716 = vshrl.u32 %v1715, 7
        %v1717 = vsub.s32 %v1714, %v1716
        %v1718 = vrot.slane %v1704, %v1717
        %v1719 = vcombine.low %v1663, %v1679
        %v1720 = vcombine.high %v1663, %v1679
        %v1722 = vunpack.c.l.s4 1934713408
        %v1723 = vunpack.c.0.s8 %v1722
        %v1724 = vlaneseq
        %v1725 = vshrl.u32 %v1724, 7
        %v1726 = vsub.s32 %v1723, %v1725
        %v1727 = vrot.slane %v1719, %v1726
        %v1729 = vunpack.c.l.s4 1934713408
        %v1730 = vunpack.c.0.s8 %v1729
        %v1731 = vlaneseq
        %v1732 = vshrl.u32 %v1731, 7
        %v1733 = vsub.s32 %v1730, %v1732
        %v1734 = vrot.slane %v1720, %v1733
        %v1735 = vcombine.low %v1670, %v1686
        %v1736 = vcombine.high %v1670, %v1686
        %v1738 = vunpack.c.l.s4 1934713408
        %v1739 = vunpack.c.0.s8 %v1738
        %v1740 = vlaneseq
        %v1741 = vshrl.u32 %v1740, 7
        %v1742 = vsub.s32 %v1739, %v1741
        %v1743 = vrot.slane %v1735, %v1742
        %v1745 = vunpack.c.l.s4 1934713408
        %v1746 = vunpack.c.0.s8 %v1745
        %v1747 = vlaneseq
        %v1748 = vshrl.u32 %v1747, 7
        %v1749 = vsub.s32 %v1746, %v1748
        %v1750 = vrot.slane %v1736, %v1749
        %v1751 = vcombine.low %v1695, %v1727
        %v1752 = vcombine.high %v1695, %v1727
        %v1753 = vcombine.low %v1702, %v1734
        %v1754 = vcombine.high %v1702, %v1734
        %v1755 = vcombine.low %v1711, %v1743
        %v1756 = vcombine.high %v1711, %v1743
        %v1757 = vcombine.low %v1718, %v1750
        %v1758 = vcombine.high %v1718, %v1750
        %v1759 = vcombine.low %v1048, %v1058
        %v1760 = vcombine.high %v1048, %v1058
        %v1762 = vunpack.c.l.s4 1983009808
        %v1763 = vunpack.c.0.s8 %v1762
        %v1764 = vlaneseq
        %v1765 = vshrl.u32 %v1764, 7
        %v1766 = vsub.s32 %v1763, %v1765
        %v1767 = vrot.slane %v1759, %v1766
        %v1769 = vunpack.c.l.s4 1983009808
        %v1770 = vunpack.c.0.s8 %v1769
        %v1771 = vlaneseq
        %v1772 = vshrl.u32 %v1771, 7
        %v1773 = vsub.s32 %v1770, %v1772
        %v1774 = vrot.slane %v1760, %v1773
        %v1775 = vcombine.low %v1053, %v1063
        %v1776 = vcombine.high %v1053, %v1063
        %v1778 = vunpack.c.l.s4 1983009808
        %v1779 = vunpack.c.0.s8 %v1778
        %v1780 = vlaneseq
        %v1781 = vshrl.u32 %v1780, 7
        %v1782 = vsub.s32 %v1779, %v1781
        %v1783 = vrot.slane %v1775, %v1782
        %v1785 = vunpack.c.l.s4 1983009808
        %v1786 = vunpack.c.0.s8 %v1785
        %v1787 = vlaneseq
        %v1788 = vshrl.u32 %v1787, 7
        %v1789 = vsub.s32 %v1786, %v1788
        %v1790 = vrot.slane %v1776, %v1789
        %v1791 = vcombine.low %v1068, %v1078
        %v1792 = vcombine.high %v1068, %v1078
        %v1794 = vunpack.c.l.s4 1983009808
        %v1795 = vunpack.c.0.s8 %v1794
        %v1796 = vlaneseq
        %v1797 = vshrl.u32 %v1796, 7
        %v1798 = vsub.s32 %v1795, %v1797
        %v1799 = vrot.slane %v1791, %v1798
        %v1801 = vunpack.c.l.s4 1983009808
        %v1802 = vunpack.c.0.s8 %v1801
        %v1803 = vlaneseq
        %v1804 = vshrl.u32 %v1803, 7
        %v1805 = vsub.s32 %v1802, %v1804
        %v1806 = vrot.slane %v1792, %v1805
        %v1807 = vcombine.low %v1073, %v1083
        %v1808 = vcombine.high %v1073, %v1083
        %v1810 = vunpack.c.l.s4 1983009808
        %v1811 = vunpack.c.0.s8 %v1810
        %v1812 = vlaneseq
        %v1813 = vshrl.u32 %v1812, 7
        %v1814 = vsub.s32 %v1811, %v1813
        %v1815 = vrot.slane %v1807, %v1814
        %v1817 = vunpack.c.l.s4 1983009808
        %v1818 = vunpack.c.0.s8 %v1817
        %v1819 = vlaneseq
        %v1820 = vshrl.u32 %v1819, 7
        %v1821 = vsub.s32 %v1818, %v1820
        %v1822 = vrot.slane %v1808, %v1821
        %v1823 = vcombine.low %v1767, %v1783
        %v1824 = vcombine.high %v1767, %v1783
        %v1826 = vunpack.c.l.s4 1934713408
        %v1827 = vunpack.c.0.s8 %v1826
        %v1828 = vlaneseq
        %v1829 = vshrl.u32 %v1828, 7
        %v1830 = vsub.s32 %v1827, %v1829
        %v1831 = vrot.slane %v1823, %v1830
        %v1833 = vunpack.c.l.s4 1934713408
        %v1834 = vunpack.c.0.s8 %v1833
        %v1835 = vlaneseq
        %v1836 = vshrl.u32 %v1835, 7
        %v1837 = vsub.s32 %v1834, %v1836
        %v1838 = vrot.slane %v1824, %v1837
        %v1839 = vcombine.low %v1774, %v1790
        %v1840 = vcombine.high %v1774, %v1790
        %v1842 = vunpack.c.l.s4 1934713408
        %v1843 = vunpack.c.0.s8 %v1842
        %v1844 = vlaneseq
        %v1845 = vshrl.u32 %v1844, 7
        %v1846 = vsub.s32 %v1843, %v1845
        %v1847 = vrot.slane %v1839, %v1846
        %v1849 = vunpack.c.l.s4 1934713408
        %v1850 = vunpack.c.0.s8 %v1849
        %v1851 = vlaneseq
        %v1852 = vshrl.u32 %v1851, 7
        %v1853 = vsub.s32 %v1850, %v1852
        %v1854 = vrot.slane %v1840, %v1853
        %v1855 = vcombine.low %v1799, %v1815
        %v1856 = vcombine.high %v1799, %v1815
        %v1858 = vunpack.c.l.s4 1934713408
        %v1859 = vunpack.c.0.s8 %v1858
        %v1860 = vlaneseq
        %v1861 = vshrl.u32 %v1860, 7
        %v1862 = vsub.s32 %v1859, %v1861
        %v1863 = vrot.slane %v1855, %v1862
        %v1865 = vunpack.c.l.s4 1934713408
        %v1866 = vunpack.c.0.s8 %v1865
        %v1867 = vlaneseq
        %v1868 = vshrl.u32 %v1867, 7
        %v1869 = vsub.s32 %v1866, %v1868
        %v1870 = vrot.slane %v1856, %v1869
        %v1871 = vcombine.low %v1806, %v1822
        %v1872 = vcombine.high %v1806, %v1822
        %v1874 = vunpack.c.l.s4 1934713408
        %v1875 = vunpack.c.0.s8 %v1874
        %v1876 = vlaneseq
        %v1877 = vshrl.u32 %v1876, 7
        %v1878 = vsub.s32 %v1875, %v1877
        %v1879 = vrot.slane %v1871, %v1878
        %v1881 = vunpack.c.l.s4 1934713408
        %v1882 = vunpack.c.0.s8 %v1881
        %v1883 = vlaneseq
        %v1884 = vshrl.u32 %v1883, 7
        %v1885 = vsub.s32 %v1882, %v1884
        %v1886 = vrot.slane %v1872, %v1885
        %v1887 = vcombine.low %v1831, %v1863
        %v1888 = vcombine.high %v1831, %v1863
        %v1889 = vcombine.low %v1838, %v1870
        %v1890 = vcombine.high %v1838, %v1870
        %v1891 = vcombine.low %v1847, %v1879
        %v1892 = vcombine.high %v1847, %v1879
        %v1893 = vcombine.low %v1854, %v1886
        %v1894 = vcombine.high %v1854, %v1886
        %v1895 = vcombine.low %v1103, %v1111
        %v1896 = vcombine.high %v1103, %v1111
        %v1898 = vunpack.c.l.s4 1983009808
        %v1899 = vunpack.c.0.s8 %v1898
        %v1900 = vlaneseq
        %v1901 = vshrl.u32 %v1900, 7
        %v1902 = vsub.s32 %v1899, %v1901
        %v1903 = vrot.slane %v1895, %v1902
        %v1905 = vunpack.c.l.s4 1983009808
        %v1906 = vunpack.c.0.s8 %v1905
        %v1907 = vlaneseq
        %v1908 = vshrl.u32 %v1907, 7
        %v1909 = vsub.s32 %v1906, %v1908
        %v1910 = vrot.slane %v1896, %v1909
        %v1911 = vcombine.low %v1107, %v1115
        %v1912 = vcombine.high %v1107, %v1115
        %v1914 = vunpack.c.l.s4 1983009808
        %v1915 = vunpack.c.0.s8 %v1914
        %v1916 = vlaneseq
        %v1917 = vshrl.u32 %v1916, 7
        %v1918 = vsub.s32 %v1915, %v1917
        %v1919 = vrot.slane %v1911, %v1918
        %v1921 = vunpack.c.l.s4 1983009808
        %v1922 = vunpack.c.0.s8 %v1921
        %v1923 = vlaneseq
        %v1924 = vshrl.u32 %v1923, 7
        %v1925 = vsub.s32 %v1922, %v1924
        %v1926 = vrot.slane %v1912, %v1925
        %v1927 = vcombine.low %v1119, %v1127
        %v1928 = vcombine.high %v1119, %v1127
        %v1930 = vunpack.c.l.s4 1983009808
        %v1931 = vunpack.c.0.s8 %v1930
        %v1932 = vlaneseq
        %v1933 = vshrl.u32 %v1932, 7
        %v1934 = vsub.s32 %v1931, %v1933
        %v1935 = vrot.slane %v1927, %v1934
        %v1937 = vunpack.c.l.s4 1983009808
        %v1938 = vunpack.c.0.s8 %v1937
        %v1939 = vlaneseq
        %v1940 = vshrl.u32 %v1939, 7
        %v1941 = vsub.s32 %v1938, %v1940
        %v1942 = vrot.slane %v1928, %v1941
        %v1943 = vcombine.low %v1123, %v1131
        %v1944 = vcombine.high %v1123, %v1131
        %v1946 = vunpack.c.l.s4 1983009808
        %v1947 = vunpack.c.0.s8 %v1946
        %v1948 = vlaneseq
        %v1949 = vshrl.u32 %v1948, 7
        %v1950 = vsub.s32 %v1947, %v1949
        %v1951 = vrot.slane %v1943, %v1950
        %v1953 = vunpack.c.l.s4 1983009808
        %v1954 = vunpack.c.0.s8 %v1953
        %v1955 = vlaneseq
        %v1956 = vshrl.u32 %v1955, 7
        %v1957 = vsub.s32 %v1954, %v1956
        %v1958 = vrot.slane %v1944, %v1957
        %v1959 = vcombine.low %v1903, %v1919
        %v1960 = vcombine.high %v1903, %v1919
        %v1962 = vunpack.c.l.s4 1934713408
        %v1963 = vunpack.c.0.s8 %v1962
        %v1964 = vlaneseq
        %v1965 = vshrl.u32 %v1964, 7
        %v1966 = vsub.s32 %v1963, %v1965
        %v1967 = vrot.slane %v1959, %v1966
        %v1969 = vunpack.c.l.s4 1934713408
        %v1970 = vunpack.c.0.s8 %v1969
        %v1971 = vlaneseq
        %v1972 = vshrl.u32 %v1971, 7
        %v1973 = vsub.s32 %v1970, %v1972
        %v1974 = vrot.slane %v1960, %v1973
        %v1975 = vcombine.low %v1910, %v1926
        %v1976 = vcombine.high %v1910, %v1926
        %v1978 = vunpack.c.l.s4 1934713408
        %v1979 = vunpack.c.0.s8 %v1978
        %v1980 = vlaneseq
        %v1981 = vshrl.u32 %v1980, 7
        %v1982 = vsub.s32 %v1979, %v1981
        %v1983 = vrot.slane %v1975, %v1982
        %v1985 = vunpack.c.l.s4 1934713408
        %v1986 = vunpack.c.0.s8 %v1985
        %v1987 = vlaneseq
        %v1988 = vshrl.u32 %v1987, 7
        %v1989 = vsub.s32 %v1986, %v1988
        %v1990 = vrot.slane %v1976, %v1989
        %v1991 = vcombine.low %v1935, %v1951
        %v1992 = vcombine.high %v1935, %v1951
        %v1994 = vunpack.c.l.s4 1934713408
        %v1995 = vunpack.c.0.s8 %v1994
        %v1996 = vlaneseq
        %v1997 = vshrl.u32 %v1996, 7
        %v1998 = vsub.s32 %v1995, %v1997
        %v1999 = vrot.slane %v1991, %v1998
        %v2001 = vunpack.c.l.s4 1934713408
        %v2002 = vunpack.c.0.s8 %v2001
        %v2003 = vlaneseq
        %v2004 = vshrl.u32 %v2003, 7
        %v2005 = vsub.s32 %v2002, %v2004
        %v2006 = vrot.slane %v1992, %v2005
        %v2007 = vcombine.low %v1942, %v1958
        %v2008 = vcombine.high %v1942, %v1958
        %v2010 = vunpack.c.l.s4 1934713408
        %v2011 = vunpack.c.0.s8 %v2010
        %v2012 = vlaneseq
        %v2013 = vshrl.u32 %v2012, 7
        %v2014 = vsub.s32 %v2011, %v2013
        %v2015 = vrot.slane %v2007, %v2014
        %v2017 = vunpack.c.l.s4 1934713408
        %v2018 = vunpack.c.0.s8 %v2017
        %v2019 = vlaneseq
        %v2020 = vshrl.u32 %v2019, 7
        %v2021 = vsub.s32 %v2018, %v2020
        %v2022 = vrot.slane %v2008, %v2021
        %v2023 = vcombine.low %v1967, %v1999
        %v2024 = vcombine.high %v1967, %v1999
        %v2025 = vcombine.low %v1974, %v2006
        %v2026 = vcombine.high %v1974, %v2006
        %v2027 = vcombine.low %v1983, %v2015
        %v2028 = vcombine.high %v1983, %v2015
        %v2029 = vcombine.low %v1990, %v2022
        %v2030 = vcombine.high %v1990, %v2022
        %v2031 = vcombine.low %v1151, %v1159
        %v2032 = vcombine.high %v1151, %v1159
        %v2034 = vunpack.c.l.s4 1983009808
        %v2035 = vunpack.c.0.s8 %v2034
        %v2036 = vlaneseq
        %v2037 = vshrl.u32 %v2036, 7
        %v2038 = vsub.s32 %v2035, %v2037
        %v2039 = vrot.slane %v2031, %v2038
        %v2041 = vunpack.c.l.s4 1983009808
        %v2042 = vunpack.c.0.s8 %v2041
        %v2043 = vlaneseq
        %v2044 = vshrl.u32 %v2043, 7
        %v2045 = vsub.s32 %v2042, %v2044
        %v2046 = vrot.slane %v2032, %v2045
        %v2047 = vcombine.low %v1155, %v1163
        %v2048 = vcombine.high %v1155, %v1163
        %v2050 = vunpack.c.l.s4 1983009808
        %v2051 = vunpack.c.0.s8 %v2050
        %v2052 = vlaneseq
        %v2053 = vshrl.u32 %v2052, 7
        %v2054 = vsub.s32 %v2051, %v2053
        %v2055 = vrot.slane %v2047, %v2054
        %v2057 = vunpack.c.l.s4 1983009808
        %v2058 = vunpack.c.0.s8 %v2057
        %v2059 = vlaneseq
        %v2060 = vshrl.u32 %v2059, 7
        %v2061 = vsub.s32 %v2058, %v2060
        %v2062 = vrot.slane %v2048, %v2061
        %v2063 = vcombine.low %v1167, %v1175
        %v2064 = vcombine.high %v1167, %v1175
        %v2066 = vunpack.c.l.s4 1983009808
        %v2067 = vunpack.c.0.s8 %v2066
        %v2068 = vlaneseq
        %v2069 = vshrl.u32 %v2068, 7
        %v2070 = vsub.s32 %v2067, %v2069
        %v2071 = vrot.slane %v2063, %v2070
        %v2073 = vunpack.c.l.s4 1983009808
        %v2074 = vunpack.c.0.s8 %v2073
        %v2075 = vlaneseq
        %v2076 = vshrl.u32 %v2075, 7
        %v2077 = vsub.s32 %v2074, %v2076
        %v2078 = vrot.slane %v2064, %v2077
        %v2079 = vcombine.low %v1171, %v1179
        %v2080 = vcombine.high %v1171, %v1179
        %v2082 = vunpack.c.l.s4 1983009808
        %v2083 = vunpack.c.0.s8 %v2082
        %v2084 = vlaneseq
        %v2085 = vshrl.u32 %v2084, 7
        %v2086 = vsub.s32 %v2083, %v2085
        %v2087 = vrot.slane %v2079, %v2086
        %v2089 = vunpack.c.l.s4 1983009808
        %v2090 = vunpack.c.0.s8 %v2089
        %v2091 = vlaneseq
        %v2092 = vshrl.u32 %v2091, 7
        %v2093 = vsub.s32 %v2090, %v2092
        %v2094 = vrot.slane %v2080, %v2093
        %v2095 = vcombine.low %v2039, %v2055
        %v2096 = vcombine.high %v2039, %v2055
        %v2098 = vunpack.c.l.s4 1934713408
        %v2099 = vunpack.c.0.s8 %v2098
        %v2100 = vlaneseq
        %v2101 = vshrl.u32 %v2100, 7
        %v2102 = vsub.s32 %v2099, %v2101
        %v2103 = vrot.slane %v2095, %v2102
        %v2105 = vunpack.c.l.s4 1934713408
        %v2106 = vunpack.c.0.s8 %v2105
        %v2107 = vlaneseq
        %v2108 = vshrl.u32 %v2107, 7
        %v2109 = vsub.s32 %v2106, %v2108
        %v2110 = vrot.slane %v2096, %v2109
        %v2111 = vcombine.low %v2046, %v2062
        %v2112 = vcombine.high %v2046, %v2062
        %v2114 = vunpack.c.l.s4 1934713408
        %v2115 = vunpack.c.0.s8 %v2114
        %v2116 = vlaneseq
        %v2117 = vshrl.u32 %v2116, 7
        %v2118 = vsub.s32 %v2115, %v2117
        %v2119 = vrot.slane %v2111, %v2118
        %v2121 = vunpack.c.l.s4 1934713408
        %v2122 = vunpack.c.0.s8 %v2121
        %v2123 = vlaneseq
        %v2124 = vshrl.u32 %v2123, 7
        %v2125 = vsub.s32 %v2122, %v2124
        %v2126 = vrot.slane %v2112, %v2125
        %v2127 = vcombine.low %v2071, %v2087
        %v2128 = vcombine.high %v2071, %v2087
        %v2130 = vunpack.c.l.s4 1934713408
        %v2131 = vunpack.c.0.s8 %v2130
        %v2132 = vlaneseq
        %v2133 = vshrl.u32 %v2132, 7
        %v2134 = vsub.s32 %v2131, %v2133
        %v2135 = vrot.slane %v2127, %v2134
        %v2137 = vunpack.c.l.s4 1934713408
        %v2138 = vunpack.c.0.s8 %v2137
        %v2139 = vlaneseq
        %v2140 = vshrl.u32 %v2139, 7
        %v2141 = vsub.s32 %v2138, %v2140
        %v2142 = vrot.slane %v2128, %v2141
        %v2143 = vcombine.low %v2078, %v2094
        %v2144 = vcombine.high %v2078, %v2094
        %v2146 = vunpack.c.l.s4 1934713408
        %v2147 = vunpack.c.0.s8 %v2146
        %v2148 = vlaneseq
        %v2149 = vshrl.u32 %v2148, 7
        %v2150 = vsub.s32 %v2147, %v2149
        %v2151 = vrot.slane %v2143, %v2150
        %v2153 = vunpack.c.l.s4 1934713408
        %v2154 = vunpack.c.0.s8 %v2153
        %v2155 = vlaneseq
        %v2156 = vshrl.u32 %v2155, 7
        %v2157 = vsub.s32 %v2154, %v2156
        %v2158 = vrot.slane %v2144, %v2157
        %v2159 = vcombine.low %v2103, %v2135
        %v2160 = vcombine.high %v2103, %v2135
        %v2161 = vcombine.low %v2110, %v2142
        %v2162 = vcombine.high %v2110, %v2142
        %v2163 = vcombine.low %v2119, %v2151
        %v2164 = vcombine.high %v2119, %v2151
        %v2165 = vcombine.low %v2126, %v2158
        %v2166 = vcombine.high %v2126, %v2158
        %v2167 = vcombine.low %v1201, %v1211
        %v2168 = vcombine.high %v1201, %v1211
        %v2170 = vunpack.c.l.s4 1983009808
        %v2171 = vunpack.c.0.s8 %v2170
        %v2172 = vlaneseq
        %v2173 = vshrl.u32 %v2172, 7
        %v2174 = vsub.s32 %v2171, %v2173
        %v2175 = vrot.slane %v2167, %v2174
        %v2177 = vunpack.c.l.s4 1983009808
        %v2178 = vunpack.c.0.s8 %v2177
        %v2179 = vlaneseq
        %v2180 = vshrl.u32 %v2179, 7
        %v2181 = vsub.s32 %v2178, %v2180
        %v2182 = vrot.slane %v2168, %v2181
        %v2183 = vcombine.low %v1206, %v1216
        %v2184 = vcombine.high %v1206, %v1216
        %v2186 = vunpack.c.l.s4 1983009808
        %v2187 = vunpack.c.0.s8 %v2186
        %v2188 = vlaneseq
        %v2189 = vshrl.u32 %v2188, 7
        %v2190 = vsub.s32 %v2187, %v2189
        %v2191 = vrot.slane %v2183, %v2190
        %v2193 = vunpack.c.l.s4 1983009808
        %v2194 = vunpack.c.0.s8 %v2193
        %v2195 = vlaneseq
        %v2196 = vshrl.u32 %v2195, 7
        %v2197 = vsub.s32 %v2194, %v2196
        %v2198 = vrot.slane %v2184, %v2197
        %v2199 = vcombine.low %v1221, %v1231
        %v2200 = vcombine.high %v1221, %v1231
        %v2202 = vunpack.c.l.s4 1983009808
        %v2203 = vunpack.c.0.s8 %v2202
        %v2204 = vlaneseq
        %v2205 = vshrl.u32 %v2204, 7
        %v2206 = vsub.s32 %v2203, %v2205
        %v2207 = vrot.slane %v2199, %v2206
        %v2209 = vunpack.c.l.s4 1983009808
        %v2210 = vunpack.c.0.s8 %v2209
        %v2211 = vlaneseq
        %v2212 = vshrl.u32 %v2211, 7
        %v2213 = vsub.s32 %v2210, %v2212
        %v2214 = vrot.slane %v2200, %v2213
        %v2215 = vcombine.low %v1226, %v1236
        %v2216 = vcombine.high %v1226, %v1236
        %v2218 = vunpack.c.l.s4 1983009808
        %v2219 = vunpack.c.0.s8 %v2218
        %v2220 = vlaneseq
        %v2221 = vshrl.u32 %v2220, 7
        %v2222 = vsub.s32 %v2219, %v2221
        %v2223 = vrot.slane %v2215, %v2222
        %v2225 = vunpack.c.l.s4 1983009808
        %v2226 = vunpack.c.0.s8 %v2225
        %v2227 = vlaneseq
        %v2228 = vshrl.u32 %v2227, 7
        %v2229 = vsub.s32 %v2226, %v2228
        %v2230 = vrot.slane %v2216, %v2229
        %v2231 = vcombine.low %v2175, %v2191
        %v2232 = vcombine.high %v2175, %v2191
        %v2234 = vunpack.c.l.s4 1934713408
        %v2235 = vunpack.c.0.s8 %v2234
        %v2236 = vlaneseq
        %v2237 = vshrl.u32 %v2236, 7
        %v2238 = vsub.s32 %v2235, %v2237
        %v2239 = vrot.slane %v2231, %v2238
        %v2241 = vunpack.c.l.s4 1934713408
        %v2242 = vunpack.c.0.s8 %v2241
        %v2243 = vlaneseq
        %v2244 = vshrl.u32 %v2243, 7
        %v2245 = vsub.s32 %v2242, %v2244
        %v2246 = vrot.slane %v2232, %v2245
        %v2247 = vcombine.low %v2182, %v2198
        %v2248 = vcombine.high %v2182, %v2198
        %v2250 = vunpack.c.l.s4 1934713408
        %v2251 = vunpack.c.0.s8 %v2250
        %v2252 = vlaneseq
        %v2253 = vshrl.u32 %v2252, 7
        %v2254 = vsub.s32 %v2251, %v2253
        %v2255 = vrot.slane %v2247, %v2254
        %v2257 = vunpack.c.l.s4 1934713408
        %v2258 = vunpack.c.0.s8 %v2257
        %v2259 = vlaneseq
        %v2260 = vshrl.u32 %v2259, 7
        %v2261 = vsub.s32 %v2258, %v2260
        %v2262 = vrot.slane %v2248, %v2261
        %v2263 = vcombine.low %v2207, %v2223
        %v2264 = vcombine.high %v2207, %v2223
        %v2266 = vunpack.c.l.s4 1934713408
        %v2267 = vunpack.c.0.s8 %v2266
        %v2268 = vlaneseq
        %v2269 = vshrl.u32 %v2268, 7
        %v2270 = vsub.s32 %v2267, %v2269
        %v2271 = vrot.slane %v2263, %v2270
        %v2273 = vunpack.c.l.s4 1934713408
        %v2274 = vunpack.c.0.s8 %v2273
        %v2275 = vlaneseq
        %v2276 = vshrl.u32 %v2275, 7
        %v2277 = vsub.s32 %v2274, %v2276
        %v2278 = vrot.slane %v2264, %v2277
        %v2279 = vcombine.low %v2214, %v2230
        %v2280 = vcombine.high %v2214, %v2230
        %v2282 = vunpack.c.l.s4 1934713408
        %v2283 = vunpack.c.0.s8 %v2282
        %v2284 = vlaneseq
        %v2285 = vshrl.u32 %v2284, 7
        %v2286 = vsub.s32 %v2283, %v2285
        %v2287 = vrot.slane %v2279, %v2286
        %v2289 = vunpack.c.l.s4 1934713408
        %v2290 = vunpack.c.0.s8 %v2289
        %v2291 = vlaneseq
        %v2292 = vshrl.u32 %v2291, 7
        %v2293 = vsub.s32 %v2290, %v2292
        %v2294 = vrot.slane %v2280, %v2293
        %v2295 = vcombine.low %v2239, %v2271
        %v2296 = vcombine.high %v2239, %v2271
        %v2297 = vcombine.low %v2246, %v2278
        %v2298 = vcombine.high %v2246, %v2278
        %v2299 = vcombine.low %v2255, %v2287
        %v2300 = vcombine.high %v2255, %v2287
        %v2301 = vcombine.low %v2262, %v2294
        %v2302 = vcombine.high %v2262, %v2294
        %v2303 = vcombine.low %v1256, %v1264
        %v2304 = vcombine.high %v1256, %v1264
        %v2306 = vunpack.c.l.s4 1983009808
        %v2307 = vunpack.c.0.s8 %v2306
        %v2308 = vlaneseq
        %v2309 = vshrl.u32 %v2308, 7
        %v2310 = vsub.s32 %v2307, %v2309
        %v2311 = vrot.slane %v2303, %v2310
        %v2313 = vunpack.c.l.s4 1983009808
        %v2314 = vunpack.c.0.s8 %v2313
        %v2315 = vlaneseq
        %v2316 = vshrl.u32 %v2315, 7
        %v2317 = vsub.s32 %v2314, %v2316
        %v2318 = vrot.slane %v2304, %v2317
        %v2319 = vcombine.low %v1260, %v1268
        %v2320 = vcombine.high %v1260, %v1268
        %v2322 = vunpack.c.l.s4 1983009808
        %v2323 = vunpack.c.0.s8 %v2322
        %v2324 = vlaneseq
        %v2325 = vshrl.u32 %v2324, 7
        %v2326 = vsub.s32 %v2323, %v2325
        %v2327 = vrot.slane %v2319, %v2326
        %v2329 = vunpack.c.l.s4 1983009808
        %v2330 = vunpack.c.0.s8 %v2329
        %v2331 = vlaneseq
        %v2332 = vshrl.u32 %v2331, 7
        %v2333 = vsub.s32 %v2330, %v2332
        %v2334 = vrot.slane %v2320, %v2333
        %v2335 = vcombine.low %v1272, %v1280
        %v2336 = vcombine.high %v1272, %v1280
        %v2338 = vunpack.c.l.s4 1983009808
        %v2339 = vunpack.c.0.s8 %v2338
        %v2340 = vlaneseq
        %v2341 = vshrl.u32 %v2340, 7
        %v2342 = vsub.s32 %v2339, %v2341
        %v2343 = vrot.slane %v2335, %v2342
        %v2345 = vunpack.c.l.s4 1983009808
        %v2346 = vunpack.c.0.s8 %v2345
        %v2347 = vlaneseq
        %v2348 = vshrl.u32 %v2347, 7
        %v2349 = vsub.s32 %v2346, %v2348
        %v2350 = vrot.slane %v2336, %v2349
        %v2351 = vcombine.low %v1276, %v1284
        %v2352 = vcombine.high %v1276, %v1284
        %v2354 = vunpack.c.l.s4 1983009808
        %v2355 = vunpack.c.0.s8 %v2354
        %v2356 = vlaneseq
        %v2357 = vshrl.u32 %v2356, 7
        %v2358 = vsub.s32 %v2355, %v2357
        %v2359 = vrot.slane %v2351, %v2358
        %v2361 = vunpack.c.l.s4 1983009808
        %v2362 = vunpack.c.0.s8 %v2361
        %v2363 = vlaneseq
        %v2364 = vshrl.u32 %v2363, 7
        %v2365 = vsub.s32 %v2362, %v2364
        %v2366 = vrot.slane %v2352, %v2365
        %v2367 = vcombine.low %v2311, %v2327
        %v2368 = vcombine.high %v2311, %v2327
        %v2370 = vunpack.c.l.s4 1934713408
        %v2371 = vunpack.c.0.s8 %v2370
        %v2372 = vlaneseq
        %v2373 = vshrl.u32 %v2372, 7
        %v2374 = vsub.s32 %v2371, %v2373
        %v2375 = vrot.slane %v2367, %v2374
        %v2377 = vunpack.c.l.s4 1934713408
        %v2378 = vunpack.c.0.s8 %v2377
        %v2379 = vlaneseq
        %v2380 = vshrl.u32 %v2379, 7
        %v2381 = vsub.s32 %v2378, %v2380
        %v2382 = vrot.slane %v2368, %v2381
        %v2383 = vcombine.low %v2318, %v2334
        %v2384 = vcombine.high %v2318, %v2334
        %v2386 = vunpack.c.l.s4 1934713408
        %v2387 = vunpack.c.0.s8 %v2386
        %v2388 = vlaneseq
        %v2389 = vshrl.u32 %v2388, 7
        %v2390 = vsub.s32 %v2387, %v2389
        %v2391 = vrot.slane %v2383, %v2390
        %v2393 = vunpack.c.l.s4 1934713408
        %v2394 = vunpack.c.0.s8 %v2393
        %v2395 = vlaneseq
        %v2396 = vshrl.u32 %v2395, 7
        %v2397 = vsub.s32 %v2394, %v2396
        %v2398 = vrot.slane %v2384, %v2397
        %v2399 = vcombine.low %v2343, %v2359
        %v2400 = vcombine.high %v2343, %v2359
        %v2402 = vunpack.c.l.s4 1934713408
        %v2403 = vunpack.c.0.s8 %v2402
        %v2404 = vlaneseq
        %v2405 = vshrl.u32 %v2404, 7
        %v2406 = vsub.s32 %v2403, %v2405
        %v2407 = vrot.slane %v2399, %v2406
        %v2409 = vunpack.c.l.s4 1934713408
        %v2410 = vunpack.c.0.s8 %v2409
        %v2411 = vlaneseq
        %v2412 = vshrl.u32 %v2411, 7
        %v2413 = vsub.s32 %v2410, %v2412
        %v2414 = vrot.slane %v2400, %v2413
        %v2415 = vcombine.low %v2350, %v2366
        %v2416 = vcombine.high %v2350, %v2366
        %v2418 = vunpack.c.l.s4 1934713408
        %v2419 = vunpack.c.0.s8 %v2418
        %v2420 = vlaneseq
        %v2421 = vshrl.u32 %v2420, 7
        %v2422 = vsub.s32 %v2419, %v2421
        %v2423 = vrot.slane %v2415, %v2422
        %v2425 = vunpack.c.l.s4 1934713408
        %v2426 = vunpack.c.0.s8 %v2425
        %v2427 = vlaneseq
        %v2428 = vshrl.u32 %v2427, 7
        %v2429 = vsub.s32 %v2426, %v2428
        %v2430 = vrot.slane %v2416, %v2429
        %v2431 = vcombine.low %v2375, %v2407
        %v2432 = vcombine.high %v2375, %v2407
        %v2433 = vcombine.low %v2382, %v2414
        %v2434 = vcombine.high %v2382, %v2414
        %v2435 = vcombine.low %v2391, %v2423
        %v2436 = vcombine.high %v2391, %v2423
        %v2437 = vcombine.low %v2398, %v2430
        %v2438 = vcombine.high %v2398, %v2430
        %v2439 = vcombine.low %v1304, %v1312
        %v2440 = vcombine.high %v1304, %v1312
        %v2442 = vunpack.c.l.s4 1983009808
        %v2443 = vunpack.c.0.s8 %v2442
        %v2444 = vlaneseq
        %v2445 = vshrl.u32 %v2444, 7
        %v2446 = vsub.s32 %v2443, %v2445
        %v2447 = vrot.slane %v2439, %v2446
        %v2449 = vunpack.c.l.s4 1983009808
        %v2450 = vunpack.c.0.s8 %v2449
        %v2451 = vlaneseq
        %v2452 = vshrl.u32 %v2451, 7
        %v2453 = vsub.s32 %v2450, %v2452
        %v2454 = vrot.slane %v2440, %v2453
        %v2455 = vcombine.low %v1308, %v1316
        %v2456 = vcombine.high %v1308, %v1316
        %v2458 = vunpack.c.l.s4 1983009808
        %v2459 = vunpack.c.0.s8 %v2458
        %v2460 = vlaneseq
        %v2461 = vshrl.u32 %v2460, 7
        %v2462 = vsub.s32 %v2459, %v2461
        %v2463 = vrot.slane %v2455, %v2462
        %v2465 = vunpack.c.l.s4 1983009808
        %v2466 = vunpack.c.0.s8 %v2465
        %v2467 = vlaneseq
        %v2468 = vshrl.u32 %v2467, 7
        %v2469 = vsub.s32 %v2466, %v2468
        %v2470 = vrot.slane %v2456, %v2469
        %v2471 = vcombine.low %v1320, %v1328
        %v2472 = vcombine.high %v1320, %v1328
        %v2474 = vunpack.c.l.s4 1983009808
        %v2475 = vunpack.c.0.s8 %v2474
        %v2476 = vlaneseq
        %v2477 = vshrl.u32 %v2476, 7
        %v2478 = vsub.s32 %v2475, %v2477
        %v2479 = vrot.slane %v2471, %v2478
        %v2481 = vunpack.c.l.s4 1983009808
        %v2482 = vunpack.c.0.s8 %v2481
        %v2483 = vlaneseq
        %v2484 = vshrl.u32 %v2483, 7
        %v2485 = vsub.s32 %v2482, %v2484
        %v2486 = vrot.slane %v2472, %v2485
        %v2487 = vcombine.low %v1324, %v1332
        %v2488 = vcombine.high %v1324, %v1332
        %v2490 = vunpack.c.l.s4 1983009808
        %v2491 = vunpack.c.0.s8 %v2490
        %v2492 = vlaneseq
        %v2493 = vshrl.u32 %v2492, 7
        %v2494 = vsub.s32 %v2491, %v2493
        %v2495 = vrot.slane %v2487, %v2494
        %v2497 = vunpack.c.l.s4 1983009808
        %v2498 = vunpack.c.0.s8 %v2497
        %v2499 = vlaneseq
        %v2500 = vshrl.u32 %v2499, 7
        %v2501 = vsub.s32 %v2498, %v2500
        %v2502 = vrot.slane %v2488, %v2501
        %v2503 = vcombine.low %v2447, %v2463
        %v2504 = vcombine.high %v2447, %v2463
        %v2506 = vunpack.c.l.s4 1934713408
        %v2507 = vunpack.c.0.s8 %v2506
        %v2508 = vlaneseq
        %v2509 = vshrl.u32 %v2508, 7
        %v2510 = vsub.s32 %v2507, %v2509
        %v2511 = vrot.slane %v2503, %v2510
        %v2513 = vunpack.c.l.s4 1934713408
        %v2514 = vunpack.c.0.s8 %v2513
        %v2515 = vlaneseq
        %v2516 = vshrl.u32 %v2515, 7
        %v2517 = vsub.s32 %v2514, %v2516
        %v2518 = vrot.slane %v2504, %v2517
        %v2519 = vcombine.low %v2454, %v2470
        %v2520 = vcombine.high %v2454, %v2470
        %v2522 = vunpack.c.l.s4 1934713408
        %v2523 = vunpack.c.0.s8 %v2522
        %v2524 = vlaneseq
        %v2525 = vshrl.u32 %v2524, 7
        %v2526 = vsub.s32 %v2523, %v2525
        %v2527 = vrot.slane %v2519, %v2526
        %v2529 = vunpack.c.l.s4 1934713408
        %v2530 = vunpack.c.0.s8 %v2529
        %v2531 = vlaneseq
        %v2532 = vshrl.u32 %v2531, 7
        %v2533 = vsub.s32 %v2530, %v2532
        %v2534 = vrot.slane %v2520, %v2533
        %v2535 = vcombine.low %v2479, %v2495
        %v2536 = vcombine.high %v2479, %v2495
        %v2538 = vunpack.c.l.s4 1934713408
        %v2539 = vunpack.c.0.s8 %v2538
        %v2540 = vlaneseq
        %v2541 = vshrl.u32 %v2540, 7
        %v2542 = vsub.s32 %v2539, %v2541
        %v2543 = vrot.slane %v2535, %v2542
        %v2545 = vunpack.c.l.s4 1934713408
        %v2546 = vunpack.c.0.s8 %v2545
        %v2547 = vlaneseq
        %v2548 = vshrl.u32 %v2547, 7
        %v2549 = vsub.s32 %v2546, %v2548
        %v2550 = vrot.slane %v2536, %v2549
        %v2551 = vcombine.low %v2486, %v2502
        %v2552 = vcombine.high %v2486, %v2502
        %v2554 = vunpack.c.l.s4 1934713408
        %v2555 = vunpack.c.0.s8 %v2554
        %v2556 = vlaneseq
        %v2557 = vshrl.u32 %v2556, 7
        %v2558 = vsub.s32 %v2555, %v2557
        %v2559 = vrot.slane %v2551, %v2558
        %v2561 = vunpack.c.l.s4 1934713408
        %v2562 = vunpack.c.0.s8 %v2561
        %v2563 = vlaneseq
        %v2564 = vshrl.u32 %v2563, 7
        %v2565 = vsub.s32 %v2562, %v2564
        %v2566 = vrot.slane %v2552, %v2565
        %v2567 = vcombine.low %v2511, %v2543
        %v2568 = vcombine.high %v2511, %v2543
        %v2569 = vcombine.low %v2518, %v2550
        %v2570 = vcombine.high %v2518, %v2550
        %v2571 = vcombine.low %v2527, %v2559
        %v2572 = vcombine.high %v2527, %v2559
        %v2573 = vcombine.low %v2534, %v2566
        %v2574 = vcombine.high %v2534, %v2566
        %v2575 = vcombine.low %v902, %v908
        %v2576 = vcombine.high %v902, %v908
        %v2578 = vunpack.c.l.s4 1983009808
        %v2579 = vunpack.c.0.s8 %v2578
        %v2580 = vlaneseq
        %v2581 = vshrl.u32 %v2580, 7
        %v2582 = vsub.s32 %v2579, %v2581
        %v2583 = vrot.slane %v2575, %v2582
        %v2585 = vunpack.c.l.s4 1983009808
        %v2586 = vunpack.c.0.s8 %v2585
        %v2587 = vlaneseq
        %v2588 = vshrl.u32 %v2587, 7
        %v2589 = vsub.s32 %v2586, %v2588
        %v2590 = vrot.slane %v2576, %v2589
        %v2591 = vcombine.low %v905, %v911
        %v2592 = vcombine.high %v905, %v911
        %v2594 = vunpack.c.l.s4 1983009808
        %v2595 = vunpack.c.0.s8 %v2594
        %v2596 = vlaneseq
        %v2597 = vshrl.u32 %v2596, 7
        %v2598 = vsub.s32 %v2595, %v2597
        %v2599 = vrot.slane %v2591, %v2598
        %v2601 = vunpack.c.l.s4 1983009808
        %v2602 = vunpack.c.0.s8 %v2601
        %v2603 = vlaneseq
        %v2604 = vshrl.u32 %v2603, 7
        %v2605 = vsub.s32 %v2602, %v2604
        %v2606 = vrot.slane %v2592, %v2605
        %v2607 = vcombine.low %v914, %v920
        %v2608 = vcombine.high %v914, %v920
        %v2610 = vunpack.c.l.s4 1983009808
        %v2611 = vunpack.c.0.s8 %v2610
        %v2612 = vlaneseq
        %v2613 = vshrl.u32 %v2612, 7
        %v2614 = vsub.s32 %v2611, %v2613
        %v2615 = vrot.slane %v2607, %v2614
        %v2617 = vunpack.c.l.s4 1983009808
        %v2618 = vunpack.c.0.s8 %v2617
        %v2619 = vlaneseq
        %v2620 = vshrl.u32 %v2619, 7
        %v2621 = vsub.s32 %v2618, %v2620
        %v2622 = vrot.slane %v2608, %v2621
        %v2623 = vcombine.low %v917, %v923
        %v2624 = vcombine.high %v917, %v923
        %v2626 = vunpack.c.l.s4 1983009808
        %v2627 = vunpack.c.0.s8 %v2626
        %v2628 = vlaneseq
        %v2629 = vshrl.u32 %v2628, 7
        %v2630 = vsub.s32 %v2627, %v2629
        %v2631 = vrot.slane %v2623, %v2630
        %v2633 = vunpack.c.l.s4 1983009808
        %v2634 = vunpack.c.0.s8 %v2633
        %v2635 = vlaneseq
        %v2636 = vshrl.u32 %v2635, 7
        %v2637 = vsub.s32 %v2634, %v2636
        %v2638 = vrot.slane %v2624, %v2637
        %v2639 = vcombine.low %v2583, %v2599
        %v2640 = vcombine.high %v2583, %v2599
        %v2642 = vunpack.c.l.s4 1934713408
        %v2643 = vunpack.c.0.s8 %v2642
        %v2644 = vlaneseq
        %v2645 = vshrl.u32 %v2644, 7
        %v2646 = vsub.s32 %v2643, %v2645
        %v2647 = vrot.slane %v2639, %v2646
        %v2649 = vunpack.c.l.s4 1934713408
        %v2650 = vunpack.c.0.s8 %v2649
        %v2651 = vlaneseq
        %v2652 = vshrl.u32 %v2651, 7
        %v2653 = vsub.s32 %v2650, %v2652
        %v2654 = vrot.slane %v2640, %v2653
        %v2655 = vcombine.low %v2590, %v2606
        %v2656 = vcombine.high %v2590, %v2606
        %v2658 = vunpack.c.l.s4 1934713408
        %v2659 = vunpack.c.0.s8 %v2658
        %v2660 = vlaneseq
        %v2661 = vshrl.u32 %v2660, 7
        %v2662 = vsub.s32 %v2659, %v2661
        %v2663 = vrot.slane %v2655, %v2662
        %v2665 = vunpack.c.l.s4 1934713408
        %v2666 = vunpack.c.0.s8 %v2665
        %v2667 = vlaneseq
        %v2668 = vshrl.u32 %v2667, 7
        %v2669 = vsub.s32 %v2666, %v2668
        %v2670 = vrot.slane %v2656, %v2669
        %v2671 = vcombine.low %v2615, %v2631
        %v2672 = vcombine.high %v2615, %v2631
        %v2674 = vunpack.c.l.s4 1934713408
        %v2675 = vunpack.c.0.s8 %v2674
        %v2676 = vlaneseq
        %v2677 = vshrl.u32 %v2676, 7
        %v2678 = vsub.s32 %v2675, %v2677
        %v2679 = vrot.slane %v2671, %v2678
        %v2681 = vunpack.c.l.s4 1934713408
        %v2682 = vunpack.c.0.s8 %v2681
        %v2683 = vlaneseq
        %v2684 = vshrl.u32 %v2683, 7
        %v2685 = vsub.s32 %v2682, %v2684
        %v2686 = vrot.slane %v2672, %v2685
        %v2687 = vcombine.low %v2622, %v2638
        %v2688 = vcombine.high %v2622, %v2638
        %v2690 = vunpack.c.l.s4 1934713408
        %v2691 = vunpack.c.0.s8 %v2690
        %v2692 = vlaneseq
        %v2693 = vshrl.u32 %v2692, 7
        %v2694 = vsub.s32 %v2691, %v2693
        %v2695 = vrot.slane %v2687, %v2694
        %v2697 = vunpack.c.l.s4 1934713408
        %v2698 = vunpack.c.0.s8 %v2697
        %v2699 = vlaneseq
        %v2700 = vshrl.u32 %v2699, 7
        %v2701 = vsub.s32 %v2698, %v2700
        %v2702 = vrot.slane %v2688, %v2701
        %v2703 = vcombine.low %v2647, %v2679
        %v2704 = vcombine.high %v2647, %v2679
        %v2705 = vcombine.low %v2654, %v2686
        %v2706 = vcombine.high %v2654, %v2686
        %v2707 = vcombine.low %v2663, %v2695
        %v2708 = vcombine.high %v2663, %v2695
        %v2709 = vcombine.low %v2670, %v2702
        %v2710 = vcombine.high %v2670, %v2702
        %v2711 = vcombine.low %v944, %v952
        %v2712 = vcombine.high %v944, %v952
        %v2714 = vunpack.c.l.s4 1983009808
        %v2715 = vunpack.c.0.s8 %v2714
        %v2716 = vlaneseq
        %v2717 = vshrl.u32 %v2716, 7
        %v2718 = vsub.s32 %v2715, %v2717
        %v2719 = vrot.slane %v2711, %v2718
        %v2721 = vunpack.c.l.s4 1983009808
        %v2722 = vunpack.c.0.s8 %v2721
        %v2723 = vlaneseq
        %v2724 = vshrl.u32 %v2723, 7
        %v2725 = vsub.s32 %v2722, %v2724
        %v2726 = vrot.slane %v2712, %v2725
        %v2727 = vcombine.low %v948, %v956
        %v2728 = vcombine.high %v948, %v956
        %v2730 = vunpack.c.l.s4 1983009808
        %v2731 = vunpack.c.0.s8 %v2730
        %v2732 = vlaneseq
        %v2733 = vshrl.u32 %v2732, 7
        %v2734 = vsub.s32 %v2731, %v2733
        %v2735 = vrot.slane %v2727, %v2734
        %v2737 = vunpack.c.l.s4 1983009808
        %v2738 = vunpack.c.0.s8 %v2737
        %v2739 = vlaneseq
        %v2740 = vshrl.u32 %v2739, 7
        %v2741 = vsub.s32 %v2738, %v2740
        %v2742 = vrot.slane %v2728, %v2741
        %v2743 = vcombine.low %v960, %v968
        %v2744 = vcombine.high %v960, %v968
        %v2746 = vunpack.c.l.s4 1983009808
        %v2747 = vunpack.c.0.s8 %v2746
        %v2748 = vlaneseq
        %v2749 = vshrl.u32 %v2748, 7
        %v2750 = vsub.s32 %v2747, %v2749
        %v2751 = vrot.slane %v2743, %v2750
        %v2753 = vunpack.c.l.s4 1983009808
        %v2754 = vunpack.c.0.s8 %v2753
        %v2755 = vlaneseq
        %v2756 = vshrl.u32 %v2755, 7
        %v2757 = vsub.s32 %v2754, %v2756
        %v2758 = vrot.slane %v2744, %v2757
        %v2759 = vcombine.low %v964, %v972
        %v2760 = vcombine.high %v964, %v972
        %v2762 = vunpack.c.l.s4 1983009808
        %v2763 = vunpack.c.0.s8 %v2762
        %v2764 = vlaneseq
        %v2765 = vshrl.u32 %v2764, 7
        %v2766 = vsub.s32 %v2763, %v2765
        %v2767 = vrot.slane %v2759, %v2766
        %v2769 = vunpack.c.l.s4 1983009808
        %v2770 = vunpack.c.0.s8 %v2769
        %v2771 = vlaneseq
        %v2772 = vshrl.u32 %v2771, 7
        %v2773 = vsub.s32 %v2770, %v2772
        %v2774 = vrot.slane %v2760, %v2773
        %v2775 = vcombine.low %v2719, %v2735
        %v2776 = vcombine.high %v2719, %v2735
        %v2778 = vunpack.c.l.s4 1934713408
        %v2779 = vunpack.c.0.s8 %v2778
        %v2780 = vlaneseq
        %v2781 = vshrl.u32 %v2780, 7
        %v2782 = vsub.s32 %v2779, %v2781
        %v2783 = vrot.slane %v2775, %v2782
        %v2785 = vunpack.c.l.s4 1934713408
        %v2786 = vunpack.c.0.s8 %v2785
        %v2787 = vlaneseq
        %v2788 = vshrl.u32 %v2787, 7
        %v2789 = vsub.s32 %v2786, %v2788
        %v2790 = vrot.slane %v2776, %v2789
        %v2791 = vcombine.low %v2726, %v2742
        %v2792 = vcombine.high %v2726, %v2742
        %v2794 = vunpack.c.l.s4 1934713408
        %v2795 = vunpack.c.0.s8 %v2794
        %v2796 = vlaneseq
        %v2797 = vshrl.u32 %v2796, 7
        %v2798 = vsub.s32 %v2795, %v2797
        %v2799 = vrot.slane %v2791, %v2798
        %v2801 = vunpack.c.l.s4 1934713408
        %v2802 = vunpack.c.0.s8 %v2801
        %v2803 = vlaneseq
        %v2804 = vshrl.u32 %v2803, 7
        %v2805 = vsub.s32 %v2802, %v2804
        %v2806 = vrot.slane %v2792, %v2805
        %v2807 = vcombine.low %v2751, %v2767
        %v2808 = vcombine.high %v2751, %v2767
        %v2810 = vunpack.c.l.s4 1934713408
        %v2811 = vunpack.c.0.s8 %v2810
        %v2812 = vlaneseq
        %v2813 = vshrl.u32 %v2812, 7
        %v2814 = vsub.s32 %v2811, %v2813
        %v2815 = vrot.slane %v2807, %v2814
        %v2817 = vunpack.c.l.s4 1934713408
        %v2818 = vunpack.c.0.s8 %v2817
        %v2819 = vlaneseq
        %v2820 = vshrl.u32 %v2819, 7
        %v2821 = vsub.s32 %v2818, %v2820
        %v2822 = vrot.slane %v2808, %v2821
        %v2823 = vcombine.low %v2758, %v2774
        %v2824 = vcombine.high %v2758, %v2774
        %v2826 = vunpack.c.l.s4 1934713408
        %v2827 = vunpack.c.0.s8 %v2826
        %v2828 = vlaneseq
        %v2829 = vshrl.u32 %v2828, 7
        %v2830 = vsub.s32 %v2827, %v2829
        %v2831 = vrot.slane %v2823, %v2830
        %v2833 = vunpack.c.l.s4 1934713408
        %v2834 = vunpack.c.0.s8 %v2833
        %v2835 = vlaneseq
        %v2836 = vshrl.u32 %v2835, 7
        %v2837 = vsub.s32 %v2834, %v2836
        %v2838 = vrot.slane %v2824, %v2837
        %v2839 = vcombine.low %v2783, %v2815
        %v2840 = vcombine.high %v2783, %v2815
        %v2841 = vcombine.low %v2790, %v2822
        %v2842 = vcombine.high %v2790, %v2822
        %v2843 = vcombine.low %v2799, %v2831
        %v2844 = vcombine.high %v2799, %v2831
        %v2845 = vcombine.low %v2806, %v2838
        %v2846 = vcombine.high %v2806, %v2838
        %v2847 = vcombine.low %v992, %v1000
        %v2848 = vcombine.high %v992, %v1000
        %v2850 = vunpack.c.l.s4 1983009808
        %v2851 = vunpack.c.0.s8 %v2850
        %v2852 = vlaneseq
        %v2853 = vshrl.u32 %v2852, 7
        %v2854 = vsub.s32 %v2851, %v2853
        %v2855 = vrot.slane %v2847, %v2854
        %v2857 = vunpack.c.l.s4 1983009808
        %v2858 = vunpack.c.0.s8 %v2857
        %v2859 = vlaneseq
        %v2860 = vshrl.u32 %v2859, 7
        %v2861 = vsub.s32 %v2858, %v2860
        %v2862 = vrot.slane %v2848, %v2861
        %v2863 = vcombine.low %v996, %v1004
        %v2864 = vcombine.high %v996, %v1004
        %v2866 = vunpack.c.l.s4 1983009808
        %v2867 = vunpack.c.0.s8 %v2866
        %v2868 = vlaneseq
        %v2869 = vshrl.u32 %v2868, 7
        %v2870 = vsub.s32 %v2867, %v2869
        %v2871 = vrot.slane %v2863, %v2870
        %v2873 = vunpack.c.l.s4 1983009808
        %v2874 = vunpack.c.0.s8 %v2873
        %v2875 = vlaneseq
        %v2876 = vshrl.u32 %v2875, 7
        %v2877 = vsub.s32 %v2874, %v2876
        %v2878 = vrot.slane %v2864, %v2877
        %v2879 = vcombine.low %v1008, %v1016
        %v2880 = vcombine.high %v1008, %v1016
        %v2882 = vunpack.c.l.s4 1983009808
        %v2883 = vunpack.c.0.s8 %v2882
        %v2884 = vlaneseq
        %v2885 = vshrl.u32 %v2884, 7
        %v2886 = vsub.s32 %v2883, %v2885
        %v2887 = vrot.slane %v2879, %v2886
        %v2889 = vunpack.c.l.s4 1983009808
        %v2890 = vunpack.c.0.s8 %v2889
        %v2891 = vlaneseq
        %v2892 = vshrl.u32 %v2891, 7
        %v2893 = vsub.s32 %v2890, %v2892
        %v2894 = vrot.slane %v2880, %v2893
        %v2895 = vcombine.low %v1012, %v1020
        %v2896 = vcombine.high %v1012, %v1020
        %v2898 = vunpack.c.l.s4 1983009808
        %v2899 = vunpack.c.0.s8 %v2898
        %v2900 = vlaneseq
        %v2901 = vshrl.u32 %v2900, 7
        %v2902 = vsub.s32 %v2899, %v2901
        %v2903 = vrot.slane %v2895, %v2902
        %v2905 = vunpack.c.l.s4 1983009808
        %v2906 = vunpack.c.0.s8 %v2905
        %v2907 = vlaneseq
        %v2908 = vshrl.u32 %v2907, 7
        %v2909 = vsub.s32 %v2906, %v2908
        %v2910 = vrot.slane %v2896, %v2909
        %v2911 = vcombine.low %v2855, %v2871
        %v2912 = vcombine.high %v2855, %v2871
        %v2914 = vunpack.c.l.s4 1934713408
        %v2915 = vunpack.c.0.s8 %v2914
        %v2916 = vlaneseq
        %v2917 = vshrl.u32 %v2916, 7
        %v2918 = vsub.s32 %v2915, %v2917
        %v2919 = vrot.slane %v2911, %v2918
        %v2921 = vunpack.c.l.s4 1934713408
        %v2922 = vunpack.c.0.s8 %v2921
        %v2923 = vlaneseq
        %v2924 = vshrl.u32 %v2923, 7
        %v2925 = vsub.s32 %v2922, %v2924
        %v2926 = vrot.slane %v2912, %v2925
        %v2927 = vcombine.low %v2862, %v2878
        %v2928 = vcombine.high %v2862, %v2878
        %v2930 = vunpack.c.l.s4 1934713408
        %v2931 = vunpack.c.0.s8 %v2930
        %v2932 = vlaneseq
        %v2933 = vshrl.u32 %v2932, 7
        %v2934 = vsub.s32 %v2931, %v2933
        %v2935 = vrot.slane %v2927, %v2934
        %v2937 = vunpack.c.l.s4 1934713408
        %v2938 = vunpack.c.0.s8 %v2937
        %v2939 = vlaneseq
        %v2940 = vshrl.u32 %v2939, 7
        %v2941 = vsub.s32 %v2938, %v2940
        %v2942 = vrot.slane %v2928, %v2941
        %v2943 = vcombine.low %v2887, %v2903
        %v2944 = vcombine.high %v2887, %v2903
        %v2946 = vunpack.c.l.s4 1934713408
        %v2947 = vunpack.c.0.s8 %v2946
        %v2948 = vlaneseq
        %v2949 = vshrl.u32 %v2948, 7
        %v2950 = vsub.s32 %v2947, %v2949
        %v2951 = vrot.slane %v2943, %v2950
        %v2953 = vunpack.c.l.s4 1934713408
        %v2954 = vunpack.c.0.s8 %v2953
        %v2955 = vlaneseq
        %v2956 = vshrl.u32 %v2955, 7
        %v2957 = vsub.s32 %v2954, %v2956
        %v2958 = vrot.slane %v2944, %v2957
        %v2959 = vcombine.low %v2894, %v2910
        %v2960 = vcombine.high %v2894, %v2910
        %v2962 = vunpack.c.l.s4 1934713408
        %v2963 = vunpack.c.0.s8 %v2962
        %v2964 = vlaneseq
        %v2965 = vshrl.u32 %v2964, 7
        %v2966 = vsub.s32 %v2963, %v2965
        %v2967 = vrot.slane %v2959, %v2966
        %v2969 = vunpack.c.l.s4 1934713408
        %v2970 = vunpack.c.0.s8 %v2969
        %v2971 = vlaneseq
        %v2972 = vshrl.u32 %v2971, 7
        %v2973 = vsub.s32 %v2970, %v2972
        %v2974 = vrot.slane %v2960, %v2973
        %v2975 = vcombine.low %v2919, %v2951
        %v2976 = vcombine.high %v2919, %v2951
        %v2977 = vcombine.low %v2926, %v2958
        %v2978 = vcombine.high %v2926, %v2958
        %v2979 = vcombine.low %v2935, %v2967
        %v2980 = vcombine.high %v2935, %v2967
        %v2981 = vcombine.low %v2942, %v2974
        %v2982 = vcombine.high %v2942, %v2974
        %v2983 = vcombine.low %v1050, %v1060
        %v2984 = vcombine.high %v1050, %v1060
        %v2986 = vunpack.c.l.s4 1983009808
        %v2987 = vunpack.c.0.s8 %v2986
        %v2988 = vlaneseq
        %v2989 = vshrl.u32 %v2988, 7
        %v2990 = vsub.s32 %v2987, %v2989
        %v2991 = vrot.slane %v2983, %v2990
        %v2993 = vunpack.c.l.s4 1983009808
        %v2994 = vunpack.c.0.s8 %v2993
        %v2995 = vlaneseq
        %v2996 = vshrl.u32 %v2995, 7
        %v2997 = vsub.s32 %v2994, %v2996
        %v2998 = vrot.slane %v2984, %v2997
        %v2999 = vcombine.low %v1055, %v1065
        %v3000 = vcombine.high %v1055, %v1065
        %v3002 = vunpack.c.l.s4 1983009808
        %v3003 = vunpack.c.0.s8 %v3002
        %v3004 = vlaneseq
        %v3005 = vshrl.u32 %v3004, 7
        %v3006 = vsub.s32 %v3003, %v3005
        %v3007 = vrot.slane %v2999, %v3006
        %v3009 = vunpack.c.l.s4 1983009808
        %v3010 = vunpack.c.0.s8 %v3009
        %v3011 = vlaneseq
        %v3012 = vshrl.u32 %v3011, 7
        %v3013 = vsub.s32 %v3010, %v3012
        %v3014 = vrot.slane %v3000, %v3013
        %v3015 = vcombine.low %v1070, %v1080
        %v3016 = vcombine.high %v1070, %v1080
        %v3018 = vunpack.c.l.s4 1983009808
        %v3019 = vunpack.c.0.s8 %v3018
        %v3020 = vlaneseq
        %v3021 = vshrl.u32 %v3020, 7
        %v3022 = vsub.s32 %v3019, %v3021
        %v3023 = vrot.slane %v3015, %v3022
        %v3025 = vunpack.c.l.s4 1983009808
        %v3026 = vunpack.c.0.s8 %v3025
        %v3027 = vlaneseq
        %v3028 = vshrl.u32 %v3027, 7
        %v3029 = vsub.s32 %v3026, %v3028
        %v3030 = vrot.slane %v3016, %v3029
        %v3031 = vcombine.low %v1075, %v1085
        %v3032 = vcombine.high %v1075, %v1085
        %v3034 = vunpack.c.l.s4 1983009808
        %v3035 = vunpack.c.0.s8 %v3034
        %v3036 = vlaneseq
        %v3037 = vshrl.u32 %v3036, 7
        %v3038 = vsub.s32 %v3035, %v3037
        %v3039 = vrot.slane %v3031, %v3038
        %v3041 = vunpack.c.l.s4 1983009808
        %v3042 = vunpack.c.0.s8 %v3041
        %v3043 = vlaneseq
        %v3044 = vshrl.u32 %v3043, 7
        %v3045 = vsub.s32 %v3042, %v3044
        %v3046 = vrot.slane %v3032, %v3045
        %v3047 = vcombine.low %v2991, %v3007
        %v3048 = vcombine.high %v2991, %v3007
        %v3050 = vunpack.c.l.s4 1934713408
        %v3051 = vunpack.c.0.s8 %v3050
        %v3052 = vlaneseq
        %v3053 = vshrl.u32 %v3052, 7
        %v3054 = vsub.s32 %v3051, %v3053
        %v3055 = vrot.slane %v3047, %v3054
        %v3057 = vunpack.c.l.s4 1934713408
        %v3058 = vunpack.c.0.s8 %v3057
        %v3059 = vlaneseq
        %v3060 = vshrl.u32 %v3059, 7
        %v3061 = vsub.s32 %v3058, %v3060
        %v3062 = vrot.slane %v3048, %v3061
        %v3063 = vcombine.low %v2998, %v3014
        %v3064 = vcombine.high %v2998, %v3014
        %v3066 = vunpack.c.l.s4 1934713408
        %v3067 = vunpack.c.0.s8 %v3066
        %v3068 = vlaneseq
        %v3069 = vshrl.u32 %v3068, 7
        %v3070 = vsub.s32 %v3067, %v3069
        %v3071 = vrot.slane %v3063, %v3070
        %v3073 = vunpack.c.l.s4 1934713408
        %v3074 = vunpack.c.0.s8 %v3073
        %v3075 = vlaneseq
        %v3076 = vshrl.u32 %v3075, 7
        %v3077 = vsub.s32 %v3074, %v3076
        %v3078 = vrot.slane %v3064, %v3077
        %v3079 = vcombine.low %v3023, %v3039
        %v3080 = vcombine.high %v3023, %v3039
        %v3082 = vunpack.c.l.s4 1934713408
        %v3083 = vunpack.c.0.s8 %v3082
        %v3084 = vlaneseq
        %v3085 = vshrl.u32 %v3084, 7
        %v3086 = vsub.s32 %v3083, %v3085
        %v3087 = vrot.slane %v3079, %v3086
        %v3089 = vunpack.c.l.s4 1934713408
        %v3090 = vunpack.c.0.s8 %v3089
        %v3091 = vlaneseq
        %v3092 = vshrl.u32 %v3091, 7
        %v3093 = vsub.s32 %v3090, %v3092
        %v3094 = vrot.slane %v3080, %v3093
        %v3095 = vcombine.low %v3030, %v3046
        %v3096 = vcombine.high %v3030, %v3046
        %v3098 = vunpack.c.l.s4 1934713408
        %v3099 = vunpack.c.0.s8 %v3098
        %v3100 = vlaneseq
        %v3101 = vshrl.u32 %v3100, 7
        %v3102 = vsub.s32 %v3099, %v3101
        %v3103 = vrot.slane %v3095, %v3102
        %v3105 = vunpack.c.l.s4 1934713408
        %v3106 = vunpack.c.0.s8 %v3105
        %v3107 = vlaneseq
        %v3108 = vshrl.u32 %v3107, 7
        %v3109 = vsub.s32 %v3106, %v3108
        %v3110 = vrot.slane %v3096, %v3109
        %v3111 = vcombine.low %v3055, %v3087
        %v3112 = vcombine.high %v3055, %v3087
        %v3113 = vcombine.low %v3062, %v3094
        %v3114 = vcombine.high %v3062, %v3094
        %v3115 = vcombine.low %v3071, %v3103
        %v3116 = vcombine.high %v3071, %v3103
        %v3117 = vcombine.low %v3078, %v3110
        %v3118 = vcombine.high %v3078, %v3110
        %v3119 = vcombine.low %v1105, %v1113
        %v3120 = vcombine.high %v1105, %v1113
        %v3122 = vunpack.c.l.s4 1983009808
        %v3123 = vunpack.c.0.s8 %v3122
        %v3124 = vlaneseq
        %v3125 = vshrl.u32 %v3124, 7
        %v3126 = vsub.s32 %v3123, %v3125
        %v3127 = vrot.slane %v3119, %v3126
        %v3129 = vunpack.c.l.s4 1983009808
        %v3130 = vunpack.c.0.s8 %v3129
        %v3131 = vlaneseq
        %v3132 = vshrl.u32 %v3131, 7
        %v3133 = vsub.s32 %v3130, %v3132
        %v3134 = vrot.slane %v3120, %v3133
        %v3135 = vcombine.low %v1109, %v1117
        %v3136 = vcombine.high %v1109, %v1117
        %v3138 = vunpack.c.l.s4 1983009808
        %v3139 = vunpack.c.0.s8 %v3138
        %v3140 = vlaneseq
        %v3141 = vshrl.u32 %v3140, 7
        %v3142 = vsub.s32 %v3139, %v3141
        %v3143 = vrot.slane %v3135, %v3142
        %v3145 = vunpack.c.l.s4 1983009808
        %v3146 = vunpack.c.0.s8 %v3145
        %v3147 = vlaneseq
        %v3148 = vshrl.u32 %v3147, 7
        %v3149 = vsub.s32 %v3146, %v3148
        %v3150 = vrot.slane %v3136, %v3149
        %v3151 = vcombine.low %v1121, %v1129
        %v3152 = vcombine.high %v1121, %v1129
        %v3154 = vunpack.c.l.s4 1983009808
        %v3155 = vunpack.c.0.s8 %v3154
        %v3156 = vlaneseq
        %v3157 = vshrl.u32 %v3156, 7
        %v3158 = vsub.s32 %v3155, %v3157
        %v3159 = vrot.slane %v3151, %v3158
        %v3161 = vunpack.c.l.s4 1983009808
        %v3162 = vunpack.c.0.s8 %v3161
        %v3163 = vlaneseq
        %v3164 = vshrl.u32 %v3163, 7
        %v3165 = vsub.s32 %v3162, %v3164
        %v3166 = vrot.slane %v3152, %v3165
        %v3167 = vcombine.low %v1125, %v1133
        %v3168 = vcombine.high %v1125, %v1133
        %v3170 = vunpack.c.l.s4 1983009808
        %v3171 = vunpack.c.0.s8 %v3170
        %v3172 = vlaneseq
        %v3173 = vshrl.u32 %v3172, 7
        %v3174 = vsub.s32 %v3171, %v3173
        %v3175 = vrot.slane %v3167, %v3174
        %v3177 = vunpack.c.l.s4 1983009808
        %v3178 = vunpack.c.0.s8 %v3177
        %v3179 = vlaneseq
        %v3180 = vshrl.u32 %v3179, 7
        %v3181 = vsub.s32 %v3178, %v3180
        %v3182 = vrot.slane %v3168, %v3181
        %v3183 = vcombine.low %v3127, %v3143
        %v3184 = vcombine.high %v3127, %v3143
        %v3186 = vunpack.c.l.s4 1934713408
        %v3187 = vunpack.c.0.s8 %v3186
        %v3188 = vlaneseq
        %v3189 = vshrl.u32 %v3188, 7
        %v3190 = vsub.s32 %v3187, %v3189
        %v3191 = vrot.slane %v3183, %v3190
        %v3193 = vunpack.c.l.s4 1934713408
        %v3194 = vunpack.c.0.s8 %v3193
        %v3195 = vlaneseq
        %v3196 = vshrl.u32 %v3195, 7
        %v3197 = vsub.s32 %v3194, %v3196
        %v3198 = vrot.slane %v3184, %v3197
        %v3199 = vcombine.low %v3134, %v3150
        %v3200 = vcombine.high %v3134, %v3150
        %v3202 = vunpack.c.l.s4 1934713408
        %v3203 = vunpack.c.0.s8 %v3202
        %v3204 = vlaneseq
        %v3205 = vshrl.u32 %v3204, 7
        %v3206 = vsub.s32 %v3203, %v3205
        %v3207 = vrot.slane %v3199, %v3206
        %v3209 = vunpack.c.l.s4 1934713408
        %v3210 = vunpack.c.0.s8 %v3209
        %v3211 = vlaneseq
        %v3212 = vshrl.u32 %v3211, 7
        %v3213 = vsub.s32 %v3210, %v3212
        %v3214 = vrot.slane %v3200, %v3213
        %v3215 = vcombine.low %v3159, %v3175
        %v3216 = vcombine.high %v3159, %v3175
        %v3218 = vunpack.c.l.s4 1934713408
        %v3219 = vunpack.c.0.s8 %v3218
        %v3220 = vlaneseq
        %v3221 = vshrl.u32 %v3220, 7
        %v3222 = vsub.s32 %v3219, %v3221
        %v3223 = vrot.slane %v3215, %v3222
        %v3225 = vunpack.c.l.s4 1934713408
        %v3226 = vunpack.c.0.s8 %v3225
        %v3227 = vlaneseq
        %v3228 = vshrl.u32 %v3227, 7
        %v3229 = vsub.s32 %v3226, %v3228
        %v3230 = vrot.slane %v3216, %v3229
        %v3231 = vcombine.low %v3166, %v3182
        %v3232 = vcombine.high %v3166, %v3182
        %v3234 = vunpack.c.l.s4 1934713408
        %v3235 = vunpack.c.0.s8 %v3234
        %v3236 = vlaneseq
        %v3237 = vshrl.u32 %v3236, 7
        %v3238 = vsub.s32 %v3235, %v3237
        %v3239 = vrot.slane %v3231, %v3238
        %v3241 = vunpack.c.l.s4 1934713408
        %v3242 = vunpack.c.0.s8 %v3241
        %v3243 = vlaneseq
        %v3244 = vshrl.u32 %v3243, 7
        %v3245 = vsub.s32 %v3242, %v3244
        %v3246 = vrot.slane %v3232, %v3245
        %v3247 = vcombine.low %v3191, %v3223
        %v3248 = vcombine.high %v3191, %v3223
        %v3249 = vcombine.low %v3198, %v3230
        %v3250 = vcombine.high %v3198, %v3230
        %v3251 = vcombine.low %v3207, %v3239
        %v3252 = vcombine.high %v3207, %v3239
        %v3253 = vcombine.low %v3214, %v3246
        %v3254 = vcombine.high %v3214, %v3246
        %v3255 = vcombine.low %v1153, %v1161
        %v3256 = vcombine.high %v1153, %v1161
        %v3258 = vunpack.c.l.s4 1983009808
        %v3259 = vunpack.c.0.s8 %v3258
        %v3260 = vlaneseq
        %v3261 = vshrl.u32 %v3260, 7
        %v3262 = vsub.s32 %v3259, %v3261
        %v3263 = vrot.slane %v3255, %v3262
        %v3265 = vunpack.c.l.s4 1983009808
        %v3266 = vunpack.c.0.s8 %v3265
        %v3267 = vlaneseq
        %v3268 = vshrl.u32 %v3267, 7
        %v3269 = vsub.s32 %v3266, %v3268
        %v3270 = vrot.slane %v3256, %v3269
        %v3271 = vcombine.low %v1157, %v1165
        %v3272 = vcombine.high %v1157, %v1165
        %v3274 = vunpack.c.l.s4 1983009808
        %v3275 = vunpack.c.0.s8 %v3274
        %v3276 = vlaneseq
        %v3277 = vshrl.u32 %v3276, 7
        %v3278 = vsub.s32 %v3275, %v3277
        %v3279 = vrot.slane %v3271, %v3278
        %v3281 = vunpack.c.l.s4 1983009808
        %v3282 = vunpack.c.0.s8 %v3281
        %v3283 = vlaneseq
        %v3284 = vshrl.u32 %v3283, 7
        %v3285 = vsub.s32 %v3282, %v3284
        %v3286 = vrot.slane %v3272, %v3285
        %v3287 = vcombine.low %v1169, %v1177
        %v3288 = vcombine.high %v1169, %v1177
        %v3290 = vunpack.c.l.s4 1983009808
        %v3291 = vunpack.c.0.s8 %v3290
        %v3292 = vlaneseq
        %v3293 = vshrl.u32 %v3292, 7
        %v3294 = vsub.s32 %v3291, %v3293
        %v3295 = vrot.slane %v3287, %v3294
        %v3297 = vunpack.c.l.s4 1983009808
        %v3298 = vunpack.c.0.s8 %v3297
        %v3299 = vlaneseq
        %v3300 = vshrl.u32 %v3299, 7
        %v3301 = vsub.s32 %v3298, %v3300
        %v3302 = vrot.slane %v3288, %v3301
        %v3303 = vcombine.low %v1173, %v1181
        %v3304 = vcombine.high %v1173, %v1181
        %v3306 = vunpack.c.l.s4 1983009808
        %v3307 = vunpack.c.0.s8 %v3306
        %v3308 = vlaneseq
        %v3309 = vshrl.u32 %v3308, 7
        %v3310 = vsub.s32 %v3307, %v3309
        %v3311 = vrot.slane %v3303, %v3310
        %v3313 = vunpack.c.l.s4 1983009808
        %v3314 = vunpack.c.0.s8 %v3313
        %v3315 = vlaneseq
        %v3316 = vshrl.u32 %v3315, 7
        %v3317 = vsub.s32 %v3314, %v3316
        %v3318 = vrot.slane %v3304, %v3317
        %v3319 = vcombine.low %v3263, %v3279
        %v3320 = vcombine.high %v3263, %v3279
        %v3322 = vunpack.c.l.s4 1934713408
        %v3323 = vunpack.c.0.s8 %v3322
        %v3324 = vlaneseq
        %v3325 = vshrl.u32 %v3324, 7
        %v3326 = vsub.s32 %v3323, %v3325
        %v3327 = vrot.slane %v3319, %v3326
        %v3329 = vunpack.c.l.s4 1934713408
        %v3330 = vunpack.c.0.s8 %v3329
        %v3331 = vlaneseq
        %v3332 = vshrl.u32 %v3331, 7
        %v3333 = vsub.s32 %v3330, %v3332
        %v3334 = vrot.slane %v3320, %v3333
        %v3335 = vcombine.low %v3270, %v3286
        %v3336 = vcombine.high %v3270, %v3286
        %v3338 = vunpack.c.l.s4 1934713408
        %v3339 = vunpack.c.0.s8 %v3338
        %v3340 = vlaneseq
        %v3341 = vshrl.u32 %v3340, 7
        %v3342 = vsub.s32 %v3339, %v3341
        %v3343 = vrot.slane %v3335, %v3342
        %v3345 = vunpack.c.l.s4 1934713408
        %v3346 = vunpack.c.0.s8 %v3345
        %v3347 = vlaneseq
        %v3348 = vshrl.u32 %v3347, 7
        %v3349 = vsub.s32 %v3346, %v3348
        %v3350 = vrot.slane %v3336, %v3349
        %v3351 = vcombine.low %v3295, %v3311
        %v3352 = vcombine.high %v3295, %v3311
        %v3354 = vunpack.c.l.s4 1934713408
        %v3355 = vunpack.c.0.s8 %v3354
        %v3356 = vlaneseq
        %v3357 = vshrl.u32 %v3356, 7
        %v3358 = vsub.s32 %v3355, %v3357
        %v3359 = vrot.slane %v3351, %v3358
        %v3361 = vunpack.c.l.s4 1934713408
        %v3362 = vunpack.c.0.s8 %v3361
        %v3363 = vlaneseq
        %v3364 = vshrl.u32 %v3363, 7
        %v3365 = vsub.s32 %v3362, %v3364
        %v3366 = vrot.slane %v3352, %v3365
        %v3367 = vcombine.low %v3302, %v3318
        %v3368 = vcombine.high %v3302, %v3318
        %v3370 = vunpack.c.l.s4 1934713408
        %v3371 = vunpack.c.0.s8 %v3370
        %v3372 = vlaneseq
        %v3373 = vshrl.u32 %v3372, 7
        %v3374 = vsub.s32 %v3371, %v3373
        %v3375 = vrot.slane %v3367, %v3374
        %v3377 = vunpack.c.l.s4 1934713408
        %v3378 = vunpack.c.0.s8 %v3377
        %v3379 = vlaneseq
        %v3380 = vshrl.u32 %v3379, 7
        %v3381 = vsub.s32 %v3378, %v3380
        %v3382 = vrot.slane %v3368, %v3381
        %v3383 = vcombine.low %v3327, %v3359
        %v3384 = vcombine.high %v3327, %v3359
        %v3385 = vcombine.low %v3334, %v3366
        %v3386 = vcombine.high %v3334, %v3366
        %v3387 = vcombine.low %v3343, %v3375
        %v3388 = vcombine.high %v3343, %v3375
        %v3389 = vcombine.low %v3350, %v3382
        %v3390 = vcombine.high %v3350, %v3382
        %v3391 = vcombine.low %v1203, %v1213
        %v3392 = vcombine.high %v1203, %v1213
        %v3394 = vunpack.c.l.s4 1983009808
        %v3395 = vunpack.c.0.s8 %v3394
        %v3396 = vlaneseq
        %v3397 = vshrl.u32 %v3396, 7
        %v3398 = vsub.s32 %v3395, %v3397
        %v3399 = vrot.slane %v3391, %v3398
        %v3401 = vunpack.c.l.s4 1983009808
        %v3402 = vunpack.c.0.s8 %v3401
        %v3403 = vlaneseq
        %v3404 = vshrl.u32 %v3403, 7
        %v3405 = vsub.s32 %v3402, %v3404
        %v3406 = vrot.slane %v3392, %v3405
        %v3407 = vcombine.low %v1208, %v1218
        %v3408 = vcombine.high %v1208, %v1218
        %v3410 = vunpack.c.l.s4 1983009808
        %v3411 = vunpack.c.0.s8 %v3410
        %v3412 = vlaneseq
        %v3413 = vshrl.u32 %v3412, 7
        %v3414 = vsub.s32 %v3411, %v3413
        %v3415 = vrot.slane %v3407, %v3414
        %v3417 = vunpack.c.l.s4 1983009808
        %v3418 = vunpack.c.0.s8 %v3417
        %v3419 = vlaneseq
        %v3420 = vshrl.u32 %v3419, 7
        %v3421 = vsub.s32 %v3418, %v3420
        %v3422 = vrot.slane %v3408, %v3421
        %v3423 = vcombine.low %v1223, %v1233
        %v3424 = vcombine.high %v1223, %v1233
        %v3426 = vunpack.c.l.s4 1983009808
        %v3427 = vunpack.c.0.s8 %v3426
        %v3428 = vlaneseq
        %v3429 = vshrl.u32 %v3428, 7
        %v3430 = vsub.s32 %v3427, %v3429
        %v3431 = vrot.slane %v3423, %v3430
        %v3433 = vunpack.c.l.s4 1983009808
        %v3434 = vunpack.c.0.s8 %v3433
        %v3435 = vlaneseq
        %v3436 = vshrl.u32 %v3435, 7
        %v3437 = vsub.s32 %v3434, %v3436
        %v3438 = vrot.slane %v3424, %v3437
        %v3439 = vcombine.low %v1228, %v1238
        %v3440 = vcombine.high %v1228, %v1238
        %v3442 = vunpack.c.l.s4 1983009808
        %v3443 = vunpack.c.0.s8 %v3442
        %v3444 = vlaneseq
        %v3445 = vshrl.u32 %v3444, 7
        %v3446 = vsub.s32 %v3443, %v3445
        %v3447 = vrot.slane %v3439, %v3446
        %v3449 = vunpack.c.l.s4 1983009808
        %v3450 = vunpack.c.0.s8 %v3449
        %v3451 = vlaneseq
        %v3452 = vshrl.u32 %v3451, 7
        %v3453 = vsub.s32 %v3450, %v3452
        %v3454 = vrot.slane %v3440, %v3453
        %v3455 = vcombine.low %v3399, %v3415
        %v3456 = vcombine.high %v3399, %v3415
        %v3458 = vunpack.c.l.s4 1934713408
        %v3459 = vunpack.c.0.s8 %v3458
        %v3460 = vlaneseq
        %v3461 = vshrl.u32 %v3460, 7
        %v3462 = vsub.s32 %v3459, %v3461
        %v3463 = vrot.slane %v3455, %v3462
        %v3465 = vunpack.c.l.s4 1934713408
        %v3466 = vunpack.c.0.s8 %v3465
        %v3467 = vlaneseq
        %v3468 = vshrl.u32 %v3467, 7
        %v3469 = vsub.s32 %v3466, %v3468
        %v3470 = vrot.slane %v3456, %v3469
        %v3471 = vcombine.low %v3406, %v3422
        %v3472 = vcombine.high %v3406, %v3422
        %v3474 = vunpack.c.l.s4 1934713408
        %v3475 = vunpack.c.0.s8 %v3474
        %v3476 = vlaneseq
        %v3477 = vshrl.u32 %v3476, 7
        %v3478 = vsub.s32 %v3475, %v3477
        %v3479 = vrot.slane %v3471, %v3478
        %v3481 = vunpack.c.l.s4 1934713408
        %v3482 = vunpack.c.0.s8 %v3481
        %v3483 = vlaneseq
        %v3484 = vshrl.u32 %v3483, 7
        %v3485 = vsub.s32 %v3482, %v3484
        %v3486 = vrot.slane %v3472, %v3485
        %v3487 = vcombine.low %v3431, %v3447
        %v3488 = vcombine.high %v3431, %v3447
        %v3490 = vunpack.c.l.s4 1934713408
        %v3491 = vunpack.c.0.s8 %v3490
        %v3492 = vlaneseq
        %v3493 = vshrl.u32 %v3492, 7
        %v3494 = vsub.s32 %v3491, %v3493
        %v3495 = vrot.slane %v3487, %v3494
        %v3497 = vunpack.c.l.s4 1934713408
        %v3498 = vunpack.c.0.s8 %v3497
        %v3499 = vlaneseq
        %v3500 = vshrl.u32 %v3499, 7
        %v3501 = vsub.s32 %v3498, %v3500
        %v3502 = vrot.slane %v3488, %v3501
        %v3503 = vcombine.low %v3438, %v3454
        %v3504 = vcombine.high %v3438, %v3454
        %v3506 = vunpack.c.l.s4 1934713408
        %v3507 = vunpack.c.0.s8 %v3506
        %v3508 = vlaneseq
        %v3509 = vshrl.u32 %v3508, 7
        %v3510 = vsub.s32 %v3507, %v3509
        %v3511 = vrot.slane %v3503, %v3510
        %v3513 = vunpack.c.l.s4 1934713408
        %v3514 = vunpack.c.0.s8 %v3513
        %v3515 = vlaneseq
        %v3516 = vshrl.u32 %v3515, 7
        %v3517 = vsub.s32 %v3514, %v3516
        %v3518 = vrot.slane %v3504, %v3517
        %v3519 = vcombine.low %v3463, %v3495
        %v3520 = vcombine.high %v3463, %v3495
        %v3521 = vcombine.low %v3470, %v3502
        %v3522 = vcombine.high %v3470, %v3502
        %v3523 = vcombine.low %v3479, %v3511
        %v3524 = vcombine.high %v3479, %v3511
        %v3525 = vcombine.low %v3486, %v3518
        %v3526 = vcombine.high %v3486, %v3518
        %v3527 = vcombine.low %v1258, %v1266
        %v3528 = vcombine.high %v1258, %v1266
        %v3530 = vunpack.c.l.s4 1983009808
        %v3531 = vunpack.c.0.s8 %v3530
        %v3532 = vlaneseq
        %v3533 = vshrl.u32 %v3532, 7
        %v3534 = vsub.s32 %v3531, %v3533
        %v3535 = vrot.slane %v3527, %v3534
        %v3537 = vunpack.c.l.s4 1983009808
        %v3538 = vunpack.c.0.s8 %v3537
        %v3539 = vlaneseq
        %v3540 = vshrl.u32 %v3539, 7
        %v3541 = vsub.s32 %v3538, %v3540
        %v3542 = vrot.slane %v3528, %v3541
        %v3543 = vcombine.low %v1262, %v1270
        %v3544 = vcombine.high %v1262, %v1270
        %v3546 = vunpack.c.l.s4 1983009808
        %v3547 = vunpack.c.0.s8 %v3546
        %v3548 = vlaneseq
        %v3549 = vshrl.u32 %v3548, 7
        %v3550 = vsub.s32 %v3547, %v3549
        %v3551 = vrot.slane %v3543, %v3550
        %v3553 = vunpack.c.l.s4 1983009808
        %v3554 = vunpack.c.0.s8 %v3553
        %v3555 = vlaneseq
        %v3556 = vshrl.u32 %v3555, 7
        %v3557 = vsub.s32 %v3554, %v3556
        %v3558 = vrot.slane %v3544, %v3557
        %v3559 = vcombine.low %v1274, %v1282
        %v3560 = vcombine.high %v1274, %v1282
        %v3562 = vunpack.c.l.s4 1983009808
        %v3563 = vunpack.c.0.s8 %v3562
        %v3564 = vlaneseq
        %v3565 = vshrl.u32 %v3564, 7
        %v3566 = vsub.s32 %v3563, %v3565
        %v3567 = vrot.slane %v3559, %v3566
        %v3569 = vunpack.c.l.s4 1983009808
        %v3570 = vunpack.c.0.s8 %v3569
        %v3571 = vlaneseq
        %v3572 = vshrl.u32 %v3571, 7
        %v3573 = vsub.s32 %v3570, %v3572
        %v3574 = vrot.slane %v3560, %v3573
        %v3575 = vcombine.low %v1278, %v1286
        %v3576 = vcombine.high %v1278, %v1286
        %v3578 = vunpack.c.l.s4 1983009808
        %v3579 = vunpack.c.0.s8 %v3578
        %v3580 = vlaneseq
        %v3581 = vshrl.u32 %v3580, 7
        %v3582 = vsub.s32 %v3579, %v3581
        %v3583 = vrot.slane %v3575, %v3582
        %v3585 = vunpack.c.l.s4 1983009808
        %v3586 = vunpack.c.0.s8 %v3585
        %v3587 = vlaneseq
        %v3588 = vshrl.u32 %v3587, 7
        %v3589 = vsub.s32 %v3586, %v3588
        %v3590 = vrot.slane %v3576, %v3589
        %v3591 = vcombine.low %v3535, %v3551
        %v3592 = vcombine.high %v3535, %v3551
        %v3594 = vunpack.c.l.s4 1934713408
        %v3595 = vunpack.c.0.s8 %v3594
        %v3596 = vlaneseq
        %v3597 = vshrl.u32 %v3596, 7
        %v3598 = vsub.s32 %v3595, %v3597
        %v3599 = vrot.slane %v3591, %v3598
        %v3601 = vunpack.c.l.s4 1934713408
        %v3602 = vunpack.c.0.s8 %v3601
        %v3603 = vlaneseq
        %v3604 = vshrl.u32 %v3603, 7
        %v3605 = vsub.s32 %v3602, %v3604
        %v3606 = vrot.slane %v3592, %v3605
        %v3607 = vcombine.low %v3542, %v3558
        %v3608 = vcombine.high %v3542, %v3558
        %v3610 = vunpack.c.l.s4 1934713408
        %v3611 = vunpack.c.0.s8 %v3610
        %v3612 = vlaneseq
        %v3613 = vshrl.u32 %v3612, 7
        %v3614 = vsub.s32 %v3611, %v3613
        %v3615 = vrot.slane %v3607, %v3614
        %v3617 = vunpack.c.l.s4 1934713408
        %v3618 = vunpack.c.0.s8 %v3617
        %v3619 = vlaneseq
        %v3620 = vshrl.u32 %v3619, 7
        %v3621 = vsub.s32 %v3618, %v3620
        %v3622 = vrot.slane %v3608, %v3621
        %v3623 = vcombine.low %v3567, %v3583
        %v3624 = vcombine.high %v3567, %v3583
        %v3626 = vunpack.c.l.s4 1934713408
        %v3627 = vunpack.c.0.s8 %v3626
        %v3628 = vlaneseq
        %v3629 = vshrl.u32 %v3628, 7
        %v3630 = vsub.s32 %v3627, %v3629
        %v3631 = vrot.slane %v3623, %v3630
        %v3633 = vunpack.c.l.s4 1934713408
        %v3634 = vunpack.c.0.s8 %v3633
        %v3635 = vlaneseq
        %v3636 = vshrl.u32 %v3635, 7
        %v3637 = vsub.s32 %v3634, %v3636
        %v3638 = vrot.slane %v3624, %v3637
        %v3639 = vcombine.low %v3574, %v3590
        %v3640 = vcombine.high %v3574, %v3590
        %v3642 = vunpack.c.l.s4 1934713408
        %v3643 = vunpack.c.0.s8 %v3642
        %v3644 = vlaneseq
        %v3645 = vshrl.u32 %v3644, 7
        %v3646 = vsub.s32 %v3643, %v3645
        %v3647 = vrot.slane %v3639, %v3646
        %v3649 = vunpack.c.l.s4 1934713408
        %v3650 = vunpack.c.0.s8 %v3649
        %v3651 = vlaneseq
        %v3652 = vshrl.u32 %v3651, 7
        %v3653 = vsub.s32 %v3650, %v3652
        %v3654 = vrot.slane %v3640, %v3653
        %v3655 = vcombine.low %v3599, %v3631
        %v3656 = vcombine.high %v3599, %v3631
        %v3657 = vcombine.low %v3606, %v3638
        %v3658 = vcombine.high %v3606, %v3638
        %v3659 = vcombine.low %v3615, %v3647
        %v3660 = vcombine.high %v3615, %v3647
        %v3661 = vcombine.low %v3622, %v3654
        %v3662 = vcombine.high %v3622, %v3654
        %v3663 = vcombine.low %v1306, %v1314
        %v3664 = vcombine.high %v1306, %v1314
        %v3666 = vunpack.c.l.s4 1983009808
        %v3667 = vunpack.c.0.s8 %v3666
        %v3668 = vlaneseq
        %v3669 = vshrl.u32 %v3668, 7
        %v3670 = vsub.s32 %v3667, %v3669
        %v3671 = vrot.slane %v3663, %v3670
        %v3673 = vunpack.c.l.s4 1983009808
        %v3674 = vunpack.c.0.s8 %v3673
        %v3675 = vlaneseq
        %v3676 = vshrl.u32 %v3675, 7
        %v3677 = vsub.s32 %v3674, %v3676
        %v3678 = vrot.slane %v3664, %v3677
        %v3679 = vcombine.low %v1310, %v1318
        %v3680 = vcombine.high %v1310, %v1318
        %v3682 = vunpack.c.l.s4 1983009808
        %v3683 = vunpack.c.0.s8 %v3682
        %v3684 = vlaneseq
        %v3685 = vshrl.u32 %v3684, 7
        %v3686 = vsub.s32 %v3683, %v3685
        %v3687 = vrot.slane %v3679, %v3686
        %v3689 = vunpack.c.l.s4 1983009808
        %v3690 = vunpack.c.0.s8 %v3689
        %v3691 = vlaneseq
        %v3692 = vshrl.u32 %v3691, 7
        %v3693 = vsub.s32 %v3690, %v3692
        %v3694 = vrot.slane %v3680, %v3693
        %v3695 = vcombine.low %v1322, %v1330
        %v3696 = vcombine.high %v1322, %v1330
        %v3698 = vunpack.c.l.s4 1983009808
        %v3699 = vunpack.c.0.s8 %v3698
        %v3700 = vlaneseq
        %v3701 = vshrl.u32 %v3700, 7
        %v3702 = vsub.s32 %v3699, %v3701
        %v3703 = vrot.slane %v3695, %v3702
        %v3705 = vunpack.c.l.s4 1983009808
        %v3706 = vunpack.c.0.s8 %v3705
        %v3707 = vlaneseq
        %v3708 = vshrl.u32 %v3707, 7
        %v3709 = vsub.s32 %v3706, %v3708
        %v3710 = vrot.slane %v3696, %v3709
        %v3711 = vcombine.low %v1326, %v1334
        %v3712 = vcombine.high %v1326, %v1334
        %v3714 = vunpack.c.l.s4 1983009808
        %v3715 = vunpack.c.0.s8 %v3714
        %v3716 = vlaneseq
        %v3717 = vshrl.u32 %v3716, 7
        %v3718 = vsub.s32 %v3715, %v3717
        %v3719 = vrot.slane %v3711, %v3718
        %v3721 = vunpack.c.l.s4 1983009808
        %v3722 = vunpack.c.0.s8 %v3721
        %v3723 = vlaneseq
        %v3724 = vshrl.u32 %v3723, 7
        %v3725 = vsub.s32 %v3722, %v3724
        %v3726 = vrot.slane %v3712, %v3725
        %v3727 = vcombine.low %v3671, %v3687
        %v3728 = vcombine.high %v3671, %v3687
        %v3730 = vunpack.c.l.s4 1934713408
        %v3731 = vunpack.c.0.s8 %v3730
        %v3732 = vlaneseq
        %v3733 = vshrl.u32 %v3732, 7
        %v3734 = vsub.s32 %v3731, %v3733
        %v3735 = vrot.slane %v3727, %v3734
        %v3737 = vunpack.c.l.s4 1934713408
        %v3738 = vunpack.c.0.s8 %v3737
        %v3739 = vlaneseq
        %v3740 = vshrl.u32 %v3739, 7
        %v3741 = vsub.s32 %v3738, %v3740
        %v3742 = vrot.slane %v3728, %v3741
        %v3743 = vcombine.low %v3678, %v3694
        %v3744 = vcombine.high %v3678, %v3694
        %v3746 = vunpack.c.l.s4 1934713408
        %v3747 = vunpack.c.0.s8 %v3746
        %v3748 = vlaneseq
        %v3749 = vshrl.u32 %v3748, 7
        %v3750 = vsub.s32 %v3747, %v3749
        %v3751 = vrot.slane %v3743, %v3750
        %v3753 = vunpack.c.l.s4 1934713408
        %v3754 = vunpack.c.0.s8 %v3753
        %v3755 = vlaneseq
        %v3756 = vshrl.u32 %v3755, 7
        %v3757 = vsub.s32 %v3754, %v3756
        %v3758 = vrot.slane %v3744, %v3757
        %v3759 = vcombine.low %v3703, %v3719
        %v3760 = vcombine.high %v3703, %v3719
        %v3762 = vunpack.c.l.s4 1934713408
        %v3763 = vunpack.c.0.s8 %v3762
        %v3764 = vlaneseq
        %v3765 = vshrl.u32 %v3764, 7
        %v3766 = vsub.s32 %v3763, %v3765
        %v3767 = vrot.slane %v3759, %v3766
        %v3769 = vunpack.c.l.s4 1934713408
        %v3770 = vunpack.c.0.s8 %v3769
        %v3771 = vlaneseq
        %v3772 = vshrl.u32 %v3771, 7
        %v3773 = vsub.s32 %v3770, %v3772
        %v3774 = vrot.slane %v3760, %v3773
        %v3775 = vcombine.low %v3710, %v3726
        %v3776 = vcombine.high %v3710, %v3726
        %v3778 = vunpack.c.l.s4 1934713408
        %v3779 = vunpack.c.0.s8 %v3778
        %v3780 = vlaneseq
        %v3781 = vshrl.u32 %v3780, 7
        %v3782 = vsub.s32 %v3779, %v3781
        %v3783 = vrot.slane %v3775, %v3782
        %v3785 = vunpack.c.l.s4 1934713408
        %v3786 = vunpack.c.0.s8 %v3785
        %v3787 = vlaneseq
        %v3788 = vshrl.u32 %v3787, 7
        %v3789 = vsub.s32 %v3786, %v3788
        %v3790 = vrot.slane %v3776, %v3789
        %v3791 = vcombine.low %v3735, %v3767
        %v3792 = vcombine.high %v3735, %v3767
        %v3793 = vcombine.low %v3742, %v3774
        %v3794 = vcombine.high %v3742, %v3774
        %v3795 = vcombine.low %v3751, %v3783
        %v3796 = vcombine.high %v3751, %v3783
        %v3797 = vcombine.low %v3758, %v3790
        %v3798 = vcombine.high %v3758, %v3790
        %3808 = vrot.lane.b32.xlu0 %v1480, 16
        %v3809 = vpop.permute.xlu0 %3808
        %3810 = vrot.lane.b32.xlu0 %v1616, 16
        %v3811 = vpop.permute.xlu0 %3810
        %3812 = vrot.lane.b32.xlu0 %v1752, 16
        %v3813 = vpop.permute.xlu0 %3812
        %3814 = vrot.lane.b32.xlu0 %v1888, 16
        %v3815 = vpop.permute.xlu0 %3814
        %3816 = vrot.lane.b32.xlu0 %v2024, 16
        %v3817 = vpop.permute.xlu0 %3816
        %3818 = vrot.lane.b32.xlu0 %v2160, 16
        %v3819 = vpop.permute.xlu0 %3818
        %3820 = vrot.lane.b32.xlu0 %v2296, 16
        %v3821 = vpop.permute.xlu0 %3820
        %3822 = vrot.lane.b32.xlu0 %v2432, 16
        %v3823 = vpop.permute.xlu0 %3822
        %3824 = vrot.lane.b32.xlu0 %v2568, 16
        %v3825 = vpop.permute.xlu0 %3824
        %3844 = vrot.lane.b32.xlu0 %v1481, 32
        %v3845 = vpop.permute.xlu0 %3844
        %3846 = vrot.lane.b32.xlu0 %v1617, 32
        %v3847 = vpop.permute.xlu0 %3846
        %3848 = vrot.lane.b32.xlu0 %v1753, 32
        %v3849 = vpop.permute.xlu0 %3848
        %3850 = vrot.lane.b32.xlu0 %v1889, 32
        %v3851 = vpop.permute.xlu0 %3850
        %3852 = vrot.lane.b32.xlu0 %v2025, 32
        %v3853 = vpop.permute.xlu0 %3852
        %3854 = vrot.lane.b32.xlu0 %v2161, 32
        %v3855 = vpop.permute.xlu0 %3854
        %3856 = vrot.lane.b32.xlu0 %v2297, 32
        %v3857 = vpop.permute.xlu0 %3856
        %3858 = vrot.lane.b32.xlu0 %v2433, 32
        %v3859 = vpop.permute.xlu0 %3858
        %3860 = vrot.lane.b32.xlu0 %v2569, 32
        %v3861 = vpop.permute.xlu0 %3860
        %3880 = vrot.lane.b32.xlu0 %v1482, 48
        %v3881 = vpop.permute.xlu0 %3880
        %3882 = vrot.lane.b32.xlu0 %v1618, 48
        %v3883 = vpop.permute.xlu0 %3882
        %3884 = vrot.lane.b32.xlu0 %v1754, 48
        %v3885 = vpop.permute.xlu0 %3884
        %3886 = vrot.lane.b32.xlu0 %v1890, 48
        %v3887 = vpop.permute.xlu0 %3886
        %3888 = vrot.lane.b32.xlu0 %v2026, 48
        %v3889 = vpop.permute.xlu0 %3888
        %3890 = vrot.lane.b32.xlu0 %v2162, 48
        %v3891 = vpop.permute.xlu0 %3890
        %3892 = vrot.lane.b32.xlu0 %v2298, 48
        %v3893 = vpop.permute.xlu0 %3892
        %3894 = vrot.lane.b32.xlu0 %v2434, 48
        %v3895 = vpop.permute.xlu0 %3894
        %3896 = vrot.lane.b32.xlu0 %v2570, 48
        %v3897 = vpop.permute.xlu0 %3896
        %3916 = vrot.lane.b32.xlu0 %v1483, 64
        %v3917 = vpop.permute.xlu0 %3916
        %3918 = vrot.lane.b32.xlu0 %v1619, 64
        %v3919 = vpop.permute.xlu0 %3918
        %3920 = vrot.lane.b32.xlu0 %v1755, 64
        %v3921 = vpop.permute.xlu0 %3920
        %3922 = vrot.lane.b32.xlu0 %v1891, 64
        %v3923 = vpop.permute.xlu0 %3922
        %3924 = vrot.lane.b32.xlu0 %v2027, 64
        %v3925 = vpop.permute.xlu0 %3924
        %3926 = vrot.lane.b32.xlu0 %v2163, 64
        %v3927 = vpop.permute.xlu0 %3926
        %3928 = vrot.lane.b32.xlu0 %v2299, 64
        %v3929 = vpop.permute.xlu0 %3928
        %3930 = vrot.lane.b32.xlu0 %v2435, 64
        %v3931 = vpop.permute.xlu0 %3930
        %3932 = vrot.lane.b32.xlu0 %v2571, 64
        %v3933 = vpop.permute.xlu0 %3932
        %3952 = vrot.lane.b32.xlu0 %v1484, 80
        %v3953 = vpop.permute.xlu0 %3952
        %3954 = vrot.lane.b32.xlu0 %v1620, 80
        %v3955 = vpop.permute.xlu0 %3954
        %3956 = vrot.lane.b32.xlu0 %v1756, 80
        %v3957 = vpop.permute.xlu0 %3956
        %3958 = vrot.lane.b32.xlu0 %v1892, 80
        %v3959 = vpop.permute.xlu0 %3958
        %3960 = vrot.lane.b32.xlu0 %v2028, 80
        %v3961 = vpop.permute.xlu0 %3960
        %3962 = vrot.lane.b32.xlu0 %v2164, 80
        %v3963 = vpop.permute.xlu0 %3962
        %3964 = vrot.lane.b32.xlu0 %v2300, 80
        %v3965 = vpop.permute.xlu0 %3964
        %3966 = vrot.lane.b32.xlu0 %v2436, 80
        %v3967 = vpop.permute.xlu0 %3966
        %3968 = vrot.lane.b32.xlu0 %v2572, 80
        %v3969 = vpop.permute.xlu0 %3968
        %3988 = vrot.lane.b32.xlu0 %v1485, 96
        %v3989 = vpop.permute.xlu0 %3988
        %3990 = vrot.lane.b32.xlu0 %v1621, 96
        %v3991 = vpop.permute.xlu0 %3990
        %3992 = vrot.lane.b32.xlu0 %v1757, 96
        %v3993 = vpop.permute.xlu0 %3992
        %3994 = vrot.lane.b32.xlu0 %v1893, 96
        %v3995 = vpop.permute.xlu0 %3994
        %3996 = vrot.lane.b32.xlu0 %v2029, 96
        %v3997 = vpop.permute.xlu0 %3996
        %3998 = vrot.lane.b32.xlu0 %v2165, 96
        %v3999 = vpop.permute.xlu0 %3998
        %4000 = vrot.lane.b32.xlu0 %v2301, 96
        %v4001 = vpop.permute.xlu0 %4000
        %4002 = vrot.lane.b32.xlu0 %v2437, 96
        %v4003 = vpop.permute.xlu0 %4002
        %4004 = vrot.lane.b32.xlu0 %v2573, 96
        %v4005 = vpop.permute.xlu0 %4004
        %4024 = vrot.lane.b32.xlu0 %v1486, 112
        %v4025 = vpop.permute.xlu0 %4024
        %4026 = vrot.lane.b32.xlu0 %v1622, 112
        %v4027 = vpop.permute.xlu0 %4026
        %4028 = vrot.lane.b32.xlu0 %v1758, 112
        %v4029 = vpop.permute.xlu0 %4028
        %4030 = vrot.lane.b32.xlu0 %v1894, 112
        %v4031 = vpop.permute.xlu0 %4030
        %4032 = vrot.lane.b32.xlu0 %v2030, 112
        %v4033 = vpop.permute.xlu0 %4032
        %4034 = vrot.lane.b32.xlu0 %v2166, 112
        %v4035 = vpop.permute.xlu0 %4034
        %4036 = vrot.lane.b32.xlu0 %v2302, 112
        %v4037 = vpop.permute.xlu0 %4036
        %4038 = vrot.lane.b32.xlu0 %v2438, 112
        %v4039 = vpop.permute.xlu0 %4038
        %4040 = vrot.lane.b32.xlu0 %v2574, 112
        %v4041 = vpop.permute.xlu0 %4040
        %4060 = vrot.lane.b32.xlu0 %v2704, 16
        %v4061 = vpop.permute.xlu0 %4060
        %4062 = vrot.lane.b32.xlu0 %v2840, 16
        %v4063 = vpop.permute.xlu0 %4062
        %4064 = vrot.lane.b32.xlu0 %v2976, 16
        %v4065 = vpop.permute.xlu0 %4064
        %4066 = vrot.lane.b32.xlu0 %v3112, 16
        %v4067 = vpop.permute.xlu0 %4066
        %4068 = vrot.lane.b32.xlu0 %v3248, 16
        %v4069 = vpop.permute.xlu0 %4068
        %4070 = vrot.lane.b32.xlu0 %v3384, 16
        %v4071 = vpop.permute.xlu0 %4070
        %4072 = vrot.lane.b32.xlu0 %v3520, 16
        %v4073 = vpop.permute.xlu0 %4072
        %4074 = vrot.lane.b32.xlu0 %v3656, 16
        %v4075 = vpop.permute.xlu0 %4074
        %4076 = vrot.lane.b32.xlu0 %v3792, 16
        %v4077 = vpop.permute.xlu0 %4076
        %4096 = vrot.lane.b32.xlu0 %v2705, 32
        %v4097 = vpop.permute.xlu0 %4096
        %4098 = vrot.lane.b32.xlu0 %v2841, 32
        %v4099 = vpop.permute.xlu0 %4098
        %4100 = vrot.lane.b32.xlu0 %v2977, 32
        %v4101 = vpop.permute.xlu0 %4100
        %4102 = vrot.lane.b32.xlu0 %v3113, 32
        %v4103 = vpop.permute.xlu0 %4102
        %4104 = vrot.lane.b32.xlu0 %v3249, 32
        %v4105 = vpop.permute.xlu0 %4104
        %4106 = vrot.lane.b32.xlu0 %v3385, 32
        %v4107 = vpop.permute.xlu0 %4106
        %4108 = vrot.lane.b32.xlu0 %v3521, 32
        %v4109 = vpop.permute.xlu0 %4108
        %4110 = vrot.lane.b32.xlu0 %v3657, 32
        %v4111 = vpop.permute.xlu0 %4110
        %4112 = vrot.lane.b32.xlu0 %v3793, 32
        %v4113 = vpop.permute.xlu0 %4112
        %4132 = vrot.lane.b32.xlu0 %v2706, 48
        %v4133 = vpop.permute.xlu0 %4132
        %4134 = vrot.lane.b32.xlu0 %v2842, 48
        %v4135 = vpop.permute.xlu0 %4134
        %4136 = vrot.lane.b32.xlu0 %v2978, 48
        %v4137 = vpop.permute.xlu0 %4136
        %4138 = vrot.lane.b32.xlu0 %v3114, 48
        %v4139 = vpop.permute.xlu0 %4138
        %4140 = vrot.lane.b32.xlu0 %v3250, 48
        %v4141 = vpop.permute.xlu0 %4140
        %4142 = vrot.lane.b32.xlu0 %v3386, 48
        %v4143 = vpop.permute.xlu0 %4142
        %4144 = vrot.lane.b32.xlu0 %v3522, 48
        %v4145 = vpop.permute.xlu0 %4144
        %4146 = vrot.lane.b32.xlu0 %v3658, 48
        %v4147 = vpop.permute.xlu0 %4146
        %4148 = vrot.lane.b32.xlu0 %v3794, 48
        %v4149 = vpop.permute.xlu0 %4148
        %4168 = vrot.lane.b32.xlu0 %v2707, 64
        %v4169 = vpop.permute.xlu0 %4168
        %4170 = vrot.lane.b32.xlu0 %v2843, 64
        %v4171 = vpop.permute.xlu0 %4170
        %4172 = vrot.lane.b32.xlu0 %v2979, 64
        %v4173 = vpop.permute.xlu0 %4172
        %4174 = vrot.lane.b32.xlu0 %v3115, 64
        %v4175 = vpop.permute.xlu0 %4174
        %4176 = vrot.lane.b32.xlu0 %v3251, 64
        %v4177 = vpop.permute.xlu0 %4176
        %4178 = vrot.lane.b32.xlu0 %v3387, 64
        %v4179 = vpop.permute.xlu0 %4178
        %4180 = vrot.lane.b32.xlu0 %v3523, 64
        %v4181 = vpop.permute.xlu0 %4180
        %4182 = vrot.lane.b32.xlu0 %v3659, 64
        %v4183 = vpop.permute.xlu0 %4182
        %4184 = vrot.lane.b32.xlu0 %v3795, 64
        %v4185 = vpop.permute.xlu0 %4184
        %4204 = vrot.lane.b32.xlu0 %v2708, 80
        %v4205 = vpop.permute.xlu0 %4204
        %4206 = vrot.lane.b32.xlu0 %v2844, 80
        %v4207 = vpop.permute.xlu0 %4206
        %4208 = vrot.lane.b32.xlu0 %v2980, 80
        %v4209 = vpop.permute.xlu0 %4208
        %4210 = vrot.lane.b32.xlu0 %v3116, 80
        %v4211 = vpop.permute.xlu0 %4210
        %4212 = vrot.lane.b32.xlu0 %v3252, 80
        %v4213 = vpop.permute.xlu0 %4212
        %4214 = vrot.lane.b32.xlu0 %v3388, 80
        %v4215 = vpop.permute.xlu0 %4214
        %4216 = vrot.lane.b32.xlu0 %v3524, 80
        %v4217 = vpop.permute.xlu0 %4216
        %4218 = vrot.lane.b32.xlu0 %v3660, 80
        %v4219 = vpop.permute.xlu0 %4218
        %4220 = vrot.lane.b32.xlu0 %v3796, 80
        %v4221 = vpop.permute.xlu0 %4220
        %4240 = vrot.lane.b32.xlu0 %v2709, 96
        %v4241 = vpop.permute.xlu0 %4240
        %4242 = vrot.lane.b32.xlu0 %v2845, 96
        %v4243 = vpop.permute.xlu0 %4242
        %4244 = vrot.lane.b32.xlu0 %v2981, 96
        %v4245 = vpop.permute.xlu0 %4244
        %4246 = vrot.lane.b32.xlu0 %v3117, 96
        %v4247 = vpop.permute.xlu0 %4246
        %4248 = vrot.lane.b32.xlu0 %v3253, 96
        %v4249 = vpop.permute.xlu0 %4248
        %4250 = vrot.lane.b32.xlu0 %v3389, 96
        %v4251 = vpop.permute.xlu0 %4250
        %4252 = vrot.lane.b32.xlu0 %v3525, 96
        %v4253 = vpop.permute.xlu0 %4252
        %4254 = vrot.lane.b32.xlu0 %v3661, 96
        %v4255 = vpop.permute.xlu0 %4254
        %4256 = vrot.lane.b32.xlu0 %v3797, 96
        %v4257 = vpop.permute.xlu0 %4256
        %4276 = vrot.lane.b32.xlu0 %v2710, 112
        %v4277 = vpop.permute.xlu0 %4276
        %4278 = vrot.lane.b32.xlu0 %v2846, 112
        %v4279 = vpop.permute.xlu0 %4278
        %4280 = vrot.lane.b32.xlu0 %v2982, 112
        %v4281 = vpop.permute.xlu0 %4280
        %4282 = vrot.lane.b32.xlu0 %v3118, 112
        %v4283 = vpop.permute.xlu0 %4282
        %4284 = vrot.lane.b32.xlu0 %v3254, 112
        %v4285 = vpop.permute.xlu0 %4284
        %4286 = vrot.lane.b32.xlu0 %v3390, 112
        %v4287 = vpop.permute.xlu0 %4286
        %4288 = vrot.lane.b32.xlu0 %v3526, 112
        %v4289 = vpop.permute.xlu0 %4288
        %4290 = vrot.lane.b32.xlu0 %v3662, 112
        %v4291 = vpop.permute.xlu0 %4290
        %4292 = vrot.lane.b32.xlu0 %v3798, 112
        %v4293 = vpop.permute.xlu0 %4292
        %v4303 = vsel %vm421, %v1479, %v3809
        %v4304 = vsel %vm421, %v1615, %v3811
        %v4305 = vsel %vm421, %v1751, %v3813
        %v4306 = vsel %vm421, %v1887, %v3815
        %v4307 = vsel %vm421, %v2023, %v3817
        %v4308 = vsel %vm421, %v2159, %v3819
        %v4309 = vsel %vm421, %v2295, %v3821
        %v4310 = vsel %vm421, %v2431, %v3823
        %v4311 = vsel %vm421, %v2567, %v3825
        %v4312 = vsel %vm425, %v4303, %v3845
        %v4313 = vsel %vm425, %v4304, %v3847
        %v4314 = vsel %vm425, %v4305, %v3849
        %v4315 = vsel %vm425, %v4306, %v3851
        %v4316 = vsel %vm425, %v4307, %v3853
        %v4317 = vsel %vm425, %v4308, %v3855
        %v4318 = vsel %vm425, %v4309, %v3857
        %v4319 = vsel %vm425, %v4310, %v3859
        %v4320 = vsel %vm425, %v4311, %v3861
        %v4321 = vsel %vm429, %v4312, %v3881
        %v4322 = vsel %vm429, %v4313, %v3883
        %v4323 = vsel %vm429, %v4314, %v3885
        %v4324 = vsel %vm429, %v4315, %v3887
        %v4325 = vsel %vm429, %v4316, %v3889
        %v4326 = vsel %vm429, %v4317, %v3891
        %v4327 = vsel %vm429, %v4318, %v3893
        %v4328 = vsel %vm429, %v4319, %v3895
        %v4329 = vsel %vm429, %v4320, %v3897
        %v4330 = vsel %vm449, %v4321, %v3917
        %v4331 = vsel %vm449, %v4322, %v3919
        %v4332 = vsel %vm449, %v4323, %v3921
        %v4333 = vsel %vm449, %v4324, %v3923
        %v4334 = vsel %vm449, %v4325, %v3925
        %v4335 = vsel %vm449, %v4326, %v3927
        %v4336 = vsel %vm449, %v4327, %v3929
        %v4337 = vsel %vm449, %v4328, %v3931
        %v4338 = vsel %vm449, %v4329, %v3933
        %vm4339 = vcmask 654336
        %v4340 = vsel %vm4339, %v4330, %v3953
        %v4341 = vsel %vm4339, %v4331, %v3955
        %v4342 = vsel %vm4339, %v4332, %v3957
        %v4343 = vsel %vm4339, %v4333, %v3959
        %v4344 = vsel %vm4339, %v4334, %v3961
        %v4345 = vsel %vm4339, %v4335, %v3963
        %v4346 = vsel %vm4339, %v4336, %v3965
        %v4347 = vsel %vm4339, %v4337, %v3967
        %v4348 = vsel %vm4339, %v4338, %v3969
        %vm4349 = vcmask 785408
        %v4350 = vsel %vm4349, %v4340, %v3989
        %v4351 = vsel %vm4349, %v4341, %v3991
        %v4352 = vsel %vm4349, %v4342, %v3993
        %v4353 = vsel %vm4349, %v4343, %v3995
        %v4354 = vsel %vm4349, %v4344, %v3997
        %v4355 = vsel %vm4349, %v4345, %v3999
        %v4356 = vsel %vm4349, %v4346, %v4001
        %v4357 = vsel %vm4349, %v4347, %v4003
        %v4358 = vsel %vm4349, %v4348, %v4005
        %vm4359 = vcmask 916480
        %v4360 = vsel %vm4359, %v4350, %v4025
        %v4361 = vsel %vm4359, %v4351, %v4027
        %v4362 = vsel %vm4359, %v4352, %v4029
        %v4363 = vsel %vm4359, %v4353, %v4031
        %v4364 = vsel %vm4359, %v4354, %v4033
        %v4365 = vsel %vm4359, %v4355, %v4035
        %v4366 = vsel %vm4359, %v4356, %v4037
        %v4367 = vsel %vm4359, %v4357, %v4039
        %v4368 = vsel %vm4359, %v4358, %v4041
        %v4369 = vsel %vm421, %v2703, %v4061
        %v4370 = vsel %vm421, %v2839, %v4063
        %v4371 = vsel %vm421, %v2975, %v4065
        %v4372 = vsel %vm421, %v3111, %v4067
        %v4373 = vsel %vm421, %v3247, %v4069
        %v4374 = vsel %vm421, %v3383, %v4071
        %v4375 = vsel %vm421, %v3519, %v4073
        %v4376 = vsel %vm421, %v3655, %v4075
        %v4377 = vsel %vm421, %v3791, %v4077
        %v4378 = vsel %vm425, %v4369, %v4097
        %v4379 = vsel %vm425, %v4370, %v4099
        %v4380 = vsel %vm425, %v4371, %v4101
        %v4381 = vsel %vm425, %v4372, %v4103
        %v4382 = vsel %vm425, %v4373, %v4105
        %v4383 = vsel %vm425, %v4374, %v4107
        %v4384 = vsel %vm425, %v4375, %v4109
        %v4385 = vsel %vm425, %v4376, %v4111
        %v4386 = vsel %vm425, %v4377, %v4113
        %v4387 = vsel %vm429, %v4378, %v4133
        %v4388 = vsel %vm429, %v4379, %v4135
        %v4389 = vsel %vm429, %v4380, %v4137
        %v4390 = vsel %vm429, %v4381, %v4139
        %v4391 = vsel %vm429, %v4382, %v4141
        %v4392 = vsel %vm429, %v4383, %v4143
        %v4393 = vsel %vm429, %v4384, %v4145
        %v4394 = vsel %vm429, %v4385, %v4147
        %v4395 = vsel %vm429, %v4386, %v4149
        %v4396 = vsel %vm449, %v4387, %v4169
        %v4397 = vsel %vm449, %v4388, %v4171
        %v4398 = vsel %vm449, %v4389, %v4173
        %v4399 = vsel %vm449, %v4390, %v4175
        %v4400 = vsel %vm449, %v4391, %v4177
        %v4401 = vsel %vm449, %v4392, %v4179
        %v4402 = vsel %vm449, %v4393, %v4181
        %v4403 = vsel %vm449, %v4394, %v4183
        %v4404 = vsel %vm449, %v4395, %v4185
        %v4405 = vsel %vm4339, %v4396, %v4205
        %v4406 = vsel %vm4339, %v4397, %v4207
        %v4407 = vsel %vm4339, %v4398, %v4209
        %v4408 = vsel %vm4339, %v4399, %v4211
        %v4409 = vsel %vm4339, %v4400, %v4213
        %v4410 = vsel %vm4339, %v4401, %v4215
        %v4411 = vsel %vm4339, %v4402, %v4217
        %v4412 = vsel %vm4339, %v4403, %v4219
        %v4413 = vsel %vm4339, %v4404, %v4221
        %v4414 = vsel %vm4349, %v4405, %v4241
        %v4415 = vsel %vm4349, %v4406, %v4243
        %v4416 = vsel %vm4349, %v4407, %v4245
        %v4417 = vsel %vm4349, %v4408, %v4247
        %v4418 = vsel %vm4349, %v4409, %v4249
        %v4419 = vsel %vm4349, %v4410, %v4251
        %v4420 = vsel %vm4349, %v4411, %v4253
        %v4421 = vsel %vm4349, %v4412, %v4255
        %v4422 = vsel %vm4349, %v4413, %v4257
        %v4423 = vsel %vm4359, %v4414, %v4277
        %v4424 = vsel %vm4359, %v4415, %v4279
        %v4425 = vsel %vm4359, %v4416, %v4281
        %v4426 = vsel %vm4359, %v4417, %v4283
        %v4427 = vsel %vm4359, %v4418, %v4285
        %v4428 = vsel %vm4359, %v4419, %v4287
        %v4429 = vsel %vm4359, %v4420, %v4289
        %v4430 = vsel %vm4359, %v4421, %v4291
        %v4431 = vsel %vm4359, %v4422, %v4293
        %4433 = vset.pattern.permute.xlu0 0
        %4434 = vperm.xlu0 %4433, %v713
        %v4435 = vpop.permute.xlu0 %4434
        %vm4437 = vcmask 588800
        %v4439 = vsel %vm4437, %v712, 0
        %4441 = vmatprep.subr.mxu0 0.0
        %4442 = vmatpush1.msra.mxu0 0.0
        %4443 = vmatprep.subr.mxu0 0.0
        %4444 = vmatpush1.msra.mxu0 0.0
        %4445 = vmatprep.subr.mxu0 0.0
        %4446 = vmatpush1.msra.mxu0 0.0
        %4447 = vmatprep.subr.mxu0 0.0
        %4448 = vmatpush1.msra.mxu0 0.0
        %4449 = vmatprep.subr.mxu0 0.0
        %4450 = vmatpush1.msra.mxu0 0.0
        %4451 = vmatprep.subr.mxu0 0.0
        %4452 = vmatpush1.msra.mxu0 0.0
        %4453 = vmatprep.subr.mxu0 0.0
        %4454 = vmatpush1.msra.mxu0 0.0
        %4455 = vmatprep.subr.mxu0 %v4431
        %4456 = vmatpush1.msra.mxu0 %v4368
        %4457 = vmatprep.subr.mxu0 %v4430
        %4458 = vmatpush1.msra.mxu0 %v4367
        %4459 = vmatprep.subr.mxu0 %v4429
        %4460 = vmatpush1.msra.mxu0 %v4366
        %4461 = vmatprep.subr.mxu0 %v4428
        %4462 = vmatpush1.msra.mxu0 %v4365
        %4463 = vmatprep.subr.mxu0 %v4427
        %4464 = vmatpush1.msra.mxu0 %v4364
        %4465 = vmatprep.subr.mxu0 %v4426
        %4466 = vmatpush1.msra.mxu0 %v4363
        %4467 = vmatprep.subr.mxu0 %v4425
        %4468 = vmatpush1.msra.mxu0 %v4362
        %4469 = vmatprep.subr.mxu0 %v4424
        %4470 = vmatpush1.msra.mxu0 %v4361
        %4471 = vmatprep.subr.mxu0 %v4423
        %4472 = vmatpush1.msra.mxu0 %v4360
        %4473 = vmatprep.subr.mxu0 0.0
        %4474 = vmatpush2.msra.mxu0 0.0
        %4475 = vmatprep.subr.mxu0 0.0
        %4476 = vmatpush2.msra.mxu0 0.0
        %4477 = vmatprep.subr.mxu0 0.0
        %4478 = vmatpush2.msra.mxu0 0.0
        %4479 = vmatprep.subr.mxu0 0.0
        %4480 = vmatpush2.msra.mxu0 0.0
        %4481 = vmatprep.subr.mxu0 0.0
        %4482 = vmatpush2.msra.mxu0 0.0
        %4483 = vmatprep.subr.mxu0 0.0
        %4484 = vmatpush2.msra.mxu0 0.0
        %4485 = vmatprep.subr.mxu0 0.0
        %4486 = vmatpush2.msra.mxu0 0.0
        %4487 = vmatprep.subr.mxu0 0.0
        %4488 = vmatpush2.msra.mxu0 0.0
        %4489 = vmatprep.subr.mxu0 0.0
        %4490 = vmatpush2.msra.mxu0 0.0
        %4491 = vmatprep.subr.mxu0 0.0
        %4492 = vmatpush2.msra.mxu0 0.0
        %4493 = vmatprep.subr.mxu0 0.0
        %4494 = vmatpush2.msra.mxu0 0.0
        %4495 = vmatprep.subr.mxu0 0.0
        %4496 = vmatpush2.msra.mxu0 0.0
        %4497 = vmatprep.subr.mxu0 0.0
        %4498 = vmatpush2.msra.mxu0 0.0
        %4499 = vmatprep.subr.mxu0 0.0
        %4500 = vmatpush2.msra.mxu0 0.0
        %4501 = vmatprep.subr.mxu0 0.0
        %4502 = vmatpush2.msra.mxu0 0.0
        %4503 = vmatprep.subr.mxu0 0.0
        %4504 = vmatpush2.msra.mxu0 0.0
        %4505 = vmatprep.mubr.f32.mxu0 0.0
        %4506 = vmatmul.mubr.f32.gmra.mxu0 %v4439
        %v4507 = vpop.f32.mrf.mxu0
        %v4508 = vadd.f32 %v4435, %v4507
        %v4509 = vpop.f32.mrf.mxu0
        %v4510 = vadd.f32 %v4435, %v4509
        %4511 = vdwg.mxu0
        %v4512 = vmax.f32 %v4508, 0.0
        %v4513 = vmax.f32 %v4510, 0.0
        %4515 = vrot.lane.b32.xlu0 %v4512, 112
        %v4516 = vpop.permute.xlu0 %4515
        %4518 = vrot.lane.b32.xlu0 %v4512, 96
        %v4519 = vpop.permute.xlu0 %4518
        %4521 = vrot.lane.b32.xlu0 %v4512, 80
        %v4522 = vpop.permute.xlu0 %4521
        %4524 = vrot.lane.b32.xlu0 %v4512, 64
        %v4525 = vpop.permute.xlu0 %4524
        %4527 = vrot.lane.b32.xlu0 %v4512, 48
        %v4528 = vpop.permute.xlu0 %4527
        %4530 = vrot.lane.b32.xlu0 %v4512, 32
        %v4531 = vpop.permute.xlu0 %4530
        %4533 = vrot.lane.b32.xlu0 %v4512, 16
        %v4534 = vpop.permute.xlu0 %4533
        %4537 = vrot.lane.b32.xlu0 %v4513, 112
        %v4538 = vpop.permute.xlu0 %4537
        %4540 = vrot.lane.b32.xlu0 %v4513, 96
        %v4541 = vpop.permute.xlu0 %4540
        %4543 = vrot.lane.b32.xlu0 %v4513, 80
        %v4544 = vpop.permute.xlu0 %4543
        %4546 = vrot.lane.b32.xlu0 %v4513, 64
        %v4547 = vpop.permute.xlu0 %4546
        %4549 = vrot.lane.b32.xlu0 %v4513, 48
        %v4550 = vpop.permute.xlu0 %4549
        %4552 = vrot.lane.b32.xlu0 %v4513, 32
        %v4553 = vpop.permute.xlu0 %4552
        %4555 = vrot.lane.b32.xlu0 %v4513, 16
        %v4556 = vpop.permute.xlu0 %4555
        %v4558 = vcombine.low %v4512, %v4519
        %v4559 = vcombine.high %v4512, %v4519
        %v4561 = vunpack.c.l.s4 1983009808
        %v4562 = vunpack.c.0.s8 %v4561
        %v4563 = vlaneseq
        %v4564 = vshrl.u32 %v4563, 7
        %v4565 = vsub.s32 %v4562, %v4564
        %v4566 = vrot.slane %v4558, %v4565
        %v4568 = vunpack.c.l.s4 1983009808
        %v4569 = vunpack.c.0.s8 %v4568
        %v4570 = vlaneseq
        %v4571 = vshrl.u32 %v4570, 7
        %v4572 = vsub.s32 %v4569, %v4571
        %v4573 = vrot.slane %v4559, %v4572
        %v4574 = vcombine.low %v4516, %v4522
        %v4575 = vcombine.high %v4516, %v4522
        %v4577 = vunpack.c.l.s4 1983009808
        %v4578 = vunpack.c.0.s8 %v4577
        %v4579 = vlaneseq
        %v4580 = vshrl.u32 %v4579, 7
        %v4581 = vsub.s32 %v4578, %v4580
        %v4582 = vrot.slane %v4574, %v4581
        %v4584 = vunpack.c.l.s4 1983009808
        %v4585 = vunpack.c.0.s8 %v4584
        %v4586 = vlaneseq
        %v4587 = vshrl.u32 %v4586, 7
        %v4588 = vsub.s32 %v4585, %v4587
        %v4589 = vrot.slane %v4575, %v4588
        %v4590 = vcombine.low %v4525, %v4531
        %v4591 = vcombine.high %v4525, %v4531
        %v4593 = vunpack.c.l.s4 1983009808
        %v4594 = vunpack.c.0.s8 %v4593
        %v4595 = vlaneseq
        %v4596 = vshrl.u32 %v4595, 7
        %v4597 = vsub.s32 %v4594, %v4596
        %v4598 = vrot.slane %v4590, %v4597
        %v4600 = vunpack.c.l.s4 1983009808
        %v4601 = vunpack.c.0.s8 %v4600
        %v4602 = vlaneseq
        %v4603 = vshrl.u32 %v4602, 7
        %v4604 = vsub.s32 %v4601, %v4603
        %v4605 = vrot.slane %v4591, %v4604
        %v4606 = vcombine.low %v4528, %v4534
        %v4607 = vcombine.high %v4528, %v4534
        %v4609 = vunpack.c.l.s4 1983009808
        %v4610 = vunpack.c.0.s8 %v4609
        %v4611 = vlaneseq
        %v4612 = vshrl.u32 %v4611, 7
        %v4613 = vsub.s32 %v4610, %v4612
        %v4614 = vrot.slane %v4606, %v4613
        %v4616 = vunpack.c.l.s4 1983009808
        %v4617 = vunpack.c.0.s8 %v4616
        %v4618 = vlaneseq
        %v4619 = vshrl.u32 %v4618, 7
        %v4620 = vsub.s32 %v4617, %v4619
        %v4621 = vrot.slane %v4607, %v4620
        %v4622 = vcombine.low %v4566, %v4582
        %v4623 = vcombine.high %v4566, %v4582
        %v4625 = vunpack.c.l.s4 1934713408
        %v4626 = vunpack.c.0.s8 %v4625
        %v4627 = vlaneseq
        %v4628 = vshrl.u32 %v4627, 7
        %v4629 = vsub.s32 %v4626, %v4628
        %v4630 = vrot.slane %v4622, %v4629
        %v4632 = vunpack.c.l.s4 1934713408
        %v4633 = vunpack.c.0.s8 %v4632
        %v4634 = vlaneseq
        %v4635 = vshrl.u32 %v4634, 7
        %v4636 = vsub.s32 %v4633, %v4635
        %v4637 = vrot.slane %v4623, %v4636
        %v4638 = vcombine.low %v4573, %v4589
        %v4639 = vcombine.high %v4573, %v4589
        %v4641 = vunpack.c.l.s4 1934713408
        %v4642 = vunpack.c.0.s8 %v4641
        %v4643 = vlaneseq
        %v4644 = vshrl.u32 %v4643, 7
        %v4645 = vsub.s32 %v4642, %v4644
        %v4646 = vrot.slane %v4638, %v4645
        %v4648 = vunpack.c.l.s4 1934713408
        %v4649 = vunpack.c.0.s8 %v4648
        %v4650 = vlaneseq
        %v4651 = vshrl.u32 %v4650, 7
        %v4652 = vsub.s32 %v4649, %v4651
        %v4653 = vrot.slane %v4639, %v4652
        %v4654 = vcombine.low %v4598, %v4614
        %v4655 = vcombine.high %v4598, %v4614
        %v4657 = vunpack.c.l.s4 1934713408
        %v4658 = vunpack.c.0.s8 %v4657
        %v4659 = vlaneseq
        %v4660 = vshrl.u32 %v4659, 7
        %v4661 = vsub.s32 %v4658, %v4660
        %v4662 = vrot.slane %v4654, %v4661
        %v4664 = vunpack.c.l.s4 1934713408
        %v4665 = vunpack.c.0.s8 %v4664
        %v4666 = vlaneseq
        %v4667 = vshrl.u32 %v4666, 7
        %v4668 = vsub.s32 %v4665, %v4667
        %v4669 = vrot.slane %v4655, %v4668
        %v4670 = vcombine.low %v4605, %v4621
        %v4671 = vcombine.high %v4605, %v4621
        %v4673 = vunpack.c.l.s4 1934713408
        %v4674 = vunpack.c.0.s8 %v4673
        %v4675 = vlaneseq
        %v4676 = vshrl.u32 %v4675, 7
        %v4677 = vsub.s32 %v4674, %v4676
        %v4678 = vrot.slane %v4670, %v4677
        %v4680 = vunpack.c.l.s4 1934713408
        %v4681 = vunpack.c.0.s8 %v4680
        %v4682 = vlaneseq
        %v4683 = vshrl.u32 %v4682, 7
        %v4684 = vsub.s32 %v4681, %v4683
        %v4685 = vrot.slane %v4671, %v4684
        %v4686 = vcombine.low %v4630, %v4662
        %v4687 = vcombine.high %v4630, %v4662
        %v4688 = vcombine.low %v4637, %v4669
        %v4689 = vcombine.high %v4637, %v4669
        %v4690 = vcombine.low %v4646, %v4678
        %v4691 = vcombine.high %v4646, %v4678
        %v4692 = vcombine.low %v4653, %v4685
        %v4693 = vcombine.high %v4653, %v4685
        %v4694 = vcombine.low %v4513, %v4541
        %v4695 = vcombine.high %v4513, %v4541
        %v4697 = vunpack.c.l.s4 1983009808
        %v4698 = vunpack.c.0.s8 %v4697
        %v4699 = vlaneseq
        %v4700 = vshrl.u32 %v4699, 7
        %v4701 = vsub.s32 %v4698, %v4700
        %v4702 = vrot.slane %v4694, %v4701
        %v4704 = vunpack.c.l.s4 1983009808
        %v4705 = vunpack.c.0.s8 %v4704
        %v4706 = vlaneseq
        %v4707 = vshrl.u32 %v4706, 7
        %v4708 = vsub.s32 %v4705, %v4707
        %v4709 = vrot.slane %v4695, %v4708
        %v4710 = vcombine.low %v4538, %v4544
        %v4711 = vcombine.high %v4538, %v4544
        %v4713 = vunpack.c.l.s4 1983009808
        %v4714 = vunpack.c.0.s8 %v4713
        %v4715 = vlaneseq
        %v4716 = vshrl.u32 %v4715, 7
        %v4717 = vsub.s32 %v4714, %v4716
        %v4718 = vrot.slane %v4710, %v4717
        %v4720 = vunpack.c.l.s4 1983009808
        %v4721 = vunpack.c.0.s8 %v4720
        %v4722 = vlaneseq
        %v4723 = vshrl.u32 %v4722, 7
        %v4724 = vsub.s32 %v4721, %v4723
        %v4725 = vrot.slane %v4711, %v4724
        %v4726 = vcombine.low %v4547, %v4553
        %v4727 = vcombine.high %v4547, %v4553
        %v4729 = vunpack.c.l.s4 1983009808
        %v4730 = vunpack.c.0.s8 %v4729
        %v4731 = vlaneseq
        %v4732 = vshrl.u32 %v4731, 7
        %v4733 = vsub.s32 %v4730, %v4732
        %v4734 = vrot.slane %v4726, %v4733
        %v4736 = vunpack.c.l.s4 1983009808
        %v4737 = vunpack.c.0.s8 %v4736
        %v4738 = vlaneseq
        %v4739 = vshrl.u32 %v4738, 7
        %v4740 = vsub.s32 %v4737, %v4739
        %v4741 = vrot.slane %v4727, %v4740
        %v4742 = vcombine.low %v4550, %v4556
        %v4743 = vcombine.high %v4550, %v4556
        %v4745 = vunpack.c.l.s4 1983009808
        %v4746 = vunpack.c.0.s8 %v4745
        %v4747 = vlaneseq
        %v4748 = vshrl.u32 %v4747, 7
        %v4749 = vsub.s32 %v4746, %v4748
        %v4750 = vrot.slane %v4742, %v4749
        %v4752 = vunpack.c.l.s4 1983009808
        %v4753 = vunpack.c.0.s8 %v4752
        %v4754 = vlaneseq
        %v4755 = vshrl.u32 %v4754, 7
        %v4756 = vsub.s32 %v4753, %v4755
        %v4757 = vrot.slane %v4743, %v4756
        %v4758 = vcombine.low %v4702, %v4718
        %v4759 = vcombine.high %v4702, %v4718
        %v4761 = vunpack.c.l.s4 1934713408
        %v4762 = vunpack.c.0.s8 %v4761
        %v4763 = vlaneseq
        %v4764 = vshrl.u32 %v4763, 7
        %v4765 = vsub.s32 %v4762, %v4764
        %v4766 = vrot.slane %v4758, %v4765
        %v4768 = vunpack.c.l.s4 1934713408
        %v4769 = vunpack.c.0.s8 %v4768
        %v4770 = vlaneseq
        %v4771 = vshrl.u32 %v4770, 7
        %v4772 = vsub.s32 %v4769, %v4771
        %v4773 = vrot.slane %v4759, %v4772
        %v4774 = vcombine.low %v4709, %v4725
        %v4775 = vcombine.high %v4709, %v4725
        %v4777 = vunpack.c.l.s4 1934713408
        %v4778 = vunpack.c.0.s8 %v4777
        %v4779 = vlaneseq
        %v4780 = vshrl.u32 %v4779, 7
        %v4781 = vsub.s32 %v4778, %v4780
        %v4782 = vrot.slane %v4774, %v4781
        %v4784 = vunpack.c.l.s4 1934713408
        %v4785 = vunpack.c.0.s8 %v4784
        %v4786 = vlaneseq
        %v4787 = vshrl.u32 %v4786, 7
        %v4788 = vsub.s32 %v4785, %v4787
        %v4789 = vrot.slane %v4775, %v4788
        %v4790 = vcombine.low %v4734, %v4750
        %v4791 = vcombine.high %v4734, %v4750
        %v4793 = vunpack.c.l.s4 1934713408
        %v4794 = vunpack.c.0.s8 %v4793
        %v4795 = vlaneseq
        %v4796 = vshrl.u32 %v4795, 7
        %v4797 = vsub.s32 %v4794, %v4796
        %v4798 = vrot.slane %v4790, %v4797
        %v4800 = vunpack.c.l.s4 1934713408
        %v4801 = vunpack.c.0.s8 %v4800
        %v4802 = vlaneseq
        %v4803 = vshrl.u32 %v4802, 7
        %v4804 = vsub.s32 %v4801, %v4803
        %v4805 = vrot.slane %v4791, %v4804
        %v4806 = vcombine.low %v4741, %v4757
        %v4807 = vcombine.high %v4741, %v4757
        %v4809 = vunpack.c.l.s4 1934713408
        %v4810 = vunpack.c.0.s8 %v4809
        %v4811 = vlaneseq
        %v4812 = vshrl.u32 %v4811, 7
        %v4813 = vsub.s32 %v4810, %v4812
        %v4814 = vrot.slane %v4806, %v4813
        %v4816 = vunpack.c.l.s4 1934713408
        %v4817 = vunpack.c.0.s8 %v4816
        %v4818 = vlaneseq
        %v4819 = vshrl.u32 %v4818, 7
        %v4820 = vsub.s32 %v4817, %v4819
        %v4821 = vrot.slane %v4807, %v4820
        %v4822 = vcombine.low %v4766, %v4798
        %v4823 = vcombine.high %v4766, %v4798
        %v4824 = vcombine.low %v4773, %v4805
        %v4825 = vcombine.high %v4773, %v4805
        %v4826 = vcombine.low %v4782, %v4814
        %v4827 = vcombine.high %v4782, %v4814
        %v4828 = vcombine.low %v4789, %v4821
        %v4829 = vcombine.high %v4789, %v4821
        %v4830 = vld [vmem:[%s5] sm:$0xff]
        %v4831 = vld [vmem:[%s6] sm:$0xff]
        %v4848 = vrot.slane %v4686, 7
        %v4849 = vrot.slane %v4822, 7
        %v4850 = vsel %vm730, %v4848, %v4849
        %v4851 = vrot.slane %v4687, 7
        %v4852 = vrot.slane %v4823, 7
        %v4853 = vsel %vm730, %v4851, %v4852
        %v4854 = vrot.slane %v4688, 7
        %v4855 = vrot.slane %v4824, 7
        %v4856 = vsel %vm730, %v4854, %v4855
        %v4857 = vrot.slane %v4689, 7
        %v4858 = vrot.slane %v4825, 7
        %v4859 = vsel %vm730, %v4857, %v4858
        %v4860 = vrot.slane %v4690, 7
        %v4861 = vrot.slane %v4826, 7
        %v4862 = vsel %vm730, %v4860, %v4861
        %v4863 = vrot.slane %v4691, 7
        %v4864 = vrot.slane %v4827, 7
        %v4865 = vsel %vm730, %v4863, %v4864
        %v4866 = vrot.slane %v4692, 7
        %v4867 = vrot.slane %v4828, 7
        %v4868 = vsel %vm730, %v4866, %v4867
        %v4869 = vrot.slane %v4693, 7
        %v4870 = vrot.slane %v4829, 7
        %v4871 = vsel %vm730, %v4869, %v4870
        %v4888 = vsel %vm730, 0.0, %v4848
        %v4889 = vsel %vm730, 0.0, %v4851
        %v4890 = vsel %vm730, 0.0, %v4854
        %v4891 = vsel %vm730, 0.0, %v4857
        %v4892 = vsel %vm730, 0.0, %v4860
        %v4893 = vsel %vm730, 0.0, %v4863
        %v4894 = vsel %vm730, 0.0, %v4866
        %v4895 = vsel %vm730, 0.0, %v4869
        %v4896 = vsel %vm730, %v4849, 0.0
        %v4897 = vsel %vm730, %v4852, 0.0
        %v4898 = vsel %vm730, %v4855, 0.0
        %v4899 = vsel %vm730, %v4858, 0.0
        %v4900 = vsel %vm730, %v4861, 0.0
        %v4901 = vsel %vm730, %v4864, 0.0
        %v4902 = vsel %vm730, %v4867, 0.0
        %v4903 = vsel %vm730, %v4870, 0.0
        %4920 = vrot.lane.b32.xlu0 %v4888, 1
        %v4921 = vpop.permute.xlu0 %4920
        %4922 = vrot.lane.b32.xlu0 %v4850, 1
        %v4923 = vpop.permute.xlu0 %4922
        %4924 = vrot.lane.b32.xlu0 %v4896, 1
        %v4925 = vpop.permute.xlu0 %4924
        %4926 = vrot.lane.b32.xlu0 %v4889, 1
        %v4927 = vpop.permute.xlu0 %4926
        %4928 = vrot.lane.b32.xlu0 %v4853, 1
        %v4929 = vpop.permute.xlu0 %4928
        %4930 = vrot.lane.b32.xlu0 %v4897, 1
        %v4931 = vpop.permute.xlu0 %4930
        %4932 = vrot.lane.b32.xlu0 %v4890, 1
        %v4933 = vpop.permute.xlu0 %4932
        %4934 = vrot.lane.b32.xlu0 %v4856, 1
        %v4935 = vpop.permute.xlu0 %4934
        %4936 = vrot.lane.b32.xlu0 %v4898, 1
        %v4937 = vpop.permute.xlu0 %4936
        %4938 = vrot.lane.b32.xlu0 %v4891, 1
        %v4939 = vpop.permute.xlu0 %4938
        %4940 = vrot.lane.b32.xlu0 %v4859, 1
        %v4941 = vpop.permute.xlu0 %4940
        %4942 = vrot.lane.b32.xlu0 %v4899, 1
        %v4943 = vpop.permute.xlu0 %4942
        %4944 = vrot.lane.b32.xlu0 %v4892, 1
        %v4945 = vpop.permute.xlu0 %4944
        %4946 = vrot.lane.b32.xlu0 %v4862, 1
        %v4947 = vpop.permute.xlu0 %4946
        %4948 = vrot.lane.b32.xlu0 %v4900, 1
        %v4949 = vpop.permute.xlu0 %4948
        %4950 = vrot.lane.b32.xlu0 %v4893, 1
        %v4951 = vpop.permute.xlu0 %4950
        %4952 = vrot.lane.b32.xlu0 %v4865, 1
        %v4953 = vpop.permute.xlu0 %4952
        %4954 = vrot.lane.b32.xlu0 %v4901, 1
        %v4955 = vpop.permute.xlu0 %4954
        %4956 = vrot.lane.b32.xlu0 %v4894, 1
        %v4957 = vpop.permute.xlu0 %4956
        %4958 = vrot.lane.b32.xlu0 %v4868, 1
        %v4959 = vpop.permute.xlu0 %4958
        %4960 = vrot.lane.b32.xlu0 %v4902, 1
        %v4961 = vpop.permute.xlu0 %4960
        %4962 = vrot.lane.b32.xlu0 %v4895, 1
        %v4963 = vpop.permute.xlu0 %4962
        %4964 = vrot.lane.b32.xlu0 %v4871, 1
        %v4965 = vpop.permute.xlu0 %4964
        %4966 = vrot.lane.b32.xlu0 %v4903, 1
        %v4967 = vpop.permute.xlu0 %4966
        %v4992 = vsel %vm875, 0.0, %v4921
        %v4993 = vsel %vm875, 0.0, %v4923
        %v4994 = vsel %vm875, 0.0, %v4925
        %v4995 = vsel %vm875, 0.0, %v4927
        %v4996 = vsel %vm875, 0.0, %v4929
        %v4997 = vsel %vm875, 0.0, %v4931
        %v4998 = vsel %vm875, 0.0, %v4933
        %v4999 = vsel %vm875, 0.0, %v4935
        %v5000 = vsel %vm875, 0.0, %v4937
        %v5001 = vsel %vm875, 0.0, %v4939
        %v5002 = vsel %vm875, 0.0, %v4941
        %v5003 = vsel %vm875, 0.0, %v4943
        %v5004 = vsel %vm875, 0.0, %v4945
        %v5005 = vsel %vm875, 0.0, %v4947
        %v5006 = vsel %vm875, 0.0, %v4949
        %v5007 = vsel %vm875, 0.0, %v4951
        %v5008 = vsel %vm875, 0.0, %v4953
        %v5009 = vsel %vm875, 0.0, %v4955
        %v5010 = vsel %vm875, 0.0, %v4957
        %v5011 = vsel %vm875, 0.0, %v4959
        %v5012 = vsel %vm875, 0.0, %v4961
        %v5013 = vsel %vm875, 0.0, %v4963
        %v5014 = vsel %vm875, 0.0, %v4965
        %v5015 = vsel %vm875, 0.0, %v4967
        %v5016 = vsel %vm900, %v4992, 0.0
        %v5017 = vsel %vm900, %v4993, 0.0
        %v5018 = vsel %vm900, %v4994, 0.0
        %v5019 = vsel %vm900, %v4995, 0.0
        %v5020 = vsel %vm900, %v4996, 0.0
        %v5021 = vsel %vm900, %v4997, 0.0
        %v5022 = vsel %vm900, %v4998, 0.0
        %v5023 = vsel %vm900, %v4999, 0.0
        %v5024 = vsel %vm900, %v5000, 0.0
        %v5025 = vsel %vm900, %v5001, 0.0
        %v5026 = vsel %vm900, %v5002, 0.0
        %v5027 = vsel %vm900, %v5003, 0.0
        %v5028 = vsel %vm900, %v5004, 0.0
        %v5029 = vsel %vm900, %v5005, 0.0
        %v5030 = vsel %vm900, %v5006, 0.0
        %v5031 = vsel %vm900, %v5007, 0.0
        %v5032 = vsel %vm900, %v5008, 0.0
        %v5033 = vsel %vm900, %v5009, 0.0
        %v5034 = vsel %vm900, %v5010, 0.0
        %v5035 = vsel %vm900, %v5011, 0.0
        %v5036 = vsel %vm900, %v5012, 0.0
        %v5037 = vsel %vm900, %v5013, 0.0
        %v5038 = vsel %vm900, %v5014, 0.0
        %v5039 = vsel %vm900, %v5015, 0.0
        %5056 = vrot.lane.b32.xlu0 %v5016, 127
        %v5057 = vpop.permute.xlu0 %5056
        %5058 = vrot.lane.b32.xlu0 %v5017, 127
        %v5059 = vpop.permute.xlu0 %5058
        %5060 = vrot.lane.b32.xlu0 %v5019, 127
        %v5061 = vpop.permute.xlu0 %5060
        %5062 = vrot.lane.b32.xlu0 %v5020, 127
        %v5063 = vpop.permute.xlu0 %5062
        %5064 = vrot.lane.b32.xlu0 %v5022, 127
        %v5065 = vpop.permute.xlu0 %5064
        %5066 = vrot.lane.b32.xlu0 %v5023, 127
        %v5067 = vpop.permute.xlu0 %5066
        %5068 = vrot.lane.b32.xlu0 %v5025, 127
        %v5069 = vpop.permute.xlu0 %5068
        %5070 = vrot.lane.b32.xlu0 %v5026, 127
        %v5071 = vpop.permute.xlu0 %5070
        %5072 = vrot.lane.b32.xlu0 %v5028, 127
        %v5073 = vpop.permute.xlu0 %5072
        %5074 = vrot.lane.b32.xlu0 %v5029, 127
        %v5075 = vpop.permute.xlu0 %5074
        %5076 = vrot.lane.b32.xlu0 %v5031, 127
        %v5077 = vpop.permute.xlu0 %5076
        %5078 = vrot.lane.b32.xlu0 %v5032, 127
        %v5079 = vpop.permute.xlu0 %5078
        %5080 = vrot.lane.b32.xlu0 %v5034, 127
        %v5081 = vpop.permute.xlu0 %5080
        %5082 = vrot.lane.b32.xlu0 %v5035, 127
        %v5083 = vpop.permute.xlu0 %5082
        %5084 = vrot.lane.b32.xlu0 %v5037, 127
        %v5085 = vpop.permute.xlu0 %5084
        %5086 = vrot.lane.b32.xlu0 %v5038, 127
        %v5087 = vpop.permute.xlu0 %5086
        %5104 = vrot.lane.b32.xlu0 %v5016, 126
        %v5105 = vpop.permute.xlu0 %5104
        %5106 = vrot.lane.b32.xlu0 %v5017, 126
        %v5107 = vpop.permute.xlu0 %5106
        %5108 = vrot.lane.b32.xlu0 %v5019, 126
        %v5109 = vpop.permute.xlu0 %5108
        %5110 = vrot.lane.b32.xlu0 %v5020, 126
        %v5111 = vpop.permute.xlu0 %5110
        %5112 = vrot.lane.b32.xlu0 %v5022, 126
        %v5113 = vpop.permute.xlu0 %5112
        %5114 = vrot.lane.b32.xlu0 %v5023, 126
        %v5115 = vpop.permute.xlu0 %5114
        %5116 = vrot.lane.b32.xlu0 %v5025, 126
        %v5117 = vpop.permute.xlu0 %5116
        %5118 = vrot.lane.b32.xlu0 %v5026, 126
        %v5119 = vpop.permute.xlu0 %5118
        %5120 = vrot.lane.b32.xlu0 %v5028, 126
        %v5121 = vpop.permute.xlu0 %5120
        %5122 = vrot.lane.b32.xlu0 %v5029, 126
        %v5123 = vpop.permute.xlu0 %5122
        %5124 = vrot.lane.b32.xlu0 %v5031, 126
        %v5125 = vpop.permute.xlu0 %5124
        %5126 = vrot.lane.b32.xlu0 %v5032, 126
        %v5127 = vpop.permute.xlu0 %5126
        %5128 = vrot.lane.b32.xlu0 %v5034, 126
        %v5129 = vpop.permute.xlu0 %5128
        %5130 = vrot.lane.b32.xlu0 %v5035, 126
        %v5131 = vpop.permute.xlu0 %5130
        %5132 = vrot.lane.b32.xlu0 %v5037, 126
        %v5133 = vpop.permute.xlu0 %5132
        %5134 = vrot.lane.b32.xlu0 %v5038, 126
        %v5135 = vpop.permute.xlu0 %5134
        %v5160 = vrot.slane %v5016, 1
        %v5161 = vrot.slane %v5017, 1
        %v5162 = vsel %vm1045, %v5160, %v5161
        %v5163 = vrot.slane %v5018, 1
        %v5164 = vsel %vm1045, %v5161, %v5163
        %v5165 = vrot.slane %v5019, 1
        %v5166 = vrot.slane %v5020, 1
        %v5167 = vsel %vm1045, %v5165, %v5166
        %v5168 = vrot.slane %v5021, 1
        %v5169 = vsel %vm1045, %v5166, %v5168
        %v5170 = vrot.slane %v5022, 1
        %v5171 = vrot.slane %v5023, 1
        %v5172 = vsel %vm1045, %v5170, %v5171
        %v5173 = vrot.slane %v5024, 1
        %v5174 = vsel %vm1045, %v5171, %v5173
        %v5175 = vrot.slane %v5025, 1
        %v5176 = vrot.slane %v5026, 1
        %v5177 = vsel %vm1045, %v5175, %v5176
        %v5178 = vrot.slane %v5027, 1
        %v5179 = vsel %vm1045, %v5176, %v5178
        %v5180 = vrot.slane %v5028, 1
        %v5181 = vrot.slane %v5029, 1
        %v5182 = vsel %vm1045, %v5180, %v5181
        %v5183 = vrot.slane %v5030, 1
        %v5184 = vsel %vm1045, %v5181, %v5183
        %v5185 = vrot.slane %v5031, 1
        %v5186 = vrot.slane %v5032, 1
        %v5187 = vsel %vm1045, %v5185, %v5186
        %v5188 = vrot.slane %v5033, 1
        %v5189 = vsel %vm1045, %v5186, %v5188
        %v5190 = vrot.slane %v5034, 1
        %v5191 = vrot.slane %v5035, 1
        %v5192 = vsel %vm1045, %v5190, %v5191
        %v5193 = vrot.slane %v5036, 1
        %v5194 = vsel %vm1045, %v5191, %v5193
        %v5195 = vrot.slane %v5037, 1
        %v5196 = vrot.slane %v5038, 1
        %v5197 = vsel %vm1045, %v5195, %v5196
        %v5198 = vrot.slane %v5039, 1
        %v5199 = vsel %vm1045, %v5196, %v5198
        %5216 = vrot.lane.b32.xlu0 %v5162, 127
        %v5217 = vpop.permute.xlu0 %5216
        %5218 = vrot.lane.b32.xlu0 %v5164, 127
        %v5219 = vpop.permute.xlu0 %5218
        %5220 = vrot.lane.b32.xlu0 %v5167, 127
        %v5221 = vpop.permute.xlu0 %5220
        %5222 = vrot.lane.b32.xlu0 %v5169, 127
        %v5223 = vpop.permute.xlu0 %5222
        %5224 = vrot.lane.b32.xlu0 %v5172, 127
        %v5225 = vpop.permute.xlu0 %5224
        %5226 = vrot.lane.b32.xlu0 %v5174, 127
        %v5227 = vpop.permute.xlu0 %5226
        %5228 = vrot.lane.b32.xlu0 %v5177, 127
        %v5229 = vpop.permute.xlu0 %5228
        %5230 = vrot.lane.b32.xlu0 %v5179, 127
        %v5231 = vpop.permute.xlu0 %5230
        %5232 = vrot.lane.b32.xlu0 %v5182, 127
        %v5233 = vpop.permute.xlu0 %5232
        %5234 = vrot.lane.b32.xlu0 %v5184, 127
        %v5235 = vpop.permute.xlu0 %5234
        %5236 = vrot.lane.b32.xlu0 %v5187, 127
        %v5237 = vpop.permute.xlu0 %5236
        %5238 = vrot.lane.b32.xlu0 %v5189, 127
        %v5239 = vpop.permute.xlu0 %5238
        %5240 = vrot.lane.b32.xlu0 %v5192, 127
        %v5241 = vpop.permute.xlu0 %5240
        %5242 = vrot.lane.b32.xlu0 %v5194, 127
        %v5243 = vpop.permute.xlu0 %5242
        %5244 = vrot.lane.b32.xlu0 %v5197, 127
        %v5245 = vpop.permute.xlu0 %5244
        %5246 = vrot.lane.b32.xlu0 %v5199, 127
        %v5247 = vpop.permute.xlu0 %5246
        %5264 = vrot.lane.b32.xlu0 %v5162, 126
        %v5265 = vpop.permute.xlu0 %5264
        %5266 = vrot.lane.b32.xlu0 %v5164, 126
        %v5267 = vpop.permute.xlu0 %5266
        %5268 = vrot.lane.b32.xlu0 %v5167, 126
        %v5269 = vpop.permute.xlu0 %5268
        %5270 = vrot.lane.b32.xlu0 %v5169, 126
        %v5271 = vpop.permute.xlu0 %5270
        %5272 = vrot.lane.b32.xlu0 %v5172, 126
        %v5273 = vpop.permute.xlu0 %5272
        %5274 = vrot.lane.b32.xlu0 %v5174, 126
        %v5275 = vpop.permute.xlu0 %5274
        %5276 = vrot.lane.b32.xlu0 %v5177, 126
        %v5277 = vpop.permute.xlu0 %5276
        %5278 = vrot.lane.b32.xlu0 %v5179, 126
        %v5279 = vpop.permute.xlu0 %5278
        %5280 = vrot.lane.b32.xlu0 %v5182, 126
        %v5281 = vpop.permute.xlu0 %5280
        %5282 = vrot.lane.b32.xlu0 %v5184, 126
        %v5283 = vpop.permute.xlu0 %5282
        %5284 = vrot.lane.b32.xlu0 %v5187, 126
        %v5285 = vpop.permute.xlu0 %5284
        %5286 = vrot.lane.b32.xlu0 %v5189, 126
        %v5287 = vpop.permute.xlu0 %5286
        %5288 = vrot.lane.b32.xlu0 %v5192, 126
        %v5289 = vpop.permute.xlu0 %5288
        %5290 = vrot.lane.b32.xlu0 %v5194, 126
        %v5291 = vpop.permute.xlu0 %5290
        %5292 = vrot.lane.b32.xlu0 %v5197, 126
        %v5293 = vpop.permute.xlu0 %5292
        %5294 = vrot.lane.b32.xlu0 %v5199, 126
        %v5295 = vpop.permute.xlu0 %5294
        %v5312 = vrot.slane %v5016, 2
        %v5313 = vrot.slane %v5017, 2
        %v5314 = vsel %vm1198, %v5312, %v5313
        %v5315 = vrot.slane %v5018, 2
        %v5316 = vsel %vm1198, %v5313, %v5315
        %v5317 = vrot.slane %v5019, 2
        %v5318 = vrot.slane %v5020, 2
        %v5319 = vsel %vm1198, %v5317, %v5318
        %v5320 = vrot.slane %v5021, 2
        %v5321 = vsel %vm1198, %v5318, %v5320
        %v5322 = vrot.slane %v5022, 2
        %v5323 = vrot.slane %v5023, 2
        %v5324 = vsel %vm1198, %v5322, %v5323
        %v5325 = vrot.slane %v5024, 2
        %v5326 = vsel %vm1198, %v5323, %v5325
        %v5327 = vrot.slane %v5025, 2
        %v5328 = vrot.slane %v5026, 2
        %v5329 = vsel %vm1198, %v5327, %v5328
        %v5330 = vrot.slane %v5027, 2
        %v5331 = vsel %vm1198, %v5328, %v5330
        %v5332 = vrot.slane %v5028, 2
        %v5333 = vrot.slane %v5029, 2
        %v5334 = vsel %vm1198, %v5332, %v5333
        %v5335 = vrot.slane %v5030, 2
        %v5336 = vsel %vm1198, %v5333, %v5335
        %v5337 = vrot.slane %v5031, 2
        %v5338 = vrot.slane %v5032, 2
        %v5339 = vsel %vm1198, %v5337, %v5338
        %v5340 = vrot.slane %v5033, 2
        %v5341 = vsel %vm1198, %v5338, %v5340
        %v5342 = vrot.slane %v5034, 2
        %v5343 = vrot.slane %v5035, 2
        %v5344 = vsel %vm1198, %v5342, %v5343
        %v5345 = vrot.slane %v5036, 2
        %v5346 = vsel %vm1198, %v5343, %v5345
        %v5347 = vrot.slane %v5037, 2
        %v5348 = vrot.slane %v5038, 2
        %v5349 = vsel %vm1198, %v5347, %v5348
        %v5350 = vrot.slane %v5039, 2
        %v5351 = vsel %vm1198, %v5348, %v5350
        %5368 = vrot.lane.b32.xlu0 %v5314, 127
        %v5369 = vpop.permute.xlu0 %5368
        %5370 = vrot.lane.b32.xlu0 %v5316, 127
        %v5371 = vpop.permute.xlu0 %5370
        %5372 = vrot.lane.b32.xlu0 %v5319, 127
        %v5373 = vpop.permute.xlu0 %5372
        %5374 = vrot.lane.b32.xlu0 %v5321, 127
        %v5375 = vpop.permute.xlu0 %5374
        %5376 = vrot.lane.b32.xlu0 %v5324, 127
        %v5377 = vpop.permute.xlu0 %5376
        %5378 = vrot.lane.b32.xlu0 %v5326, 127
        %v5379 = vpop.permute.xlu0 %5378
        %5380 = vrot.lane.b32.xlu0 %v5329, 127
        %v5381 = vpop.permute.xlu0 %5380
        %5382 = vrot.lane.b32.xlu0 %v5331, 127
        %v5383 = vpop.permute.xlu0 %5382
        %5384 = vrot.lane.b32.xlu0 %v5334, 127
        %v5385 = vpop.permute.xlu0 %5384
        %5386 = vrot.lane.b32.xlu0 %v5336, 127
        %v5387 = vpop.permute.xlu0 %5386
        %5388 = vrot.lane.b32.xlu0 %v5339, 127
        %v5389 = vpop.permute.xlu0 %5388
        %5390 = vrot.lane.b32.xlu0 %v5341, 127
        %v5391 = vpop.permute.xlu0 %5390
        %5392 = vrot.lane.b32.xlu0 %v5344, 127
        %v5393 = vpop.permute.xlu0 %5392
        %5394 = vrot.lane.b32.xlu0 %v5346, 127
        %v5395 = vpop.permute.xlu0 %5394
        %5396 = vrot.lane.b32.xlu0 %v5349, 127
        %v5397 = vpop.permute.xlu0 %5396
        %5398 = vrot.lane.b32.xlu0 %v5351, 127
        %v5399 = vpop.permute.xlu0 %5398
        %5416 = vrot.lane.b32.xlu0 %v5314, 126
        %v5417 = vpop.permute.xlu0 %5416
        %5418 = vrot.lane.b32.xlu0 %v5316, 126
        %v5419 = vpop.permute.xlu0 %5418
        %5420 = vrot.lane.b32.xlu0 %v5319, 126
        %v5421 = vpop.permute.xlu0 %5420
        %5422 = vrot.lane.b32.xlu0 %v5321, 126
        %v5423 = vpop.permute.xlu0 %5422
        %5424 = vrot.lane.b32.xlu0 %v5324, 126
        %v5425 = vpop.permute.xlu0 %5424
        %5426 = vrot.lane.b32.xlu0 %v5326, 126
        %v5427 = vpop.permute.xlu0 %5426
        %5428 = vrot.lane.b32.xlu0 %v5329, 126
        %v5429 = vpop.permute.xlu0 %5428
        %5430 = vrot.lane.b32.xlu0 %v5331, 126
        %v5431 = vpop.permute.xlu0 %5430
        %5432 = vrot.lane.b32.xlu0 %v5334, 126
        %v5433 = vpop.permute.xlu0 %5432
        %5434 = vrot.lane.b32.xlu0 %v5336, 126
        %v5435 = vpop.permute.xlu0 %5434
        %5436 = vrot.lane.b32.xlu0 %v5339, 126
        %v5437 = vpop.permute.xlu0 %5436
        %5438 = vrot.lane.b32.xlu0 %v5341, 126
        %v5439 = vpop.permute.xlu0 %5438
        %5440 = vrot.lane.b32.xlu0 %v5344, 126
        %v5441 = vpop.permute.xlu0 %5440
        %5442 = vrot.lane.b32.xlu0 %v5346, 126
        %v5443 = vpop.permute.xlu0 %5442
        %5444 = vrot.lane.b32.xlu0 %v5349, 126
        %v5445 = vpop.permute.xlu0 %5444
        %5446 = vrot.lane.b32.xlu0 %v5351, 126
        %v5447 = vpop.permute.xlu0 %5446
        %v5464 = vcombine.low %v5016, %v5022
        %v5465 = vcombine.high %v5016, %v5022
        %v5467 = vunpack.c.l.s4 1983009808
        %v5468 = vunpack.c.0.s8 %v5467
        %v5469 = vlaneseq
        %v5470 = vshrl.u32 %v5469, 7
        %v5471 = vsub.s32 %v5468, %v5470
        %v5472 = vrot.slane %v5464, %v5471
        %v5474 = vunpack.c.l.s4 1983009808
        %v5475 = vunpack.c.0.s8 %v5474
        %v5476 = vlaneseq
        %v5477 = vshrl.u32 %v5476, 7
        %v5478 = vsub.s32 %v5475, %v5477
        %v5479 = vrot.slane %v5465, %v5478
        %v5480 = vcombine.low %v5019, %v5025
        %v5481 = vcombine.high %v5019, %v5025
        %v5483 = vunpack.c.l.s4 1983009808
        %v5484 = vunpack.c.0.s8 %v5483
        %v5485 = vlaneseq
        %v5486 = vshrl.u32 %v5485, 7
        %v5487 = vsub.s32 %v5484, %v5486
        %v5488 = vrot.slane %v5480, %v5487
        %v5490 = vunpack.c.l.s4 1983009808
        %v5491 = vunpack.c.0.s8 %v5490
        %v5492 = vlaneseq
        %v5493 = vshrl.u32 %v5492, 7
        %v5494 = vsub.s32 %v5491, %v5493
        %v5495 = vrot.slane %v5481, %v5494
        %v5496 = vcombine.low %v5028, %v5034
        %v5497 = vcombine.high %v5028, %v5034
        %v5499 = vunpack.c.l.s4 1983009808
        %v5500 = vunpack.c.0.s8 %v5499
        %v5501 = vlaneseq
        %v5502 = vshrl.u32 %v5501, 7
        %v5503 = vsub.s32 %v5500, %v5502
        %v5504 = vrot.slane %v5496, %v5503
        %v5506 = vunpack.c.l.s4 1983009808
        %v5507 = vunpack.c.0.s8 %v5506
        %v5508 = vlaneseq
        %v5509 = vshrl.u32 %v5508, 7
        %v5510 = vsub.s32 %v5507, %v5509
        %v5511 = vrot.slane %v5497, %v5510
        %v5512 = vcombine.low %v5031, %v5037
        %v5513 = vcombine.high %v5031, %v5037
        %v5515 = vunpack.c.l.s4 1983009808
        %v5516 = vunpack.c.0.s8 %v5515
        %v5517 = vlaneseq
        %v5518 = vshrl.u32 %v5517, 7
        %v5519 = vsub.s32 %v5516, %v5518
        %v5520 = vrot.slane %v5512, %v5519
        %v5522 = vunpack.c.l.s4 1983009808
        %v5523 = vunpack.c.0.s8 %v5522
        %v5524 = vlaneseq
        %v5525 = vshrl.u32 %v5524, 7
        %v5526 = vsub.s32 %v5523, %v5525
        %v5527 = vrot.slane %v5513, %v5526
        %v5528 = vcombine.low %v5472, %v5488
        %v5529 = vcombine.high %v5472, %v5488
        %v5531 = vunpack.c.l.s4 1934713408
        %v5532 = vunpack.c.0.s8 %v5531
        %v5533 = vlaneseq
        %v5534 = vshrl.u32 %v5533, 7
        %v5535 = vsub.s32 %v5532, %v5534
        %v5536 = vrot.slane %v5528, %v5535
        %v5538 = vunpack.c.l.s4 1934713408
        %v5539 = vunpack.c.0.s8 %v5538
        %v5540 = vlaneseq
        %v5541 = vshrl.u32 %v5540, 7
        %v5542 = vsub.s32 %v5539, %v5541
        %v5543 = vrot.slane %v5529, %v5542
        %v5544 = vcombine.low %v5479, %v5495
        %v5545 = vcombine.high %v5479, %v5495
        %v5547 = vunpack.c.l.s4 1934713408
        %v5548 = vunpack.c.0.s8 %v5547
        %v5549 = vlaneseq
        %v5550 = vshrl.u32 %v5549, 7
        %v5551 = vsub.s32 %v5548, %v5550
        %v5552 = vrot.slane %v5544, %v5551
        %v5554 = vunpack.c.l.s4 1934713408
        %v5555 = vunpack.c.0.s8 %v5554
        %v5556 = vlaneseq
        %v5557 = vshrl.u32 %v5556, 7
        %v5558 = vsub.s32 %v5555, %v5557
        %v5559 = vrot.slane %v5545, %v5558
        %v5560 = vcombine.low %v5504, %v5520
        %v5561 = vcombine.high %v5504, %v5520
        %v5563 = vunpack.c.l.s4 1934713408
        %v5564 = vunpack.c.0.s8 %v5563
        %v5565 = vlaneseq
        %v5566 = vshrl.u32 %v5565, 7
        %v5567 = vsub.s32 %v5564, %v5566
        %v5568 = vrot.slane %v5560, %v5567
        %v5570 = vunpack.c.l.s4 1934713408
        %v5571 = vunpack.c.0.s8 %v5570
        %v5572 = vlaneseq
        %v5573 = vshrl.u32 %v5572, 7
        %v5574 = vsub.s32 %v5571, %v5573
        %v5575 = vrot.slane %v5561, %v5574
        %v5576 = vcombine.low %v5511, %v5527
        %v5577 = vcombine.high %v5511, %v5527
        %v5579 = vunpack.c.l.s4 1934713408
        %v5580 = vunpack.c.0.s8 %v5579
        %v5581 = vlaneseq
        %v5582 = vshrl.u32 %v5581, 7
        %v5583 = vsub.s32 %v5580, %v5582
        %v5584 = vrot.slane %v5576, %v5583
        %v5586 = vunpack.c.l.s4 1934713408
        %v5587 = vunpack.c.0.s8 %v5586
        %v5588 = vlaneseq
        %v5589 = vshrl.u32 %v5588, 7
        %v5590 = vsub.s32 %v5587, %v5589
        %v5591 = vrot.slane %v5577, %v5590
        %v5592 = vcombine.low %v5536, %v5568
        %v5593 = vcombine.high %v5536, %v5568
        %v5594 = vcombine.low %v5543, %v5575
        %v5595 = vcombine.high %v5543, %v5575
        %v5596 = vcombine.low %v5552, %v5584
        %v5597 = vcombine.high %v5552, %v5584
        %v5598 = vcombine.low %v5559, %v5591
        %v5599 = vcombine.high %v5559, %v5591
        %v5600 = vcombine.low %v5057, %v5065
        %v5601 = vcombine.high %v5057, %v5065
        %v5603 = vunpack.c.l.s4 1983009808
        %v5604 = vunpack.c.0.s8 %v5603
        %v5605 = vlaneseq
        %v5606 = vshrl.u32 %v5605, 7
        %v5607 = vsub.s32 %v5604, %v5606
        %v5608 = vrot.slane %v5600, %v5607
        %v5610 = vunpack.c.l.s4 1983009808
        %v5611 = vunpack.c.0.s8 %v5610
        %v5612 = vlaneseq
        %v5613 = vshrl.u32 %v5612, 7
        %v5614 = vsub.s32 %v5611, %v5613
        %v5615 = vrot.slane %v5601, %v5614
        %v5616 = vcombine.low %v5061, %v5069
        %v5617 = vcombine.high %v5061, %v5069
        %v5619 = vunpack.c.l.s4 1983009808
        %v5620 = vunpack.c.0.s8 %v5619
        %v5621 = vlaneseq
        %v5622 = vshrl.u32 %v5621, 7
        %v5623 = vsub.s32 %v5620, %v5622
        %v5624 = vrot.slane %v5616, %v5623
        %v5626 = vunpack.c.l.s4 1983009808
        %v5627 = vunpack.c.0.s8 %v5626
        %v5628 = vlaneseq
        %v5629 = vshrl.u32 %v5628, 7
        %v5630 = vsub.s32 %v5627, %v5629
        %v5631 = vrot.slane %v5617, %v5630
        %v5632 = vcombine.low %v5073, %v5081
        %v5633 = vcombine.high %v5073, %v5081
        %v5635 = vunpack.c.l.s4 1983009808
        %v5636 = vunpack.c.0.s8 %v5635
        %v5637 = vlaneseq
        %v5638 = vshrl.u32 %v5637, 7
        %v5639 = vsub.s32 %v5636, %v5638
        %v5640 = vrot.slane %v5632, %v5639
        %v5642 = vunpack.c.l.s4 1983009808
        %v5643 = vunpack.c.0.s8 %v5642
        %v5644 = vlaneseq
        %v5645 = vshrl.u32 %v5644, 7
        %v5646 = vsub.s32 %v5643, %v5645
        %v5647 = vrot.slane %v5633, %v5646
        %v5648 = vcombine.low %v5077, %v5085
        %v5649 = vcombine.high %v5077, %v5085
        %v5651 = vunpack.c.l.s4 1983009808
        %v5652 = vunpack.c.0.s8 %v5651
        %v5653 = vlaneseq
        %v5654 = vshrl.u32 %v5653, 7
        %v5655 = vsub.s32 %v5652, %v5654
        %v5656 = vrot.slane %v5648, %v5655
        %v5658 = vunpack.c.l.s4 1983009808
        %v5659 = vunpack.c.0.s8 %v5658
        %v5660 = vlaneseq
        %v5661 = vshrl.u32 %v5660, 7
        %v5662 = vsub.s32 %v5659, %v5661
        %v5663 = vrot.slane %v5649, %v5662
        %v5664 = vcombine.low %v5608, %v5624
        %v5665 = vcombine.high %v5608, %v5624
        %v5667 = vunpack.c.l.s4 1934713408
        %v5668 = vunpack.c.0.s8 %v5667
        %v5669 = vlaneseq
        %v5670 = vshrl.u32 %v5669, 7
        %v5671 = vsub.s32 %v5668, %v5670
        %v5672 = vrot.slane %v5664, %v5671
        %v5674 = vunpack.c.l.s4 1934713408
        %v5675 = vunpack.c.0.s8 %v5674
        %v5676 = vlaneseq
        %v5677 = vshrl.u32 %v5676, 7
        %v5678 = vsub.s32 %v5675, %v5677
        %v5679 = vrot.slane %v5665, %v5678
        %v5680 = vcombine.low %v5615, %v5631
        %v5681 = vcombine.high %v5615, %v5631
        %v5683 = vunpack.c.l.s4 1934713408
        %v5684 = vunpack.c.0.s8 %v5683
        %v5685 = vlaneseq
        %v5686 = vshrl.u32 %v5685, 7
        %v5687 = vsub.s32 %v5684, %v5686
        %v5688 = vrot.slane %v5680, %v5687
        %v5690 = vunpack.c.l.s4 1934713408
        %v5691 = vunpack.c.0.s8 %v5690
        %v5692 = vlaneseq
        %v5693 = vshrl.u32 %v5692, 7
        %v5694 = vsub.s32 %v5691, %v5693
        %v5695 = vrot.slane %v5681, %v5694
        %v5696 = vcombine.low %v5640, %v5656
        %v5697 = vcombine.high %v5640, %v5656
        %v5699 = vunpack.c.l.s4 1934713408
        %v5700 = vunpack.c.0.s8 %v5699
        %v5701 = vlaneseq
        %v5702 = vshrl.u32 %v5701, 7
        %v5703 = vsub.s32 %v5700, %v5702
        %v5704 = vrot.slane %v5696, %v5703
        %v5706 = vunpack.c.l.s4 1934713408
        %v5707 = vunpack.c.0.s8 %v5706
        %v5708 = vlaneseq
        %v5709 = vshrl.u32 %v5708, 7
        %v5710 = vsub.s32 %v5707, %v5709
        %v5711 = vrot.slane %v5697, %v5710
        %v5712 = vcombine.low %v5647, %v5663
        %v5713 = vcombine.high %v5647, %v5663
        %v5715 = vunpack.c.l.s4 1934713408
        %v5716 = vunpack.c.0.s8 %v5715
        %v5717 = vlaneseq
        %v5718 = vshrl.u32 %v5717, 7
        %v5719 = vsub.s32 %v5716, %v5718
        %v5720 = vrot.slane %v5712, %v5719
        %v5722 = vunpack.c.l.s4 1934713408
        %v5723 = vunpack.c.0.s8 %v5722
        %v5724 = vlaneseq
        %v5725 = vshrl.u32 %v5724, 7
        %v5726 = vsub.s32 %v5723, %v5725
        %v5727 = vrot.slane %v5713, %v5726
        %v5728 = vcombine.low %v5672, %v5704
        %v5729 = vcombine.high %v5672, %v5704
        %v5730 = vcombine.low %v5679, %v5711
        %v5731 = vcombine.high %v5679, %v5711
        %v5732 = vcombine.low %v5688, %v5720
        %v5733 = vcombine.high %v5688, %v5720
        %v5734 = vcombine.low %v5695, %v5727
        %v5735 = vcombine.high %v5695, %v5727
        %v5736 = vcombine.low %v5105, %v5113
        %v5737 = vcombine.high %v5105, %v5113
        %v5739 = vunpack.c.l.s4 1983009808
        %v5740 = vunpack.c.0.s8 %v5739
        %v5741 = vlaneseq
        %v5742 = vshrl.u32 %v5741, 7
        %v5743 = vsub.s32 %v5740, %v5742
        %v5744 = vrot.slane %v5736, %v5743
        %v5746 = vunpack.c.l.s4 1983009808
        %v5747 = vunpack.c.0.s8 %v5746
        %v5748 = vlaneseq
        %v5749 = vshrl.u32 %v5748, 7
        %v5750 = vsub.s32 %v5747, %v5749
        %v5751 = vrot.slane %v5737, %v5750
        %v5752 = vcombine.low %v5109, %v5117
        %v5753 = vcombine.high %v5109, %v5117
        %v5755 = vunpack.c.l.s4 1983009808
        %v5756 = vunpack.c.0.s8 %v5755
        %v5757 = vlaneseq
        %v5758 = vshrl.u32 %v5757, 7
        %v5759 = vsub.s32 %v5756, %v5758
        %v5760 = vrot.slane %v5752, %v5759
        %v5762 = vunpack.c.l.s4 1983009808
        %v5763 = vunpack.c.0.s8 %v5762
        %v5764 = vlaneseq
        %v5765 = vshrl.u32 %v5764, 7
        %v5766 = vsub.s32 %v5763, %v5765
        %v5767 = vrot.slane %v5753, %v5766
        %v5768 = vcombine.low %v5121, %v5129
        %v5769 = vcombine.high %v5121, %v5129
        %v5771 = vunpack.c.l.s4 1983009808
        %v5772 = vunpack.c.0.s8 %v5771
        %v5773 = vlaneseq
        %v5774 = vshrl.u32 %v5773, 7
        %v5775 = vsub.s32 %v5772, %v5774
        %v5776 = vrot.slane %v5768, %v5775
        %v5778 = vunpack.c.l.s4 1983009808
        %v5779 = vunpack.c.0.s8 %v5778
        %v5780 = vlaneseq
        %v5781 = vshrl.u32 %v5780, 7
        %v5782 = vsub.s32 %v5779, %v5781
        %v5783 = vrot.slane %v5769, %v5782
        %v5784 = vcombine.low %v5125, %v5133
        %v5785 = vcombine.high %v5125, %v5133
        %v5787 = vunpack.c.l.s4 1983009808
        %v5788 = vunpack.c.0.s8 %v5787
        %v5789 = vlaneseq
        %v5790 = vshrl.u32 %v5789, 7
        %v5791 = vsub.s32 %v5788, %v5790
        %v5792 = vrot.slane %v5784, %v5791
        %v5794 = vunpack.c.l.s4 1983009808
        %v5795 = vunpack.c.0.s8 %v5794
        %v5796 = vlaneseq
        %v5797 = vshrl.u32 %v5796, 7
        %v5798 = vsub.s32 %v5795, %v5797
        %v5799 = vrot.slane %v5785, %v5798
        %v5800 = vcombine.low %v5744, %v5760
        %v5801 = vcombine.high %v5744, %v5760
        %v5803 = vunpack.c.l.s4 1934713408
        %v5804 = vunpack.c.0.s8 %v5803
        %v5805 = vlaneseq
        %v5806 = vshrl.u32 %v5805, 7
        %v5807 = vsub.s32 %v5804, %v5806
        %v5808 = vrot.slane %v5800, %v5807
        %v5810 = vunpack.c.l.s4 1934713408
        %v5811 = vunpack.c.0.s8 %v5810
        %v5812 = vlaneseq
        %v5813 = vshrl.u32 %v5812, 7
        %v5814 = vsub.s32 %v5811, %v5813
        %v5815 = vrot.slane %v5801, %v5814
        %v5816 = vcombine.low %v5751, %v5767
        %v5817 = vcombine.high %v5751, %v5767
        %v5819 = vunpack.c.l.s4 1934713408
        %v5820 = vunpack.c.0.s8 %v5819
        %v5821 = vlaneseq
        %v5822 = vshrl.u32 %v5821, 7
        %v5823 = vsub.s32 %v5820, %v5822
        %v5824 = vrot.slane %v5816, %v5823
        %v5826 = vunpack.c.l.s4 1934713408
        %v5827 = vunpack.c.0.s8 %v5826
        %v5828 = vlaneseq
        %v5829 = vshrl.u32 %v5828, 7
        %v5830 = vsub.s32 %v5827, %v5829
        %v5831 = vrot.slane %v5817, %v5830
        %v5832 = vcombine.low %v5776, %v5792
        %v5833 = vcombine.high %v5776, %v5792
        %v5835 = vunpack.c.l.s4 1934713408
        %v5836 = vunpack.c.0.s8 %v5835
        %v5837 = vlaneseq
        %v5838 = vshrl.u32 %v5837, 7
        %v5839 = vsub.s32 %v5836, %v5838
        %v5840 = vrot.slane %v5832, %v5839
        %v5842 = vunpack.c.l.s4 1934713408
        %v5843 = vunpack.c.0.s8 %v5842
        %v5844 = vlaneseq
        %v5845 = vshrl.u32 %v5844, 7
        %v5846 = vsub.s32 %v5843, %v5845
        %v5847 = vrot.slane %v5833, %v5846
        %v5848 = vcombine.low %v5783, %v5799
        %v5849 = vcombine.high %v5783, %v5799
        %v5851 = vunpack.c.l.s4 1934713408
        %v5852 = vunpack.c.0.s8 %v5851
        %v5853 = vlaneseq
        %v5854 = vshrl.u32 %v5853, 7
        %v5855 = vsub.s32 %v5852, %v5854
        %v5856 = vrot.slane %v5848, %v5855
        %v5858 = vunpack.c.l.s4 1934713408
        %v5859 = vunpack.c.0.s8 %v5858
        %v5860 = vlaneseq
        %v5861 = vshrl.u32 %v5860, 7
        %v5862 = vsub.s32 %v5859, %v5861
        %v5863 = vrot.slane %v5849, %v5862
        %v5864 = vcombine.low %v5808, %v5840
        %v5865 = vcombine.high %v5808, %v5840
        %v5866 = vcombine.low %v5815, %v5847
        %v5867 = vcombine.high %v5815, %v5847
        %v5868 = vcombine.low %v5824, %v5856
        %v5869 = vcombine.high %v5824, %v5856
        %v5870 = vcombine.low %v5831, %v5863
        %v5871 = vcombine.high %v5831, %v5863
        %v5872 = vcombine.low %v5162, %v5172
        %v5873 = vcombine.high %v5162, %v5172
        %v5875 = vunpack.c.l.s4 1983009808
        %v5876 = vunpack.c.0.s8 %v5875
        %v5877 = vlaneseq
        %v5878 = vshrl.u32 %v5877, 7
        %v5879 = vsub.s32 %v5876, %v5878
        %v5880 = vrot.slane %v5872, %v5879
        %v5882 = vunpack.c.l.s4 1983009808
        %v5883 = vunpack.c.0.s8 %v5882
        %v5884 = vlaneseq
        %v5885 = vshrl.u32 %v5884, 7
        %v5886 = vsub.s32 %v5883, %v5885
        %v5887 = vrot.slane %v5873, %v5886
        %v5888 = vcombine.low %v5167, %v5177
        %v5889 = vcombine.high %v5167, %v5177
        %v5891 = vunpack.c.l.s4 1983009808
        %v5892 = vunpack.c.0.s8 %v5891
        %v5893 = vlaneseq
        %v5894 = vshrl.u32 %v5893, 7
        %v5895 = vsub.s32 %v5892, %v5894
        %v5896 = vrot.slane %v5888, %v5895
        %v5898 = vunpack.c.l.s4 1983009808
        %v5899 = vunpack.c.0.s8 %v5898
        %v5900 = vlaneseq
        %v5901 = vshrl.u32 %v5900, 7
        %v5902 = vsub.s32 %v5899, %v5901
        %v5903 = vrot.slane %v5889, %v5902
        %v5904 = vcombine.low %v5182, %v5192
        %v5905 = vcombine.high %v5182, %v5192
        %v5907 = vunpack.c.l.s4 1983009808
        %v5908 = vunpack.c.0.s8 %v5907
        %v5909 = vlaneseq
        %v5910 = vshrl.u32 %v5909, 7
        %v5911 = vsub.s32 %v5908, %v5910
        %v5912 = vrot.slane %v5904, %v5911
        %v5914 = vunpack.c.l.s4 1983009808
        %v5915 = vunpack.c.0.s8 %v5914
        %v5916 = vlaneseq
        %v5917 = vshrl.u32 %v5916, 7
        %v5918 = vsub.s32 %v5915, %v5917
        %v5919 = vrot.slane %v5905, %v5918
        %v5920 = vcombine.low %v5187, %v5197
        %v5921 = vcombine.high %v5187, %v5197
        %v5923 = vunpack.c.l.s4 1983009808
        %v5924 = vunpack.c.0.s8 %v5923
        %v5925 = vlaneseq
        %v5926 = vshrl.u32 %v5925, 7
        %v5927 = vsub.s32 %v5924, %v5926
        %v5928 = vrot.slane %v5920, %v5927
        %v5930 = vunpack.c.l.s4 1983009808
        %v5931 = vunpack.c.0.s8 %v5930
        %v5932 = vlaneseq
        %v5933 = vshrl.u32 %v5932, 7
        %v5934 = vsub.s32 %v5931, %v5933
        %v5935 = vrot.slane %v5921, %v5934
        %v5936 = vcombine.low %v5880, %v5896
        %v5937 = vcombine.high %v5880, %v5896
        %v5939 = vunpack.c.l.s4 1934713408
        %v5940 = vunpack.c.0.s8 %v5939
        %v5941 = vlaneseq
        %v5942 = vshrl.u32 %v5941, 7
        %v5943 = vsub.s32 %v5940, %v5942
        %v5944 = vrot.slane %v5936, %v5943
        %v5946 = vunpack.c.l.s4 1934713408
        %v5947 = vunpack.c.0.s8 %v5946
        %v5948 = vlaneseq
        %v5949 = vshrl.u32 %v5948, 7
        %v5950 = vsub.s32 %v5947, %v5949
        %v5951 = vrot.slane %v5937, %v5950
        %v5952 = vcombine.low %v5887, %v5903
        %v5953 = vcombine.high %v5887, %v5903
        %v5955 = vunpack.c.l.s4 1934713408
        %v5956 = vunpack.c.0.s8 %v5955
        %v5957 = vlaneseq
        %v5958 = vshrl.u32 %v5957, 7
        %v5959 = vsub.s32 %v5956, %v5958
        %v5960 = vrot.slane %v5952, %v5959
        %v5962 = vunpack.c.l.s4 1934713408
        %v5963 = vunpack.c.0.s8 %v5962
        %v5964 = vlaneseq
        %v5965 = vshrl.u32 %v5964, 7
        %v5966 = vsub.s32 %v5963, %v5965
        %v5967 = vrot.slane %v5953, %v5966
        %v5968 = vcombine.low %v5912, %v5928
        %v5969 = vcombine.high %v5912, %v5928
        %v5971 = vunpack.c.l.s4 1934713408
        %v5972 = vunpack.c.0.s8 %v5971
        %v5973 = vlaneseq
        %v5974 = vshrl.u32 %v5973, 7
        %v5975 = vsub.s32 %v5972, %v5974
        %v5976 = vrot.slane %v5968, %v5975
        %v5978 = vunpack.c.l.s4 1934713408
        %v5979 = vunpack.c.0.s8 %v5978
        %v5980 = vlaneseq
        %v5981 = vshrl.u32 %v5980, 7
        %v5982 = vsub.s32 %v5979, %v5981
        %v5983 = vrot.slane %v5969, %v5982
        %v5984 = vcombine.low %v5919, %v5935
        %v5985 = vcombine.high %v5919, %v5935
        %v5987 = vunpack.c.l.s4 1934713408
        %v5988 = vunpack.c.0.s8 %v5987
        %v5989 = vlaneseq
        %v5990 = vshrl.u32 %v5989, 7
        %v5991 = vsub.s32 %v5988, %v5990
        %v5992 = vrot.slane %v5984, %v5991
        %v5994 = vunpack.c.l.s4 1934713408
        %v5995 = vunpack.c.0.s8 %v5994
        %v5996 = vlaneseq
        %v5997 = vshrl.u32 %v5996, 7
        %v5998 = vsub.s32 %v5995, %v5997
        %v5999 = vrot.slane %v5985, %v5998
        %v6000 = vcombine.low %v5944, %v5976
        %v6001 = vcombine.high %v5944, %v5976
        %v6002 = vcombine.low %v5951, %v5983
        %v6003 = vcombine.high %v5951, %v5983
        %v6004 = vcombine.low %v5960, %v5992
        %v6005 = vcombine.high %v5960, %v5992
        %v6006 = vcombine.low %v5967, %v5999
        %v6007 = vcombine.high %v5967, %v5999
        %v6008 = vcombine.low %v5217, %v5225
        %v6009 = vcombine.high %v5217, %v5225
        %v6011 = vunpack.c.l.s4 1983009808
        %v6012 = vunpack.c.0.s8 %v6011
        %v6013 = vlaneseq
        %v6014 = vshrl.u32 %v6013, 7
        %v6015 = vsub.s32 %v6012, %v6014
        %v6016 = vrot.slane %v6008, %v6015
        %v6018 = vunpack.c.l.s4 1983009808
        %v6019 = vunpack.c.0.s8 %v6018
        %v6020 = vlaneseq
        %v6021 = vshrl.u32 %v6020, 7
        %v6022 = vsub.s32 %v6019, %v6021
        %v6023 = vrot.slane %v6009, %v6022
        %v6024 = vcombine.low %v5221, %v5229
        %v6025 = vcombine.high %v5221, %v5229
        %v6027 = vunpack.c.l.s4 1983009808
        %v6028 = vunpack.c.0.s8 %v6027
        %v6029 = vlaneseq
        %v6030 = vshrl.u32 %v6029, 7
        %v6031 = vsub.s32 %v6028, %v6030
        %v6032 = vrot.slane %v6024, %v6031
        %v6034 = vunpack.c.l.s4 1983009808
        %v6035 = vunpack.c.0.s8 %v6034
        %v6036 = vlaneseq
        %v6037 = vshrl.u32 %v6036, 7
        %v6038 = vsub.s32 %v6035, %v6037
        %v6039 = vrot.slane %v6025, %v6038
        %v6040 = vcombine.low %v5233, %v5241
        %v6041 = vcombine.high %v5233, %v5241
        %v6043 = vunpack.c.l.s4 1983009808
        %v6044 = vunpack.c.0.s8 %v6043
        %v6045 = vlaneseq
        %v6046 = vshrl.u32 %v6045, 7
        %v6047 = vsub.s32 %v6044, %v6046
        %v6048 = vrot.slane %v6040, %v6047
        %v6050 = vunpack.c.l.s4 1983009808
        %v6051 = vunpack.c.0.s8 %v6050
        %v6052 = vlaneseq
        %v6053 = vshrl.u32 %v6052, 7
        %v6054 = vsub.s32 %v6051, %v6053
        %v6055 = vrot.slane %v6041, %v6054
        %v6056 = vcombine.low %v5237, %v5245
        %v6057 = vcombine.high %v5237, %v5245
        %v6059 = vunpack.c.l.s4 1983009808
        %v6060 = vunpack.c.0.s8 %v6059
        %v6061 = vlaneseq
        %v6062 = vshrl.u32 %v6061, 7
        %v6063 = vsub.s32 %v6060, %v6062
        %v6064 = vrot.slane %v6056, %v6063
        %v6066 = vunpack.c.l.s4 1983009808
        %v6067 = vunpack.c.0.s8 %v6066
        %v6068 = vlaneseq
        %v6069 = vshrl.u32 %v6068, 7
        %v6070 = vsub.s32 %v6067, %v6069
        %v6071 = vrot.slane %v6057, %v6070
        %v6072 = vcombine.low %v6016, %v6032
        %v6073 = vcombine.high %v6016, %v6032
        %v6075 = vunpack.c.l.s4 1934713408
        %v6076 = vunpack.c.0.s8 %v6075
        %v6077 = vlaneseq
        %v6078 = vshrl.u32 %v6077, 7
        %v6079 = vsub.s32 %v6076, %v6078
        %v6080 = vrot.slane %v6072, %v6079
        %v6082 = vunpack.c.l.s4 1934713408
        %v6083 = vunpack.c.0.s8 %v6082
        %v6084 = vlaneseq
        %v6085 = vshrl.u32 %v6084, 7
        %v6086 = vsub.s32 %v6083, %v6085
        %v6087 = vrot.slane %v6073, %v6086
        %v6088 = vcombine.low %v6023, %v6039
        %v6089 = vcombine.high %v6023, %v6039
        %v6091 = vunpack.c.l.s4 1934713408
        %v6092 = vunpack.c.0.s8 %v6091
        %v6093 = vlaneseq
        %v6094 = vshrl.u32 %v6093, 7
        %v6095 = vsub.s32 %v6092, %v6094
        %v6096 = vrot.slane %v6088, %v6095
        %v6098 = vunpack.c.l.s4 1934713408
        %v6099 = vunpack.c.0.s8 %v6098
        %v6100 = vlaneseq
        %v6101 = vshrl.u32 %v6100, 7
        %v6102 = vsub.s32 %v6099, %v6101
        %v6103 = vrot.slane %v6089, %v6102
        %v6104 = vcombine.low %v6048, %v6064
        %v6105 = vcombine.high %v6048, %v6064
        %v6107 = vunpack.c.l.s4 1934713408
        %v6108 = vunpack.c.0.s8 %v6107
        %v6109 = vlaneseq
        %v6110 = vshrl.u32 %v6109, 7
        %v6111 = vsub.s32 %v6108, %v6110
        %v6112 = vrot.slane %v6104, %v6111
        %v6114 = vunpack.c.l.s4 1934713408
        %v6115 = vunpack.c.0.s8 %v6114
        %v6116 = vlaneseq
        %v6117 = vshrl.u32 %v6116, 7
        %v6118 = vsub.s32 %v6115, %v6117
        %v6119 = vrot.slane %v6105, %v6118
        %v6120 = vcombine.low %v6055, %v6071
        %v6121 = vcombine.high %v6055, %v6071
        %v6123 = vunpack.c.l.s4 1934713408
        %v6124 = vunpack.c.0.s8 %v6123
        %v6125 = vlaneseq
        %v6126 = vshrl.u32 %v6125, 7
        %v6127 = vsub.s32 %v6124, %v6126
        %v6128 = vrot.slane %v6120, %v6127
        %v6130 = vunpack.c.l.s4 1934713408
        %v6131 = vunpack.c.0.s8 %v6130
        %v6132 = vlaneseq
        %v6133 = vshrl.u32 %v6132, 7
        %v6134 = vsub.s32 %v6131, %v6133
        %v6135 = vrot.slane %v6121, %v6134
        %v6136 = vcombine.low %v6080, %v6112
        %v6137 = vcombine.high %v6080, %v6112
        %v6138 = vcombine.low %v6087, %v6119
        %v6139 = vcombine.high %v6087, %v6119
        %v6140 = vcombine.low %v6096, %v6128
        %v6141 = vcombine.high %v6096, %v6128
        %v6142 = vcombine.low %v6103, %v6135
        %v6143 = vcombine.high %v6103, %v6135
        %v6144 = vcombine.low %v5265, %v5273
        %v6145 = vcombine.high %v5265, %v5273
        %v6147 = vunpack.c.l.s4 1983009808
        %v6148 = vunpack.c.0.s8 %v6147
        %v6149 = vlaneseq
        %v6150 = vshrl.u32 %v6149, 7
        %v6151 = vsub.s32 %v6148, %v6150
        %v6152 = vrot.slane %v6144, %v6151
        %v6154 = vunpack.c.l.s4 1983009808
        %v6155 = vunpack.c.0.s8 %v6154
        %v6156 = vlaneseq
        %v6157 = vshrl.u32 %v6156, 7
        %v6158 = vsub.s32 %v6155, %v6157
        %v6159 = vrot.slane %v6145, %v6158
        %v6160 = vcombine.low %v5269, %v5277
        %v6161 = vcombine.high %v5269, %v5277
        %v6163 = vunpack.c.l.s4 1983009808
        %v6164 = vunpack.c.0.s8 %v6163
        %v6165 = vlaneseq
        %v6166 = vshrl.u32 %v6165, 7
        %v6167 = vsub.s32 %v6164, %v6166
        %v6168 = vrot.slane %v6160, %v6167
        %v6170 = vunpack.c.l.s4 1983009808
        %v6171 = vunpack.c.0.s8 %v6170
        %v6172 = vlaneseq
        %v6173 = vshrl.u32 %v6172, 7
        %v6174 = vsub.s32 %v6171, %v6173
        %v6175 = vrot.slane %v6161, %v6174
        %v6176 = vcombine.low %v5281, %v5289
        %v6177 = vcombine.high %v5281, %v5289
        %v6179 = vunpack.c.l.s4 1983009808
        %v6180 = vunpack.c.0.s8 %v6179
        %v6181 = vlaneseq
        %v6182 = vshrl.u32 %v6181, 7
        %v6183 = vsub.s32 %v6180, %v6182
        %v6184 = vrot.slane %v6176, %v6183
        %v6186 = vunpack.c.l.s4 1983009808
        %v6187 = vunpack.c.0.s8 %v6186
        %v6188 = vlaneseq
        %v6189 = vshrl.u32 %v6188, 7
        %v6190 = vsub.s32 %v6187, %v6189
        %v6191 = vrot.slane %v6177, %v6190
        %v6192 = vcombine.low %v5285, %v5293
        %v6193 = vcombine.high %v5285, %v5293
        %v6195 = vunpack.c.l.s4 1983009808
        %v6196 = vunpack.c.0.s8 %v6195
        %v6197 = vlaneseq
        %v6198 = vshrl.u32 %v6197, 7
        %v6199 = vsub.s32 %v6196, %v6198
        %v6200 = vrot.slane %v6192, %v6199
        %v6202 = vunpack.c.l.s4 1983009808
        %v6203 = vunpack.c.0.s8 %v6202
        %v6204 = vlaneseq
        %v6205 = vshrl.u32 %v6204, 7
        %v6206 = vsub.s32 %v6203, %v6205
        %v6207 = vrot.slane %v6193, %v6206
        %v6208 = vcombine.low %v6152, %v6168
        %v6209 = vcombine.high %v6152, %v6168
        %v6211 = vunpack.c.l.s4 1934713408
        %v6212 = vunpack.c.0.s8 %v6211
        %v6213 = vlaneseq
        %v6214 = vshrl.u32 %v6213, 7
        %v6215 = vsub.s32 %v6212, %v6214
        %v6216 = vrot.slane %v6208, %v6215
        %v6218 = vunpack.c.l.s4 1934713408
        %v6219 = vunpack.c.0.s8 %v6218
        %v6220 = vlaneseq
        %v6221 = vshrl.u32 %v6220, 7
        %v6222 = vsub.s32 %v6219, %v6221
        %v6223 = vrot.slane %v6209, %v6222
        %v6224 = vcombine.low %v6159, %v6175
        %v6225 = vcombine.high %v6159, %v6175
        %v6227 = vunpack.c.l.s4 1934713408
        %v6228 = vunpack.c.0.s8 %v6227
        %v6229 = vlaneseq
        %v6230 = vshrl.u32 %v6229, 7
        %v6231 = vsub.s32 %v6228, %v6230
        %v6232 = vrot.slane %v6224, %v6231
        %v6234 = vunpack.c.l.s4 1934713408
        %v6235 = vunpack.c.0.s8 %v6234
        %v6236 = vlaneseq
        %v6237 = vshrl.u32 %v6236, 7
        %v6238 = vsub.s32 %v6235, %v6237
        %v6239 = vrot.slane %v6225, %v6238
        %v6240 = vcombine.low %v6184, %v6200
        %v6241 = vcombine.high %v6184, %v6200
        %v6243 = vunpack.c.l.s4 1934713408
        %v6244 = vunpack.c.0.s8 %v6243
        %v6245 = vlaneseq
        %v6246 = vshrl.u32 %v6245, 7
        %v6247 = vsub.s32 %v6244, %v6246
        %v6248 = vrot.slane %v6240, %v6247
        %v6250 = vunpack.c.l.s4 1934713408
        %v6251 = vunpack.c.0.s8 %v6250
        %v6252 = vlaneseq
        %v6253 = vshrl.u32 %v6252, 7
        %v6254 = vsub.s32 %v6251, %v6253
        %v6255 = vrot.slane %v6241, %v6254
        %v6256 = vcombine.low %v6191, %v6207
        %v6257 = vcombine.high %v6191, %v6207
        %v6259 = vunpack.c.l.s4 1934713408
        %v6260 = vunpack.c.0.s8 %v6259
        %v6261 = vlaneseq
        %v6262 = vshrl.u32 %v6261, 7
        %v6263 = vsub.s32 %v6260, %v6262
        %v6264 = vrot.slane %v6256, %v6263
        %v6266 = vunpack.c.l.s4 1934713408
        %v6267 = vunpack.c.0.s8 %v6266
        %v6268 = vlaneseq
        %v6269 = vshrl.u32 %v6268, 7
        %v6270 = vsub.s32 %v6267, %v6269
        %v6271 = vrot.slane %v6257, %v6270
        %v6272 = vcombine.low %v6216, %v6248
        %v6273 = vcombine.high %v6216, %v6248
        %v6274 = vcombine.low %v6223, %v6255
        %v6275 = vcombine.high %v6223, %v6255
        %v6276 = vcombine.low %v6232, %v6264
        %v6277 = vcombine.high %v6232, %v6264
        %v6278 = vcombine.low %v6239, %v6271
        %v6279 = vcombine.high %v6239, %v6271
        %v6280 = vcombine.low %v5314, %v5324
        %v6281 = vcombine.high %v5314, %v5324
        %v6283 = vunpack.c.l.s4 1983009808
        %v6284 = vunpack.c.0.s8 %v6283
        %v6285 = vlaneseq
        %v6286 = vshrl.u32 %v6285, 7
        %v6287 = vsub.s32 %v6284, %v6286
        %v6288 = vrot.slane %v6280, %v6287
        %v6290 = vunpack.c.l.s4 1983009808
        %v6291 = vunpack.c.0.s8 %v6290
        %v6292 = vlaneseq
        %v6293 = vshrl.u32 %v6292, 7
        %v6294 = vsub.s32 %v6291, %v6293
        %v6295 = vrot.slane %v6281, %v6294
        %v6296 = vcombine.low %v5319, %v5329
        %v6297 = vcombine.high %v5319, %v5329
        %v6299 = vunpack.c.l.s4 1983009808
        %v6300 = vunpack.c.0.s8 %v6299
        %v6301 = vlaneseq
        %v6302 = vshrl.u32 %v6301, 7
        %v6303 = vsub.s32 %v6300, %v6302
        %v6304 = vrot.slane %v6296, %v6303
        %v6306 = vunpack.c.l.s4 1983009808
        %v6307 = vunpack.c.0.s8 %v6306
        %v6308 = vlaneseq
        %v6309 = vshrl.u32 %v6308, 7
        %v6310 = vsub.s32 %v6307, %v6309
        %v6311 = vrot.slane %v6297, %v6310
        %v6312 = vcombine.low %v5334, %v5344
        %v6313 = vcombine.high %v5334, %v5344
        %v6315 = vunpack.c.l.s4 1983009808
        %v6316 = vunpack.c.0.s8 %v6315
        %v6317 = vlaneseq
        %v6318 = vshrl.u32 %v6317, 7
        %v6319 = vsub.s32 %v6316, %v6318
        %v6320 = vrot.slane %v6312, %v6319
        %v6322 = vunpack.c.l.s4 1983009808
        %v6323 = vunpack.c.0.s8 %v6322
        %v6324 = vlaneseq
        %v6325 = vshrl.u32 %v6324, 7
        %v6326 = vsub.s32 %v6323, %v6325
        %v6327 = vrot.slane %v6313, %v6326
        %v6328 = vcombine.low %v5339, %v5349
        %v6329 = vcombine.high %v5339, %v5349
        %v6331 = vunpack.c.l.s4 1983009808
        %v6332 = vunpack.c.0.s8 %v6331
        %v6333 = vlaneseq
        %v6334 = vshrl.u32 %v6333, 7
        %v6335 = vsub.s32 %v6332, %v6334
        %v6336 = vrot.slane %v6328, %v6335
        %v6338 = vunpack.c.l.s4 1983009808
        %v6339 = vunpack.c.0.s8 %v6338
        %v6340 = vlaneseq
        %v6341 = vshrl.u32 %v6340, 7
        %v6342 = vsub.s32 %v6339, %v6341
        %v6343 = vrot.slane %v6329, %v6342
        %v6344 = vcombine.low %v6288, %v6304
        %v6345 = vcombine.high %v6288, %v6304
        %v6347 = vunpack.c.l.s4 1934713408
        %v6348 = vunpack.c.0.s8 %v6347
        %v6349 = vlaneseq
        %v6350 = vshrl.u32 %v6349, 7
        %v6351 = vsub.s32 %v6348, %v6350
        %v6352 = vrot.slane %v6344, %v6351
        %v6354 = vunpack.c.l.s4 1934713408
        %v6355 = vunpack.c.0.s8 %v6354
        %v6356 = vlaneseq
        %v6357 = vshrl.u32 %v6356, 7
        %v6358 = vsub.s32 %v6355, %v6357
        %v6359 = vrot.slane %v6345, %v6358
        %v6360 = vcombine.low %v6295, %v6311
        %v6361 = vcombine.high %v6295, %v6311
        %v6363 = vunpack.c.l.s4 1934713408
        %v6364 = vunpack.c.0.s8 %v6363
        %v6365 = vlaneseq
        %v6366 = vshrl.u32 %v6365, 7
        %v6367 = vsub.s32 %v6364, %v6366
        %v6368 = vrot.slane %v6360, %v6367
        %v6370 = vunpack.c.l.s4 1934713408
        %v6371 = vunpack.c.0.s8 %v6370
        %v6372 = vlaneseq
        %v6373 = vshrl.u32 %v6372, 7
        %v6374 = vsub.s32 %v6371, %v6373
        %v6375 = vrot.slane %v6361, %v6374
        %v6376 = vcombine.low %v6320, %v6336
        %v6377 = vcombine.high %v6320, %v6336
        %v6379 = vunpack.c.l.s4 1934713408
        %v6380 = vunpack.c.0.s8 %v6379
        %v6381 = vlaneseq
        %v6382 = vshrl.u32 %v6381, 7
        %v6383 = vsub.s32 %v6380, %v6382
        %v6384 = vrot.slane %v6376, %v6383
        %v6386 = vunpack.c.l.s4 1934713408
        %v6387 = vunpack.c.0.s8 %v6386
        %v6388 = vlaneseq
        %v6389 = vshrl.u32 %v6388, 7
        %v6390 = vsub.s32 %v6387, %v6389
        %v6391 = vrot.slane %v6377, %v6390
        %v6392 = vcombine.low %v6327, %v6343
        %v6393 = vcombine.high %v6327, %v6343
        %v6395 = vunpack.c.l.s4 1934713408
        %v6396 = vunpack.c.0.s8 %v6395
        %v6397 = vlaneseq
        %v6398 = vshrl.u32 %v6397, 7
        %v6399 = vsub.s32 %v6396, %v6398
        %v6400 = vrot.slane %v6392, %v6399
        %v6402 = vunpack.c.l.s4 1934713408
        %v6403 = vunpack.c.0.s8 %v6402
        %v6404 = vlaneseq
        %v6405 = vshrl.u32 %v6404, 7
        %v6406 = vsub.s32 %v6403, %v6405
        %v6407 = vrot.slane %v6393, %v6406
        %v6408 = vcombine.low %v6352, %v6384
        %v6409 = vcombine.high %v6352, %v6384
        %v6410 = vcombine.low %v6359, %v6391
        %v6411 = vcombine.high %v6359, %v6391
        %v6412 = vcombine.low %v6368, %v6400
        %v6413 = vcombine.high %v6368, %v6400
        %v6414 = vcombine.low %v6375, %v6407
        %v6415 = vcombine.high %v6375, %v6407
        %v6416 = vcombine.low %v5369, %v5377
        %v6417 = vcombine.high %v5369, %v5377
        %v6419 = vunpack.c.l.s4 1983009808
        %v6420 = vunpack.c.0.s8 %v6419
        %v6421 = vlaneseq
        %v6422 = vshrl.u32 %v6421, 7
        %v6423 = vsub.s32 %v6420, %v6422
        %v6424 = vrot.slane %v6416, %v6423
        %v6426 = vunpack.c.l.s4 1983009808
        %v6427 = vunpack.c.0.s8 %v6426
        %v6428 = vlaneseq
        %v6429 = vshrl.u32 %v6428, 7
        %v6430 = vsub.s32 %v6427, %v6429
        %v6431 = vrot.slane %v6417, %v6430
        %v6432 = vcombine.low %v5373, %v5381
        %v6433 = vcombine.high %v5373, %v5381
        %v6435 = vunpack.c.l.s4 1983009808
        %v6436 = vunpack.c.0.s8 %v6435
        %v6437 = vlaneseq
        %v6438 = vshrl.u32 %v6437, 7
        %v6439 = vsub.s32 %v6436, %v6438
        %v6440 = vrot.slane %v6432, %v6439
        %v6442 = vunpack.c.l.s4 1983009808
        %v6443 = vunpack.c.0.s8 %v6442
        %v6444 = vlaneseq
        %v6445 = vshrl.u32 %v6444, 7
        %v6446 = vsub.s32 %v6443, %v6445
        %v6447 = vrot.slane %v6433, %v6446
        %v6448 = vcombine.low %v5385, %v5393
        %v6449 = vcombine.high %v5385, %v5393
        %v6451 = vunpack.c.l.s4 1983009808
        %v6452 = vunpack.c.0.s8 %v6451
        %v6453 = vlaneseq
        %v6454 = vshrl.u32 %v6453, 7
        %v6455 = vsub.s32 %v6452, %v6454
        %v6456 = vrot.slane %v6448, %v6455
        %v6458 = vunpack.c.l.s4 1983009808
        %v6459 = vunpack.c.0.s8 %v6458
        %v6460 = vlaneseq
        %v6461 = vshrl.u32 %v6460, 7
        %v6462 = vsub.s32 %v6459, %v6461
        %v6463 = vrot.slane %v6449, %v6462
        %v6464 = vcombine.low %v5389, %v5397
        %v6465 = vcombine.high %v5389, %v5397
        %v6467 = vunpack.c.l.s4 1983009808
        %v6468 = vunpack.c.0.s8 %v6467
        %v6469 = vlaneseq
        %v6470 = vshrl.u32 %v6469, 7
        %v6471 = vsub.s32 %v6468, %v6470
        %v6472 = vrot.slane %v6464, %v6471
        %v6474 = vunpack.c.l.s4 1983009808
        %v6475 = vunpack.c.0.s8 %v6474
        %v6476 = vlaneseq
        %v6477 = vshrl.u32 %v6476, 7
        %v6478 = vsub.s32 %v6475, %v6477
        %v6479 = vrot.slane %v6465, %v6478
        %v6480 = vcombine.low %v6424, %v6440
        %v6481 = vcombine.high %v6424, %v6440
        %v6483 = vunpack.c.l.s4 1934713408
        %v6484 = vunpack.c.0.s8 %v6483
        %v6485 = vlaneseq
        %v6486 = vshrl.u32 %v6485, 7
        %v6487 = vsub.s32 %v6484, %v6486
        %v6488 = vrot.slane %v6480, %v6487
        %v6490 = vunpack.c.l.s4 1934713408
        %v6491 = vunpack.c.0.s8 %v6490
        %v6492 = vlaneseq
        %v6493 = vshrl.u32 %v6492, 7
        %v6494 = vsub.s32 %v6491, %v6493
        %v6495 = vrot.slane %v6481, %v6494
        %v6496 = vcombine.low %v6431, %v6447
        %v6497 = vcombine.high %v6431, %v6447
        %v6499 = vunpack.c.l.s4 1934713408
        %v6500 = vunpack.c.0.s8 %v6499
        %v6501 = vlaneseq
        %v6502 = vshrl.u32 %v6501, 7
        %v6503 = vsub.s32 %v6500, %v6502
        %v6504 = vrot.slane %v6496, %v6503
        %v6506 = vunpack.c.l.s4 1934713408
        %v6507 = vunpack.c.0.s8 %v6506
        %v6508 = vlaneseq
        %v6509 = vshrl.u32 %v6508, 7
        %v6510 = vsub.s32 %v6507, %v6509
        %v6511 = vrot.slane %v6497, %v6510
        %v6512 = vcombine.low %v6456, %v6472
        %v6513 = vcombine.high %v6456, %v6472
        %v6515 = vunpack.c.l.s4 1934713408
        %v6516 = vunpack.c.0.s8 %v6515
        %v6517 = vlaneseq
        %v6518 = vshrl.u32 %v6517, 7
        %v6519 = vsub.s32 %v6516, %v6518
        %v6520 = vrot.slane %v6512, %v6519
        %v6522 = vunpack.c.l.s4 1934713408
        %v6523 = vunpack.c.0.s8 %v6522
        %v6524 = vlaneseq
        %v6525 = vshrl.u32 %v6524, 7
        %v6526 = vsub.s32 %v6523, %v6525
        %v6527 = vrot.slane %v6513, %v6526
        %v6528 = vcombine.low %v6463, %v6479
        %v6529 = vcombine.high %v6463, %v6479
        %v6531 = vunpack.c.l.s4 1934713408
        %v6532 = vunpack.c.0.s8 %v6531
        %v6533 = vlaneseq
        %v6534 = vshrl.u32 %v6533, 7
        %v6535 = vsub.s32 %v6532, %v6534
        %v6536 = vrot.slane %v6528, %v6535
        %v6538 = vunpack.c.l.s4 1934713408
        %v6539 = vunpack.c.0.s8 %v6538
        %v6540 = vlaneseq
        %v6541 = vshrl.u32 %v6540, 7
        %v6542 = vsub.s32 %v6539, %v6541
        %v6543 = vrot.slane %v6529, %v6542
        %v6544 = vcombine.low %v6488, %v6520
        %v6545 = vcombine.high %v6488, %v6520
        %v6546 = vcombine.low %v6495, %v6527
        %v6547 = vcombine.high %v6495, %v6527
        %v6548 = vcombine.low %v6504, %v6536
        %v6549 = vcombine.high %v6504, %v6536
        %v6550 = vcombine.low %v6511, %v6543
        %v6551 = vcombine.high %v6511, %v6543
        %v6552 = vcombine.low %v5417, %v5425
        %v6553 = vcombine.high %v5417, %v5425
        %v6555 = vunpack.c.l.s4 1983009808
        %v6556 = vunpack.c.0.s8 %v6555
        %v6557 = vlaneseq
        %v6558 = vshrl.u32 %v6557, 7
        %v6559 = vsub.s32 %v6556, %v6558
        %v6560 = vrot.slane %v6552, %v6559
        %v6562 = vunpack.c.l.s4 1983009808
        %v6563 = vunpack.c.0.s8 %v6562
        %v6564 = vlaneseq
        %v6565 = vshrl.u32 %v6564, 7
        %v6566 = vsub.s32 %v6563, %v6565
        %v6567 = vrot.slane %v6553, %v6566
        %v6568 = vcombine.low %v5421, %v5429
        %v6569 = vcombine.high %v5421, %v5429
        %v6571 = vunpack.c.l.s4 1983009808
        %v6572 = vunpack.c.0.s8 %v6571
        %v6573 = vlaneseq
        %v6574 = vshrl.u32 %v6573, 7
        %v6575 = vsub.s32 %v6572, %v6574
        %v6576 = vrot.slane %v6568, %v6575
        %v6578 = vunpack.c.l.s4 1983009808
        %v6579 = vunpack.c.0.s8 %v6578
        %v6580 = vlaneseq
        %v6581 = vshrl.u32 %v6580, 7
        %v6582 = vsub.s32 %v6579, %v6581
        %v6583 = vrot.slane %v6569, %v6582
        %v6584 = vcombine.low %v5433, %v5441
        %v6585 = vcombine.high %v5433, %v5441
        %v6587 = vunpack.c.l.s4 1983009808
        %v6588 = vunpack.c.0.s8 %v6587
        %v6589 = vlaneseq
        %v6590 = vshrl.u32 %v6589, 7
        %v6591 = vsub.s32 %v6588, %v6590
        %v6592 = vrot.slane %v6584, %v6591
        %v6594 = vunpack.c.l.s4 1983009808
        %v6595 = vunpack.c.0.s8 %v6594
        %v6596 = vlaneseq
        %v6597 = vshrl.u32 %v6596, 7
        %v6598 = vsub.s32 %v6595, %v6597
        %v6599 = vrot.slane %v6585, %v6598
        %v6600 = vcombine.low %v5437, %v5445
        %v6601 = vcombine.high %v5437, %v5445
        %v6603 = vunpack.c.l.s4 1983009808
        %v6604 = vunpack.c.0.s8 %v6603
        %v6605 = vlaneseq
        %v6606 = vshrl.u32 %v6605, 7
        %v6607 = vsub.s32 %v6604, %v6606
        %v6608 = vrot.slane %v6600, %v6607
        %v6610 = vunpack.c.l.s4 1983009808
        %v6611 = vunpack.c.0.s8 %v6610
        %v6612 = vlaneseq
        %v6613 = vshrl.u32 %v6612, 7
        %v6614 = vsub.s32 %v6611, %v6613
        %v6615 = vrot.slane %v6601, %v6614
        %v6616 = vcombine.low %v6560, %v6576
        %v6617 = vcombine.high %v6560, %v6576
        %v6619 = vunpack.c.l.s4 1934713408
        %v6620 = vunpack.c.0.s8 %v6619
        %v6621 = vlaneseq
        %v6622 = vshrl.u32 %v6621, 7
        %v6623 = vsub.s32 %v6620, %v6622
        %v6624 = vrot.slane %v6616, %v6623
        %v6626 = vunpack.c.l.s4 1934713408
        %v6627 = vunpack.c.0.s8 %v6626
        %v6628 = vlaneseq
        %v6629 = vshrl.u32 %v6628, 7
        %v6630 = vsub.s32 %v6627, %v6629
        %v6631 = vrot.slane %v6617, %v6630
        %v6632 = vcombine.low %v6567, %v6583
        %v6633 = vcombine.high %v6567, %v6583
        %v6635 = vunpack.c.l.s4 1934713408
        %v6636 = vunpack.c.0.s8 %v6635
        %v6637 = vlaneseq
        %v6638 = vshrl.u32 %v6637, 7
        %v6639 = vsub.s32 %v6636, %v6638
        %v6640 = vrot.slane %v6632, %v6639
        %v6642 = vunpack.c.l.s4 1934713408
        %v6643 = vunpack.c.0.s8 %v6642
        %v6644 = vlaneseq
        %v6645 = vshrl.u32 %v6644, 7
        %v6646 = vsub.s32 %v6643, %v6645
        %v6647 = vrot.slane %v6633, %v6646
        %v6648 = vcombine.low %v6592, %v6608
        %v6649 = vcombine.high %v6592, %v6608
        %v6651 = vunpack.c.l.s4 1934713408
        %v6652 = vunpack.c.0.s8 %v6651
        %v6653 = vlaneseq
        %v6654 = vshrl.u32 %v6653, 7
        %v6655 = vsub.s32 %v6652, %v6654
        %v6656 = vrot.slane %v6648, %v6655
        %v6658 = vunpack.c.l.s4 1934713408
        %v6659 = vunpack.c.0.s8 %v6658
        %v6660 = vlaneseq
        %v6661 = vshrl.u32 %v6660, 7
        %v6662 = vsub.s32 %v6659, %v6661
        %v6663 = vrot.slane %v6649, %v6662
        %v6664 = vcombine.low %v6599, %v6615
        %v6665 = vcombine.high %v6599, %v6615
        %v6667 = vunpack.c.l.s4 1934713408
        %v6668 = vunpack.c.0.s8 %v6667
        %v6669 = vlaneseq
        %v6670 = vshrl.u32 %v6669, 7
        %v6671 = vsub.s32 %v6668, %v6670
        %v6672 = vrot.slane %v6664, %v6671
        %v6674 = vunpack.c.l.s4 1934713408
        %v6675 = vunpack.c.0.s8 %v6674
        %v6676 = vlaneseq
        %v6677 = vshrl.u32 %v6676, 7
        %v6678 = vsub.s32 %v6675, %v6677
        %v6679 = vrot.slane %v6665, %v6678
        %v6680 = vcombine.low %v6624, %v6656
        %v6681 = vcombine.high %v6624, %v6656
        %v6682 = vcombine.low %v6631, %v6663
        %v6683 = vcombine.high %v6631, %v6663
        %v6684 = vcombine.low %v6640, %v6672
        %v6685 = vcombine.high %v6640, %v6672
        %v6686 = vcombine.low %v6647, %v6679
        %v6687 = vcombine.high %v6647, %v6679
        %v6688 = vcombine.low %v5017, %v5023
        %v6689 = vcombine.high %v5017, %v5023
        %v6691 = vunpack.c.l.s4 1983009808
        %v6692 = vunpack.c.0.s8 %v6691
        %v6693 = vlaneseq
        %v6694 = vshrl.u32 %v6693, 7
        %v6695 = vsub.s32 %v6692, %v6694
        %v6696 = vrot.slane %v6688, %v6695
        %v6698 = vunpack.c.l.s4 1983009808
        %v6699 = vunpack.c.0.s8 %v6698
        %v6700 = vlaneseq
        %v6701 = vshrl.u32 %v6700, 7
        %v6702 = vsub.s32 %v6699, %v6701
        %v6703 = vrot.slane %v6689, %v6702
        %v6704 = vcombine.low %v5020, %v5026
        %v6705 = vcombine.high %v5020, %v5026
        %v6707 = vunpack.c.l.s4 1983009808
        %v6708 = vunpack.c.0.s8 %v6707
        %v6709 = vlaneseq
        %v6710 = vshrl.u32 %v6709, 7
        %v6711 = vsub.s32 %v6708, %v6710
        %v6712 = vrot.slane %v6704, %v6711
        %v6714 = vunpack.c.l.s4 1983009808
        %v6715 = vunpack.c.0.s8 %v6714
        %v6716 = vlaneseq
        %v6717 = vshrl.u32 %v6716, 7
        %v6718 = vsub.s32 %v6715, %v6717
        %v6719 = vrot.slane %v6705, %v6718
        %v6720 = vcombine.low %v5029, %v5035
        %v6721 = vcombine.high %v5029, %v5035
        %v6723 = vunpack.c.l.s4 1983009808
        %v6724 = vunpack.c.0.s8 %v6723
        %v6725 = vlaneseq
        %v6726 = vshrl.u32 %v6725, 7
        %v6727 = vsub.s32 %v6724, %v6726
        %v6728 = vrot.slane %v6720, %v6727
        %v6730 = vunpack.c.l.s4 1983009808
        %v6731 = vunpack.c.0.s8 %v6730
        %v6732 = vlaneseq
        %v6733 = vshrl.u32 %v6732, 7
        %v6734 = vsub.s32 %v6731, %v6733
        %v6735 = vrot.slane %v6721, %v6734
        %v6736 = vcombine.low %v5032, %v5038
        %v6737 = vcombine.high %v5032, %v5038
        %v6739 = vunpack.c.l.s4 1983009808
        %v6740 = vunpack.c.0.s8 %v6739
        %v6741 = vlaneseq
        %v6742 = vshrl.u32 %v6741, 7
        %v6743 = vsub.s32 %v6740, %v6742
        %v6744 = vrot.slane %v6736, %v6743
        %v6746 = vunpack.c.l.s4 1983009808
        %v6747 = vunpack.c.0.s8 %v6746
        %v6748 = vlaneseq
        %v6749 = vshrl.u32 %v6748, 7
        %v6750 = vsub.s32 %v6747, %v6749
        %v6751 = vrot.slane %v6737, %v6750
        %v6752 = vcombine.low %v6696, %v6712
        %v6753 = vcombine.high %v6696, %v6712
        %v6755 = vunpack.c.l.s4 1934713408
        %v6756 = vunpack.c.0.s8 %v6755
        %v6757 = vlaneseq
        %v6758 = vshrl.u32 %v6757, 7
        %v6759 = vsub.s32 %v6756, %v6758
        %v6760 = vrot.slane %v6752, %v6759
        %v6762 = vunpack.c.l.s4 1934713408
        %v6763 = vunpack.c.0.s8 %v6762
        %v6764 = vlaneseq
        %v6765 = vshrl.u32 %v6764, 7
        %v6766 = vsub.s32 %v6763, %v6765
        %v6767 = vrot.slane %v6753, %v6766
        %v6768 = vcombine.low %v6703, %v6719
        %v6769 = vcombine.high %v6703, %v6719
        %v6771 = vunpack.c.l.s4 1934713408
        %v6772 = vunpack.c.0.s8 %v6771
        %v6773 = vlaneseq
        %v6774 = vshrl.u32 %v6773, 7
        %v6775 = vsub.s32 %v6772, %v6774
        %v6776 = vrot.slane %v6768, %v6775
        %v6778 = vunpack.c.l.s4 1934713408
        %v6779 = vunpack.c.0.s8 %v6778
        %v6780 = vlaneseq
        %v6781 = vshrl.u32 %v6780, 7
        %v6782 = vsub.s32 %v6779, %v6781
        %v6783 = vrot.slane %v6769, %v6782
        %v6784 = vcombine.low %v6728, %v6744
        %v6785 = vcombine.high %v6728, %v6744
        %v6787 = vunpack.c.l.s4 1934713408
        %v6788 = vunpack.c.0.s8 %v6787
        %v6789 = vlaneseq
        %v6790 = vshrl.u32 %v6789, 7
        %v6791 = vsub.s32 %v6788, %v6790
        %v6792 = vrot.slane %v6784, %v6791
        %v6794 = vunpack.c.l.s4 1934713408
        %v6795 = vunpack.c.0.s8 %v6794
        %v6796 = vlaneseq
        %v6797 = vshrl.u32 %v6796, 7
        %v6798 = vsub.s32 %v6795, %v6797
        %v6799 = vrot.slane %v6785, %v6798
        %v6800 = vcombine.low %v6735, %v6751
        %v6801 = vcombine.high %v6735, %v6751
        %v6803 = vunpack.c.l.s4 1934713408
        %v6804 = vunpack.c.0.s8 %v6803
        %v6805 = vlaneseq
        %v6806 = vshrl.u32 %v6805, 7
        %v6807 = vsub.s32 %v6804, %v6806
        %v6808 = vrot.slane %v6800, %v6807
        %v6810 = vunpack.c.l.s4 1934713408
        %v6811 = vunpack.c.0.s8 %v6810
        %v6812 = vlaneseq
        %v6813 = vshrl.u32 %v6812, 7
        %v6814 = vsub.s32 %v6811, %v6813
        %v6815 = vrot.slane %v6801, %v6814
        %v6816 = vcombine.low %v6760, %v6792
        %v6817 = vcombine.high %v6760, %v6792
        %v6818 = vcombine.low %v6767, %v6799
        %v6819 = vcombine.high %v6767, %v6799
        %v6820 = vcombine.low %v6776, %v6808
        %v6821 = vcombine.high %v6776, %v6808
        %v6822 = vcombine.low %v6783, %v6815
        %v6823 = vcombine.high %v6783, %v6815
        %v6824 = vcombine.low %v5059, %v5067
        %v6825 = vcombine.high %v5059, %v5067
        %v6827 = vunpack.c.l.s4 1983009808
        %v6828 = vunpack.c.0.s8 %v6827
        %v6829 = vlaneseq
        %v6830 = vshrl.u32 %v6829, 7
        %v6831 = vsub.s32 %v6828, %v6830
        %v6832 = vrot.slane %v6824, %v6831
        %v6834 = vunpack.c.l.s4 1983009808
        %v6835 = vunpack.c.0.s8 %v6834
        %v6836 = vlaneseq
        %v6837 = vshrl.u32 %v6836, 7
        %v6838 = vsub.s32 %v6835, %v6837
        %v6839 = vrot.slane %v6825, %v6838
        %v6840 = vcombine.low %v5063, %v5071
        %v6841 = vcombine.high %v5063, %v5071
        %v6843 = vunpack.c.l.s4 1983009808
        %v6844 = vunpack.c.0.s8 %v6843
        %v6845 = vlaneseq
        %v6846 = vshrl.u32 %v6845, 7
        %v6847 = vsub.s32 %v6844, %v6846
        %v6848 = vrot.slane %v6840, %v6847
        %v6850 = vunpack.c.l.s4 1983009808
        %v6851 = vunpack.c.0.s8 %v6850
        %v6852 = vlaneseq
        %v6853 = vshrl.u32 %v6852, 7
        %v6854 = vsub.s32 %v6851, %v6853
        %v6855 = vrot.slane %v6841, %v6854
        %v6856 = vcombine.low %v5075, %v5083
        %v6857 = vcombine.high %v5075, %v5083
        %v6859 = vunpack.c.l.s4 1983009808
        %v6860 = vunpack.c.0.s8 %v6859
        %v6861 = vlaneseq
        %v6862 = vshrl.u32 %v6861, 7
        %v6863 = vsub.s32 %v6860, %v6862
        %v6864 = vrot.slane %v6856, %v6863
        %v6866 = vunpack.c.l.s4 1983009808
        %v6867 = vunpack.c.0.s8 %v6866
        %v6868 = vlaneseq
        %v6869 = vshrl.u32 %v6868, 7
        %v6870 = vsub.s32 %v6867, %v6869
        %v6871 = vrot.slane %v6857, %v6870
        %v6872 = vcombine.low %v5079, %v5087
        %v6873 = vcombine.high %v5079, %v5087
        %v6875 = vunpack.c.l.s4 1983009808
        %v6876 = vunpack.c.0.s8 %v6875
        %v6877 = vlaneseq
        %v6878 = vshrl.u32 %v6877, 7
        %v6879 = vsub.s32 %v6876, %v6878
        %v6880 = vrot.slane %v6872, %v6879
        %v6882 = vunpack.c.l.s4 1983009808
        %v6883 = vunpack.c.0.s8 %v6882
        %v6884 = vlaneseq
        %v6885 = vshrl.u32 %v6884, 7
        %v6886 = vsub.s32 %v6883, %v6885
        %v6887 = vrot.slane %v6873, %v6886
        %v6888 = vcombine.low %v6832, %v6848
        %v6889 = vcombine.high %v6832, %v6848
        %v6891 = vunpack.c.l.s4 1934713408
        %v6892 = vunpack.c.0.s8 %v6891
        %v6893 = vlaneseq
        %v6894 = vshrl.u32 %v6893, 7
        %v6895 = vsub.s32 %v6892, %v6894
        %v6896 = vrot.slane %v6888, %v6895
        %v6898 = vunpack.c.l.s4 1934713408
        %v6899 = vunpack.c.0.s8 %v6898
        %v6900 = vlaneseq
        %v6901 = vshrl.u32 %v6900, 7
        %v6902 = vsub.s32 %v6899, %v6901
        %v6903 = vrot.slane %v6889, %v6902
        %v6904 = vcombine.low %v6839, %v6855
        %v6905 = vcombine.high %v6839, %v6855
        %v6907 = vunpack.c.l.s4 1934713408
        %v6908 = vunpack.c.0.s8 %v6907
        %v6909 = vlaneseq
        %v6910 = vshrl.u32 %v6909, 7
        %v6911 = vsub.s32 %v6908, %v6910
        %v6912 = vrot.slane %v6904, %v6911
        %v6914 = vunpack.c.l.s4 1934713408
        %v6915 = vunpack.c.0.s8 %v6914
        %v6916 = vlaneseq
        %v6917 = vshrl.u32 %v6916, 7
        %v6918 = vsub.s32 %v6915, %v6917
        %v6919 = vrot.slane %v6905, %v6918
        %v6920 = vcombine.low %v6864, %v6880
        %v6921 = vcombine.high %v6864, %v6880
        %v6923 = vunpack.c.l.s4 1934713408
        %v6924 = vunpack.c.0.s8 %v6923
        %v6925 = vlaneseq
        %v6926 = vshrl.u32 %v6925, 7
        %v6927 = vsub.s32 %v6924, %v6926
        %v6928 = vrot.slane %v6920, %v6927
        %v6930 = vunpack.c.l.s4 1934713408
        %v6931 = vunpack.c.0.s8 %v6930
        %v6932 = vlaneseq
        %v6933 = vshrl.u32 %v6932, 7
        %v6934 = vsub.s32 %v6931, %v6933
        %v6935 = vrot.slane %v6921, %v6934
        %v6936 = vcombine.low %v6871, %v6887
        %v6937 = vcombine.high %v6871, %v6887
        %v6939 = vunpack.c.l.s4 1934713408
        %v6940 = vunpack.c.0.s8 %v6939
        %v6941 = vlaneseq
        %v6942 = vshrl.u32 %v6941, 7
        %v6943 = vsub.s32 %v6940, %v6942
        %v6944 = vrot.slane %v6936, %v6943
        %v6946 = vunpack.c.l.s4 1934713408
        %v6947 = vunpack.c.0.s8 %v6946
        %v6948 = vlaneseq
        %v6949 = vshrl.u32 %v6948, 7
        %v6950 = vsub.s32 %v6947, %v6949
        %v6951 = vrot.slane %v6937, %v6950
        %v6952 = vcombine.low %v6896, %v6928
        %v6953 = vcombine.high %v6896, %v6928
        %v6954 = vcombine.low %v6903, %v6935
        %v6955 = vcombine.high %v6903, %v6935
        %v6956 = vcombine.low %v6912, %v6944
        %v6957 = vcombine.high %v6912, %v6944
        %v6958 = vcombine.low %v6919, %v6951
        %v6959 = vcombine.high %v6919, %v6951
        %v6960 = vcombine.low %v5107, %v5115
        %v6961 = vcombine.high %v5107, %v5115
        %v6963 = vunpack.c.l.s4 1983009808
        %v6964 = vunpack.c.0.s8 %v6963
        %v6965 = vlaneseq
        %v6966 = vshrl.u32 %v6965, 7
        %v6967 = vsub.s32 %v6964, %v6966
        %v6968 = vrot.slane %v6960, %v6967
        %v6970 = vunpack.c.l.s4 1983009808
        %v6971 = vunpack.c.0.s8 %v6970
        %v6972 = vlaneseq
        %v6973 = vshrl.u32 %v6972, 7
        %v6974 = vsub.s32 %v6971, %v6973
        %v6975 = vrot.slane %v6961, %v6974
        %v6976 = vcombine.low %v5111, %v5119
        %v6977 = vcombine.high %v5111, %v5119
        %v6979 = vunpack.c.l.s4 1983009808
        %v6980 = vunpack.c.0.s8 %v6979
        %v6981 = vlaneseq
        %v6982 = vshrl.u32 %v6981, 7
        %v6983 = vsub.s32 %v6980, %v6982
        %v6984 = vrot.slane %v6976, %v6983
        %v6986 = vunpack.c.l.s4 1983009808
        %v6987 = vunpack.c.0.s8 %v6986
        %v6988 = vlaneseq
        %v6989 = vshrl.u32 %v6988, 7
        %v6990 = vsub.s32 %v6987, %v6989
        %v6991 = vrot.slane %v6977, %v6990
        %v6992 = vcombine.low %v5123, %v5131
        %v6993 = vcombine.high %v5123, %v5131
        %v6995 = vunpack.c.l.s4 1983009808
        %v6996 = vunpack.c.0.s8 %v6995
        %v6997 = vlaneseq
        %v6998 = vshrl.u32 %v6997, 7
        %v6999 = vsub.s32 %v6996, %v6998
        %v7000 = vrot.slane %v6992, %v6999
        %v7002 = vunpack.c.l.s4 1983009808
        %v7003 = vunpack.c.0.s8 %v7002
        %v7004 = vlaneseq
        %v7005 = vshrl.u32 %v7004, 7
        %v7006 = vsub.s32 %v7003, %v7005
        %v7007 = vrot.slane %v6993, %v7006
        %v7008 = vcombine.low %v5127, %v5135
        %v7009 = vcombine.high %v5127, %v5135
        %v7011 = vunpack.c.l.s4 1983009808
        %v7012 = vunpack.c.0.s8 %v7011
        %v7013 = vlaneseq
        %v7014 = vshrl.u32 %v7013, 7
        %v7015 = vsub.s32 %v7012, %v7014
        %v7016 = vrot.slane %v7008, %v7015
        %v7018 = vunpack.c.l.s4 1983009808
        %v7019 = vunpack.c.0.s8 %v7018
        %v7020 = vlaneseq
        %v7021 = vshrl.u32 %v7020, 7
        %v7022 = vsub.s32 %v7019, %v7021
        %v7023 = vrot.slane %v7009, %v7022
        %v7024 = vcombine.low %v6968, %v6984
        %v7025 = vcombine.high %v6968, %v6984
        %v7027 = vunpack.c.l.s4 1934713408
        %v7028 = vunpack.c.0.s8 %v7027
        %v7029 = vlaneseq
        %v7030 = vshrl.u32 %v7029, 7
        %v7031 = vsub.s32 %v7028, %v7030
        %v7032 = vrot.slane %v7024, %v7031
        %v7034 = vunpack.c.l.s4 1934713408
        %v7035 = vunpack.c.0.s8 %v7034
        %v7036 = vlaneseq
        %v7037 = vshrl.u32 %v7036, 7
        %v7038 = vsub.s32 %v7035, %v7037
        %v7039 = vrot.slane %v7025, %v7038
        %v7040 = vcombine.low %v6975, %v6991
        %v7041 = vcombine.high %v6975, %v6991
        %v7043 = vunpack.c.l.s4 1934713408
        %v7044 = vunpack.c.0.s8 %v7043
        %v7045 = vlaneseq
        %v7046 = vshrl.u32 %v7045, 7
        %v7047 = vsub.s32 %v7044, %v7046
        %v7048 = vrot.slane %v7040, %v7047
        %v7050 = vunpack.c.l.s4 1934713408
        %v7051 = vunpack.c.0.s8 %v7050
        %v7052 = vlaneseq
        %v7053 = vshrl.u32 %v7052, 7
        %v7054 = vsub.s32 %v7051, %v7053
        %v7055 = vrot.slane %v7041, %v7054
        %v7056 = vcombine.low %v7000, %v7016
        %v7057 = vcombine.high %v7000, %v7016
        %v7059 = vunpack.c.l.s4 1934713408
        %v7060 = vunpack.c.0.s8 %v7059
        %v7061 = vlaneseq
        %v7062 = vshrl.u32 %v7061, 7
        %v7063 = vsub.s32 %v7060, %v7062
        %v7064 = vrot.slane %v7056, %v7063
        %v7066 = vunpack.c.l.s4 1934713408
        %v7067 = vunpack.c.0.s8 %v7066
        %v7068 = vlaneseq
        %v7069 = vshrl.u32 %v7068, 7
        %v7070 = vsub.s32 %v7067, %v7069
        %v7071 = vrot.slane %v7057, %v7070
        %v7072 = vcombine.low %v7007, %v7023
        %v7073 = vcombine.high %v7007, %v7023
        %v7075 = vunpack.c.l.s4 1934713408
        %v7076 = vunpack.c.0.s8 %v7075
        %v7077 = vlaneseq
        %v7078 = vshrl.u32 %v7077, 7
        %v7079 = vsub.s32 %v7076, %v7078
        %v7080 = vrot.slane %v7072, %v7079
        %v7082 = vunpack.c.l.s4 1934713408
        %v7083 = vunpack.c.0.s8 %v7082
        %v7084 = vlaneseq
        %v7085 = vshrl.u32 %v7084, 7
        %v7086 = vsub.s32 %v7083, %v7085
        %v7087 = vrot.slane %v7073, %v7086
        %v7088 = vcombine.low %v7032, %v7064
        %v7089 = vcombine.high %v7032, %v7064
        %v7090 = vcombine.low %v7039, %v7071
        %v7091 = vcombine.high %v7039, %v7071
        %v7092 = vcombine.low %v7048, %v7080
        %v7093 = vcombine.high %v7048, %v7080
        %v7094 = vcombine.low %v7055, %v7087
        %v7095 = vcombine.high %v7055, %v7087
        %v7096 = vcombine.low %v5164, %v5174
        %v7097 = vcombine.high %v5164, %v5174
        %v7099 = vunpack.c.l.s4 1983009808
        %v7100 = vunpack.c.0.s8 %v7099
        %v7101 = vlaneseq
        %v7102 = vshrl.u32 %v7101, 7
        %v7103 = vsub.s32 %v7100, %v7102
        %v7104 = vrot.slane %v7096, %v7103
        %v7106 = vunpack.c.l.s4 1983009808
        %v7107 = vunpack.c.0.s8 %v7106
        %v7108 = vlaneseq
        %v7109 = vshrl.u32 %v7108, 7
        %v7110 = vsub.s32 %v7107, %v7109
        %v7111 = vrot.slane %v7097, %v7110
        %v7112 = vcombine.low %v5169, %v5179
        %v7113 = vcombine.high %v5169, %v5179
        %v7115 = vunpack.c.l.s4 1983009808
        %v7116 = vunpack.c.0.s8 %v7115
        %v7117 = vlaneseq
        %v7118 = vshrl.u32 %v7117, 7
        %v7119 = vsub.s32 %v7116, %v7118
        %v7120 = vrot.slane %v7112, %v7119
        %v7122 = vunpack.c.l.s4 1983009808
        %v7123 = vunpack.c.0.s8 %v7122
        %v7124 = vlaneseq
        %v7125 = vshrl.u32 %v7124, 7
        %v7126 = vsub.s32 %v7123, %v7125
        %v7127 = vrot.slane %v7113, %v7126
        %v7128 = vcombine.low %v5184, %v5194
        %v7129 = vcombine.high %v5184, %v5194
        %v7131 = vunpack.c.l.s4 1983009808
        %v7132 = vunpack.c.0.s8 %v7131
        %v7133 = vlaneseq
        %v7134 = vshrl.u32 %v7133, 7
        %v7135 = vsub.s32 %v7132, %v7134
        %v7136 = vrot.slane %v7128, %v7135
        %v7138 = vunpack.c.l.s4 1983009808
        %v7139 = vunpack.c.0.s8 %v7138
        %v7140 = vlaneseq
        %v7141 = vshrl.u32 %v7140, 7
        %v7142 = vsub.s32 %v7139, %v7141
        %v7143 = vrot.slane %v7129, %v7142
        %v7144 = vcombine.low %v5189, %v5199
        %v7145 = vcombine.high %v5189, %v5199
        %v7147 = vunpack.c.l.s4 1983009808
        %v7148 = vunpack.c.0.s8 %v7147
        %v7149 = vlaneseq
        %v7150 = vshrl.u32 %v7149, 7
        %v7151 = vsub.s32 %v7148, %v7150
        %v7152 = vrot.slane %v7144, %v7151
        %v7154 = vunpack.c.l.s4 1983009808
        %v7155 = vunpack.c.0.s8 %v7154
        %v7156 = vlaneseq
        %v7157 = vshrl.u32 %v7156, 7
        %v7158 = vsub.s32 %v7155, %v7157
        %v7159 = vrot.slane %v7145, %v7158
        %v7160 = vcombine.low %v7104, %v7120
        %v7161 = vcombine.high %v7104, %v7120
        %v7163 = vunpack.c.l.s4 1934713408
        %v7164 = vunpack.c.0.s8 %v7163
        %v7165 = vlaneseq
        %v7166 = vshrl.u32 %v7165, 7
        %v7167 = vsub.s32 %v7164, %v7166
        %v7168 = vrot.slane %v7160, %v7167
        %v7170 = vunpack.c.l.s4 1934713408
        %v7171 = vunpack.c.0.s8 %v7170
        %v7172 = vlaneseq
        %v7173 = vshrl.u32 %v7172, 7
        %v7174 = vsub.s32 %v7171, %v7173
        %v7175 = vrot.slane %v7161, %v7174
        %v7176 = vcombine.low %v7111, %v7127
        %v7177 = vcombine.high %v7111, %v7127
        %v7179 = vunpack.c.l.s4 1934713408
        %v7180 = vunpack.c.0.s8 %v7179
        %v7181 = vlaneseq
        %v7182 = vshrl.u32 %v7181, 7
        %v7183 = vsub.s32 %v7180, %v7182
        %v7184 = vrot.slane %v7176, %v7183
        %v7186 = vunpack.c.l.s4 1934713408
        %v7187 = vunpack.c.0.s8 %v7186
        %v7188 = vlaneseq
        %v7189 = vshrl.u32 %v7188, 7
        %v7190 = vsub.s32 %v7187, %v7189
        %v7191 = vrot.slane %v7177, %v7190
        %v7192 = vcombine.low %v7136, %v7152
        %v7193 = vcombine.high %v7136, %v7152
        %v7195 = vunpack.c.l.s4 1934713408
        %v7196 = vunpack.c.0.s8 %v7195
        %v7197 = vlaneseq
        %v7198 = vshrl.u32 %v7197, 7
        %v7199 = vsub.s32 %v7196, %v7198
        %v7200 = vrot.slane %v7192, %v7199
        %v7202 = vunpack.c.l.s4 1934713408
        %v7203 = vunpack.c.0.s8 %v7202
        %v7204 = vlaneseq
        %v7205 = vshrl.u32 %v7204, 7
        %v7206 = vsub.s32 %v7203, %v7205
        %v7207 = vrot.slane %v7193, %v7206
        %v7208 = vcombine.low %v7143, %v7159
        %v7209 = vcombine.high %v7143, %v7159
        %v7211 = vunpack.c.l.s4 1934713408
        %v7212 = vunpack.c.0.s8 %v7211
        %v7213 = vlaneseq
        %v7214 = vshrl.u32 %v7213, 7
        %v7215 = vsub.s32 %v7212, %v7214
        %v7216 = vrot.slane %v7208, %v7215
        %v7218 = vunpack.c.l.s4 1934713408
        %v7219 = vunpack.c.0.s8 %v7218
        %v7220 = vlaneseq
        %v7221 = vshrl.u32 %v7220, 7
        %v7222 = vsub.s32 %v7219, %v7221
        %v7223 = vrot.slane %v7209, %v7222
        %v7224 = vcombine.low %v7168, %v7200
        %v7225 = vcombine.high %v7168, %v7200
        %v7226 = vcombine.low %v7175, %v7207
        %v7227 = vcombine.high %v7175, %v7207
        %v7228 = vcombine.low %v7184, %v7216
        %v7229 = vcombine.high %v7184, %v7216
        %v7230 = vcombine.low %v7191, %v7223
        %v7231 = vcombine.high %v7191, %v7223
        %v7232 = vcombine.low %v5219, %v5227
        %v7233 = vcombine.high %v5219, %v5227
        %v7235 = vunpack.c.l.s4 1983009808
        %v7236 = vunpack.c.0.s8 %v7235
        %v7237 = vlaneseq
        %v7238 = vshrl.u32 %v7237, 7
        %v7239 = vsub.s32 %v7236, %v7238
        %v7240 = vrot.slane %v7232, %v7239
        %v7242 = vunpack.c.l.s4 1983009808
        %v7243 = vunpack.c.0.s8 %v7242
        %v7244 = vlaneseq
        %v7245 = vshrl.u32 %v7244, 7
        %v7246 = vsub.s32 %v7243, %v7245
        %v7247 = vrot.slane %v7233, %v7246
        %v7248 = vcombine.low %v5223, %v5231
        %v7249 = vcombine.high %v5223, %v5231
        %v7251 = vunpack.c.l.s4 1983009808
        %v7252 = vunpack.c.0.s8 %v7251
        %v7253 = vlaneseq
        %v7254 = vshrl.u32 %v7253, 7
        %v7255 = vsub.s32 %v7252, %v7254
        %v7256 = vrot.slane %v7248, %v7255
        %v7258 = vunpack.c.l.s4 1983009808
        %v7259 = vunpack.c.0.s8 %v7258
        %v7260 = vlaneseq
        %v7261 = vshrl.u32 %v7260, 7
        %v7262 = vsub.s32 %v7259, %v7261
        %v7263 = vrot.slane %v7249, %v7262
        %v7264 = vcombine.low %v5235, %v5243
        %v7265 = vcombine.high %v5235, %v5243
        %v7267 = vunpack.c.l.s4 1983009808
        %v7268 = vunpack.c.0.s8 %v7267
        %v7269 = vlaneseq
        %v7270 = vshrl.u32 %v7269, 7
        %v7271 = vsub.s32 %v7268, %v7270
        %v7272 = vrot.slane %v7264, %v7271
        %v7274 = vunpack.c.l.s4 1983009808
        %v7275 = vunpack.c.0.s8 %v7274
        %v7276 = vlaneseq
        %v7277 = vshrl.u32 %v7276, 7
        %v7278 = vsub.s32 %v7275, %v7277
        %v7279 = vrot.slane %v7265, %v7278
        %v7280 = vcombine.low %v5239, %v5247
        %v7281 = vcombine.high %v5239, %v5247
        %v7283 = vunpack.c.l.s4 1983009808
        %v7284 = vunpack.c.0.s8 %v7283
        %v7285 = vlaneseq
        %v7286 = vshrl.u32 %v7285, 7
        %v7287 = vsub.s32 %v7284, %v7286
        %v7288 = vrot.slane %v7280, %v7287
        %v7290 = vunpack.c.l.s4 1983009808
        %v7291 = vunpack.c.0.s8 %v7290
        %v7292 = vlaneseq
        %v7293 = vshrl.u32 %v7292, 7
        %v7294 = vsub.s32 %v7291, %v7293
        %v7295 = vrot.slane %v7281, %v7294
        %v7296 = vcombine.low %v7240, %v7256
        %v7297 = vcombine.high %v7240, %v7256
        %v7299 = vunpack.c.l.s4 1934713408
        %v7300 = vunpack.c.0.s8 %v7299
        %v7301 = vlaneseq
        %v7302 = vshrl.u32 %v7301, 7
        %v7303 = vsub.s32 %v7300, %v7302
        %v7304 = vrot.slane %v7296, %v7303
        %v7306 = vunpack.c.l.s4 1934713408
        %v7307 = vunpack.c.0.s8 %v7306
        %v7308 = vlaneseq
        %v7309 = vshrl.u32 %v7308, 7
        %v7310 = vsub.s32 %v7307, %v7309
        %v7311 = vrot.slane %v7297, %v7310
        %v7312 = vcombine.low %v7247, %v7263
        %v7313 = vcombine.high %v7247, %v7263
        %v7315 = vunpack.c.l.s4 1934713408
        %v7316 = vunpack.c.0.s8 %v7315
        %v7317 = vlaneseq
        %v7318 = vshrl.u32 %v7317, 7
        %v7319 = vsub.s32 %v7316, %v7318
        %v7320 = vrot.slane %v7312, %v7319
        %v7322 = vunpack.c.l.s4 1934713408
        %v7323 = vunpack.c.0.s8 %v7322
        %v7324 = vlaneseq
        %v7325 = vshrl.u32 %v7324, 7
        %v7326 = vsub.s32 %v7323, %v7325
        %v7327 = vrot.slane %v7313, %v7326
        %v7328 = vcombine.low %v7272, %v7288
        %v7329 = vcombine.high %v7272, %v7288
        %v7331 = vunpack.c.l.s4 1934713408
        %v7332 = vunpack.c.0.s8 %v7331
        %v7333 = vlaneseq
        %v7334 = vshrl.u32 %v7333, 7
        %v7335 = vsub.s32 %v7332, %v7334
        %v7336 = vrot.slane %v7328, %v7335
        %v7338 = vunpack.c.l.s4 1934713408
        %v7339 = vunpack.c.0.s8 %v7338
        %v7340 = vlaneseq
        %v7341 = vshrl.u32 %v7340, 7
        %v7342 = vsub.s32 %v7339, %v7341
        %v7343 = vrot.slane %v7329, %v7342
        %v7344 = vcombine.low %v7279, %v7295
        %v7345 = vcombine.high %v7279, %v7295
        %v7347 = vunpack.c.l.s4 1934713408
        %v7348 = vunpack.c.0.s8 %v7347
        %v7349 = vlaneseq
        %v7350 = vshrl.u32 %v7349, 7
        %v7351 = vsub.s32 %v7348, %v7350
        %v7352 = vrot.slane %v7344, %v7351
        %v7354 = vunpack.c.l.s4 1934713408
        %v7355 = vunpack.c.0.s8 %v7354
        %v7356 = vlaneseq
        %v7357 = vshrl.u32 %v7356, 7
        %v7358 = vsub.s32 %v7355, %v7357
        %v7359 = vrot.slane %v7345, %v7358
        %v7360 = vcombine.low %v7304, %v7336
        %v7361 = vcombine.high %v7304, %v7336
        %v7362 = vcombine.low %v7311, %v7343
        %v7363 = vcombine.high %v7311, %v7343
        %v7364 = vcombine.low %v7320, %v7352
        %v7365 = vcombine.high %v7320, %v7352
        %v7366 = vcombine.low %v7327, %v7359
        %v7367 = vcombine.high %v7327, %v7359
        %v7368 = vcombine.low %v5267, %v5275
        %v7369 = vcombine.high %v5267, %v5275
        %v7371 = vunpack.c.l.s4 1983009808
        %v7372 = vunpack.c.0.s8 %v7371
        %v7373 = vlaneseq
        %v7374 = vshrl.u32 %v7373, 7
        %v7375 = vsub.s32 %v7372, %v7374
        %v7376 = vrot.slane %v7368, %v7375
        %v7378 = vunpack.c.l.s4 1983009808
        %v7379 = vunpack.c.0.s8 %v7378
        %v7380 = vlaneseq
        %v7381 = vshrl.u32 %v7380, 7
        %v7382 = vsub.s32 %v7379, %v7381
        %v7383 = vrot.slane %v7369, %v7382
        %v7384 = vcombine.low %v5271, %v5279
        %v7385 = vcombine.high %v5271, %v5279
        %v7387 = vunpack.c.l.s4 1983009808
        %v7388 = vunpack.c.0.s8 %v7387
        %v7389 = vlaneseq
        %v7390 = vshrl.u32 %v7389, 7
        %v7391 = vsub.s32 %v7388, %v7390
        %v7392 = vrot.slane %v7384, %v7391
        %v7394 = vunpack.c.l.s4 1983009808
        %v7395 = vunpack.c.0.s8 %v7394
        %v7396 = vlaneseq
        %v7397 = vshrl.u32 %v7396, 7
        %v7398 = vsub.s32 %v7395, %v7397
        %v7399 = vrot.slane %v7385, %v7398
        %v7400 = vcombine.low %v5283, %v5291
        %v7401 = vcombine.high %v5283, %v5291
        %v7403 = vunpack.c.l.s4 1983009808
        %v7404 = vunpack.c.0.s8 %v7403
        %v7405 = vlaneseq
        %v7406 = vshrl.u32 %v7405, 7
        %v7407 = vsub.s32 %v7404, %v7406
        %v7408 = vrot.slane %v7400, %v7407
        %v7410 = vunpack.c.l.s4 1983009808
        %v7411 = vunpack.c.0.s8 %v7410
        %v7412 = vlaneseq
        %v7413 = vshrl.u32 %v7412, 7
        %v7414 = vsub.s32 %v7411, %v7413
        %v7415 = vrot.slane %v7401, %v7414
        %v7416 = vcombine.low %v5287, %v5295
        %v7417 = vcombine.high %v5287, %v5295
        %v7419 = vunpack.c.l.s4 1983009808
        %v7420 = vunpack.c.0.s8 %v7419
        %v7421 = vlaneseq
        %v7422 = vshrl.u32 %v7421, 7
        %v7423 = vsub.s32 %v7420, %v7422
        %v7424 = vrot.slane %v7416, %v7423
        %v7426 = vunpack.c.l.s4 1983009808
        %v7427 = vunpack.c.0.s8 %v7426
        %v7428 = vlaneseq
        %v7429 = vshrl.u32 %v7428, 7
        %v7430 = vsub.s32 %v7427, %v7429
        %v7431 = vrot.slane %v7417, %v7430
        %v7432 = vcombine.low %v7376, %v7392
        %v7433 = vcombine.high %v7376, %v7392
        %v7435 = vunpack.c.l.s4 1934713408
        %v7436 = vunpack.c.0.s8 %v7435
        %v7437 = vlaneseq
        %v7438 = vshrl.u32 %v7437, 7
        %v7439 = vsub.s32 %v7436, %v7438
        %v7440 = vrot.slane %v7432, %v7439
        %v7442 = vunpack.c.l.s4 1934713408
        %v7443 = vunpack.c.0.s8 %v7442
        %v7444 = vlaneseq
        %v7445 = vshrl.u32 %v7444, 7
        %v7446 = vsub.s32 %v7443, %v7445
        %v7447 = vrot.slane %v7433, %v7446
        %v7448 = vcombine.low %v7383, %v7399
        %v7449 = vcombine.high %v7383, %v7399
        %v7451 = vunpack.c.l.s4 1934713408
        %v7452 = vunpack.c.0.s8 %v7451
        %v7453 = vlaneseq
        %v7454 = vshrl.u32 %v7453, 7
        %v7455 = vsub.s32 %v7452, %v7454
        %v7456 = vrot.slane %v7448, %v7455
        %v7458 = vunpack.c.l.s4 1934713408
        %v7459 = vunpack.c.0.s8 %v7458
        %v7460 = vlaneseq
        %v7461 = vshrl.u32 %v7460, 7
        %v7462 = vsub.s32 %v7459, %v7461
        %v7463 = vrot.slane %v7449, %v7462
        %v7464 = vcombine.low %v7408, %v7424
        %v7465 = vcombine.high %v7408, %v7424
        %v7467 = vunpack.c.l.s4 1934713408
        %v7468 = vunpack.c.0.s8 %v7467
        %v7469 = vlaneseq
        %v7470 = vshrl.u32 %v7469, 7
        %v7471 = vsub.s32 %v7468, %v7470
        %v7472 = vrot.slane %v7464, %v7471
        %v7474 = vunpack.c.l.s4 1934713408
        %v7475 = vunpack.c.0.s8 %v7474
        %v7476 = vlaneseq
        %v7477 = vshrl.u32 %v7476, 7
        %v7478 = vsub.s32 %v7475, %v7477
        %v7479 = vrot.slane %v7465, %v7478
        %v7480 = vcombine.low %v7415, %v7431
        %v7481 = vcombine.high %v7415, %v7431
        %v7483 = vunpack.c.l.s4 1934713408
        %v7484 = vunpack.c.0.s8 %v7483
        %v7485 = vlaneseq
        %v7486 = vshrl.u32 %v7485, 7
        %v7487 = vsub.s32 %v7484, %v7486
        %v7488 = vrot.slane %v7480, %v7487
        %v7490 = vunpack.c.l.s4 1934713408
        %v7491 = vunpack.c.0.s8 %v7490
        %v7492 = vlaneseq
        %v7493 = vshrl.u32 %v7492, 7
        %v7494 = vsub.s32 %v7491, %v7493
        %v7495 = vrot.slane %v7481, %v7494
        %v7496 = vcombine.low %v7440, %v7472
        %v7497 = vcombine.high %v7440, %v7472
        %v7498 = vcombine.low %v7447, %v7479
        %v7499 = vcombine.high %v7447, %v7479
        %v7500 = vcombine.low %v7456, %v7488
        %v7501 = vcombine.high %v7456, %v7488
        %v7502 = vcombine.low %v7463, %v7495
        %v7503 = vcombine.high %v7463, %v7495
        %v7504 = vcombine.low %v5316, %v5326
        %v7505 = vcombine.high %v5316, %v5326
        %v7507 = vunpack.c.l.s4 1983009808
        %v7508 = vunpack.c.0.s8 %v7507
        %v7509 = vlaneseq
        %v7510 = vshrl.u32 %v7509, 7
        %v7511 = vsub.s32 %v7508, %v7510
        %v7512 = vrot.slane %v7504, %v7511
        %v7514 = vunpack.c.l.s4 1983009808
        %v7515 = vunpack.c.0.s8 %v7514
        %v7516 = vlaneseq
        %v7517 = vshrl.u32 %v7516, 7
        %v7518 = vsub.s32 %v7515, %v7517
        %v7519 = vrot.slane %v7505, %v7518
        %v7520 = vcombine.low %v5321, %v5331
        %v7521 = vcombine.high %v5321, %v5331
        %v7523 = vunpack.c.l.s4 1983009808
        %v7524 = vunpack.c.0.s8 %v7523
        %v7525 = vlaneseq
        %v7526 = vshrl.u32 %v7525, 7
        %v7527 = vsub.s32 %v7524, %v7526
        %v7528 = vrot.slane %v7520, %v7527
        %v7530 = vunpack.c.l.s4 1983009808
        %v7531 = vunpack.c.0.s8 %v7530
        %v7532 = vlaneseq
        %v7533 = vshrl.u32 %v7532, 7
        %v7534 = vsub.s32 %v7531, %v7533
        %v7535 = vrot.slane %v7521, %v7534
        %v7536 = vcombine.low %v5336, %v5346
        %v7537 = vcombine.high %v5336, %v5346
        %v7539 = vunpack.c.l.s4 1983009808
        %v7540 = vunpack.c.0.s8 %v7539
        %v7541 = vlaneseq
        %v7542 = vshrl.u32 %v7541, 7
        %v7543 = vsub.s32 %v7540, %v7542
        %v7544 = vrot.slane %v7536, %v7543
        %v7546 = vunpack.c.l.s4 1983009808
        %v7547 = vunpack.c.0.s8 %v7546
        %v7548 = vlaneseq
        %v7549 = vshrl.u32 %v7548, 7
        %v7550 = vsub.s32 %v7547, %v7549
        %v7551 = vrot.slane %v7537, %v7550
        %v7552 = vcombine.low %v5341, %v5351
        %v7553 = vcombine.high %v5341, %v5351
        %v7555 = vunpack.c.l.s4 1983009808
        %v7556 = vunpack.c.0.s8 %v7555
        %v7557 = vlaneseq
        %v7558 = vshrl.u32 %v7557, 7
        %v7559 = vsub.s32 %v7556, %v7558
        %v7560 = vrot.slane %v7552, %v7559
        %v7562 = vunpack.c.l.s4 1983009808
        %v7563 = vunpack.c.0.s8 %v7562
        %v7564 = vlaneseq
        %v7565 = vshrl.u32 %v7564, 7
        %v7566 = vsub.s32 %v7563, %v7565
        %v7567 = vrot.slane %v7553, %v7566
        %v7568 = vcombine.low %v7512, %v7528
        %v7569 = vcombine.high %v7512, %v7528
        %v7571 = vunpack.c.l.s4 1934713408
        %v7572 = vunpack.c.0.s8 %v7571
        %v7573 = vlaneseq
        %v7574 = vshrl.u32 %v7573, 7
        %v7575 = vsub.s32 %v7572, %v7574
        %v7576 = vrot.slane %v7568, %v7575
        %v7578 = vunpack.c.l.s4 1934713408
        %v7579 = vunpack.c.0.s8 %v7578
        %v7580 = vlaneseq
        %v7581 = vshrl.u32 %v7580, 7
        %v7582 = vsub.s32 %v7579, %v7581
        %v7583 = vrot.slane %v7569, %v7582
        %v7584 = vcombine.low %v7519, %v7535
        %v7585 = vcombine.high %v7519, %v7535
        %v7587 = vunpack.c.l.s4 1934713408
        %v7588 = vunpack.c.0.s8 %v7587
        %v7589 = vlaneseq
        %v7590 = vshrl.u32 %v7589, 7
        %v7591 = vsub.s32 %v7588, %v7590
        %v7592 = vrot.slane %v7584, %v7591
        %v7594 = vunpack.c.l.s4 1934713408
        %v7595 = vunpack.c.0.s8 %v7594
        %v7596 = vlaneseq
        %v7597 = vshrl.u32 %v7596, 7
        %v7598 = vsub.s32 %v7595, %v7597
        %v7599 = vrot.slane %v7585, %v7598
        %v7600 = vcombine.low %v7544, %v7560
        %v7601 = vcombine.high %v7544, %v7560
        %v7603 = vunpack.c.l.s4 1934713408
        %v7604 = vunpack.c.0.s8 %v7603
        %v7605 = vlaneseq
        %v7606 = vshrl.u32 %v7605, 7
        %v7607 = vsub.s32 %v7604, %v7606
        %v7608 = vrot.slane %v7600, %v7607
        %v7610 = vunpack.c.l.s4 1934713408
        %v7611 = vunpack.c.0.s8 %v7610
        %v7612 = vlaneseq
        %v7613 = vshrl.u32 %v7612, 7
        %v7614 = vsub.s32 %v7611, %v7613
        %v7615 = vrot.slane %v7601, %v7614
        %v7616 = vcombine.low %v7551, %v7567
        %v7617 = vcombine.high %v7551, %v7567
        %v7619 = vunpack.c.l.s4 1934713408
        %v7620 = vunpack.c.0.s8 %v7619
        %v7621 = vlaneseq
        %v7622 = vshrl.u32 %v7621, 7
        %v7623 = vsub.s32 %v7620, %v7622
        %v7624 = vrot.slane %v7616, %v7623
        %v7626 = vunpack.c.l.s4 1934713408
        %v7627 = vunpack.c.0.s8 %v7626
        %v7628 = vlaneseq
        %v7629 = vshrl.u32 %v7628, 7
        %v7630 = vsub.s32 %v7627, %v7629
        %v7631 = vrot.slane %v7617, %v7630
        %v7632 = vcombine.low %v7576, %v7608
        %v7633 = vcombine.high %v7576, %v7608
        %v7634 = vcombine.low %v7583, %v7615
        %v7635 = vcombine.high %v7583, %v7615
        %v7636 = vcombine.low %v7592, %v7624
        %v7637 = vcombine.high %v7592, %v7624
        %v7638 = vcombine.low %v7599, %v7631
        %v7639 = vcombine.high %v7599, %v7631
        %v7640 = vcombine.low %v5371, %v5379
        %v7641 = vcombine.high %v5371, %v5379
        %v7643 = vunpack.c.l.s4 1983009808
        %v7644 = vunpack.c.0.s8 %v7643
        %v7645 = vlaneseq
        %v7646 = vshrl.u32 %v7645, 7
        %v7647 = vsub.s32 %v7644, %v7646
        %v7648 = vrot.slane %v7640, %v7647
        %v7650 = vunpack.c.l.s4 1983009808
        %v7651 = vunpack.c.0.s8 %v7650
        %v7652 = vlaneseq
        %v7653 = vshrl.u32 %v7652, 7
        %v7654 = vsub.s32 %v7651, %v7653
        %v7655 = vrot.slane %v7641, %v7654
        %v7656 = vcombine.low %v5375, %v5383
        %v7657 = vcombine.high %v5375, %v5383
        %v7659 = vunpack.c.l.s4 1983009808
        %v7660 = vunpack.c.0.s8 %v7659
        %v7661 = vlaneseq
        %v7662 = vshrl.u32 %v7661, 7
        %v7663 = vsub.s32 %v7660, %v7662
        %v7664 = vrot.slane %v7656, %v7663
        %v7666 = vunpack.c.l.s4 1983009808
        %v7667 = vunpack.c.0.s8 %v7666
        %v7668 = vlaneseq
        %v7669 = vshrl.u32 %v7668, 7
        %v7670 = vsub.s32 %v7667, %v7669
        %v7671 = vrot.slane %v7657, %v7670
        %v7672 = vcombine.low %v5387, %v5395
        %v7673 = vcombine.high %v5387, %v5395
        %v7675 = vunpack.c.l.s4 1983009808
        %v7676 = vunpack.c.0.s8 %v7675
        %v7677 = vlaneseq
        %v7678 = vshrl.u32 %v7677, 7
        %v7679 = vsub.s32 %v7676, %v7678
        %v7680 = vrot.slane %v7672, %v7679
        %v7682 = vunpack.c.l.s4 1983009808
        %v7683 = vunpack.c.0.s8 %v7682
        %v7684 = vlaneseq
        %v7685 = vshrl.u32 %v7684, 7
        %v7686 = vsub.s32 %v7683, %v7685
        %v7687 = vrot.slane %v7673, %v7686
        %v7688 = vcombine.low %v5391, %v5399
        %v7689 = vcombine.high %v5391, %v5399
        %v7691 = vunpack.c.l.s4 1983009808
        %v7692 = vunpack.c.0.s8 %v7691
        %v7693 = vlaneseq
        %v7694 = vshrl.u32 %v7693, 7
        %v7695 = vsub.s32 %v7692, %v7694
        %v7696 = vrot.slane %v7688, %v7695
        %v7698 = vunpack.c.l.s4 1983009808
        %v7699 = vunpack.c.0.s8 %v7698
        %v7700 = vlaneseq
        %v7701 = vshrl.u32 %v7700, 7
        %v7702 = vsub.s32 %v7699, %v7701
        %v7703 = vrot.slane %v7689, %v7702
        %v7704 = vcombine.low %v7648, %v7664
        %v7705 = vcombine.high %v7648, %v7664
        %v7707 = vunpack.c.l.s4 1934713408
        %v7708 = vunpack.c.0.s8 %v7707
        %v7709 = vlaneseq
        %v7710 = vshrl.u32 %v7709, 7
        %v7711 = vsub.s32 %v7708, %v7710
        %v7712 = vrot.slane %v7704, %v7711
        %v7714 = vunpack.c.l.s4 1934713408
        %v7715 = vunpack.c.0.s8 %v7714
        %v7716 = vlaneseq
        %v7717 = vshrl.u32 %v7716, 7
        %v7718 = vsub.s32 %v7715, %v7717
        %v7719 = vrot.slane %v7705, %v7718
        %v7720 = vcombine.low %v7655, %v7671
        %v7721 = vcombine.high %v7655, %v7671
        %v7723 = vunpack.c.l.s4 1934713408
        %v7724 = vunpack.c.0.s8 %v7723
        %v7725 = vlaneseq
        %v7726 = vshrl.u32 %v7725, 7
        %v7727 = vsub.s32 %v7724, %v7726
        %v7728 = vrot.slane %v7720, %v7727
        %v7730 = vunpack.c.l.s4 1934713408
        %v7731 = vunpack.c.0.s8 %v7730
        %v7732 = vlaneseq
        %v7733 = vshrl.u32 %v7732, 7
        %v7734 = vsub.s32 %v7731, %v7733
        %v7735 = vrot.slane %v7721, %v7734
        %v7736 = vcombine.low %v7680, %v7696
        %v7737 = vcombine.high %v7680, %v7696
        %v7739 = vunpack.c.l.s4 1934713408
        %v7740 = vunpack.c.0.s8 %v7739
        %v7741 = vlaneseq
        %v7742 = vshrl.u32 %v7741, 7
        %v7743 = vsub.s32 %v7740, %v7742
        %v7744 = vrot.slane %v7736, %v7743
        %v7746 = vunpack.c.l.s4 1934713408
        %v7747 = vunpack.c.0.s8 %v7746
        %v7748 = vlaneseq
        %v7749 = vshrl.u32 %v7748, 7
        %v7750 = vsub.s32 %v7747, %v7749
        %v7751 = vrot.slane %v7737, %v7750
        %v7752 = vcombine.low %v7687, %v7703
        %v7753 = vcombine.high %v7687, %v7703
        %v7755 = vunpack.c.l.s4 1934713408
        %v7756 = vunpack.c.0.s8 %v7755
        %v7757 = vlaneseq
        %v7758 = vshrl.u32 %v7757, 7
        %v7759 = vsub.s32 %v7756, %v7758
        %v7760 = vrot.slane %v7752, %v7759
        %v7762 = vunpack.c.l.s4 1934713408
        %v7763 = vunpack.c.0.s8 %v7762
        %v7764 = vlaneseq
        %v7765 = vshrl.u32 %v7764, 7
        %v7766 = vsub.s32 %v7763, %v7765
        %v7767 = vrot.slane %v7753, %v7766
        %v7768 = vcombine.low %v7712, %v7744
        %v7769 = vcombine.high %v7712, %v7744
        %v7770 = vcombine.low %v7719, %v7751
        %v7771 = vcombine.high %v7719, %v7751
        %v7772 = vcombine.low %v7728, %v7760
        %v7773 = vcombine.high %v7728, %v7760
        %v7774 = vcombine.low %v7735, %v7767
        %v7775 = vcombine.high %v7735, %v7767
        %v7776 = vcombine.low %v5419, %v5427
        %v7777 = vcombine.high %v5419, %v5427
        %v7779 = vunpack.c.l.s4 1983009808
        %v7780 = vunpack.c.0.s8 %v7779
        %v7781 = vlaneseq
        %v7782 = vshrl.u32 %v7781, 7
        %v7783 = vsub.s32 %v7780, %v7782
        %v7784 = vrot.slane %v7776, %v7783
        %v7786 = vunpack.c.l.s4 1983009808
        %v7787 = vunpack.c.0.s8 %v7786
        %v7788 = vlaneseq
        %v7789 = vshrl.u32 %v7788, 7
        %v7790 = vsub.s32 %v7787, %v7789
        %v7791 = vrot.slane %v7777, %v7790
        %v7792 = vcombine.low %v5423, %v5431
        %v7793 = vcombine.high %v5423, %v5431
        %v7795 = vunpack.c.l.s4 1983009808
        %v7796 = vunpack.c.0.s8 %v7795
        %v7797 = vlaneseq
        %v7798 = vshrl.u32 %v7797, 7
        %v7799 = vsub.s32 %v7796, %v7798
        %v7800 = vrot.slane %v7792, %v7799
        %v7802 = vunpack.c.l.s4 1983009808
        %v7803 = vunpack.c.0.s8 %v7802
        %v7804 = vlaneseq
        %v7805 = vshrl.u32 %v7804, 7
        %v7806 = vsub.s32 %v7803, %v7805
        %v7807 = vrot.slane %v7793, %v7806
        %v7808 = vcombine.low %v5435, %v5443
        %v7809 = vcombine.high %v5435, %v5443
        %v7811 = vunpack.c.l.s4 1983009808
        %v7812 = vunpack.c.0.s8 %v7811
        %v7813 = vlaneseq
        %v7814 = vshrl.u32 %v7813, 7
        %v7815 = vsub.s32 %v7812, %v7814
        %v7816 = vrot.slane %v7808, %v7815
        %v7818 = vunpack.c.l.s4 1983009808
        %v7819 = vunpack.c.0.s8 %v7818
        %v7820 = vlaneseq
        %v7821 = vshrl.u32 %v7820, 7
        %v7822 = vsub.s32 %v7819, %v7821
        %v7823 = vrot.slane %v7809, %v7822
        %v7824 = vcombine.low %v5439, %v5447
        %v7825 = vcombine.high %v5439, %v5447
        %v7827 = vunpack.c.l.s4 1983009808
        %v7828 = vunpack.c.0.s8 %v7827
        %v7829 = vlaneseq
        %v7830 = vshrl.u32 %v7829, 7
        %v7831 = vsub.s32 %v7828, %v7830
        %v7832 = vrot.slane %v7824, %v7831
        %v7834 = vunpack.c.l.s4 1983009808
        %v7835 = vunpack.c.0.s8 %v7834
        %v7836 = vlaneseq
        %v7837 = vshrl.u32 %v7836, 7
        %v7838 = vsub.s32 %v7835, %v7837
        %v7839 = vrot.slane %v7825, %v7838
        %v7840 = vcombine.low %v7784, %v7800
        %v7841 = vcombine.high %v7784, %v7800
        %v7843 = vunpack.c.l.s4 1934713408
        %v7844 = vunpack.c.0.s8 %v7843
        %v7845 = vlaneseq
        %v7846 = vshrl.u32 %v7845, 7
        %v7847 = vsub.s32 %v7844, %v7846
        %v7848 = vrot.slane %v7840, %v7847
        %v7850 = vunpack.c.l.s4 1934713408
        %v7851 = vunpack.c.0.s8 %v7850
        %v7852 = vlaneseq
        %v7853 = vshrl.u32 %v7852, 7
        %v7854 = vsub.s32 %v7851, %v7853
        %v7855 = vrot.slane %v7841, %v7854
        %v7856 = vcombine.low %v7791, %v7807
        %v7857 = vcombine.high %v7791, %v7807
        %v7859 = vunpack.c.l.s4 1934713408
        %v7860 = vunpack.c.0.s8 %v7859
        %v7861 = vlaneseq
        %v7862 = vshrl.u32 %v7861, 7
        %v7863 = vsub.s32 %v7860, %v7862
        %v7864 = vrot.slane %v7856, %v7863
        %v7866 = vunpack.c.l.s4 1934713408
        %v7867 = vunpack.c.0.s8 %v7866
        %v7868 = vlaneseq
        %v7869 = vshrl.u32 %v7868, 7
        %v7870 = vsub.s32 %v7867, %v7869
        %v7871 = vrot.slane %v7857, %v7870
        %v7872 = vcombine.low %v7816, %v7832
        %v7873 = vcombine.high %v7816, %v7832
        %v7875 = vunpack.c.l.s4 1934713408
        %v7876 = vunpack.c.0.s8 %v7875
        %v7877 = vlaneseq
        %v7878 = vshrl.u32 %v7877, 7
        %v7879 = vsub.s32 %v7876, %v7878
        %v7880 = vrot.slane %v7872, %v7879
        %v7882 = vunpack.c.l.s4 1934713408
        %v7883 = vunpack.c.0.s8 %v7882
        %v7884 = vlaneseq
        %v7885 = vshrl.u32 %v7884, 7
        %v7886 = vsub.s32 %v7883, %v7885
        %v7887 = vrot.slane %v7873, %v7886
        %v7888 = vcombine.low %v7823, %v7839
        %v7889 = vcombine.high %v7823, %v7839
        %v7891 = vunpack.c.l.s4 1934713408
        %v7892 = vunpack.c.0.s8 %v7891
        %v7893 = vlaneseq
        %v7894 = vshrl.u32 %v7893, 7
        %v7895 = vsub.s32 %v7892, %v7894
        %v7896 = vrot.slane %v7888, %v7895
        %v7898 = vunpack.c.l.s4 1934713408
        %v7899 = vunpack.c.0.s8 %v7898
        %v7900 = vlaneseq
        %v7901 = vshrl.u32 %v7900, 7
        %v7902 = vsub.s32 %v7899, %v7901
        %v7903 = vrot.slane %v7889, %v7902
        %v7904 = vcombine.low %v7848, %v7880
        %v7905 = vcombine.high %v7848, %v7880
        %v7906 = vcombine.low %v7855, %v7887
        %v7907 = vcombine.high %v7855, %v7887
        %v7908 = vcombine.low %v7864, %v7896
        %v7909 = vcombine.high %v7864, %v7896
        %v7910 = vcombine.low %v7871, %v7903
        %v7911 = vcombine.high %v7871, %v7903
        %7921 = vrot.lane.b32.xlu0 %v5593, 16
        %v7922 = vpop.permute.xlu0 %7921
        %7923 = vrot.lane.b32.xlu0 %v5729, 16
        %v7924 = vpop.permute.xlu0 %7923
        %7925 = vrot.lane.b32.xlu0 %v5865, 16
        %v7926 = vpop.permute.xlu0 %7925
        %7927 = vrot.lane.b32.xlu0 %v6001, 16
        %v7928 = vpop.permute.xlu0 %7927
        %7929 = vrot.lane.b32.xlu0 %v6137, 16
        %v7930 = vpop.permute.xlu0 %7929
        %7931 = vrot.lane.b32.xlu0 %v6273, 16
        %v7932 = vpop.permute.xlu0 %7931
        %7933 = vrot.lane.b32.xlu0 %v6409, 16
        %v7934 = vpop.permute.xlu0 %7933
        %7935 = vrot.lane.b32.xlu0 %v6545, 16
        %v7936 = vpop.permute.xlu0 %7935
        %7937 = vrot.lane.b32.xlu0 %v6681, 16
        %v7938 = vpop.permute.xlu0 %7937
        %7957 = vrot.lane.b32.xlu0 %v5594, 32
        %v7958 = vpop.permute.xlu0 %7957
        %7959 = vrot.lane.b32.xlu0 %v5730, 32
        %v7960 = vpop.permute.xlu0 %7959
        %7961 = vrot.lane.b32.xlu0 %v5866, 32
        %v7962 = vpop.permute.xlu0 %7961
        %7963 = vrot.lane.b32.xlu0 %v6002, 32
        %v7964 = vpop.permute.xlu0 %7963
        %7965 = vrot.lane.b32.xlu0 %v6138, 32
        %v7966 = vpop.permute.xlu0 %7965
        %7967 = vrot.lane.b32.xlu0 %v6274, 32
        %v7968 = vpop.permute.xlu0 %7967
        %7969 = vrot.lane.b32.xlu0 %v6410, 32
        %v7970 = vpop.permute.xlu0 %7969
        %7971 = vrot.lane.b32.xlu0 %v6546, 32
        %v7972 = vpop.permute.xlu0 %7971
        %7973 = vrot.lane.b32.xlu0 %v6682, 32
        %v7974 = vpop.permute.xlu0 %7973
        %7993 = vrot.lane.b32.xlu0 %v5595, 48
        %v7994 = vpop.permute.xlu0 %7993
        %7995 = vrot.lane.b32.xlu0 %v5731, 48
        %v7996 = vpop.permute.xlu0 %7995
        %7997 = vrot.lane.b32.xlu0 %v5867, 48
        %v7998 = vpop.permute.xlu0 %7997
        %7999 = vrot.lane.b32.xlu0 %v6003, 48
        %v8000 = vpop.permute.xlu0 %7999
        %8001 = vrot.lane.b32.xlu0 %v6139, 48
        %v8002 = vpop.permute.xlu0 %8001
        %8003 = vrot.lane.b32.xlu0 %v6275, 48
        %v8004 = vpop.permute.xlu0 %8003
        %8005 = vrot.lane.b32.xlu0 %v6411, 48
        %v8006 = vpop.permute.xlu0 %8005
        %8007 = vrot.lane.b32.xlu0 %v6547, 48
        %v8008 = vpop.permute.xlu0 %8007
        %8009 = vrot.lane.b32.xlu0 %v6683, 48
        %v8010 = vpop.permute.xlu0 %8009
        %8029 = vrot.lane.b32.xlu0 %v5596, 64
        %v8030 = vpop.permute.xlu0 %8029
        %8031 = vrot.lane.b32.xlu0 %v5732, 64
        %v8032 = vpop.permute.xlu0 %8031
        %8033 = vrot.lane.b32.xlu0 %v5868, 64
        %v8034 = vpop.permute.xlu0 %8033
        %8035 = vrot.lane.b32.xlu0 %v6004, 64
        %v8036 = vpop.permute.xlu0 %8035
        %8037 = vrot.lane.b32.xlu0 %v6140, 64
        %v8038 = vpop.permute.xlu0 %8037
        %8039 = vrot.lane.b32.xlu0 %v6276, 64
        %v8040 = vpop.permute.xlu0 %8039
        %8041 = vrot.lane.b32.xlu0 %v6412, 64
        %v8042 = vpop.permute.xlu0 %8041
        %8043 = vrot.lane.b32.xlu0 %v6548, 64
        %v8044 = vpop.permute.xlu0 %8043
        %8045 = vrot.lane.b32.xlu0 %v6684, 64
        %v8046 = vpop.permute.xlu0 %8045
        %8065 = vrot.lane.b32.xlu0 %v5597, 80
        %v8066 = vpop.permute.xlu0 %8065
        %8067 = vrot.lane.b32.xlu0 %v5733, 80
        %v8068 = vpop.permute.xlu0 %8067
        %8069 = vrot.lane.b32.xlu0 %v5869, 80
        %v8070 = vpop.permute.xlu0 %8069
        %8071 = vrot.lane.b32.xlu0 %v6005, 80
        %v8072 = vpop.permute.xlu0 %8071
        %8073 = vrot.lane.b32.xlu0 %v6141, 80
        %v8074 = vpop.permute.xlu0 %8073
        %8075 = vrot.lane.b32.xlu0 %v6277, 80
        %v8076 = vpop.permute.xlu0 %8075
        %8077 = vrot.lane.b32.xlu0 %v6413, 80
        %v8078 = vpop.permute.xlu0 %8077
        %8079 = vrot.lane.b32.xlu0 %v6549, 80
        %v8080 = vpop.permute.xlu0 %8079
        %8081 = vrot.lane.b32.xlu0 %v6685, 80
        %v8082 = vpop.permute.xlu0 %8081
        %8101 = vrot.lane.b32.xlu0 %v5598, 96
        %v8102 = vpop.permute.xlu0 %8101
        %8103 = vrot.lane.b32.xlu0 %v5734, 96
        %v8104 = vpop.permute.xlu0 %8103
        %8105 = vrot.lane.b32.xlu0 %v5870, 96
        %v8106 = vpop.permute.xlu0 %8105
        %8107 = vrot.lane.b32.xlu0 %v6006, 96
        %v8108 = vpop.permute.xlu0 %8107
        %8109 = vrot.lane.b32.xlu0 %v6142, 96
        %v8110 = vpop.permute.xlu0 %8109
        %8111 = vrot.lane.b32.xlu0 %v6278, 96
        %v8112 = vpop.permute.xlu0 %8111
        %8113 = vrot.lane.b32.xlu0 %v6414, 96
        %v8114 = vpop.permute.xlu0 %8113
        %8115 = vrot.lane.b32.xlu0 %v6550, 96
        %v8116 = vpop.permute.xlu0 %8115
        %8117 = vrot.lane.b32.xlu0 %v6686, 96
        %v8118 = vpop.permute.xlu0 %8117
        %8137 = vrot.lane.b32.xlu0 %v5599, 112
        %v8138 = vpop.permute.xlu0 %8137
        %8139 = vrot.lane.b32.xlu0 %v5735, 112
        %v8140 = vpop.permute.xlu0 %8139
        %8141 = vrot.lane.b32.xlu0 %v5871, 112
        %v8142 = vpop.permute.xlu0 %8141
        %8143 = vrot.lane.b32.xlu0 %v6007, 112
        %v8144 = vpop.permute.xlu0 %8143
        %8145 = vrot.lane.b32.xlu0 %v6143, 112
        %v8146 = vpop.permute.xlu0 %8145
        %8147 = vrot.lane.b32.xlu0 %v6279, 112
        %v8148 = vpop.permute.xlu0 %8147
        %8149 = vrot.lane.b32.xlu0 %v6415, 112
        %v8150 = vpop.permute.xlu0 %8149
        %8151 = vrot.lane.b32.xlu0 %v6551, 112
        %v8152 = vpop.permute.xlu0 %8151
        %8153 = vrot.lane.b32.xlu0 %v6687, 112
        %v8154 = vpop.permute.xlu0 %8153
        %8173 = vrot.lane.b32.xlu0 %v6817, 16
        %v8174 = vpop.permute.xlu0 %8173
        %8175 = vrot.lane.b32.xlu0 %v6953, 16
        %v8176 = vpop.permute.xlu0 %8175
        %8177 = vrot.lane.b32.xlu0 %v7089, 16
        %v8178 = vpop.permute.xlu0 %8177
        %8179 = vrot.lane.b32.xlu0 %v7225, 16
        %v8180 = vpop.permute.xlu0 %8179
        %8181 = vrot.lane.b32.xlu0 %v7361, 16
        %v8182 = vpop.permute.xlu0 %8181
        %8183 = vrot.lane.b32.xlu0 %v7497, 16
        %v8184 = vpop.permute.xlu0 %8183
        %8185 = vrot.lane.b32.xlu0 %v7633, 16
        %v8186 = vpop.permute.xlu0 %8185
        %8187 = vrot.lane.b32.xlu0 %v7769, 16
        %v8188 = vpop.permute.xlu0 %8187
        %8189 = vrot.lane.b32.xlu0 %v7905, 16
        %v8190 = vpop.permute.xlu0 %8189
        %8209 = vrot.lane.b32.xlu0 %v6818, 32
        %v8210 = vpop.permute.xlu0 %8209
        %8211 = vrot.lane.b32.xlu0 %v6954, 32
        %v8212 = vpop.permute.xlu0 %8211
        %8213 = vrot.lane.b32.xlu0 %v7090, 32
        %v8214 = vpop.permute.xlu0 %8213
        %8215 = vrot.lane.b32.xlu0 %v7226, 32
        %v8216 = vpop.permute.xlu0 %8215
        %8217 = vrot.lane.b32.xlu0 %v7362, 32
        %v8218 = vpop.permute.xlu0 %8217
        %8219 = vrot.lane.b32.xlu0 %v7498, 32
        %v8220 = vpop.permute.xlu0 %8219
        %8221 = vrot.lane.b32.xlu0 %v7634, 32
        %v8222 = vpop.permute.xlu0 %8221
        %8223 = vrot.lane.b32.xlu0 %v7770, 32
        %v8224 = vpop.permute.xlu0 %8223
        %8225 = vrot.lane.b32.xlu0 %v7906, 32
        %v8226 = vpop.permute.xlu0 %8225
        %8245 = vrot.lane.b32.xlu0 %v6819, 48
        %v8246 = vpop.permute.xlu0 %8245
        %8247 = vrot.lane.b32.xlu0 %v6955, 48
        %v8248 = vpop.permute.xlu0 %8247
        %8249 = vrot.lane.b32.xlu0 %v7091, 48
        %v8250 = vpop.permute.xlu0 %8249
        %8251 = vrot.lane.b32.xlu0 %v7227, 48
        %v8252 = vpop.permute.xlu0 %8251
        %8253 = vrot.lane.b32.xlu0 %v7363, 48
        %v8254 = vpop.permute.xlu0 %8253
        %8255 = vrot.lane.b32.xlu0 %v7499, 48
        %v8256 = vpop.permute.xlu0 %8255
        %8257 = vrot.lane.b32.xlu0 %v7635, 48
        %v8258 = vpop.permute.xlu0 %8257
        %8259 = vrot.lane.b32.xlu0 %v7771, 48
        %v8260 = vpop.permute.xlu0 %8259
        %8261 = vrot.lane.b32.xlu0 %v7907, 48
        %v8262 = vpop.permute.xlu0 %8261
        %8281 = vrot.lane.b32.xlu0 %v6820, 64
        %v8282 = vpop.permute.xlu0 %8281
        %8283 = vrot.lane.b32.xlu0 %v6956, 64
        %v8284 = vpop.permute.xlu0 %8283
        %8285 = vrot.lane.b32.xlu0 %v7092, 64
        %v8286 = vpop.permute.xlu0 %8285
        %8287 = vrot.lane.b32.xlu0 %v7228, 64
        %v8288 = vpop.permute.xlu0 %8287
        %8289 = vrot.lane.b32.xlu0 %v7364, 64
        %v8290 = vpop.permute.xlu0 %8289
        %8291 = vrot.lane.b32.xlu0 %v7500, 64
        %v8292 = vpop.permute.xlu0 %8291
        %8293 = vrot.lane.b32.xlu0 %v7636, 64
        %v8294 = vpop.permute.xlu0 %8293
        %8295 = vrot.lane.b32.xlu0 %v7772, 64
        %v8296 = vpop.permute.xlu0 %8295
        %8297 = vrot.lane.b32.xlu0 %v7908, 64
        %v8298 = vpop.permute.xlu0 %8297
        %8317 = vrot.lane.b32.xlu0 %v6821, 80
        %v8318 = vpop.permute.xlu0 %8317
        %8319 = vrot.lane.b32.xlu0 %v6957, 80
        %v8320 = vpop.permute.xlu0 %8319
        %8321 = vrot.lane.b32.xlu0 %v7093, 80
        %v8322 = vpop.permute.xlu0 %8321
        %8323 = vrot.lane.b32.xlu0 %v7229, 80
        %v8324 = vpop.permute.xlu0 %8323
        %8325 = vrot.lane.b32.xlu0 %v7365, 80
        %v8326 = vpop.permute.xlu0 %8325
        %8327 = vrot.lane.b32.xlu0 %v7501, 80
        %v8328 = vpop.permute.xlu0 %8327
        %8329 = vrot.lane.b32.xlu0 %v7637, 80
        %v8330 = vpop.permute.xlu0 %8329
        %8331 = vrot.lane.b32.xlu0 %v7773, 80
        %v8332 = vpop.permute.xlu0 %8331
        %8333 = vrot.lane.b32.xlu0 %v7909, 80
        %v8334 = vpop.permute.xlu0 %8333
        %8353 = vrot.lane.b32.xlu0 %v6822, 96
        %v8354 = vpop.permute.xlu0 %8353
        %8355 = vrot.lane.b32.xlu0 %v6958, 96
        %v8356 = vpop.permute.xlu0 %8355
        %8357 = vrot.lane.b32.xlu0 %v7094, 96
        %v8358 = vpop.permute.xlu0 %8357
        %8359 = vrot.lane.b32.xlu0 %v7230, 96
        %v8360 = vpop.permute.xlu0 %8359
        %8361 = vrot.lane.b32.xlu0 %v7366, 96
        %v8362 = vpop.permute.xlu0 %8361
        %8363 = vrot.lane.b32.xlu0 %v7502, 96
        %v8364 = vpop.permute.xlu0 %8363
        %8365 = vrot.lane.b32.xlu0 %v7638, 96
        %v8366 = vpop.permute.xlu0 %8365
        %8367 = vrot.lane.b32.xlu0 %v7774, 96
        %v8368 = vpop.permute.xlu0 %8367
        %8369 = vrot.lane.b32.xlu0 %v7910, 96
        %v8370 = vpop.permute.xlu0 %8369
        %8389 = vrot.lane.b32.xlu0 %v6823, 112
        %v8390 = vpop.permute.xlu0 %8389
        %8391 = vrot.lane.b32.xlu0 %v6959, 112
        %v8392 = vpop.permute.xlu0 %8391
        %8393 = vrot.lane.b32.xlu0 %v7095, 112
        %v8394 = vpop.permute.xlu0 %8393
        %8395 = vrot.lane.b32.xlu0 %v7231, 112
        %v8396 = vpop.permute.xlu0 %8395
        %8397 = vrot.lane.b32.xlu0 %v7367, 112
        %v8398 = vpop.permute.xlu0 %8397
        %8399 = vrot.lane.b32.xlu0 %v7503, 112
        %v8400 = vpop.permute.xlu0 %8399
        %8401 = vrot.lane.b32.xlu0 %v7639, 112
        %v8402 = vpop.permute.xlu0 %8401
        %8403 = vrot.lane.b32.xlu0 %v7775, 112
        %v8404 = vpop.permute.xlu0 %8403
        %8405 = vrot.lane.b32.xlu0 %v7911, 112
        %v8406 = vpop.permute.xlu0 %8405
        %v8416 = vsel %vm421, %v5592, %v7922
        %v8417 = vsel %vm421, %v5728, %v7924
        %v8418 = vsel %vm421, %v5864, %v7926
        %v8419 = vsel %vm421, %v6000, %v7928
        %v8420 = vsel %vm421, %v6136, %v7930
        %v8421 = vsel %vm421, %v6272, %v7932
        %v8422 = vsel %vm421, %v6408, %v7934
        %v8423 = vsel %vm421, %v6544, %v7936
        %v8424 = vsel %vm421, %v6680, %v7938
        %v8425 = vsel %vm425, %v8416, %v7958
        %v8426 = vsel %vm425, %v8417, %v7960
        %v8427 = vsel %vm425, %v8418, %v7962
        %v8428 = vsel %vm425, %v8419, %v7964
        %v8429 = vsel %vm425, %v8420, %v7966
        %v8430 = vsel %vm425, %v8421, %v7968
        %v8431 = vsel %vm425, %v8422, %v7970
        %v8432 = vsel %vm425, %v8423, %v7972
        %v8433 = vsel %vm425, %v8424, %v7974
        %v8434 = vsel %vm429, %v8425, %v7994
        %v8435 = vsel %vm429, %v8426, %v7996
        %v8436 = vsel %vm429, %v8427, %v7998
        %v8437 = vsel %vm429, %v8428, %v8000
        %v8438 = vsel %vm429, %v8429, %v8002
        %v8439 = vsel %vm429, %v8430, %v8004
        %v8440 = vsel %vm429, %v8431, %v8006
        %v8441 = vsel %vm429, %v8432, %v8008
        %v8442 = vsel %vm429, %v8433, %v8010
        %v8443 = vsel %vm449, %v8434, %v8030
        %v8444 = vsel %vm449, %v8435, %v8032
        %v8445 = vsel %vm449, %v8436, %v8034
        %v8446 = vsel %vm449, %v8437, %v8036
        %v8447 = vsel %vm449, %v8438, %v8038
        %v8448 = vsel %vm449, %v8439, %v8040
        %v8449 = vsel %vm449, %v8440, %v8042
        %v8450 = vsel %vm449, %v8441, %v8044
        %v8451 = vsel %vm449, %v8442, %v8046
        %v8452 = vsel %vm4339, %v8443, %v8066
        %v8453 = vsel %vm4339, %v8444, %v8068
        %v8454 = vsel %vm4339, %v8445, %v8070
        %v8455 = vsel %vm4339, %v8446, %v8072
        %v8456 = vsel %vm4339, %v8447, %v8074
        %v8457 = vsel %vm4339, %v8448, %v8076
        %v8458 = vsel %vm4339, %v8449, %v8078
        %v8459 = vsel %vm4339, %v8450, %v8080
        %v8460 = vsel %vm4339, %v8451, %v8082
        %v8461 = vsel %vm4349, %v8452, %v8102
        %v8462 = vsel %vm4349, %v8453, %v8104
        %v8463 = vsel %vm4349, %v8454, %v8106
        %v8464 = vsel %vm4349, %v8455, %v8108
        %v8465 = vsel %vm4349, %v8456, %v8110
        %v8466 = vsel %vm4349, %v8457, %v8112
        %v8467 = vsel %vm4349, %v8458, %v8114
        %v8468 = vsel %vm4349, %v8459, %v8116
        %v8469 = vsel %vm4349, %v8460, %v8118
        %v8470 = vsel %vm4359, %v8461, %v8138
        %v8471 = vsel %vm4359, %v8462, %v8140
        %v8472 = vsel %vm4359, %v8463, %v8142
        %v8473 = vsel %vm4359, %v8464, %v8144
        %v8474 = vsel %vm4359, %v8465, %v8146
        %v8475 = vsel %vm4359, %v8466, %v8148
        %v8476 = vsel %vm4359, %v8467, %v8150
        %v8477 = vsel %vm4359, %v8468, %v8152
        %v8478 = vsel %vm4359, %v8469, %v8154
        %v8479 = vsel %vm421, %v6816, %v8174
        %v8480 = vsel %vm421, %v6952, %v8176
        %v8481 = vsel %vm421, %v7088, %v8178
        %v8482 = vsel %vm421, %v7224, %v8180
        %v8483 = vsel %vm421, %v7360, %v8182
        %v8484 = vsel %vm421, %v7496, %v8184
        %v8485 = vsel %vm421, %v7632, %v8186
        %v8486 = vsel %vm421, %v7768, %v8188
        %v8487 = vsel %vm421, %v7904, %v8190
        %v8488 = vsel %vm425, %v8479, %v8210
        %v8489 = vsel %vm425, %v8480, %v8212
        %v8490 = vsel %vm425, %v8481, %v8214
        %v8491 = vsel %vm425, %v8482, %v8216
        %v8492 = vsel %vm425, %v8483, %v8218
        %v8493 = vsel %vm425, %v8484, %v8220
        %v8494 = vsel %vm425, %v8485, %v8222
        %v8495 = vsel %vm425, %v8486, %v8224
        %v8496 = vsel %vm425, %v8487, %v8226
        %v8497 = vsel %vm429, %v8488, %v8246
        %v8498 = vsel %vm429, %v8489, %v8248
        %v8499 = vsel %vm429, %v8490, %v8250
        %v8500 = vsel %vm429, %v8491, %v8252
        %v8501 = vsel %vm429, %v8492, %v8254
        %v8502 = vsel %vm429, %v8493, %v8256
        %v8503 = vsel %vm429, %v8494, %v8258
        %v8504 = vsel %vm429, %v8495, %v8260
        %v8505 = vsel %vm429, %v8496, %v8262
        %v8506 = vsel %vm449, %v8497, %v8282
        %v8507 = vsel %vm449, %v8498, %v8284
        %v8508 = vsel %vm449, %v8499, %v8286
        %v8509 = vsel %vm449, %v8500, %v8288
        %v8510 = vsel %vm449, %v8501, %v8290
        %v8511 = vsel %vm449, %v8502, %v8292
        %v8512 = vsel %vm449, %v8503, %v8294
        %v8513 = vsel %vm449, %v8504, %v8296
        %v8514 = vsel %vm449, %v8505, %v8298
        %v8515 = vsel %vm4339, %v8506, %v8318
        %v8516 = vsel %vm4339, %v8507, %v8320
        %v8517 = vsel %vm4339, %v8508, %v8322
        %v8518 = vsel %vm4339, %v8509, %v8324
        %v8519 = vsel %vm4339, %v8510, %v8326
        %v8520 = vsel %vm4339, %v8511, %v8328
        %v8521 = vsel %vm4339, %v8512, %v8330
        %v8522 = vsel %vm4339, %v8513, %v8332
        %v8523 = vsel %vm4339, %v8514, %v8334
        %v8524 = vsel %vm4349, %v8515, %v8354
        %v8525 = vsel %vm4349, %v8516, %v8356
        %v8526 = vsel %vm4349, %v8517, %v8358
        %v8527 = vsel %vm4349, %v8518, %v8360
        %v8528 = vsel %vm4349, %v8519, %v8362
        %v8529 = vsel %vm4349, %v8520, %v8364
        %v8530 = vsel %vm4349, %v8521, %v8366
        %v8531 = vsel %vm4349, %v8522, %v8368
        %v8532 = vsel %vm4349, %v8523, %v8370
        %v8533 = vsel %vm4359, %v8524, %v8390
        %v8534 = vsel %vm4359, %v8525, %v8392
        %v8535 = vsel %vm4359, %v8526, %v8394
        %v8536 = vsel %vm4359, %v8527, %v8396
        %v8537 = vsel %vm4359, %v8528, %v8398
        %v8538 = vsel %vm4359, %v8529, %v8400
        %v8539 = vsel %vm4359, %v8530, %v8402
        %v8540 = vsel %vm4359, %v8531, %v8404
        %v8541 = vsel %vm4359, %v8532, %v8406
        %8543 = vset.pattern.permute.xlu0 0
        %8544 = vperm.xlu0 %8543, %v4831
        %v8545 = vpop.permute.xlu0 %8544
        %v8548 = vsel %vm4437, %v4830, 0
        %8550 = vmatprep.subr.mxu0 0.0
        %8551 = vmatpush1.msra.mxu0 0.0
        %8552 = vmatprep.subr.mxu0 0.0
        %8553 = vmatpush1.msra.mxu0 0.0
        %8554 = vmatprep.subr.mxu0 0.0
        %8555 = vmatpush1.msra.mxu0 0.0
        %8556 = vmatprep.subr.mxu0 0.0
        %8557 = vmatpush1.msra.mxu0 0.0
        %8558 = vmatprep.subr.mxu0 0.0
        %8559 = vmatpush1.msra.mxu0 0.0
        %8560 = vmatprep.subr.mxu0 0.0
        %8561 = vmatpush1.msra.mxu0 0.0
        %8562 = vmatprep.subr.mxu0 0.0
        %8563 = vmatpush1.msra.mxu0 0.0
        %8564 = vmatprep.subr.mxu0 %v8541
        %8565 = vmatpush1.msra.mxu0 %v8478
        %8566 = vmatprep.subr.mxu0 %v8540
        %8567 = vmatpush1.msra.mxu0 %v8477
        %8568 = vmatprep.subr.mxu0 %v8539
        %8569 = vmatpush1.msra.mxu0 %v8476
        %8570 = vmatprep.subr.mxu0 %v8538
        %8571 = vmatpush1.msra.mxu0 %v8475
        %8572 = vmatprep.subr.mxu0 %v8537
        %8573 = vmatpush1.msra.mxu0 %v8474
        %8574 = vmatprep.subr.mxu0 %v8536
        %8575 = vmatpush1.msra.mxu0 %v8473
        %8576 = vmatprep.subr.mxu0 %v8535
        %8577 = vmatpush1.msra.mxu0 %v8472
        %8578 = vmatprep.subr.mxu0 %v8534
        %8579 = vmatpush1.msra.mxu0 %v8471
        %8580 = vmatprep.subr.mxu0 %v8533
        %8581 = vmatpush1.msra.mxu0 %v8470
        %8582 = vmatprep.subr.mxu0 0.0
        %8583 = vmatpush2.msra.mxu0 0.0
        %8584 = vmatprep.subr.mxu0 0.0
        %8585 = vmatpush2.msra.mxu0 0.0
        %8586 = vmatprep.subr.mxu0 0.0
        %8587 = vmatpush2.msra.mxu0 0.0
        %8588 = vmatprep.subr.mxu0 0.0
        %8589 = vmatpush2.msra.mxu0 0.0
        %8590 = vmatprep.subr.mxu0 0.0
        %8591 = vmatpush2.msra.mxu0 0.0
        %8592 = vmatprep.subr.mxu0 0.0
        %8593 = vmatpush2.msra.mxu0 0.0
        %8594 = vmatprep.subr.mxu0 0.0
        %8595 = vmatpush2.msra.mxu0 0.0
        %8596 = vmatprep.subr.mxu0 0.0
        %8597 = vmatpush2.msra.mxu0 0.0
        %8598 = vmatprep.subr.mxu0 0.0
        %8599 = vmatpush2.msra.mxu0 0.0
        %8600 = vmatprep.subr.mxu0 0.0
        %8601 = vmatpush2.msra.mxu0 0.0
        %8602 = vmatprep.subr.mxu0 0.0
        %8603 = vmatpush2.msra.mxu0 0.0
        %8604 = vmatprep.subr.mxu0 0.0
        %8605 = vmatpush2.msra.mxu0 0.0
        %8606 = vmatprep.subr.mxu0 0.0
        %8607 = vmatpush2.msra.mxu0 0.0
        %8608 = vmatprep.subr.mxu0 0.0
        %8609 = vmatpush2.msra.mxu0 0.0
        %8610 = vmatprep.subr.mxu0 0.0
        %8611 = vmatpush2.msra.mxu0 0.0
        %8612 = vmatprep.subr.mxu0 0.0
        %8613 = vmatpush2.msra.mxu0 0.0
        %8614 = vmatprep.mubr.f32.mxu0 0.0
        %8615 = vmatmul.mubr.f32.gmra.mxu0 %v8548
        %v8616 = vpop.f32.mrf.mxu0
        %v8617 = vadd.f32 %v8545, %v8616
        %v8618 = vpop.f32.mrf.mxu0
        %v8619 = vadd.f32 %v8545, %v8618
        %8620 = vdwg.mxu0
        %v8621 = vmax.f32 %v8617, 0.0
        %v8622 = vmax.f32 %v8619, 0.0
        %8623 = vst [vmem:[%s318] sm:$0xff] %v8621
        %8624 = vst [vmem:[%s318 + $0x8] sm:$0xff] %v8622
        %p8625 = scmp.lt.s32.totalorder %s21, 1
        %s8626 = scalar_select %p8625, %s21, 1
        %s8627 = smul.addr %s8626, 2
        %s8628 = smul.addr %s8627, 8
        %s8629 = scalar_lea.vmem %s7, %s8628
        // Predicated region
        $region53: #{up_forward.1} parent=47 // pred_check
          %p8630 = pneg %p196
        $region54: #{up_forward.1} parent=47 // pred_check_branch
          %8632 = sbr.rel (%p8630) target = $region56
        $region55: #{up_forward.1} parent=47 // pred_region
          _
        $region56: #{up_forward.1} parent=47 // pred_fallthru
          _
      $region48: #{up_forward.1} parent=5 // pred_fallthru
        _
      %p8633 = scmp.le.s32.totalorder 2, %s16
      // Predicated region
      $region57: #{up_forward.1} parent=5 // pred_check
        %p8634 = pneg %p8633
      $region58: #{up_forward.1} parent=5 // pred_check_branch
        %8636 = sbr.rel (%p8634) target = $region60
      $region59: #{up_forward.1} parent=5 // pred_region
        %s8637 = ssub.s32 %s16, 2
        // Predicated region
        $region61: #{up_forward.1} parent=59 // pred_check
          %p8638 = pneg %p202
        $region62: #{up_forward.1} parent=59 // pred_check_branch
          %8640 = sbr.rel (%p8638) target = $region64
        $region63: #{up_forward.1} parent=59 // pred_region
          %p8641 = scmp.lt.s32.totalorder %s22, 1
          %s8642 = scalar_select %p8641, %s22, 1
          %s8643 = smul.addr %s8642, 2
          %s8644 = smul.addr %s8643, 8
          %s8645 = scalar_lea.vmem %s7, %s8644
        $region64: #{up_forward.1} parent=59 // pred_fallthru
          _
      $region60: #{up_forward.1} parent=5 // pred_fallthru
        _
    $region6: #{up_forward.1} parent=1 // loop_footer
      %s20 = sadd.s32 1, %s16
    $region7: #{up_forward.1} parent=1 // loop_footer_branch
      %15 = sbr.rel target = $region3
    $region8: #{up_forward.1} parent=1 // loop_exit
      _
    %8646 = vsyncpa [#allocation3], 1
    %s8647 = scalar_lea.sflag [#allocation3], 1
    %8648 = vsyncpa %s8647, 1

</llo_original>
